<compile_context>
chip_gen: v6e
topology: v6e:2x2x1
jax: 0.10.0
libtpu: 0.0.40
codegen_flags: <defaults>
</compile_context>

<pallas_src>
import functools

import jax
import jax.numpy as jnp
from jax import lax
from jax.experimental import pallas as pl
from jax.experimental.pallas import tpu as pltpu


def _round_up(x, m):
    return ((x + m - 1) // m) * m


# ---------------------------------------------------------------------------
# Fused Conv(GEMM) + [BatchNorm (batch stats)] + activation Pallas kernel
# ---------------------------------------------------------------------------

def conv_fused_kernel(a_ref, b_ref, g_ref, bt_ref, o_ref, acc_ref,
                      *, m_true, use_bn, act, eps):
    """Grid = (Cout tiles, K tiles).

    acc_ref holds the full-M rows of the current Cout tile.  At the last K
    step the BN statistics, affine and activation are applied directly to the
    accumulator and the final activations are written.
    """
    k = pl.program_id(1)

    @pl.when(k == 0)
    def _():
        acc_ref[...] = jnp.zeros_like(acc_ref)

    acc_ref[...] += jnp.dot(a_ref[...], b_ref[...],
                            preferred_element_type=jnp.float32)

    @pl.when(k == pl.num_programs(1) - 1)
    def _():
        acc = acc_ref[...]
        if use_bn:
            # BatchNorm2d (training mode): biased batch statistics over the
            # true M rows.  Conv bias is absorbed by the mean subtraction.
            inv_m = jnp.float32(1.0 / m_true)
            mean = jnp.sum(acc, axis=0, keepdims=True) * inv_m
            centered = acc - mean
            var = jnp.sum(centered * centered, axis=0, keepdims=True) * inv_m
            scale = g_ref[...] * lax.rsqrt(var + eps)
            y = centered * scale + bt_ref[...]          # bt = beta
        else:
            y = acc + bt_ref[...]                       # bt = conv bias
        if act == "lrelu":
            y = jnp.where(y >= 0, y, 0.01 * y)
        else:  # sigmoid
            y = 1.0 / (1.0 + jnp.exp(-y))
        o_ref[...] = y.astype(o_ref.dtype)


def pallas_conv_fused(patches, w2d, gamma_p, beta_p, *, use_bn, act):
    """patches: (M, K) f32, w2d: (K, Np) f32, gamma_p/beta_p: (1, Np) f32.

    K and Np must be multiples of 128 (guaranteed by the callers).
    Returns (M, Np) f32 activations.
    """
    M, K = patches.shape
    K2, Np = w2d.shape
    assert K == K2 and K % 128 == 0 and Np % 128 == 0

    # Adaptive K tile: no padding of K to a fixed 512.
    if K <= 512:
        tk = K
    elif K % 512 == 0:
        tk = 512
    else:
        tk = 128
    # Wider N tile when possible (better MXU shape on v6e/v7x).
    tn = 256 if Np % 256 == 0 else 128

    grid = (Np // tn, K // tk)
    kernel = functools.partial(conv_fused_kernel, m_true=M, use_bn=use_bn,
                               act=act, eps=1e-5)
    return pl.pallas_call(
        kernel,
        out_shape=jax.ShapeDtypeStruct((M, Np), jnp.float32),
        grid_spec=pltpu.PrefetchScalarGridSpec(
            num_scalar_prefetch=0,
            grid=grid,
            in_specs=[
                pl.BlockSpec((M, tk), lambda j, k: (0, k)),
                pl.BlockSpec((tk, tn), lambda j, k: (k, j)),
                pl.BlockSpec((1, tn), lambda j, k: (0, j)),
                pl.BlockSpec((1, tn), lambda j, k: (0, j)),
            ],
            out_specs=pl.BlockSpec((M, tn), lambda j, k: (0, j)),
            scratch_shapes=[pltpu.VMEM((M, tn), jnp.float32)],
        ),
        compiler_params=pltpu.CompilerParams(
            dimension_semantics=("parallel", "arbitrary")),
    )(patches, w2d, gamma_p, beta_p)


# ---------------------------------------------------------------------------
# im2col glue (single pad op handles spatial AND channel alignment)
# ---------------------------------------------------------------------------

def im2col(x_nhwc, k, s, p, c_pad):
    """x: (N, H, W, C) -> patches (N*OH*OW, k*k*c_pad), plus (OH, OW)."""
    N, H, W, C = x_nhwc.shape
    xp = jnp.pad(x_nhwc, ((0, 0), (p, p), (p, p), (0, c_pad - C)))
    OH = (H + 2 * p - k) // s + 1
    OW = (W + 2 * p - k) // s + 1
    rows = []
    for kh in range(k):
        cols = [xp[:, kh:kh + (OH - 1) * s + 1:s,
                    kw:kw + (OW - 1) * s + 1:s, :] for kw in range(k)]
        rows.append(jnp.stack(cols, axis=3))        # (N, OH, OW, kw, Cpad)
    patches = jnp.stack(rows, axis=3)               # (N, OH, OW, kh, kw, Cpad)
    return patches.reshape(N * OH * OW, k * k * c_pad), OH, OW


def conv_bn_act(x_nhwc, w_hwio, b, gamma, beta, stride, act):
    """Conv2d(k=4, pad=2) [+ BatchNorm2d (batch stats)] + activation."""
    N, H, W, C = x_nhwc.shape
    kh, kw, cin, cout = w_hwio.shape
    assert cin == C
    cpad = _round_up(C, 8)                 # -> K = kh*kw*cpad, multiple of 128
    np_ = _round_up(cout, 128)

    patches, OH, OW = im2col(x_nhwc, k=kh, s=stride, p=2, c_pad=cpad)

    # Tiny static weight / per-channel-parameter padding (no activation copies).
    w_p = jnp.zeros((kh, kw, cpad, np_), jnp.float32)
    w_p = w_p.at[:, :, :cin, :cout].set(w_hwio)
    w2d = w_p.reshape(kh * kw * cpad, np_)

    if gamma is not None:
        g_p = jnp.zeros((1, np_), jnp.float32).at[0, :cout].set(gamma)
        bt_p = jnp.zeros((1, np_), jnp.float32).at[0, :cout].set(beta)
        use_bn = True
    else:
        g_p = jnp.ones((1, np_), jnp.float32)            # unused in kernel
        bt_p = jnp.zeros((1, np_), jnp.float32).at[0, :cout].set(b)
        use_bn = False

    out = pallas_conv_fused(patches, w2d, g_p, bt_p, use_bn=use_bn, act=act)
    out = out.reshape(N, OH, OW, np_)[..., :cout]        # no-op when np_==cout
    return out


# ---------------------------------------------------------------------------
# Model definition
# ---------------------------------------------------------------------------

STRIDES = (2, 2, 2, 2, 2, 2, 1, 1)


def layer_configs(input_nc):
    # (Cin, Cout, stride, use_bn)
    return [
        (input_nc, 64, 2, False),
        (64, 128, 2, True),
        (128, 256, 2, True),
        (256, 512, 2, True),
        (512, 512, 2, True),
        (512, 512, 2, True),
        (512, 512, 1, True),
        (512, 1, 1, False),
    ]


def init_params(key, input_nc):
    params = []
    for (cin, cout, stride, use_bn) in layer_configs(input_nc):
        key, kw_, kb, kg, kbeta = jax.random.split(key, 5)
        w = 0.05 * jax.random.normal(kw_, (4, 4, cin, cout), jnp.float32)
        b = 0.01 * jax.random.normal(kb, (cout,), jnp.float32)
        if use_bn:
            gamma = 1.0 + 0.1 * jax.random.normal(kg, (cout,), jnp.float32)
            beta = 0.1 * jax.random.normal(kbeta, (cout,), jnp.float32)
        else:
            gamma, beta = None, None
        params.append((w, b, gamma, beta))
    return params


@jax.jit
def fusegan_discriminator_forward(x_nchw, params):
    """Pallas implementation of FuseGAN_Discriminator.forward (NCHW in/out)."""
    x = jnp.transpose(x_nchw, (0, 2, 3, 1)).astype(jnp.float32)     # -> NHWC
    n_layers = len(params)
    for i, ((w, b, gamma, beta), stride) in enumerate(zip(params, STRIDES)):
        act = "sigmoid" if i == n_layers - 1 else "lrelu"
        x = conv_bn_act(x, w, b, gamma, beta, stride, act)
    return jnp.transpose(x, (0, 3, 1, 2))                            # -> NCHW


# ---------------------------------------------------------------------------
# Pure-JAX reference (for correctness check)
# ---------------------------------------------------------------------------

def reference_forward(x_nchw, params):
    x = jnp.transpose(x_nchw, (0, 2, 3, 1)).astype(jnp.float32)
    n_layers = len(params)
    for i, ((w, b, gamma, beta), stride) in enumerate(zip(params, STRIDES)):
        act = "sigmoid" if i == n_layers - 1 else "lrelu"
        y = lax.conv_general_dilated(
            x, w, window_strides=(stride, stride),
            padding=((2, 2), (2, 2)),
            dimension_numbers=("NHWC", "HWIO", "NHWC")) + b
        if gamma is not None:
            mean = jnp.mean(y, axis=(0, 1, 2))
            var = jnp.var(y, axis=(0, 1, 2))
            y = (y - mean) / jnp.sqrt(var + 1e-5) * gamma + beta
        if act == "lrelu":
            y = jnp.where(y >= 0, y, 0.01 * y)
        else:
            y = 1.0 / (1.0 + jnp.exp(-y))
        x = y
    return jnp.transpose(x, (0, 3, 1, 2))


# ---------------------------------------------------------------------------

if __name__ == "__main__":
    key = jax.random.PRNGKey(0)
    key, kx, kp = jax.random.split(key, 3)

    input_nc = 4
    x = jax.random.normal(kx, (2, input_nc, 16, 16), jnp.float32)   # NCHW

    params = init_params(kp, input_nc)

    out = fusegan_discriminator_forward(x, params)
    out = jax.block_until_ready(out)

    ref = jax.block_until_ready(reference_forward(x, params))

    assert out.shape == ref.shape == (2, 1, 4, 4), out.shape
    assert jnp.allclose(out, ref, atol=2e-3, rtol=2e-3), (
        float(jnp.max(jnp.abs(out - ref))))

    print("KERNEL_OK")
</pallas_src>

<mosaic_0001>
module attributes {stable_mosaic.version = 11 : i64} {
  func.func @conv_fused_kernel(%arg0: i32, %arg1: i32, %arg2: memref<162x128xf32, #tpu.memory_space<vmem>>, %arg3: memref<128x128xf32, #tpu.memory_space<vmem>>, %arg4: memref<1x128xf32, #tpu.memory_space<vmem>>, %arg5: memref<1x128xf32, #tpu.memory_space<vmem>>, %arg6: memref<162x128xf32, #tpu.memory_space<vmem>>, %arg7: memref<162x128xf32, #tpu.memory_space<vmem>>) attributes {dimension_semantics = [#tpu.dimension_semantics<parallel>, #tpu.dimension_semantics<arbitrary>], iteration_bounds = array<i64: 1, 1>, scalar_prefetch = 0 : i64, scratch_operands = 1 : i64, tpu.core_type = #tpu.core_type<tc>, window_params = [{transform_indices = @transform_0, window_bounds = array<i64: 162, 128>}, {transform_indices = @transform_1, window_bounds = array<i64: 128, 128>}, {transform_indices = @transform_2, window_bounds = array<i64: 1, 128>}, {transform_indices = @transform_3, window_bounds = array<i64: 1, 128>}, {transform_indices = @transform_4, window_bounds = array<i64: 162, 128>}]} {
    %c0_i32 = arith.constant 0 : i32
    %0 = arith.cmpi eq, %arg1, %c0_i32 : i32
    %1 = arith.extui %0 : i1 to i32
    %c0_i32_0 = arith.constant 0 : i32
    %2 = arith.cmpi ne, %1, %c0_i32_0 : i32
    scf.if %2 {
      %cst_10 = arith.constant 0.000000e+00 : f32
      %12 = vector.broadcast %cst_10 : f32 to vector<162x128xf32>
      %c0_11 = arith.constant 0 : index
      %c0_12 = arith.constant 0 : index
      %13 = vector.load %arg7[%c0_11, %c0_12] : memref<162x128xf32, #tpu.memory_space<vmem>>, vector<162x128xf32>
      tpu.vector_store %arg7[%c0_11, %c0_12], %12 {strides = array<i32>} : memref<162x128xf32, #tpu.memory_space<vmem>>, vector<162x128xf32>,
    } else {
    }
    %c0 = arith.constant 0 : index
    %c0_1 = arith.constant 0 : index
    %3 = vector.load %arg7[%c0, %c0_1] : memref<162x128xf32, #tpu.memory_space<vmem>>, vector<162x128xf32>
    %c0_2 = arith.constant 0 : index
    %c0_3 = arith.constant 0 : index
    %4 = vector.load %arg2[%c0_2, %c0_3] : memref<162x128xf32, #tpu.memory_space<vmem>>, vector<162x128xf32>
    %c0_4 = arith.constant 0 : index
    %c0_5 = arith.constant 0 : index
    %5 = vector.load %arg3[%c0_4, %c0_5] : memref<128x128xf32, #tpu.memory_space<vmem>>, vector<128x128xf32>
    %cst = arith.constant dense<0.000000e+00> : vector<162x128xf32>
    %6 = tpu.matmul %4, %5, %cst {dimension_numbers = #tpu.dot_dimension_numbers<[1], [0], [0], [1], [0, 0, 1, 1], [], []>} : vector<162x128xf32>, vector<128x128xf32>, vector<162x128xf32> -> vector<162x128xf32>
    %7 = arith.addf %3, %6 : vector<162x128xf32>
    %c0_6 = arith.constant 0 : index
    %c0_7 = arith.constant 0 : index
    %8 = vector.load %arg7[%c0_6, %c0_7] : memref<162x128xf32, #tpu.memory_space<vmem>>, vector<162x128xf32>
    tpu.vector_store %arg7[%c0_6, %c0_7], %7 {strides = array<i32>} : memref<162x128xf32, #tpu.memory_space<vmem>>, vector<162x128xf32>,
    %c0_i32_8 = arith.constant 0 : i32
    %9 = arith.cmpi eq, %arg1, %c0_i32_8 : i32
    %10 = arith.extui %9 : i1 to i32
    %c0_i32_9 = arith.constant 0 : i32
    %11 = arith.cmpi ne, %10, %c0_i32_9 : i32
    scf.if %11 {
      %c0_10 = arith.constant 0 : index
      %c0_11 = arith.constant 0 : index
      %12 = vector.load %arg7[%c0_10, %c0_11] : memref<162x128xf32, #tpu.memory_space<vmem>>, vector<162x128xf32>
      %c0_12 = arith.constant 0 : index
      %c0_13 = arith.constant 0 : index
      %13 = vector.load %arg5[%c0_12, %c0_13] : memref<1x128xf32, #tpu.memory_space<vmem>>, vector<1x128xf32>
      %14 = vector.broadcast %13 : vector<1x128xf32> to vector<162x128xf32>
      %15 = arith.addf %12, %14 : vector<162x128xf32>
      %cst_14 = arith.constant 0.000000e+00 : f32
      %16 = vector.broadcast %cst_14 : f32 to vector<162x128xf32>
      %17 = arith.cmpf oge, %15, %16 : vector<162x128xf32>
      %cst_15 = arith.constant 0.00999999977 : f32
      %18 = vector.broadcast %cst_15 : f32 to vector<162x128xf32>
      %19 = arith.mulf %18, %15 : vector<162x128xf32>
      %20 = arith.select %17, %15, %19 : vector<162x128xi1>, vector<162x128xf32>
      %c0_16 = arith.constant 0 : index
      %c0_17 = arith.constant 0 : index
      %21 = vector.load %arg6[%c0_16, %c0_17] : memref<162x128xf32, #tpu.memory_space<vmem>>, vector<162x128xf32>
      tpu.vector_store %arg6[%c0_16, %c0_17], %20 {strides = array<i32>} : memref<162x128xf32, #tpu.memory_space<vmem>>, vector<162x128xf32>,
    } else {
    }
    return
  }
  func.func @transform_0(%arg0: i32, %arg1: i32) -> (i32, i32) {
    %c0_i32 = arith.constant 0 : i32
    %c0_i32_0 = arith.constant 0 : i32
    return %c0_i32, %arg1 : i32, i32
  }
  func.func @transform_1(%arg0: i32, %arg1: i32) -> (i32, i32) {
    %c0_i32 = arith.constant 0 : i32
    return %arg1, %arg0 : i32, i32
  }
  func.func @transform_2(%arg0: i32, %arg1: i32) -> (i32, i32) {
    %c0_i32 = arith.constant 0 : i32
    %c0_i32_0 = arith.constant 0 : i32
    return %c0_i32, %arg0 : i32, i32
  }
  func.func @transform_3(%arg0: i32, %arg1: i32) -> (i32, i32) {
    %c0_i32 = arith.constant 0 : i32
    %c0_i32_0 = arith.constant 0 : i32
    return %c0_i32, %arg0 : i32, i32
  }
  func.func @transform_4(%arg0: i32, %arg1: i32) -> (i32, i32) {
    %c0_i32 = arith.constant 0 : i32
    %c0_i32_0 = arith.constant 0 : i32
    return %c0_i32, %arg0 : i32, i32
  }
}

module attributes {stable_mosaic.version = 11 : i64} {
  func.func @conv_fused_kernel(%arg0: i32, %arg1: i32, %arg2: memref<50x512xf32, #tpu.memory_space<vmem>>, %arg3: memref<512x128xf32, #tpu.memory_space<vmem>>, %arg4: memref<1x128xf32, #tpu.memory_space<vmem>>, %arg5: memref<1x128xf32, #tpu.memory_space<vmem>>, %arg6: memref<50x128xf32, #tpu.memory_space<vmem>>, %arg7: memref<50x128xf32, #tpu.memory_space<vmem>>) attributes {dimension_semantics = [#tpu.dimension_semantics<parallel>, #tpu.dimension_semantics<arbitrary>], iteration_bounds = array<i64: 1, 2>, scalar_prefetch = 0 : i64, scratch_operands = 1 : i64, tpu.core_type = #tpu.core_type<tc>, window_params = [{transform_indices = @transform_0, window_bounds = array<i64: 50, 512>}, {transform_indices = @transform_1, window_bounds = array<i64: 512, 128>}, {transform_indices = @transform_2, window_bounds = array<i64: 1, 128>}, {transform_indices = @transform_3, window_bounds = array<i64: 1, 128>}, {transform_indices = @transform_4, window_bounds = array<i64: 50, 128>}]} {
    %c0_i32 = arith.constant 0 : i32
    %0 = arith.cmpi eq, %arg1, %c0_i32 : i32
    %1 = arith.extui %0 : i1 to i32
    %c0_i32_0 = arith.constant 0 : i32
    %2 = arith.cmpi ne, %1, %c0_i32_0 : i32
    scf.if %2 {
      %cst_9 = arith.constant 0.000000e+00 : f32
      %12 = vector.broadcast %cst_9 : f32 to vector<50x128xf32>
      %c0_10 = arith.constant 0 : index
      %c0_11 = arith.constant 0 : index
      %13 = vector.load %arg7[%c0_10, %c0_11] : memref<50x128xf32, #tpu.memory_space<vmem>>, vector<50x128xf32>
      tpu.vector_store %arg7[%c0_10, %c0_11], %12 {strides = array<i32>} : memref<50x128xf32, #tpu.memory_space<vmem>>, vector<50x128xf32>,
    } else {
    }
    %c0 = arith.constant 0 : index
    %c0_1 = arith.constant 0 : index
    %3 = vector.load %arg7[%c0, %c0_1] : memref<50x128xf32, #tpu.memory_space<vmem>>, vector<50x128xf32>
    %c0_2 = arith.constant 0 : index
    %c0_3 = arith.constant 0 : index
    %4 = vector.load %arg2[%c0_2, %c0_3] : memref<50x512xf32, #tpu.memory_space<vmem>>, vector<50x512xf32>
    %c0_4 = arith.constant 0 : index
    %c0_5 = arith.constant 0 : index
    %5 = vector.load %arg3[%c0_4, %c0_5] : memref<512x128xf32, #tpu.memory_space<vmem>>, vector<512x128xf32>
    %cst = arith.constant dense<0.000000e+00> : vector<50x128xf32>
    %6 = tpu.matmul %4, %5, %cst {dimension_numbers = #tpu.dot_dimension_numbers<[1], [0], [0], [1], [0, 0, 1, 1], [], []>} : vector<50x512xf32>, vector<512x128xf32>, vector<50x128xf32> -> vector<50x128xf32>
    %7 = arith.addf %3, %6 : vector<50x128xf32>
    %c0_6 = arith.constant 0 : index
    %c0_7 = arith.constant 0 : index
    %8 = vector.load %arg7[%c0_6, %c0_7] : memref<50x128xf32, #tpu.memory_space<vmem>>, vector<50x128xf32>
    tpu.vector_store %arg7[%c0_6, %c0_7], %7 {strides = array<i32>} : memref<50x128xf32, #tpu.memory_space<vmem>>, vector<50x128xf32>,
    %c1_i32 = arith.constant 1 : i32
    %9 = arith.cmpi eq, %arg1, %c1_i32 : i32
    %10 = arith.extui %9 : i1 to i32
    %c0_i32_8 = arith.constant 0 : i32
    %11 = arith.cmpi ne, %10, %c0_i32_8 : i32
    scf.if %11 {
      %c0_9 = arith.constant 0 : index
      %c0_10 = arith.constant 0 : index
      %12 = vector.load %arg7[%c0_9, %c0_10] : memref<50x128xf32, #tpu.memory_space<vmem>>, vector<50x128xf32>
      %cst_11 = arith.constant dense<0.000000e+00> : vector<128xf32>
      %13 = vector.multi_reduction <add>, %12, %cst_11 [0] : vector<50x128xf32> to vector<128xf32>
      %14 = vector.shape_cast %13 : vector<128xf32> to vector<1x128xf32>
      %cst_12 = arith.constant 2.000000e-02 : f32
      %15 = vector.broadcast %cst_12 : f32 to vector<1x128xf32>
      %16 = arith.mulf %14, %15 : vector<1x128xf32>
      %17 = vector.broadcast %16 : vector<1x128xf32> to vector<50x128xf32>
      %18 = arith.subf %12, %17 : vector<50x128xf32>
      %19 = arith.mulf %18, %18 : vector<50x128xf32>
      %cst_13 = arith.constant dense<0.000000e+00> : vector<128xf32>
      %20 = vector.multi_reduction <add>, %19, %cst_13 [0] : vector<50x128xf32> to vector<128xf32>
      %21 = vector.shape_cast %20 : vector<128xf32> to vector<1x128xf32>
      %cst_14 = arith.constant 2.000000e-02 : f32
      %22 = vector.broadcast %cst_14 : f32 to vector<1x128xf32>
      %23 = arith.mulf %21, %22 : vector<1x128xf32>
      %c0_15 = arith.constant 0 : index
      %c0_16 = arith.constant 0 : index
      %24 = vector.load %arg4[%c0_15, %c0_16] : memref<1x128xf32, #tpu.memory_space<vmem>>, vector<1x128xf32>
      %cst_17 = arith.constant 9.99999974E-6 : f32
      %25 = vector.broadcast %cst_17 : f32 to vector<1x128xf32>
      %26 = arith.addf %23, %25 : vector<1x128xf32>
      %27 = math.rsqrt %26 : vector<1x128xf32>
      %28 = arith.mulf %24, %27 : vector<1x128xf32>
      %29 = vector.broadcast %28 : vector<1x128xf32> to vector<50x128xf32>
      %30 = arith.mulf %18, %29 : vector<50x128xf32>
      %c0_18 = arith.constant 0 : index
      %c0_19 = arith.constant 0 : index
      %31 = vector.load %arg5[%c0_18, %c0_19] : memref<1x128xf32, #tpu.memory_space<vmem>>, vector<1x128xf32>
      %32 = vector.broadcast %31 : vector<1x128xf32> to vector<50x128xf32>
      %33 = arith.addf %30, %32 : vector<50x128xf32>
      %cst_20 = arith.constant 0.000000e+00 : f32
      %34 = vector.broadcast %cst_20 : f32 to vector<50x128xf32>
      %35 = arith.cmpf oge, %33, %34 : vector<50x128xf32>
      %cst_21 = arith.constant 0.00999999977 : f32
      %36 = vector.broadcast %cst_21 : f32 to vector<50x128xf32>
      %37 = arith.mulf %36, %33 : vector<50x128xf32>
      %38 = arith.select %35, %33, %37 : vector<50x128xi1>, vector<50x128xf32>
      %c0_22 = arith.constant 0 : index
      %c0_23 = arith.constant 0 : index
      %39 = vector.load %arg6[%c0_22, %c0_23] : memref<50x128xf32, #tpu.memory_space<vmem>>, vector<50x128xf32>
      tpu.vector_store %arg6[%c0_22, %c0_23], %38 {strides = array<i32>} : memref<50x128xf32, #tpu.memory_space<vmem>>, vector<50x128xf32>,
    } else {
    }
    return
  }
  func.func @transform_0(%arg0: i32, %arg1: i32) -> (i32, i32) {
    %c0_i32 = arith.constant 0 : i32
    %c0_i32_0 = arith.constant 0 : i32
    return %c0_i32, %arg1 : i32, i32
  }
  func.func @transform_1(%arg0: i32, %arg1: i32) -> (i32, i32) {
    %c0_i32 = arith.constant 0 : i32
    return %arg1, %arg0 : i32, i32
  }
  func.func @transform_2(%arg0: i32, %arg1: i32) -> (i32, i32) {
    %c0_i32 = arith.constant 0 : i32
    %c0_i32_0 = arith.constant 0 : i32
    return %c0_i32, %arg0 : i32, i32
  }
  func.func @transform_3(%arg0: i32, %arg1: i32) -> (i32, i32) {
    %c0_i32 = arith.constant 0 : i32
    %c0_i32_0 = arith.constant 0 : i32
    return %c0_i32, %arg0 : i32, i32
  }
  func.func @transform_4(%arg0: i32, %arg1: i32) -> (i32, i32) {
    %c0_i32 = arith.constant 0 : i32
    %c0_i32_0 = arith.constant 0 : i32
    return %c0_i32, %arg0 : i32, i32
  }
}

module attributes {stable_mosaic.version = 11 : i64} {
  func.func @conv_fused_kernel(%arg0: i32, %arg1: i32, %arg2: memref<18x512xf32, #tpu.memory_space<vmem>>, %arg3: memref<512x256xf32, #tpu.memory_space<vmem>>, %arg4: memref<1x256xf32, #tpu.memory_space<vmem>>, %arg5: memref<1x256xf32, #tpu.memory_space<vmem>>, %arg6: memref<18x256xf32, #tpu.memory_space<vmem>>, %arg7: memref<18x256xf32, #tpu.memory_space<vmem>>) attributes {dimension_semantics = [#tpu.dimension_semantics<parallel>, #tpu.dimension_semantics<arbitrary>], iteration_bounds = array<i64: 1, 4>, scalar_prefetch = 0 : i64, scratch_operands = 1 : i64, tpu.core_type = #tpu.core_type<tc>, window_params = [{transform_indices = @transform_0, window_bounds = array<i64: 18, 512>}, {transform_indices = @transform_1, window_bounds = array<i64: 512, 256>}, {transform_indices = @transform_2, window_bounds = array<i64: 1, 256>}, {transform_indices = @transform_3, window_bounds = array<i64: 1, 256>}, {transform_indices = @transform_4, window_bounds = array<i64: 18, 256>}]} {
    %c0_i32 = arith.constant 0 : i32
    %0 = arith.cmpi eq, %arg1, %c0_i32 : i32
    %1 = arith.extui %0 : i1 to i32
    %c0_i32_0 = arith.constant 0 : i32
    %2 = arith.cmpi ne, %1, %c0_i32_0 : i32
    scf.if %2 {
      %cst_9 = arith.constant 0.000000e+00 : f32
      %12 = vector.broadcast %cst_9 : f32 to vector<18x256xf32>
      %c0_10 = arith.constant 0 : index
      %c0_11 = arith.constant 0 : index
      %13 = vector.load %arg7[%c0_10, %c0_11] : memref<18x256xf32, #tpu.memory_space<vmem>>, vector<18x256xf32>
      tpu.vector_store %arg7[%c0_10, %c0_11], %12 {strides = array<i32>} : memref<18x256xf32, #tpu.memory_space<vmem>>, vector<18x256xf32>,
    } else {
    }
    %c0 = arith.constant 0 : index
    %c0_1 = arith.constant 0 : index
    %3 = vector.load %arg7[%c0, %c0_1] : memref<18x256xf32, #tpu.memory_space<vmem>>, vector<18x256xf32>
    %c0_2 = arith.constant 0 : index
    %c0_3 = arith.constant 0 : index
    %4 = vector.load %arg2[%c0_2, %c0_3] : memref<18x512xf32, #tpu.memory_space<vmem>>, vector<18x512xf32>
    %c0_4 = arith.constant 0 : index
    %c0_5 = arith.constant 0 : index
    %5 = vector.load %arg3[%c0_4, %c0_5] : memref<512x256xf32, #tpu.memory_space<vmem>>, vector<512x256xf32>
    %cst = arith.constant dense<0.000000e+00> : vector<18x256xf32>
    %6 = tpu.matmul %4, %5, %cst {dimension_numbers = #tpu.dot_dimension_numbers<[1], [0], [0], [1], [0, 0, 1, 1], [], []>} : vector<18x512xf32>, vector<512x256xf32>, vector<18x256xf32> -> vector<18x256xf32>
    %7 = arith.addf %3, %6 : vector<18x256xf32>
    %c0_6 = arith.constant 0 : index
    %c0_7 = arith.constant 0 : index
    %8 = vector.load %arg7[%c0_6, %c0_7] : memref<18x256xf32, #tpu.memory_space<vmem>>, vector<18x256xf32>
    tpu.vector_store %arg7[%c0_6, %c0_7], %7 {strides = array<i32>} : memref<18x256xf32, #tpu.memory_space<vmem>>, vector<18x256xf32>,
    %c3_i32 = arith.constant 3 : i32
    %9 = arith.cmpi eq, %arg1, %c3_i32 : i32
    %10 = arith.extui %9 : i1 to i32
    %c0_i32_8 = arith.constant 0 : i32
    %11 = arith.cmpi ne, %10, %c0_i32_8 : i32
    scf.if %11 {
      %c0_9 = arith.constant 0 : index
      %c0_10 = arith.constant 0 : index
      %12 = vector.load %arg7[%c0_9, %c0_10] : memref<18x256xf32, #tpu.memory_space<vmem>>, vector<18x256xf32>
      %cst_11 = arith.constant dense<0.000000e+00> : vector<256xf32>
      %13 = vector.multi_reduction <add>, %12, %cst_11 [0] : vector<18x256xf32> to vector<256xf32>
      %14 = vector.shape_cast %13 : vector<256xf32> to vector<1x256xf32>
      %cst_12 = arith.constant 0.055555556 : f32
      %15 = vector.broadcast %cst_12 : f32 to vector<1x256xf32>
      %16 = arith.mulf %14, %15 : vector<1x256xf32>
      %17 = vector.broadcast %16 : vector<1x256xf32> to vector<18x256xf32>
      %18 = arith.subf %12, %17 : vector<18x256xf32>
      %19 = arith.mulf %18, %18 : vector<18x256xf32>
      %cst_13 = arith.constant dense<0.000000e+00> : vector<256xf32>
      %20 = vector.multi_reduction <add>, %19, %cst_13 [0] : vector<18x256xf32> to vector<256xf32>
      %21 = vector.shape_cast %20 : vector<256xf32> to vector<1x256xf32>
      %cst_14 = arith.constant 0.055555556 : f32
      %22 = vector.broadcast %cst_14 : f32 to vector<1x256xf32>
      %23 = arith.mulf %21, %22 : vector<1x256xf32>
      %c0_15 = arith.constant 0 : index
      %c0_16 = arith.constant 0 : index
      %24 = vector.load %arg4[%c0_15, %c0_16] : memref<1x256xf32, #tpu.memory_space<vmem>>, vector<1x256xf32>
      %cst_17 = arith.constant 9.99999974E-6 : f32
      %25 = vector.broadcast %cst_17 : f32 to vector<1x256xf32>
      %26 = arith.addf %23, %25 : vector<1x256xf32>
      %27 = math.rsqrt %26 : vector<1x256xf32>
      %28 = arith.mulf %24, %27 : vector<1x256xf32>
      %29 = vector.broadcast %28 : vector<1x256xf32> to vector<18x256xf32>
      %30 = arith.mulf %18, %29 : vector<18x256xf32>
      %c0_18 = arith.constant 0 : index
      %c0_19 = arith.constant 0 : index
      %31 = vector.load %arg5[%c0_18, %c0_19] : memref<1x256xf32, #tpu.memory_space<vmem>>, vector<1x256xf32>
      %32 = vector.broadcast %31 : vector<1x256xf32> to vector<18x256xf32>
      %33 = arith.addf %30, %32 : vector<18x256xf32>
      %cst_20 = arith.constant 0.000000e+00 : f32
      %34 = vector.broadcast %cst_20 : f32 to vector<18x256xf32>
      %35 = arith.cmpf oge, %33, %34 : vector<18x256xf32>
      %cst_21 = arith.constant 0.00999999977 : f32
      %36 = vector.broadcast %cst_21 : f32 to vector<18x256xf32>
      %37 = arith.mulf %36, %33 : vector<18x256xf32>
      %38 = arith.select %35, %33, %37 : vector<18x256xi1>, vector<18x256xf32>
      %c0_22 = arith.constant 0 : index
      %c0_23 = arith.constant 0 : index
      %39 = vector.load %arg6[%c0_22, %c0_23] : memref<18x256xf32, #tpu.memory_space<vmem>>, vector<18x256xf32>
      tpu.vector_store %arg6[%c0_22, %c0_23], %38 {strides = array<i32>} : memref<18x256xf32, #tpu.memory_space<vmem>>, vector<18x256xf32>,
    } else {
    }
    return
  }
  func.func @transform_0(%arg0: i32, %arg1: i32) -> (i32, i32) {
    %c0_i32 = arith.constant 0 : i32
    %c0_i32_0 = arith.constant 0 : i32
    return %c0_i32, %arg1 : i32, i32
  }
  func.func @transform_1(%arg0: i32, %arg1: i32) -> (i32, i32) {
    %c0_i32 = arith.constant 0 : i32
    return %arg1, %arg0 : i32, i32
  }
  func.func @transform_2(%arg0: i32, %arg1: i32) -> (i32, i32) {
    %c0_i32 = arith.constant 0 : i32
    %c0_i32_0 = arith.constant 0 : i32
    return %c0_i32, %arg0 : i32, i32
  }
  func.func @transform_3(%arg0: i32, %arg1: i32) -> (i32, i32) {
    %c0_i32 = arith.constant 0 : i32
    %c0_i32_0 = arith.constant 0 : i32
    return %c0_i32, %arg0 : i32, i32
  }
  func.func @transform_4(%arg0: i32, %arg1: i32) -> (i32, i32) {
    %c0_i32 = arith.constant 0 : i32
    %c0_i32_0 = arith.constant 0 : i32
    return %c0_i32, %arg0 : i32, i32
  }
}

module attributes {stable_mosaic.version = 11 : i64} {
  func.func @conv_fused_kernel(%arg0: i32, %arg1: i32, %arg2: memref<8x512xf32, #tpu.memory_space<vmem>>, %arg3: memref<512x256xf32, #tpu.memory_space<vmem>>, %arg4: memref<1x256xf32, #tpu.memory_space<vmem>>, %arg5: memref<1x256xf32, #tpu.memory_space<vmem>>, %arg6: memref<8x256xf32, #tpu.memory_space<vmem>>, %arg7: memref<8x256xf32, #tpu.memory_space<vmem>>) attributes {dimension_semantics = [#tpu.dimension_semantics<parallel>, #tpu.dimension_semantics<arbitrary>], iteration_bounds = array<i64: 2, 8>, scalar_prefetch = 0 : i64, scratch_operands = 1 : i64, tpu.core_type = #tpu.core_type<tc>, window_params = [{transform_indices = @transform_0, window_bounds = array<i64: 8, 512>}, {transform_indices = @transform_1, window_bounds = array<i64: 512, 256>}, {transform_indices = @transform_2, window_bounds = array<i64: 1, 256>}, {transform_indices = @transform_3, window_bounds = array<i64: 1, 256>}, {transform_indices = @transform_4, window_bounds = array<i64: 8, 256>}]} {
    %c0_i32 = arith.constant 0 : i32
    %0 = arith.cmpi eq, %arg1, %c0_i32 : i32
    %1 = arith.extui %0 : i1 to i32
    %c0_i32_0 = arith.constant 0 : i32
    %2 = arith.cmpi ne, %1, %c0_i32_0 : i32
    scf.if %2 {
      %cst_9 = arith.constant 0.000000e+00 : f32
      %12 = vector.broadcast %cst_9 : f32 to vector<8x256xf32>
      %c0_10 = arith.constant 0 : index
      %c0_11 = arith.constant 0 : index
      %13 = vector.load %arg7[%c0_10, %c0_11] : memref<8x256xf32, #tpu.memory_space<vmem>>, vector<8x256xf32>
      tpu.vector_store %arg7[%c0_10, %c0_11], %12 {strides = array<i32>} : memref<8x256xf32, #tpu.memory_space<vmem>>, vector<8x256xf32>,
    } else {
    }
    %c0 = arith.constant 0 : index
    %c0_1 = arith.constant 0 : index
    %3 = vector.load %arg7[%c0, %c0_1] : memref<8x256xf32, #tpu.memory_space<vmem>>, vector<8x256xf32>
    %c0_2 = arith.constant 0 : index
    %c0_3 = arith.constant 0 : index
    %4 = vector.load %arg2[%c0_2, %c0_3] : memref<8x512xf32, #tpu.memory_space<vmem>>, vector<8x512xf32>
    %c0_4 = arith.constant 0 : index
    %c0_5 = arith.constant 0 : index
    %5 = vector.load %arg3[%c0_4, %c0_5] : memref<512x256xf32, #tpu.memory_space<vmem>>, vector<512x256xf32>
    %cst = arith.constant dense<0.000000e+00> : vector<8x256xf32>
    %6 = tpu.matmul %4, %5, %cst {dimension_numbers = #tpu.dot_dimension_numbers<[1], [0], [0], [1], [0, 0, 1, 1], [], []>} : vector<8x512xf32>, vector<512x256xf32>, vector<8x256xf32> -> vector<8x256xf32>
    %7 = arith.addf %3, %6 : vector<8x256xf32>
    %c0_6 = arith.constant 0 : index
    %c0_7 = arith.constant 0 : index
    %8 = vector.load %arg7[%c0_6, %c0_7] : memref<8x256xf32, #tpu.memory_space<vmem>>, vector<8x256xf32>
    tpu.vector_store %arg7[%c0_6, %c0_7], %7 {strides = array<i32>} : memref<8x256xf32, #tpu.memory_space<vmem>>, vector<8x256xf32>,
    %c7_i32 = arith.constant 7 : i32
    %9 = arith.cmpi eq, %arg1, %c7_i32 : i32
    %10 = arith.extui %9 : i1 to i32
    %c0_i32_8 = arith.constant 0 : i32
    %11 = arith.cmpi ne, %10, %c0_i32_8 : i32
    scf.if %11 {
      %c0_9 = arith.constant 0 : index
      %c0_10 = arith.constant 0 : index
      %12 = vector.load %arg7[%c0_9, %c0_10] : memref<8x256xf32, #tpu.memory_space<vmem>>, vector<8x256xf32>
      %cst_11 = arith.constant dense<0.000000e+00> : vector<256xf32>
      %13 = vector.multi_reduction <add>, %12, %cst_11 [0] : vector<8x256xf32> to vector<256xf32>
      %14 = vector.shape_cast %13 : vector<256xf32> to vector<1x256xf32>
      %cst_12 = arith.constant 1.250000e-01 : f32
      %15 = vector.broadcast %cst_12 : f32 to vector<1x256xf32>
      %16 = arith.mulf %14, %15 : vector<1x256xf32>
      %17 = vector.broadcast %16 : vector<1x256xf32> to vector<8x256xf32>
      %18 = arith.subf %12, %17 : vector<8x256xf32>
      %19 = arith.mulf %18, %18 : vector<8x256xf32>
      %cst_13 = arith.constant dense<0.000000e+00> : vector<256xf32>
      %20 = vector.multi_reduction <add>, %19, %cst_13 [0] : vector<8x256xf32> to vector<256xf32>
      %21 = vector.shape_cast %20 : vector<256xf32> to vector<1x256xf32>
      %cst_14 = arith.constant 1.250000e-01 : f32
      %22 = vector.broadcast %cst_14 : f32 to vector<1x256xf32>
      %23 = arith.mulf %21, %22 : vector<1x256xf32>
      %c0_15 = arith.constant 0 : index
      %c0_16 = arith.constant 0 : index
      %24 = vector.load %arg4[%c0_15, %c0_16] : memref<1x256xf32, #tpu.memory_space<vmem>>, vector<1x256xf32>
      %cst_17 = arith.constant 9.99999974E-6 : f32
      %25 = vector.broadcast %cst_17 : f32 to vector<1x256xf32>
      %26 = arith.addf %23, %25 : vector<1x256xf32>
      %27 = math.rsqrt %26 : vector<1x256xf32>
      %28 = arith.mulf %24, %27 : vector<1x256xf32>
      %29 = vector.broadcast %28 : vector<1x256xf32> to vector<8x256xf32>
      %30 = arith.mulf %18, %29 : vector<8x256xf32>
      %c0_18 = arith.constant 0 : index
      %c0_19 = arith.constant 0 : index
      %31 = vector.load %arg5[%c0_18, %c0_19] : memref<1x256xf32, #tpu.memory_space<vmem>>, vector<1x256xf32>
      %32 = vector.broadcast %31 : vector<1x256xf32> to vector<8x256xf32>
      %33 = arith.addf %30, %32 : vector<8x256xf32>
      %cst_20 = arith.constant 0.000000e+00 : f32
      %34 = vector.broadcast %cst_20 : f32 to vector<8x256xf32>
      %35 = arith.cmpf oge, %33, %34 : vector<8x256xf32>
      %cst_21 = arith.constant 0.00999999977 : f32
      %36 = vector.broadcast %cst_21 : f32 to vector<8x256xf32>
      %37 = arith.mulf %36, %33 : vector<8x256xf32>
      %38 = arith.select %35, %33, %37 : vector<8x256xi1>, vector<8x256xf32>
      %c0_22 = arith.constant 0 : index
      %c0_23 = arith.constant 0 : index
      %39 = vector.load %arg6[%c0_22, %c0_23] : memref<8x256xf32, #tpu.memory_space<vmem>>, vector<8x256xf32>
      tpu.vector_store %arg6[%c0_22, %c0_23], %38 {strides = array<i32>} : memref<8x256xf32, #tpu.memory_space<vmem>>, vector<8x256xf32>,
    } else {
    }
    return
  }
  func.func @transform_0(%arg0: i32, %arg1: i32) -> (i32, i32) {
    %c0_i32 = arith.constant 0 : i32
    %c0_i32_0 = arith.constant 0 : i32
    return %c0_i32, %arg1 : i32, i32
  }
  func.func @transform_1(%arg0: i32, %arg1: i32) -> (i32, i32) {
    %c0_i32 = arith.constant 0 : i32
    return %arg1, %arg0 : i32, i32
  }
  func.func @transform_2(%arg0: i32, %arg1: i32) -> (i32, i32) {
    %c0_i32 = arith.constant 0 : i32
    %c0_i32_0 = arith.constant 0 : i32
    return %c0_i32, %arg0 : i32, i32
  }
  func.func @transform_3(%arg0: i32, %arg1: i32) -> (i32, i32) {
    %c0_i32 = arith.constant 0 : i32
    %c0_i32_0 = arith.constant 0 : i32
    return %c0_i32, %arg0 : i32, i32
  }
  func.func @transform_4(%arg0: i32, %arg1: i32) -> (i32, i32) {
    %c0_i32 = arith.constant 0 : i32
    %c0_i32_0 = arith.constant 0 : i32
    return %c0_i32, %arg0 : i32, i32
  }
}

module attributes {stable_mosaic.version = 11 : i64} {
  func.func @conv_fused_kernel(%arg0: i32, %arg1: i32, %arg2: memref<8x512xf32, #tpu.memory_space<vmem>>, %arg3: memref<512x256xf32, #tpu.memory_space<vmem>>, %arg4: memref<1x256xf32, #tpu.memory_space<vmem>>, %arg5: memref<1x256xf32, #tpu.memory_space<vmem>>, %arg6: memref<8x256xf32, #tpu.memory_space<vmem>>, %arg7: memref<8x256xf32, #tpu.memory_space<vmem>>) attributes {dimension_semantics = [#tpu.dimension_semantics<parallel>, #tpu.dimension_semantics<arbitrary>], iteration_bounds = array<i64: 2, 16>, scalar_prefetch = 0 : i64, scratch_operands = 1 : i64, tpu.core_type = #tpu.core_type<tc>, window_params = [{transform_indices = @transform_0, window_bounds = array<i64: 8, 512>}, {transform_indices = @transform_1, window_bounds = array<i64: 512, 256>}, {transform_indices = @transform_2, window_bounds = array<i64: 1, 256>}, {transform_indices = @transform_3, window_bounds = array<i64: 1, 256>}, {transform_indices = @transform_4, window_bounds = array<i64: 8, 256>}]} {
    %c0_i32 = arith.constant 0 : i32
    %0 = arith.cmpi eq, %arg1, %c0_i32 : i32
    %1 = arith.extui %0 : i1 to i32
    %c0_i32_0 = arith.constant 0 : i32
    %2 = arith.cmpi ne, %1, %c0_i32_0 : i32
    scf.if %2 {
      %cst_9 = arith.constant 0.000000e+00 : f32
      %12 = vector.broadcast %cst_9 : f32 to vector<8x256xf32>
      %c0_10 = arith.constant 0 : index
      %c0_11 = arith.constant 0 : index
      %13 = vector.load %arg7[%c0_10, %c0_11] : memref<8x256xf32, #tpu.memory_space<vmem>>, vector<8x256xf32>
      tpu.vector_store %arg7[%c0_10, %c0_11], %12 {strides = array<i32>} : memref<8x256xf32, #tpu.memory_space<vmem>>, vector<8x256xf32>,
    } else {
    }
    %c0 = arith.constant 0 : index
    %c0_1 = arith.constant 0 : index
    %3 = vector.load %arg7[%c0, %c0_1] : memref<8x256xf32, #tpu.memory_space<vmem>>, vector<8x256xf32>
    %c0_2 = arith.constant 0 : index
    %c0_3 = arith.constant 0 : index
    %4 = vector.load %arg2[%c0_2, %c0_3] : memref<8x512xf32, #tpu.memory_space<vmem>>, vector<8x512xf32>
    %c0_4 = arith.constant 0 : index
    %c0_5 = arith.constant 0 : index
    %5 = vector.load %arg3[%c0_4, %c0_5] : memref<512x256xf32, #tpu.memory_space<vmem>>, vector<512x256xf32>
    %cst = arith.constant dense<0.000000e+00> : vector<8x256xf32>
    %6 = tpu.matmul %4, %5, %cst {dimension_numbers = #tpu.dot_dimension_numbers<[1], [0], [0], [1], [0, 0, 1, 1], [], []>} : vector<8x512xf32>, vector<512x256xf32>, vector<8x256xf32> -> vector<8x256xf32>
    %7 = arith.addf %3, %6 : vector<8x256xf32>
    %c0_6 = arith.constant 0 : index
    %c0_7 = arith.constant 0 : index
    %8 = vector.load %arg7[%c0_6, %c0_7] : memref<8x256xf32, #tpu.memory_space<vmem>>, vector<8x256xf32>
    tpu.vector_store %arg7[%c0_6, %c0_7], %7 {strides = array<i32>} : memref<8x256xf32, #tpu.memory_space<vmem>>, vector<8x256xf32>,
    %c15_i32 = arith.constant 15 : i32
    %9 = arith.cmpi eq, %arg1, %c15_i32 : i32
    %10 = arith.extui %9 : i1 to i32
    %c0_i32_8 = arith.constant 0 : i32
    %11 = arith.cmpi ne, %10, %c0_i32_8 : i32
    scf.if %11 {
      %c0_9 = arith.constant 0 : index
      %c0_10 = arith.constant 0 : index
      %12 = vector.load %arg7[%c0_9, %c0_10] : memref<8x256xf32, #tpu.memory_space<vmem>>, vector<8x256xf32>
      %cst_11 = arith.constant dense<0.000000e+00> : vector<256xf32>
      %13 = vector.multi_reduction <add>, %12, %cst_11 [0] : vector<8x256xf32> to vector<256xf32>
      %14 = vector.shape_cast %13 : vector<256xf32> to vector<1x256xf32>
      %cst_12 = arith.constant 1.250000e-01 : f32
      %15 = vector.broadcast %cst_12 : f32 to vector<1x256xf32>
      %16 = arith.mulf %14, %15 : vector<1x256xf32>
      %17 = vector.broadcast %16 : vector<1x256xf32> to vector<8x256xf32>
      %18 = arith.subf %12, %17 : vector<8x256xf32>
      %19 = arith.mulf %18, %18 : vector<8x256xf32>
      %cst_13 = arith.constant dense<0.000000e+00> : vector<256xf32>
      %20 = vector.multi_reduction <add>, %19, %cst_13 [0] : vector<8x256xf32> to vector<256xf32>
      %21 = vector.shape_cast %20 : vector<256xf32> to vector<1x256xf32>
      %cst_14 = arith.constant 1.250000e-01 : f32
      %22 = vector.broadcast %cst_14 : f32 to vector<1x256xf32>
      %23 = arith.mulf %21, %22 : vector<1x256xf32>
      %c0_15 = arith.constant 0 : index
      %c0_16 = arith.constant 0 : index
      %24 = vector.load %arg4[%c0_15, %c0_16] : memref<1x256xf32, #tpu.memory_space<vmem>>, vector<1x256xf32>
      %cst_17 = arith.constant 9.99999974E-6 : f32
      %25 = vector.broadcast %cst_17 : f32 to vector<1x256xf32>
      %26 = arith.addf %23, %25 : vector<1x256xf32>
      %27 = math.rsqrt %26 : vector<1x256xf32>
      %28 = arith.mulf %24, %27 : vector<1x256xf32>
      %29 = vector.broadcast %28 : vector<1x256xf32> to vector<8x256xf32>
      %30 = arith.mulf %18, %29 : vector<8x256xf32>
      %c0_18 = arith.constant 0 : index
      %c0_19 = arith.constant 0 : index
      %31 = vector.load %arg5[%c0_18, %c0_19] : memref<1x256xf32, #tpu.memory_space<vmem>>, vector<1x256xf32>
      %32 = vector.broadcast %31 : vector<1x256xf32> to vector<8x256xf32>
      %33 = arith.addf %30, %32 : vector<8x256xf32>
      %cst_20 = arith.constant 0.000000e+00 : f32
      %34 = vector.broadcast %cst_20 : f32 to vector<8x256xf32>
      %35 = arith.cmpf oge, %33, %34 : vector<8x256xf32>
      %cst_21 = arith.constant 0.00999999977 : f32
      %36 = vector.broadcast %cst_21 : f32 to vector<8x256xf32>
      %37 = arith.mulf %36, %33 : vector<8x256xf32>
      %38 = arith.select %35, %33, %37 : vector<8x256xi1>, vector<8x256xf32>
      %c0_22 = arith.constant 0 : index
      %c0_23 = arith.constant 0 : index
      %39 = vector.load %arg6[%c0_22, %c0_23] : memref<8x256xf32, #tpu.memory_space<vmem>>, vector<8x256xf32>
      tpu.vector_store %arg6[%c0_22, %c0_23], %38 {strides = array<i32>} : memref<8x256xf32, #tpu.memory_space<vmem>>, vector<8x256xf32>,
    } else {
    }
    return
  }
  func.func @transform_0(%arg0: i32, %arg1: i32) -> (i32, i32) {
    %c0_i32 = arith.constant 0 : i32
    %c0_i32_0 = arith.constant 0 : i32
    return %c0_i32, %arg1 : i32, i32
  }
  func.func @transform_1(%arg0: i32, %arg1: i32) -> (i32, i32) {
    %c0_i32 = arith.constant 0 : i32
    return %arg1, %arg0 : i32, i32
  }
  func.func @transform_2(%arg0: i32, %arg1: i32) -> (i32, i32) {
    %c0_i32 = arith.constant 0 : i32
    %c0_i32_0 = arith.constant 0 : i32
    return %c0_i32, %arg0 : i32, i32
  }
  func.func @transform_3(%arg0: i32, %arg1: i32) -> (i32, i32) {
    %c0_i32 = arith.constant 0 : i32
    %c0_i32_0 = arith.constant 0 : i32
    return %c0_i32, %arg0 : i32, i32
  }
  func.func @transform_4(%arg0: i32, %arg1: i32) -> (i32, i32) {
    %c0_i32 = arith.constant 0 : i32
    %c0_i32_0 = arith.constant 0 : i32
    return %c0_i32, %arg0 : i32, i32
  }
}

module attributes {stable_mosaic.version = 11 : i64} {
  func.func @conv_fused_kernel(%arg0: i32, %arg1: i32, %arg2: memref<18x512xf32, #tpu.memory_space<vmem>>, %arg3: memref<512x256xf32, #tpu.memory_space<vmem>>, %arg4: memref<1x256xf32, #tpu.memory_space<vmem>>, %arg5: memref<1x256xf32, #tpu.memory_space<vmem>>, %arg6: memref<18x256xf32, #tpu.memory_space<vmem>>, %arg7: memref<18x256xf32, #tpu.memory_space<vmem>>) attributes {dimension_semantics = [#tpu.dimension_semantics<parallel>, #tpu.dimension_semantics<arbitrary>], iteration_bounds = array<i64: 2, 16>, scalar_prefetch = 0 : i64, scratch_operands = 1 : i64, tpu.core_type = #tpu.core_type<tc>, window_params = [{transform_indices = @transform_0, window_bounds = array<i64: 18, 512>}, {transform_indices = @transform_1, window_bounds = array<i64: 512, 256>}, {transform_indices = @transform_2, window_bounds = array<i64: 1, 256>}, {transform_indices = @transform_3, window_bounds = array<i64: 1, 256>}, {transform_indices = @transform_4, window_bounds = array<i64: 18, 256>}]} {
    %c0_i32 = arith.constant 0 : i32
    %0 = arith.cmpi eq, %arg1, %c0_i32 : i32
    %1 = arith.extui %0 : i1 to i32
    %c0_i32_0 = arith.constant 0 : i32
    %2 = arith.cmpi ne, %1, %c0_i32_0 : i32
    scf.if %2 {
      %cst_9 = arith.constant 0.000000e+00 : f32
      %12 = vector.broadcast %cst_9 : f32 to vector<18x256xf32>
      %c0_10 = arith.constant 0 : index
      %c0_11 = arith.constant 0 : index
      %13 = vector.load %arg7[%c0_10, %c0_11] : memref<18x256xf32, #tpu.memory_space<vmem>>, vector<18x256xf32>
      tpu.vector_store %arg7[%c0_10, %c0_11], %12 {strides = array<i32>} : memref<18x256xf32, #tpu.memory_space<vmem>>, vector<18x256xf32>,
    } else {
    }
    %c0 = arith.constant 0 : index
    %c0_1 = arith.constant 0 : index
    %3 = vector.load %arg7[%c0, %c0_1] : memref<18x256xf32, #tpu.memory_space<vmem>>, vector<18x256xf32>
    %c0_2 = arith.constant 0 : index
    %c0_3 = arith.constant 0 : index
    %4 = vector.load %arg2[%c0_2, %c0_3] : memref<18x512xf32, #tpu.memory_space<vmem>>, vector<18x512xf32>
    %c0_4 = arith.constant 0 : index
    %c0_5 = arith.constant 0 : index
    %5 = vector.load %arg3[%c0_4, %c0_5] : memref<512x256xf32, #tpu.memory_space<vmem>>, vector<512x256xf32>
    %cst = arith.constant dense<0.000000e+00> : vector<18x256xf32>
    %6 = tpu.matmul %4, %5, %cst {dimension_numbers = #tpu.dot_dimension_numbers<[1], [0], [0], [1], [0, 0, 1, 1], [], []>} : vector<18x512xf32>, vector<512x256xf32>, vector<18x256xf32> -> vector<18x256xf32>
    %7 = arith.addf %3, %6 : vector<18x256xf32>
    %c0_6 = arith.constant 0 : index
    %c0_7 = arith.constant 0 : index
    %8 = vector.load %arg7[%c0_6, %c0_7] : memref<18x256xf32, #tpu.memory_space<vmem>>, vector<18x256xf32>
    tpu.vector_store %arg7[%c0_6, %c0_7], %7 {strides = array<i32>} : memref<18x256xf32, #tpu.memory_space<vmem>>, vector<18x256xf32>,
    %c15_i32 = arith.constant 15 : i32
    %9 = arith.cmpi eq, %arg1, %c15_i32 : i32
    %10 = arith.extui %9 : i1 to i32
    %c0_i32_8 = arith.constant 0 : i32
    %11 = arith.cmpi ne, %10, %c0_i32_8 : i32
    scf.if %11 {
      %c0_9 = arith.constant 0 : index
      %c0_10 = arith.constant 0 : index
      %12 = vector.load %arg7[%c0_9, %c0_10] : memref<18x256xf32, #tpu.memory_space<vmem>>, vector<18x256xf32>
      %cst_11 = arith.constant dense<0.000000e+00> : vector<256xf32>
      %13 = vector.multi_reduction <add>, %12, %cst_11 [0] : vector<18x256xf32> to vector<256xf32>
      %14 = vector.shape_cast %13 : vector<256xf32> to vector<1x256xf32>
      %cst_12 = arith.constant 0.055555556 : f32
      %15 = vector.broadcast %cst_12 : f32 to vector<1x256xf32>
      %16 = arith.mulf %14, %15 : vector<1x256xf32>
      %17 = vector.broadcast %16 : vector<1x256xf32> to vector<18x256xf32>
      %18 = arith.subf %12, %17 : vector<18x256xf32>
      %19 = arith.mulf %18, %18 : vector<18x256xf32>
      %cst_13 = arith.constant dense<0.000000e+00> : vector<256xf32>
      %20 = vector.multi_reduction <add>, %19, %cst_13 [0] : vector<18x256xf32> to vector<256xf32>
      %21 = vector.shape_cast %20 : vector<256xf32> to vector<1x256xf32>
      %cst_14 = arith.constant 0.055555556 : f32
      %22 = vector.broadcast %cst_14 : f32 to vector<1x256xf32>
      %23 = arith.mulf %21, %22 : vector<1x256xf32>
      %c0_15 = arith.constant 0 : index
      %c0_16 = arith.constant 0 : index
      %24 = vector.load %arg4[%c0_15, %c0_16] : memref<1x256xf32, #tpu.memory_space<vmem>>, vector<1x256xf32>
      %cst_17 = arith.constant 9.99999974E-6 : f32
      %25 = vector.broadcast %cst_17 : f32 to vector<1x256xf32>
      %26 = arith.addf %23, %25 : vector<1x256xf32>
      %27 = math.rsqrt %26 : vector<1x256xf32>
      %28 = arith.mulf %24, %27 : vector<1x256xf32>
      %29 = vector.broadcast %28 : vector<1x256xf32> to vector<18x256xf32>
      %30 = arith.mulf %18, %29 : vector<18x256xf32>
      %c0_18 = arith.constant 0 : index
      %c0_19 = arith.constant 0 : index
      %31 = vector.load %arg5[%c0_18, %c0_19] : memref<1x256xf32, #tpu.memory_space<vmem>>, vector<1x256xf32>
      %32 = vector.broadcast %31 : vector<1x256xf32> to vector<18x256xf32>
      %33 = arith.addf %30, %32 : vector<18x256xf32>
      %cst_20 = arith.constant 0.000000e+00 : f32
      %34 = vector.broadcast %cst_20 : f32 to vector<18x256xf32>
      %35 = arith.cmpf oge, %33, %34 : vector<18x256xf32>
      %cst_21 = arith.constant 0.00999999977 : f32
      %36 = vector.broadcast %cst_21 : f32 to vector<18x256xf32>
      %37 = arith.mulf %36, %33 : vector<18x256xf32>
      %38 = arith.select %35, %33, %37 : vector<18x256xi1>, vector<18x256xf32>
      %c0_22 = arith.constant 0 : index
      %c0_23 = arith.constant 0 : index
      %39 = vector.load %arg6[%c0_22, %c0_23] : memref<18x256xf32, #tpu.memory_space<vmem>>, vector<18x256xf32>
      tpu.vector_store %arg6[%c0_22, %c0_23], %38 {strides = array<i32>} : memref<18x256xf32, #tpu.memory_space<vmem>>, vector<18x256xf32>,
    } else {
    }
    return
  }
  func.func @transform_0(%arg0: i32, %arg1: i32) -> (i32, i32) {
    %c0_i32 = arith.constant 0 : i32
    %c0_i32_0 = arith.constant 0 : i32
    return %c0_i32, %arg1 : i32, i32
  }
  func.func @transform_1(%arg0: i32, %arg1: i32) -> (i32, i32) {
    %c0_i32 = arith.constant 0 : i32
    return %arg1, %arg0 : i32, i32
  }
  func.func @transform_2(%arg0: i32, %arg1: i32) -> (i32, i32) {
    %c0_i32 = arith.constant 0 : i32
    %c0_i32_0 = arith.constant 0 : i32
    return %c0_i32, %arg0 : i32, i32
  }
  func.func @transform_3(%arg0: i32, %arg1: i32) -> (i32, i32) {
    %c0_i32 = arith.constant 0 : i32
    %c0_i32_0 = arith.constant 0 : i32
    return %c0_i32, %arg0 : i32, i32
  }
  func.func @transform_4(%arg0: i32, %arg1: i32) -> (i32, i32) {
    %c0_i32 = arith.constant 0 : i32
    %c0_i32_0 = arith.constant 0 : i32
    return %c0_i32, %arg0 : i32, i32
  }
}

module attributes {stable_mosaic.version = 11 : i64} {
  func.func @conv_fused_kernel(%arg0: i32, %arg1: i32, %arg2: memref<32x512xf32, #tpu.memory_space<vmem>>, %arg3: memref<512x128xf32, #tpu.memory_space<vmem>>, %arg4: memref<1x128xf32, #tpu.memory_space<vmem>>, %arg5: memref<1x128xf32, #tpu.memory_space<vmem>>, %arg6: memref<32x128xf32, #tpu.memory_space<vmem>>, %arg7: memref<32x128xf32, #tpu.memory_space<vmem>>) attributes {dimension_semantics = [#tpu.dimension_semantics<parallel>, #tpu.dimension_semantics<arbitrary>], iteration_bounds = array<i64: 1, 16>, scalar_prefetch = 0 : i64, scratch_operands = 1 : i64, tpu.core_type = #tpu.core_type<tc>, window_params = [{transform_indices = @transform_0, window_bounds = array<i64: 32, 512>}, {transform_indices = @transform_1, window_bounds = array<i64: 512, 128>}, {transform_indices = @transform_2, window_bounds = array<i64: 1, 128>}, {transform_indices = @transform_3, window_bounds = array<i64: 1, 128>}, {transform_indices = @transform_4, window_bounds = array<i64: 32, 128>}]} {
    %c0_i32 = arith.constant 0 : i32
    %0 = arith.cmpi eq, %arg1, %c0_i32 : i32
    %1 = arith.extui %0 : i1 to i32
    %c0_i32_0 = arith.constant 0 : i32
    %2 = arith.cmpi ne, %1, %c0_i32_0 : i32
    scf.if %2 {
      %cst_9 = arith.constant 0.000000e+00 : f32
      %12 = vector.broadcast %cst_9 : f32 to vector<32x128xf32>
      %c0_10 = arith.constant 0 : index
      %c0_11 = arith.constant 0 : index
      %13 = vector.load %arg7[%c0_10, %c0_11] : memref<32x128xf32, #tpu.memory_space<vmem>>, vector<32x128xf32>
      tpu.vector_store %arg7[%c0_10, %c0_11], %12 {strides = array<i32>} : memref<32x128xf32, #tpu.memory_space<vmem>>, vector<32x128xf32>,
    } else {
    }
    %c0 = arith.constant 0 : index
    %c0_1 = arith.constant 0 : index
    %3 = vector.load %arg7[%c0, %c0_1] : memref<32x128xf32, #tpu.memory_space<vmem>>, vector<32x128xf32>
    %c0_2 = arith.constant 0 : index
    %c0_3 = arith.constant 0 : index
    %4 = vector.load %arg2[%c0_2, %c0_3] : memref<32x512xf32, #tpu.memory_space<vmem>>, vector<32x512xf32>
    %c0_4 = arith.constant 0 : index
    %c0_5 = arith.constant 0 : index
    %5 = vector.load %arg3[%c0_4, %c0_5] : memref<512x128xf32, #tpu.memory_space<vmem>>, vector<512x128xf32>
    %cst = arith.constant dense<0.000000e+00> : vector<32x128xf32>
    %6 = tpu.matmul %4, %5, %cst {dimension_numbers = #tpu.dot_dimension_numbers<[1], [0], [0], [1], [0, 0, 1, 1], [], []>} : vector<32x512xf32>, vector<512x128xf32>, vector<32x128xf32> -> vector<32x128xf32>
    %7 = arith.addf %3, %6 : vector<32x128xf32>
    %c0_6 = arith.constant 0 : index
    %c0_7 = arith.constant 0 : index
    %8 = vector.load %arg7[%c0_6, %c0_7] : memref<32x128xf32, #tpu.memory_space<vmem>>, vector<32x128xf32>
    tpu.vector_store %arg7[%c0_6, %c0_7], %7 {strides = array<i32>} : memref<32x128xf32, #tpu.memory_space<vmem>>, vector<32x128xf32>,
    %c15_i32 = arith.constant 15 : i32
    %9 = arith.cmpi eq, %arg1, %c15_i32 : i32
    %10 = arith.extui %9 : i1 to i32
    %c0_i32_8 = arith.constant 0 : i32
    %11 = arith.cmpi ne, %10, %c0_i32_8 : i32
    scf.if %11 {
      %c0_9 = arith.constant 0 : index
      %c0_10 = arith.constant 0 : index
      %12 = vector.load %arg7[%c0_9, %c0_10] : memref<32x128xf32, #tpu.memory_space<vmem>>, vector<32x128xf32>
      %c0_11 = arith.constant 0 : index
      %c0_12 = arith.constant 0 : index
      %13 = vector.load %arg5[%c0_11, %c0_12] : memref<1x128xf32, #tpu.memory_space<vmem>>, vector<1x128xf32>
      %14 = vector.broadcast %13 : vector<1x128xf32> to vector<32x128xf32>
      %15 = arith.addf %12, %14 : vector<32x128xf32>
      %cst_13 = arith.constant 0.000000e+00 : f32
      %16 = vector.broadcast %cst_13 : f32 to vector<32x128xf32>
      %17 = arith.subf %16, %15 : vector<32x128xf32>
      %18 = math.exp %17 : vector<32x128xf32>
      %cst_14 = arith.constant 1.000000e+00 : f32
      %19 = vector.broadcast %cst_14 : f32 to vector<32x128xf32>
      %20 = arith.addf %19, %18 : vector<32x128xf32>
      %cst_15 = arith.constant 1.000000e+00 : f32
      %21 = vector.broadcast %cst_15 : f32 to vector<32x128xf32>
      %22 = arith.divf %21, %20 : vector<32x128xf32>
      %c0_16 = arith.constant 0 : index
      %c0_17 = arith.constant 0 : index
      %23 = vector.load %arg6[%c0_16, %c0_17] : memref<32x128xf32, #tpu.memory_space<vmem>>, vector<32x128xf32>
      tpu.vector_store %arg6[%c0_16, %c0_17], %22 {strides = array<i32>} : memref<32x128xf32, #tpu.memory_space<vmem>>, vector<32x128xf32>,
    } else {
    }
    return
  }
  func.func @transform_0(%arg0: i32, %arg1: i32) -> (i32, i32) {
    %c0_i32 = arith.constant 0 : i32
    %c0_i32_0 = arith.constant 0 : i32
    return %c0_i32, %arg1 : i32, i32
  }
  func.func @transform_1(%arg0: i32, %arg1: i32) -> (i32, i32) {
    %c0_i32 = arith.constant 0 : i32
    return %arg1, %arg0 : i32, i32
  }
  func.func @transform_2(%arg0: i32, %arg1: i32) -> (i32, i32) {
    %c0_i32 = arith.constant 0 : i32
    %c0_i32_0 = arith.constant 0 : i32
    return %c0_i32, %arg0 : i32, i32
  }
  func.func @transform_3(%arg0: i32, %arg1: i32) -> (i32, i32) {
    %c0_i32 = arith.constant 0 : i32
    %c0_i32_0 = arith.constant 0 : i32
    return %c0_i32, %arg0 : i32, i32
  }
  func.func @transform_4(%arg0: i32, %arg1: i32) -> (i32, i32) {
    %c0_i32 = arith.constant 0 : i32
    %c0_i32_0 = arith.constant 0 : i32
    return %c0_i32, %arg0 : i32, i32
  }
}

</mosaic_0001>

<llo_original>
// kernel: fusegan_discriminator_forward.8
$region0: #{fusegan_discriminator_forward.8}
  #allocation0 [shape = 'u32[]', space=smem, size = 0x4, offset = 0x4, fixed_abs, tag = 'smem constant byte address 0x4 - core index']
  #allocation1 [shape = 'u32[144,128]{1,0:T(1,128)}', space=vmem, size = 0x12000, scoped, tag = 'internal scratch']
  #allocation2 [shape = 'f32[162,128]{1,0:T(8,128)}', space=vmem, size = 0x15000, scoped, tag = 'scratch operand']
  %s0 = inlined_call_operand.vmem [shape: f32[162,128], index: 0, kind: input, shape index: {}]
  %s1 = inlined_call_operand.vmem [shape: f32[128,128], index: 1, kind: input, shape index: {}]
  %s2 = inlined_call_operand.vmem [shape: f32[1,128], index: 2, kind: input, shape index: {}]
  %s3 = inlined_call_operand.vmem [shape: f32[1,128], index: 3, kind: input, shape index: {}]
  %s4 = inlined_call_operand.vmem [shape: f32[162,128], index: 4, kind: output, shape index: {}]
  %s5 = sld [smem:[#allocation0]]
  $region34: #{fusegan_discriminator_forward.8} parent=0
    _
  %s7 = ssub.s32 1, %s5
  %s8 = scalar_select 0, %s7, %s5
  // Predicated region
  $region2: #{fusegan_discriminator_forward.8} parent=0 // pred_check
    _
  $region3: #{fusegan_discriminator_forward.8} parent=0 // pred_check_branch
    %10 = sbr.rel (0) target = $region5
  $region4: #{fusegan_discriminator_forward.8} parent=0 // pred_region
    _
  $region5: #{fusegan_discriminator_forward.8} parent=0 // pred_fallthru
    _
  // Predicated region
  $region6: #{fusegan_discriminator_forward.8} parent=0 // pred_check
    _
  $region7: #{fusegan_discriminator_forward.8} parent=0 // pred_check_branch
    %12 = sbr.rel (0) target = $region9
  $region8: #{fusegan_discriminator_forward.8} parent=0 // pred_region
    _
  $region9: #{fusegan_discriminator_forward.8} parent=0 // pred_fallthru
    _
  // Predicated region
  $region10: #{fusegan_discriminator_forward.8} parent=0 // pred_check
    _
  $region11: #{fusegan_discriminator_forward.8} parent=0 // pred_check_branch
    %14 = sbr.rel (0) target = $region13
  $region12: #{fusegan_discriminator_forward.8} parent=0 // pred_region
    _
  $region13: #{fusegan_discriminator_forward.8} parent=0 // pred_fallthru
    _
  // Predicated region
  $region14: #{fusegan_discriminator_forward.8} parent=0 // pred_check
    _
  $region15: #{fusegan_discriminator_forward.8} parent=0 // pred_check_branch
    %16 = sbr.rel (0) target = $region17
  $region16: #{fusegan_discriminator_forward.8} parent=0 // pred_region
    _
  $region17: #{fusegan_discriminator_forward.8} parent=0 // pred_fallthru
    _
  %p17 = scmp.eq.s32.totalorder 0, 0
  // Predicated region
  $region18: #{fusegan_discriminator_forward.8} parent=0 // pred_check
    %p18 = pneg %p17
  $region19: #{fusegan_discriminator_forward.8} parent=0 // pred_check_branch
    %20 = sbr.rel (%p18) target = $region21
  $region20: #{fusegan_discriminator_forward.8} parent=0 // pred_region
    %21 = vst [vmem:[#allocation2] sm:$0xff] 0.0
    %22 = vst [vmem:[#allocation2 + $0x8] sm:$0xff] 0.0
    %23 = vst [vmem:[#allocation2 + $0x10] sm:$0xff] 0.0
    %24 = vst [vmem:[#allocation2 + $0x18] sm:$0xff] 0.0
    %25 = vst [vmem:[#allocation2 + $0x20] sm:$0xff] 0.0
    %26 = vst [vmem:[#allocation2 + $0x28] sm:$0xff] 0.0
    %27 = vst [vmem:[#allocation2 + $0x30] sm:$0xff] 0.0
    %28 = vst [vmem:[#allocation2 + $0x38] sm:$0xff] 0.0
    %29 = vst [vmem:[#allocation2 + $0x40] sm:$0xff] 0.0
    %30 = vst [vmem:[#allocation2 + $0x48] sm:$0xff] 0.0
    %31 = vst [vmem:[#allocation2 + $0x50] sm:$0xff] 0.0
    %32 = vst [vmem:[#allocation2 + $0x58] sm:$0xff] 0.0
    %33 = vst [vmem:[#allocation2 + $0x60] sm:$0xff] 0.0
    %34 = vst [vmem:[#allocation2 + $0x68] sm:$0xff] 0.0
    %35 = vst [vmem:[#allocation2 + $0x70] sm:$0xff] 0.0
    %36 = vst [vmem:[#allocation2 + $0x78] sm:$0xff] 0.0
    %37 = vst [vmem:[#allocation2 + $0x80] sm:$0xff] 0.0
    %38 = vst [vmem:[#allocation2 + $0x88] sm:$0xff] 0.0
    %39 = vst [vmem:[#allocation2 + $0x90] sm:$0xff] 0.0
    %40 = vst [vmem:[#allocation2 + $0x98] sm:$0xff] 0.0
    %41 = vst [vmem:[#allocation2 + $0xa0] sm:$0x3] 0.0
  $region21: #{fusegan_discriminator_forward.8} parent=0 // pred_fallthru
    _
  %v42 = vld [vmem:[#allocation2] sm:$0xff]
  %v43 = vld [vmem:[#allocation2 + $0x8] sm:$0xff]
  %v44 = vld [vmem:[#allocation2 + $0x10] sm:$0xff]
  %v45 = vld [vmem:[#allocation2 + $0x18] sm:$0xff]
  %v46 = vld [vmem:[#allocation2 + $0x20] sm:$0xff]
  %v47 = vld [vmem:[#allocation2 + $0x28] sm:$0xff]
  %v48 = vld [vmem:[#allocation2 + $0x30] sm:$0xff]
  %v49 = vld [vmem:[#allocation2 + $0x38] sm:$0xff]
  %v50 = vld [vmem:[#allocation2 + $0x40] sm:$0xff]
  %v51 = vld [vmem:[#allocation2 + $0x48] sm:$0xff]
  %v52 = vld [vmem:[#allocation2 + $0x50] sm:$0xff]
  %v53 = vld [vmem:[#allocation2 + $0x58] sm:$0xff]
  %v54 = vld [vmem:[#allocation2 + $0x60] sm:$0xff]
  %v55 = vld [vmem:[#allocation2 + $0x68] sm:$0xff]
  %v56 = vld [vmem:[#allocation2 + $0x70] sm:$0xff]
  %v57 = vld [vmem:[#allocation2 + $0x78] sm:$0xff]
  %v58 = vld [vmem:[#allocation2 + $0x80] sm:$0xff]
  %v59 = vld [vmem:[#allocation2 + $0x88] sm:$0xff]
  %v60 = vld [vmem:[#allocation2 + $0x90] sm:$0xff]
  %v61 = vld [vmem:[#allocation2 + $0x98] sm:$0xff]
  %v62 = vld [vmem:[#allocation2 + $0xa0] sm:$0x3]
  %v63 = vld [vmem:[%s0] sm:$0xff]
  %v64 = vld [vmem:[%s0 + $0x8] sm:$0xff]
  %v65 = vld [vmem:[%s0 + $0x10] sm:$0xff]
  %v66 = vld [vmem:[%s0 + $0x18] sm:$0xff]
  %v67 = vld [vmem:[%s0 + $0x20] sm:$0xff]
  %v68 = vld [vmem:[%s0 + $0x28] sm:$0xff]
  %v69 = vld [vmem:[%s0 + $0x30] sm:$0xff]
  %v70 = vld [vmem:[%s0 + $0x38] sm:$0xff]
  %v71 = vld [vmem:[%s0 + $0x40] sm:$0xff]
  %v72 = vld [vmem:[%s0 + $0x48] sm:$0xff]
  %v73 = vld [vmem:[%s0 + $0x50] sm:$0xff]
  %v74 = vld [vmem:[%s0 + $0x58] sm:$0xff]
  %v75 = vld [vmem:[%s0 + $0x60] sm:$0xff]
  %v76 = vld [vmem:[%s0 + $0x68] sm:$0xff]
  %v77 = vld [vmem:[%s0 + $0x70] sm:$0xff]
  %v78 = vld [vmem:[%s0 + $0x78] sm:$0xff]
  %v79 = vld [vmem:[%s0 + $0x80] sm:$0xff]
  %v80 = vld [vmem:[%s0 + $0x88] sm:$0xff]
  %v81 = vld [vmem:[%s0 + $0x90] sm:$0xff]
  %v82 = vld [vmem:[%s0 + $0x98] sm:$0xff]
  %v83 = vld [vmem:[%s0 + $0xa0] sm:$0x3]
  %v84 = vld [vmem:[%s1] sm:$0xff]
  %v85 = vld [vmem:[%s1 + $0x8] sm:$0xff]
  %v86 = vld [vmem:[%s1 + $0x10] sm:$0xff]
  %v87 = vld [vmem:[%s1 + $0x18] sm:$0xff]
  %v88 = vld [vmem:[%s1 + $0x20] sm:$0xff]
  %v89 = vld [vmem:[%s1 + $0x28] sm:$0xff]
  %v90 = vld [vmem:[%s1 + $0x30] sm:$0xff]
  %v91 = vld [vmem:[%s1 + $0x38] sm:$0xff]
  %v92 = vld [vmem:[%s1 + $0x40] sm:$0xff]
  %v93 = vld [vmem:[%s1 + $0x48] sm:$0xff]
  %v94 = vld [vmem:[%s1 + $0x50] sm:$0xff]
  %v95 = vld [vmem:[%s1 + $0x58] sm:$0xff]
  %v96 = vld [vmem:[%s1 + $0x60] sm:$0xff]
  %v97 = vld [vmem:[%s1 + $0x68] sm:$0xff]
  %v98 = vld [vmem:[%s1 + $0x70] sm:$0xff]
  %v99 = vld [vmem:[%s1 + $0x78] sm:$0xff]
  %100 = vmatprep.subr.mxu0 0.0
  %101 = vmatpush1.msra.mxu0 %v99
  %102 = vmatprep.subr.mxu0 0.0
  %103 = vmatpush1.msra.mxu0 %v98
  %104 = vmatprep.subr.mxu0 0.0
  %105 = vmatpush1.msra.mxu0 %v97
  %106 = vmatprep.subr.mxu0 0.0
  %107 = vmatpush1.msra.mxu0 %v96
  %108 = vmatprep.subr.mxu0 0.0
  %109 = vmatpush1.msra.mxu0 %v95
  %110 = vmatprep.subr.mxu0 0.0
  %111 = vmatpush1.msra.mxu0 %v94
  %112 = vmatprep.subr.mxu0 0.0
  %113 = vmatpush1.msra.mxu0 %v93
  %114 = vmatprep.subr.mxu0 0.0
  %115 = vmatpush1.msra.mxu0 %v92
  %116 = vmatprep.subr.mxu0 0.0
  %117 = vmatpush1.msra.mxu0 %v91
  %118 = vmatprep.subr.mxu0 0.0
  %119 = vmatpush1.msra.mxu0 %v90
  %120 = vmatprep.subr.mxu0 0.0
  %121 = vmatpush1.msra.mxu0 %v89
  %122 = vmatprep.subr.mxu0 0.0
  %123 = vmatpush1.msra.mxu0 %v88
  %124 = vmatprep.subr.mxu0 0.0
  %125 = vmatpush1.msra.mxu0 %v87
  %126 = vmatprep.subr.mxu0 0.0
  %127 = vmatpush1.msra.mxu0 %v86
  %128 = vmatprep.subr.mxu0 0.0
  %129 = vmatpush1.msra.mxu0 %v85
  %130 = vmatprep.subr.mxu0 0.0
  %131 = vmatpush1.msra.mxu0 %v84
  %132 = vmatprep.subr.mxu0 0.0
  %133 = vmatpush2.msra.mxu0 0.0
  %134 = vmatprep.subr.mxu0 0.0
  %135 = vmatpush2.msra.mxu0 0.0
  %136 = vmatprep.subr.mxu0 0.0
  %137 = vmatpush2.msra.mxu0 0.0
  %138 = vmatprep.subr.mxu0 0.0
  %139 = vmatpush2.msra.mxu0 0.0
  %140 = vmatprep.subr.mxu0 0.0
  %141 = vmatpush2.msra.mxu0 0.0
  %142 = vmatprep.subr.mxu0 0.0
  %143 = vmatpush2.msra.mxu0 0.0
  %144 = vmatprep.subr.mxu0 0.0
  %145 = vmatpush2.msra.mxu0 0.0
  %146 = vmatprep.subr.mxu0 0.0
  %147 = vmatpush2.msra.mxu0 0.0
  %148 = vmatprep.subr.mxu0 0.0
  %149 = vmatpush2.msra.mxu0 0.0
  %150 = vmatprep.subr.mxu0 0.0
  %151 = vmatpush2.msra.mxu0 0.0
  %152 = vmatprep.subr.mxu0 0.0
  %153 = vmatpush2.msra.mxu0 0.0
  %154 = vmatprep.subr.mxu0 0.0
  %155 = vmatpush2.msra.mxu0 0.0
  %156 = vmatprep.subr.mxu0 0.0
  %157 = vmatpush2.msra.mxu0 0.0
  %158 = vmatprep.subr.mxu0 0.0
  %159 = vmatpush2.msra.mxu0 0.0
  %160 = vmatprep.subr.mxu0 0.0
  %161 = vmatpush2.msra.mxu0 0.0
  %162 = vmatprep.subr.mxu0 0.0
  %163 = vmatpush2.msra.mxu0 0.0
  %164 = vmatprep.mubr.f32.mxu0 0.0
  %165 = vmatmul.mubr.f32.gmra.mxu0 %v63
  %v166 = vpop.f32.mrf.mxu0
  %v167 = vadd.f32 0.0, %v166
  %v168 = vpop.f32.mrf.mxu0
  %169 = vmatprep.mubr.f32.mxu0 0.0
  %170 = vmatmul.mubr.f32.gmra.mxu0 %v64
  %v171 = vpop.f32.mrf.mxu0
  %v172 = vadd.f32 0.0, %v171
  %v173 = vpop.f32.mrf.mxu0
  %174 = vmatprep.mubr.f32.mxu0 0.0
  %175 = vmatmul.mubr.f32.gmra.mxu0 %v65
  %v176 = vpop.f32.mrf.mxu0
  %v177 = vadd.f32 0.0, %v176
  %v178 = vpop.f32.mrf.mxu0
  %179 = vmatprep.mubr.f32.mxu0 0.0
  %180 = vmatmul.mubr.f32.gmra.mxu0 %v66
  %v181 = vpop.f32.mrf.mxu0
  %v182 = vadd.f32 0.0, %v181
  %v183 = vpop.f32.mrf.mxu0
  %184 = vmatprep.mubr.f32.mxu0 0.0
  %185 = vmatmul.mubr.f32.gmra.mxu0 %v67
  %v186 = vpop.f32.mrf.mxu0
  %v187 = vadd.f32 0.0, %v186
  %v188 = vpop.f32.mrf.mxu0
  %189 = vmatprep.mubr.f32.mxu0 0.0
  %190 = vmatmul.mubr.f32.gmra.mxu0 %v68
  %v191 = vpop.f32.mrf.mxu0
  %v192 = vadd.f32 0.0, %v191
  %v193 = vpop.f32.mrf.mxu0
  %194 = vmatprep.mubr.f32.mxu0 0.0
  %195 = vmatmul.mubr.f32.gmra.mxu0 %v69
  %v196 = vpop.f32.mrf.mxu0
  %v197 = vadd.f32 0.0, %v196
  %v198 = vpop.f32.mrf.mxu0
  %199 = vmatprep.mubr.f32.mxu0 0.0
  %200 = vmatmul.mubr.f32.gmra.mxu0 %v70
  %v201 = vpop.f32.mrf.mxu0
  %v202 = vadd.f32 0.0, %v201
  %v203 = vpop.f32.mrf.mxu0
  %204 = vmatprep.mubr.f32.mxu0 0.0
  %205 = vmatmul.mubr.f32.gmra.mxu0 %v71
  %v206 = vpop.f32.mrf.mxu0
  %v207 = vadd.f32 0.0, %v206
  %v208 = vpop.f32.mrf.mxu0
  %209 = vmatprep.mubr.f32.mxu0 0.0
  %210 = vmatmul.mubr.f32.gmra.mxu0 %v72
  %v211 = vpop.f32.mrf.mxu0
  %v212 = vadd.f32 0.0, %v211
  %v213 = vpop.f32.mrf.mxu0
  %214 = vmatprep.mubr.f32.mxu0 0.0
  %215 = vmatmul.mubr.f32.gmra.mxu0 %v73
  %v216 = vpop.f32.mrf.mxu0
  %v217 = vadd.f32 0.0, %v216
  %v218 = vpop.f32.mrf.mxu0
  %219 = vmatprep.mubr.f32.mxu0 0.0
  %220 = vmatmul.mubr.f32.gmra.mxu0 %v74
  %v221 = vpop.f32.mrf.mxu0
  %v222 = vadd.f32 0.0, %v221
  %v223 = vpop.f32.mrf.mxu0
  %224 = vmatprep.mubr.f32.mxu0 0.0
  %225 = vmatmul.mubr.f32.gmra.mxu0 %v75
  %v226 = vpop.f32.mrf.mxu0
  %v227 = vadd.f32 0.0, %v226
  %v228 = vpop.f32.mrf.mxu0
  %229 = vmatprep.mubr.f32.mxu0 0.0
  %230 = vmatmul.mubr.f32.gmra.mxu0 %v76
  %v231 = vpop.f32.mrf.mxu0
  %v232 = vadd.f32 0.0, %v231
  %v233 = vpop.f32.mrf.mxu0
  %234 = vmatprep.mubr.f32.mxu0 0.0
  %235 = vmatmul.mubr.f32.gmra.mxu0 %v77
  %v236 = vpop.f32.mrf.mxu0
  %v237 = vadd.f32 0.0, %v236
  %v238 = vpop.f32.mrf.mxu0
  %239 = vmatprep.mubr.f32.mxu0 0.0
  %240 = vmatmul.mubr.f32.gmra.mxu0 %v78
  %v241 = vpop.f32.mrf.mxu0
  %v242 = vadd.f32 0.0, %v241
  %v243 = vpop.f32.mrf.mxu0
  %244 = vmatprep.mubr.f32.mxu0 0.0
  %245 = vmatmul.mubr.f32.gmra.mxu0 %v79
  %v246 = vpop.f32.mrf.mxu0
  %v247 = vadd.f32 0.0, %v246
  %v248 = vpop.f32.mrf.mxu0
  %249 = vmatprep.mubr.f32.mxu0 0.0
  %250 = vmatmul.mubr.f32.gmra.mxu0 %v80
  %v251 = vpop.f32.mrf.mxu0
  %v252 = vadd.f32 0.0, %v251
  %v253 = vpop.f32.mrf.mxu0
  %254 = vmatprep.mubr.f32.mxu0 0.0
  %255 = vmatmul.mubr.f32.gmra.mxu0 %v81
  %v256 = vpop.f32.mrf.mxu0
  %v257 = vadd.f32 0.0, %v256
  %v258 = vpop.f32.mrf.mxu0
  %259 = vmatprep.mubr.f32.mxu0 0.0
  %260 = vmatmul.mubr.f32.gmra.mxu0 %v82
  %v261 = vpop.f32.mrf.mxu0
  %v262 = vadd.f32 0.0, %v261
  %v263 = vpop.f32.mrf.mxu0
  %264 = vmatprep.mubr.f32.mxu0 0.0
  %265 = vmatmul.mubr.f32.gmra.mxu0 %v83
  %v266 = vpop.f32.mrf.mxu0
  %v267 = vadd.f32 0.0, %v266
  %v268 = vpop.f32.mrf.mxu0
  %269 = vdwg.mxu0
  %v270 = vadd.f32 %v42, %v167
  %v271 = vadd.f32 %v43, %v172
  %v272 = vadd.f32 %v44, %v177
  %v273 = vadd.f32 %v45, %v182
  %v274 = vadd.f32 %v46, %v187
  %v275 = vadd.f32 %v47, %v192
  %v276 = vadd.f32 %v48, %v197
  %v277 = vadd.f32 %v49, %v202
  %v278 = vadd.f32 %v50, %v207
  %v279 = vadd.f32 %v51, %v212
  %v280 = vadd.f32 %v52, %v217
  %v281 = vadd.f32 %v53, %v222
  %v282 = vadd.f32 %v54, %v227
  %v283 = vadd.f32 %v55, %v232
  %v284 = vadd.f32 %v56, %v237
  %v285 = vadd.f32 %v57, %v242
  %v286 = vadd.f32 %v58, %v247
  %v287 = vadd.f32 %v59, %v252
  %v288 = vadd.f32 %v60, %v257
  %v289 = vadd.f32 %v61, %v262
  %v290 = vadd.f32 %v62, %v267
  %291 = vst [vmem:[#allocation2] sm:$0xff] %v270
  %292 = vst [vmem:[#allocation2 + $0x8] sm:$0xff] %v271
  %293 = vst [vmem:[#allocation2 + $0x10] sm:$0xff] %v272
  %294 = vst [vmem:[#allocation2 + $0x18] sm:$0xff] %v273
  %295 = vst [vmem:[#allocation2 + $0x20] sm:$0xff] %v274
  %296 = vst [vmem:[#allocation2 + $0x28] sm:$0xff] %v275
  %297 = vst [vmem:[#allocation2 + $0x30] sm:$0xff] %v276
  %298 = vst [vmem:[#allocation2 + $0x38] sm:$0xff] %v277
  %299 = vst [vmem:[#allocation2 + $0x40] sm:$0xff] %v278
  %300 = vst [vmem:[#allocation2 + $0x48] sm:$0xff] %v279
  %301 = vst [vmem:[#allocation2 + $0x50] sm:$0xff] %v280
  %302 = vst [vmem:[#allocation2 + $0x58] sm:$0xff] %v281
  %303 = vst [vmem:[#allocation2 + $0x60] sm:$0xff] %v282
  %304 = vst [vmem:[#allocation2 + $0x68] sm:$0xff] %v283
  %305 = vst [vmem:[#allocation2 + $0x70] sm:$0xff] %v284
  %306 = vst [vmem:[#allocation2 + $0x78] sm:$0xff] %v285
  %307 = vst [vmem:[#allocation2 + $0x80] sm:$0xff] %v286
  %308 = vst [vmem:[#allocation2 + $0x88] sm:$0xff] %v287
  %309 = vst [vmem:[#allocation2 + $0x90] sm:$0xff] %v288
  %310 = vst [vmem:[#allocation2 + $0x98] sm:$0xff] %v289
  %311 = vst [vmem:[#allocation2 + $0xa0] sm:$0x3] %v290
  // Predicated region
  $region22: #{fusegan_discriminator_forward.8} parent=0 // pred_check
    %p312 = pneg %p17
  $region23: #{fusegan_discriminator_forward.8} parent=0 // pred_check_branch
    %314 = sbr.rel (%p312) target = $region25
  $region24: #{fusegan_discriminator_forward.8} parent=0 // pred_region
    %v315 = vld [vmem:[#allocation2] sm:$0xff]
    %v316 = vld [vmem:[#allocation2 + $0x8] sm:$0xff]
    %v317 = vld [vmem:[#allocation2 + $0x10] sm:$0xff]
    %v318 = vld [vmem:[#allocation2 + $0x18] sm:$0xff]
    %v319 = vld [vmem:[#allocation2 + $0x20] sm:$0xff]
    %v320 = vld [vmem:[#allocation2 + $0x28] sm:$0xff]
    %v321 = vld [vmem:[#allocation2 + $0x30] sm:$0xff]
    %v322 = vld [vmem:[#allocation2 + $0x38] sm:$0xff]
    %v323 = vld [vmem:[#allocation2 + $0x40] sm:$0xff]
    %v324 = vld [vmem:[#allocation2 + $0x48] sm:$0xff]
    %v325 = vld [vmem:[#allocation2 + $0x50] sm:$0xff]
    %v326 = vld [vmem:[#allocation2 + $0x58] sm:$0xff]
    %v327 = vld [vmem:[#allocation2 + $0x60] sm:$0xff]
    %v328 = vld [vmem:[#allocation2 + $0x68] sm:$0xff]
    %v329 = vld [vmem:[#allocation2 + $0x70] sm:$0xff]
    %v330 = vld [vmem:[#allocation2 + $0x78] sm:$0xff]
    %v331 = vld [vmem:[#allocation2 + $0x80] sm:$0xff]
    %v332 = vld [vmem:[#allocation2 + $0x88] sm:$0xff]
    %v333 = vld [vmem:[#allocation2 + $0x90] sm:$0xff]
    %v334 = vld [vmem:[#allocation2 + $0x98] sm:$0xff]
    %v335 = vld [vmem:[#allocation2 + $0xa0] sm:$0x3]
    %v336 = vld [vmem:[%s3] sm:$0x1]
    %v338 = vlaneseq
    %v339 = vshrl.u32 %v338, 7
    %v340 = vsub.s32 0, %v339
    %v341 = vrot.slane %v336, %v340
    %v343 = vadd.f32 %v315, %v341
    %v344 = vadd.f32 %v316, %v341
    %v345 = vadd.f32 %v317, %v341
    %v346 = vadd.f32 %v318, %v341
    %v347 = vadd.f32 %v319, %v341
    %v348 = vadd.f32 %v320, %v341
    %v349 = vadd.f32 %v321, %v341
    %v350 = vadd.f32 %v322, %v341
    %v351 = vadd.f32 %v323, %v341
    %v352 = vadd.f32 %v324, %v341
    %v353 = vadd.f32 %v325, %v341
    %v354 = vadd.f32 %v326, %v341
    %v355 = vadd.f32 %v327, %v341
    %v356 = vadd.f32 %v328, %v341
    %v357 = vadd.f32 %v329, %v341
    %v358 = vadd.f32 %v330, %v341
    %v359 = vadd.f32 %v331, %v341
    %v360 = vadd.f32 %v332, %v341
    %v361 = vadd.f32 %v333, %v341
    %v362 = vadd.f32 %v334, %v341
    %v363 = vadd.f32 %v335, %v341
    %vm364 = vcmp.ge.f32.partialorder %v343, 0.0
    %vm365 = vcmp.ge.f32.partialorder %v344, 0.0
    %vm366 = vcmp.ge.f32.partialorder %v345, 0.0
    %vm367 = vcmp.ge.f32.partialorder %v346, 0.0
    %vm368 = vcmp.ge.f32.partialorder %v347, 0.0
    %vm369 = vcmp.ge.f32.partialorder %v348, 0.0
    %vm370 = vcmp.ge.f32.partialorder %v349, 0.0
    %vm371 = vcmp.ge.f32.partialorder %v350, 0.0
    %vm372 = vcmp.ge.f32.partialorder %v351, 0.0
    %vm373 = vcmp.ge.f32.partialorder %v352, 0.0
    %vm374 = vcmp.ge.f32.partialorder %v353, 0.0
    %vm375 = vcmp.ge.f32.partialorder %v354, 0.0
    %vm376 = vcmp.ge.f32.partialorder %v355, 0.0
    %vm377 = vcmp.ge.f32.partialorder %v356, 0.0
    %vm378 = vcmp.ge.f32.partialorder %v357, 0.0
    %vm379 = vcmp.ge.f32.partialorder %v358, 0.0
    %vm380 = vcmp.ge.f32.partialorder %v359, 0.0
    %vm381 = vcmp.ge.f32.partialorder %v360, 0.0
    %vm382 = vcmp.ge.f32.partialorder %v361, 0.0
    %vm383 = vcmp.ge.f32.partialorder %v362, 0.0
    %vm384 = vcmp.ge.f32.partialorder %v363, 0.0
    %v385 = vmul.f32 %v343, 0.01
    %v386 = vmul.f32 %v344, 0.01
    %v387 = vmul.f32 %v345, 0.01
    %v388 = vmul.f32 %v346, 0.01
    %v389 = vmul.f32 %v347, 0.01
    %v390 = vmul.f32 %v348, 0.01
    %v391 = vmul.f32 %v349, 0.01
    %v392 = vmul.f32 %v350, 0.01
    %v393 = vmul.f32 %v351, 0.01
    %v394 = vmul.f32 %v352, 0.01
    %v395 = vmul.f32 %v353, 0.01
    %v396 = vmul.f32 %v354, 0.01
    %v397 = vmul.f32 %v355, 0.01
    %v398 = vmul.f32 %v356, 0.01
    %v399 = vmul.f32 %v357, 0.01
    %v400 = vmul.f32 %v358, 0.01
    %v401 = vmul.f32 %v359, 0.01
    %v402 = vmul.f32 %v360, 0.01
    %v403 = vmul.f32 %v361, 0.01
    %v404 = vmul.f32 %v362, 0.01
    %v405 = vmul.f32 %v363, 0.01
    %v406 = vsel %vm364, %v343, %v385
    %v407 = vsel %vm365, %v344, %v386
    %v408 = vsel %vm366, %v345, %v387
    %v409 = vsel %vm367, %v346, %v388
    %v410 = vsel %vm368, %v347, %v389
    %v411 = vsel %vm369, %v348, %v390
    %v412 = vsel %vm370, %v349, %v391
    %v413 = vsel %vm371, %v350, %v392
    %v414 = vsel %vm372, %v351, %v393
    %v415 = vsel %vm373, %v352, %v394
    %v416 = vsel %vm374, %v353, %v395
    %v417 = vsel %vm375, %v354, %v396
    %v418 = vsel %vm376, %v355, %v397
    %v419 = vsel %vm377, %v356, %v398
    %v420 = vsel %vm378, %v357, %v399
    %v421 = vsel %vm379, %v358, %v400
    %v422 = vsel %vm380, %v359, %v401
    %v423 = vsel %vm381, %v360, %v402
    %v424 = vsel %vm382, %v361, %v403
    %v425 = vsel %vm383, %v362, %v404
    %v426 = vsel %vm384, %v363, %v405
    %427 = vst [vmem:[%s4] sm:$0xff] %v406
    %428 = vst [vmem:[%s4 + $0x8] sm:$0xff] %v407
    %429 = vst [vmem:[%s4 + $0x10] sm:$0xff] %v408
    %430 = vst [vmem:[%s4 + $0x18] sm:$0xff] %v409
    %431 = vst [vmem:[%s4 + $0x20] sm:$0xff] %v410
    %432 = vst [vmem:[%s4 + $0x28] sm:$0xff] %v411
    %433 = vst [vmem:[%s4 + $0x30] sm:$0xff] %v412
    %434 = vst [vmem:[%s4 + $0x38] sm:$0xff] %v413
    %435 = vst [vmem:[%s4 + $0x40] sm:$0xff] %v414
    %436 = vst [vmem:[%s4 + $0x48] sm:$0xff] %v415
    %437 = vst [vmem:[%s4 + $0x50] sm:$0xff] %v416
    %438 = vst [vmem:[%s4 + $0x58] sm:$0xff] %v417
    %439 = vst [vmem:[%s4 + $0x60] sm:$0xff] %v418
    %440 = vst [vmem:[%s4 + $0x68] sm:$0xff] %v419
    %441 = vst [vmem:[%s4 + $0x70] sm:$0xff] %v420
    %442 = vst [vmem:[%s4 + $0x78] sm:$0xff] %v421
    %443 = vst [vmem:[%s4 + $0x80] sm:$0xff] %v422
    %444 = vst [vmem:[%s4 + $0x88] sm:$0xff] %v423
    %445 = vst [vmem:[%s4 + $0x90] sm:$0xff] %v424
    %446 = vst [vmem:[%s4 + $0x98] sm:$0xff] %v425
    %447 = vst [vmem:[%s4 + $0xa0] sm:$0x3] %v426
  $region25: #{fusegan_discriminator_forward.8} parent=0 // pred_fallthru
    _
  // Predicated region
  $region26: #{fusegan_discriminator_forward.8} parent=0 // pred_check
    _
  $region27: #{fusegan_discriminator_forward.8} parent=0 // pred_check_branch
    %449 = sbr.rel (0) target = $region29
  $region28: #{fusegan_discriminator_forward.8} parent=0 // pred_region
    _
  $region29: #{fusegan_discriminator_forward.8} parent=0 // pred_fallthru
    _
  // Predicated region
  $region30: #{fusegan_discriminator_forward.8} parent=0 // pred_check
    _
  $region31: #{fusegan_discriminator_forward.8} parent=0 // pred_check_branch
    %451 = sbr.rel (0) target = $region33
  $region32: #{fusegan_discriminator_forward.8} parent=0 // pred_region
    _
  $region33: #{fusegan_discriminator_forward.8} parent=0 // pred_fallthru
    _

// kernel: fusegan_discriminator_forward.9
$region0: #{fusegan_discriminator_forward.9}
  #allocation0 [shape = 'u32[]', space=smem, size = 0x4, offset = 0x4, fixed_abs, tag = 'smem constant byte address 0x4 - core index']
  #allocation1 [shape = 'u32[144,128]{1,0:T(1,128)}', space=vmem, size = 0x12000, scoped, tag = 'internal scratch']
  #allocation2 [shape = 'f32[50,128]{1,0:T(8,128)}', space=vmem, size = 0x7000, scoped, tag = 'scratch operand']
  %s0 = inlined_call_operand.vmem [shape: f32[50,1024], index: 0, kind: input, shape index: {}]
  %s1 = inlined_call_operand.vmem [shape: f32[1024,128], index: 1, kind: input, shape index: {}]
  %s2 = inlined_call_operand.vmem [shape: f32[1,128], index: 2, kind: input, shape index: {}]
  %s3 = inlined_call_operand.vmem [shape: f32[1,128], index: 3, kind: input, shape index: {}]
  %s4 = inlined_call_operand.vmem [shape: f32[50,128], index: 4, kind: output, shape index: {}]
  %s5 = sld [smem:[#allocation0]]
  $region80: #{fusegan_discriminator_forward.9} parent=0
    _
  %s7 = ssub.s32 1, %s5
  %s8 = scalar_select 0, %s7, %s5
  $region1: #{fusegan_discriminator_forward.9} parent=0
    #allocation3 [shape = 'u8[229376]{0}', space=vmem, size = 0x38000, scoped, tag = 'input window, operand 0']
    loop: start=0, step=1, limit=4
    $region2: #{fusegan_discriminator_forward.9} parent=1 // loop_pre_header
      _
    $region3: #{fusegan_discriminator_forward.9} parent=1 // loop_header
      %s10 = sphi 0, %s14
      %p11 = scmp.ge.s32.totalorder %s10, 4
      %s17 = sphi 0, %s29
      %s18 = sphi 0, %s25
      %s19 = sphi 0, %s17
      %s20 = sphi 0, %s18
      %s21 = sphi 0, %s19
      %s22 = sphi 0, %s20
      %s32 = sphi 0, %s34
      %s35 = sphi 0, %s32
      %s36 = sphi 0, %s35
      %s52 = sphi 0, %s36
      %s60 = sphi 0, %s62
      %s63 = sphi 0, %s60
      %s64 = sphi 0, %s63
      %s80 = sphi 0, %s64
      %s86 = sphi 0, %s88
      %s89 = sphi 0, %s86
      %s90 = sphi 0, %s89
      %s106 = sphi 0, %s90
      %s112 = sphi 0, %s114
      %s115 = sphi 0, %s112
      %s116 = sphi 0, %s115
      %s132 = sphi 0, %s116
      %s138 = sphi 0, %s140
      %s141 = sphi 0, %s138
      %s142 = sphi 0, %s141
      %s158 = sphi 0, %s142
    $region4: #{fusegan_discriminator_forward.9} parent=1 // loop_header_branch
      %13 = sbr.rel (%p11) target = $region8
    $region5: #{fusegan_discriminator_forward.9} parent=1 // loop_body
      %s15 = ssub.s32 %s10, 1
      %s16 = ssub.s32 %s10, 2
      %s23 = sadd.s32 1, %s18
      %p24 = scmp.ge.s32.totalorder %s23, 2
      %s25 = scalar_select %p24, 0, %s23
      %s26 = sadd.s32 1, %s17
      %s27 = scalar_select %p24, %s26, %s17
      %p28 = scmp.ge.s32.totalorder %s27, 1
      %s29 = scalar_select %p28, 0, %s27
      %s30 = ssub.s32 %s18, %s25
      %p31 = scmp.eq.s32.totalorder %s30, 0
      %s33 = sadd.s32 %s32, 1
      %s34 = scalar_select %p31, %s32, %s33
      %p37 = pneg %p31
      %p38 = scmp.eq.s32.totalorder %s10, 1
      %p39 = por %p37, %p38
      %p40 = scmp.ne.s32.totalorder %s32, %s35
      %p41 = scmp.eq.s32.totalorder %s10, 0
      %p42 = por %p40, %p41
      %p43 = scmp.ne.s32.totalorder %s32, %s35
      %p44 = scmp.eq.s32.totalorder %s15, 1
      %p45 = por %p43, %p44
      %p46 = scmp.ne.s32.totalorder %s35, %s36
      %p47 = scmp.eq.s32.totalorder %s15, 0
      %p48 = por %p46, %p47
      %p49 = scmp.ne.s32.totalorder %s35, %s36
      %p50 = scmp.eq.s32.totalorder %s16, 1
      %p51 = por %p49, %p50
      %p53 = scmp.ne.s32.totalorder %s36, %s52
      %p54 = scmp.eq.s32.totalorder %s16, 0
      %p55 = por %p53, %p54
      %s56 = ssub.s32 %s18, %s25
      %s57 = ssub.s32 %s17, %s29
      %s58 = sor.u32 %s56, %s57
      %p59 = scmp.eq.s32.totalorder %s58, 0
      %s61 = sadd.s32 %s60, 1
      %s62 = scalar_select %p59, %s60, %s61
      %p65 = pneg %p59
      %p66 = scmp.eq.s32.totalorder %s10, 1
      %p67 = por %p65, %p66
      %p68 = scmp.ne.s32.totalorder %s60, %s63
      %p69 = scmp.eq.s32.totalorder %s10, 0
      %p70 = por %p68, %p69
      %p71 = scmp.ne.s32.totalorder %s60, %s63
      %p72 = scmp.eq.s32.totalorder %s15, 1
      %p73 = por %p71, %p72
      %p74 = scmp.ne.s32.totalorder %s63, %s64
      %p75 = scmp.eq.s32.totalorder %s15, 0
      %p76 = por %p74, %p75
      %p77 = scmp.ne.s32.totalorder %s63, %s64
      %p78 = scmp.eq.s32.totalorder %s16, 1
      %p79 = por %p77, %p78
      %p81 = scmp.ne.s32.totalorder %s64, %s80
      %p82 = scmp.eq.s32.totalorder %s16, 0
      %p83 = por %p81, %p82
      %s84 = ssub.s32 %s17, %s29
      %p85 = scmp.eq.s32.totalorder %s84, 0
      %s87 = sadd.s32 %s86, 1
      %s88 = scalar_select %p85, %s86, %s87
      %p91 = pneg %p85
      %p92 = scmp.eq.s32.totalorder %s10, 1
      %p93 = por %p91, %p92
      %p94 = scmp.ne.s32.totalorder %s86, %s89
      %p95 = scmp.eq.s32.totalorder %s10, 0
      %p96 = por %p94, %p95
      %p97 = scmp.ne.s32.totalorder %s86, %s89
      %p98 = scmp.eq.s32.totalorder %s15, 1
      %p99 = por %p97, %p98
      %p100 = scmp.ne.s32.totalorder %s89, %s90
      %p101 = scmp.eq.s32.totalorder %s15, 0
      %p102 = por %p100, %p101
      %p103 = scmp.ne.s32.totalorder %s89, %s90
      %p104 = scmp.eq.s32.totalorder %s16, 1
      %p105 = por %p103, %p104
      %p107 = scmp.ne.s32.totalorder %s90, %s106
      %p108 = scmp.eq.s32.totalorder %s16, 0
      %p109 = por %p107, %p108
      %s110 = ssub.s32 %s17, %s29
      %p111 = scmp.eq.s32.totalorder %s110, 0
      %s113 = sadd.s32 %s112, 1
      %s114 = scalar_select %p111, %s112, %s113
      %p117 = pneg %p111
      %p118 = scmp.eq.s32.totalorder %s10, 1
      %p119 = por %p117, %p118
      %p120 = scmp.ne.s32.totalorder %s112, %s115
      %p121 = scmp.eq.s32.totalorder %s10, 0
      %p122 = por %p120, %p121
      %p123 = scmp.ne.s32.totalorder %s112, %s115
      %p124 = scmp.eq.s32.totalorder %s15, 1
      %p125 = por %p123, %p124
      %p126 = scmp.ne.s32.totalorder %s115, %s116
      %p127 = scmp.eq.s32.totalorder %s15, 0
      %p128 = por %p126, %p127
      %p129 = scmp.ne.s32.totalorder %s115, %s116
      %p130 = scmp.eq.s32.totalorder %s16, 1
      %p131 = por %p129, %p130
      %p133 = scmp.ne.s32.totalorder %s116, %s132
      %p134 = scmp.eq.s32.totalorder %s16, 0
      %p135 = por %p133, %p134
      %s136 = ssub.s32 %s17, %s29
      %p137 = scmp.eq.s32.totalorder %s136, 0
      %s139 = sadd.s32 %s138, 1
      %s140 = scalar_select %p137, %s138, %s139
      %p143 = pneg %p137
      %p144 = scmp.eq.s32.totalorder %s10, 1
      %p145 = por %p143, %p144
      %p146 = scmp.ne.s32.totalorder %s138, %s141
      %p147 = scmp.eq.s32.totalorder %s10, 0
      %p148 = por %p146, %p147
      %p149 = scmp.ne.s32.totalorder %s138, %s141
      %p150 = scmp.eq.s32.totalorder %s15, 1
      %p151 = por %p149, %p150
      %p152 = scmp.ne.s32.totalorder %s141, %s142
      %p153 = scmp.eq.s32.totalorder %s15, 0
      %p154 = por %p152, %p153
      %p155 = scmp.ne.s32.totalorder %s141, %s142
      %p156 = scmp.eq.s32.totalorder %s16, 1
      %p157 = por %p155, %p156
      %p159 = scmp.ne.s32.totalorder %s142, %s158
      %p160 = scmp.eq.s32.totalorder %s16, 0
      %p161 = por %p159, %p160
      %p162 = scmp.le.s32.totalorder 1, %s10
      %p163 = scmp.lt.s32.totalorder %s10, 3
      %p164 = pnand %p162, %p163
      %p165 = pneg %p164
      // Predicated region
      $region9: #{fusegan_discriminator_forward.9} parent=5 // pred_check
        _
      $region10: #{fusegan_discriminator_forward.9} parent=5 // pred_check_branch
        %167 = sbr.rel (%p164) target = $region12
      $region11: #{fusegan_discriminator_forward.9} parent=5 // pred_region
        %s168 = ssub.s32 %s10, 1
        // Predicated region
        $region13: #{fusegan_discriminator_forward.9} parent=11 // pred_check
          %p169 = pneg %p102
        $region14: #{fusegan_discriminator_forward.9} parent=11 // pred_check_branch
          %171 = sbr.rel (%p169) target = $region16
        $region15: #{fusegan_discriminator_forward.9} parent=11 // pred_region
          %p172 = scmp.lt.s32.totalorder %s19, 0
          %s173 = scalar_select %p172, %s19, 0
          %s174 = scalar_lea.vmem %s2, %s173
        $region16: #{fusegan_discriminator_forward.9} parent=11 // pred_fallthru
          _
        // Predicated region
        $region17: #{fusegan_discriminator_forward.9} parent=11 // pred_check
          %p175 = pneg %p128
        $region18: #{fusegan_discriminator_forward.9} parent=11 // pred_check_branch
          %177 = sbr.rel (%p175) target = $region20
        $region19: #{fusegan_discriminator_forward.9} parent=11 // pred_region
          %p178 = scmp.lt.s32.totalorder %s19, 0
          %s179 = scalar_select %p178, %s19, 0
          %s180 = scalar_lea.vmem %s3, %s179
        $region20: #{fusegan_discriminator_forward.9} parent=11 // pred_fallthru
          _
      $region12: #{fusegan_discriminator_forward.9} parent=5 // pred_fallthru
        _
      %p181 = scmp.lt.s32.totalorder %s10, 2
      // Predicated region
      $region21: #{fusegan_discriminator_forward.9} parent=5 // pred_check
        %p182 = pneg %p181
      $region22: #{fusegan_discriminator_forward.9} parent=5 // pred_check_branch
        %184 = sbr.rel (%p182) target = $region24
      $region23: #{fusegan_discriminator_forward.9} parent=5 // pred_region
        // Predicated region
        $region25: #{fusegan_discriminator_forward.9} parent=23 // pred_check
          %p185 = pneg %p42
        $region26: #{fusegan_discriminator_forward.9} parent=23 // pred_check_branch
          %187 = sbr.rel (%p185) target = $region28
        $region27: #{fusegan_discriminator_forward.9} parent=23 // pred_region
          %s188 = sand.u32 %s32, 1
          %s189 = sand.u32 %s32, 1
          %s190 = smul.addr %s189, 224
          %s191 = scalar_lea.vmem [#allocation3], %s190
          %s192 = smul.u32 4, %s18
          %s193 = smul.addr %s192, 8
          %s194 = scalar_lea.vmem %s0, %s193
          // Predicated region
          $region29: #{fusegan_discriminator_forward.9} parent=27 // pred_check
            _
          $region30: #{fusegan_discriminator_forward.9} parent=27 // pred_check_branch
            %196 = sbr.rel (0) target = $region32
          $region31: #{fusegan_discriminator_forward.9} parent=27 // pred_region
            // Predicated region
            $region33: #{fusegan_discriminator_forward.9} parent=31 // pred_check
              _
            $region34: #{fusegan_discriminator_forward.9} parent=31 // pred_check_branch
              %198 = sbr.rel (0) target = $region36
            $region35: #{fusegan_discriminator_forward.9} parent=31 // pred_region
              loop: start=0, step=1, limit=1
              $region37: #{fusegan_discriminator_forward.9} parent=35 // loop_pre_header
                _
              $region38: #{fusegan_discriminator_forward.9} parent=35 // loop_header
                %s200 = sphi 0, %s204
                %p201 = scmp.ge.s32.totalorder %s200, 1
                %s205 = sphi %s194, %s194
                %s206 = sphi %s191, %s191
              $region39: #{fusegan_discriminator_forward.9} parent=35 // loop_header_branch
                %203 = sbr.rel (%p201) target = $region43
              $region40: #{fusegan_discriminator_forward.9} parent=35 // loop_body
                %v207 = vld [vmem:[%s205] sm:$0xff]
                %208 = vst [vmem:[%s206] sm:$0xff] %v207
                %v209 = vld [vmem:[%s205 + $0x8] sm:$0xff]
                %210 = vst [vmem:[%s206 + $0x8] sm:$0xff] %v209
                %v211 = vld [vmem:[%s205 + $0x10] sm:$0xff]
                %212 = vst [vmem:[%s206 + $0x10] sm:$0xff] %v211
                %v213 = vld [vmem:[%s205 + $0x18] sm:$0xff]
                %214 = vst [vmem:[%s206 + $0x18] sm:$0xff] %v213
                %v215 = vld [vmem:[%s205 + $0x40] sm:$0xff]
                %216 = vst [vmem:[%s206 + $0x20] sm:$0xff] %v215
                %v217 = vld [vmem:[%s205 + $0x48] sm:$0xff]
                %218 = vst [vmem:[%s206 + $0x28] sm:$0xff] %v217
                %v219 = vld [vmem:[%s205 + $0x50] sm:$0xff]
                %220 = vst [vmem:[%s206 + $0x30] sm:$0xff] %v219
                %v221 = vld [vmem:[%s205 + $0x58] sm:$0xff]
                %222 = vst [vmem:[%s206 + $0x38] sm:$0xff] %v221
                %v223 = vld [vmem:[%s205 + $0x80] sm:$0xff]
                %224 = vst [vmem:[%s206 + $0x40] sm:$0xff] %v223
                %v225 = vld [vmem:[%s205 + $0x88] sm:$0xff]
                %226 = vst [vmem:[%s206 + $0x48] sm:$0xff] %v225
                %v227 = vld [vmem:[%s205 + $0x90] sm:$0xff]
                %228 = vst [vmem:[%s206 + $0x50] sm:$0xff] %v227
                %v229 = vld [vmem:[%s205 + $0x98] sm:$0xff]
                %230 = vst [vmem:[%s206 + $0x58] sm:$0xff] %v229
                %v231 = vld [vmem:[%s205 + $0xc0] sm:$0xff]
                %232 = vst [vmem:[%s206 + $0x60] sm:$0xff] %v231
                %v233 = vld [vmem:[%s205 + $0xc8] sm:$0xff]
                %234 = vst [vmem:[%s206 + $0x68] sm:$0xff] %v233
                %v235 = vld [vmem:[%s205 + $0xd0] sm:$0xff]
                %236 = vst [vmem:[%s206 + $0x70] sm:$0xff] %v235
                %v237 = vld [vmem:[%s205 + $0xd8] sm:$0xff]
                %238 = vst [vmem:[%s206 + $0x78] sm:$0xff] %v237
                %v239 = vld [vmem:[%s205 + $0x100] sm:$0xff]
                %240 = vst [vmem:[%s206 + $0x80] sm:$0xff] %v239
                %v241 = vld [vmem:[%s205 + $0x108] sm:$0xff]
                %242 = vst [vmem:[%s206 + $0x88] sm:$0xff] %v241
                %v243 = vld [vmem:[%s205 + $0x110] sm:$0xff]
                %244 = vst [vmem:[%s206 + $0x90] sm:$0xff] %v243
                %v245 = vld [vmem:[%s205 + $0x118] sm:$0xff]
                %246 = vst [vmem:[%s206 + $0x98] sm:$0xff] %v245
                %v247 = vld [vmem:[%s205 + $0x140] sm:$0xff]
                %248 = vst [vmem:[%s206 + $0xa0] sm:$0xff] %v247
                %v249 = vld [vmem:[%s205 + $0x148] sm:$0xff]
                %250 = vst [vmem:[%s206 + $0xa8] sm:$0xff] %v249
                %v251 = vld [vmem:[%s205 + $0x150] sm:$0xff]
                %252 = vst [vmem:[%s206 + $0xb0] sm:$0xff] %v251
                %v253 = vld [vmem:[%s205 + $0x158] sm:$0xff]
                %254 = vst [vmem:[%s206 + $0xb8] sm:$0xff] %v253
                %v255 = vld [vmem:[%s205 + $0x180] sm:$0xff]
                %256 = vst [vmem:[%s206 + $0xc0] sm:$0xff] %v255
                %v257 = vld [vmem:[%s205 + $0x188] sm:$0xff]
                %258 = vst [vmem:[%s206 + $0xc8] sm:$0xff] %v257
                %v259 = vld [vmem:[%s205 + $0x190] sm:$0xff]
                %260 = vst [vmem:[%s206 + $0xd0] sm:$0xff] %v259
                %v261 = vld [vmem:[%s205 + $0x198] sm:$0xff]
                %262 = vst [vmem:[%s206 + $0xd8] sm:$0xff] %v261
              $region41: #{fusegan_discriminator_forward.9} parent=35 // loop_footer
                %s204 = sadd.s32 1, %s200
              $region42: #{fusegan_discriminator_forward.9} parent=35 // loop_footer_branch
                %199 = sbr.rel target = $region38
              $region43: #{fusegan_discriminator_forward.9} parent=35 // loop_exit
                _
            $region36: #{fusegan_discriminator_forward.9} parent=31 // pred_fallthru
              _
            // Predicated region
            $region44: #{fusegan_discriminator_forward.9} parent=31 // pred_check
              _
            $region45: #{fusegan_discriminator_forward.9} parent=31 // pred_check_branch
              %264 = sbr.rel target = $region47
            $region46: #{fusegan_discriminator_forward.9} parent=31 // pred_region
              _
            $region47: #{fusegan_discriminator_forward.9} parent=31 // pred_fallthru
              _
          $region32: #{fusegan_discriminator_forward.9} parent=27 // pred_fallthru
            _
          %265 = vnop
        $region28: #{fusegan_discriminator_forward.9} parent=23 // pred_fallthru
          _
        // Predicated region
        $region48: #{fusegan_discriminator_forward.9} parent=23 // pred_check
          %p266 = pneg %p70
        $region49: #{fusegan_discriminator_forward.9} parent=23 // pred_check_branch
          %268 = sbr.rel (%p266) target = $region51
        $region50: #{fusegan_discriminator_forward.9} parent=23 // pred_region
          %s269 = smul.u32 64, %s18
          %p270 = scmp.lt.s32.totalorder %s269, 127
          %s271 = scalar_select %p270, %s269, 127
          %p272 = scmp.lt.s32.totalorder %s17, 0
          %s273 = scalar_select %p272, %s17, 0
          %s274 = sadd.s32 %s273, %s271
          %s275 = smul.addr %s274, 8
          %s276 = scalar_lea.vmem %s1, %s275
          %s277 = smul.u32 64, %s18
        $region51: #{fusegan_discriminator_forward.9} parent=23 // pred_fallthru
          _
      $region24: #{fusegan_discriminator_forward.9} parent=5 // pred_fallthru
        _
      %p278 = scmp.le.s32.totalorder 1, %s10
      %p279 = scmp.lt.s32.totalorder %s10, 3
      %p280 = pnand %p278, %p279
      %p281 = pneg %p280
      // Predicated region
      $region52: #{fusegan_discriminator_forward.9} parent=5 // pred_check
        _
      $region53: #{fusegan_discriminator_forward.9} parent=5 // pred_check_branch
        %283 = sbr.rel (%p280) target = $region55
      $region54: #{fusegan_discriminator_forward.9} parent=5 // pred_region
        %s284 = ssub.s32 %s10, 1
        %s285 = sand.u32 %s35, 1
        %s286 = sand.u32 %s35, 1
        %s287 = smul.addr %s286, 224
        %s288 = scalar_lea.vmem [#allocation3], %s287
        // Predicated region
        $region56: #{fusegan_discriminator_forward.9} parent=54 // pred_check
          %p289 = pneg %p48
        $region57: #{fusegan_discriminator_forward.9} parent=54 // pred_check_branch
          %291 = sbr.rel (%p289) target = $region59
        $region58: #{fusegan_discriminator_forward.9} parent=54 // pred_region
          _
        $region59: #{fusegan_discriminator_forward.9} parent=54 // pred_fallthru
          _
        %s292 = sand.u32 %s35, 1
        %s293 = sand.u32 %s35, 1
        %s294 = smul.addr %s293, 224
        %s295 = scalar_lea.vmem [#allocation3], %s294
        %p296 = pneg %p48
        %p297 = pneg %p45
        %s298 = smul.u32 64, %s20
        %p299 = scmp.lt.s32.totalorder %s298, 127
        %s300 = scalar_select %p299, %s298, 127
        %p301 = scmp.lt.s32.totalorder %s19, 0
        %s302 = scalar_select %p301, %s19, 0
        %s303 = sadd.s32 %s302, %s300
        %s304 = smul.addr %s303, 8
        %s305 = scalar_lea.vmem %s1, %s304
        %p306 = pneg %p76
        %p307 = pneg %p73
        %p308 = scmp.lt.s32.totalorder %s19, 0
        %s309 = scalar_select %p308, %s19, 0
        %s310 = scalar_lea.vmem %s2, %s309
        %p311 = pneg %p102
        %p312 = pneg %p99
        %p313 = scmp.lt.s32.totalorder %s19, 0
        %s314 = scalar_select %p313, %s19, 0
        %s315 = scalar_lea.vmem %s3, %s314
        %p316 = pneg %p128
        %p317 = pneg %p125
        %p318 = pneg %p154
        %p319 = pneg %p151
        %p320 = scmp.lt.s32.totalorder %s19, 0
        %s321 = scalar_select %p320, %s19, 0
        %s322 = smul.addr %s321, 8
        %s323 = scalar_lea.vmem %s4, %s322
        %s324 = smul.u32 4, %s20
        %s325 = smul.u32 64, %s20
        %p326 = scmp.lt.s32.totalorder %s325, 127
        %s327 = scalar_select %p326, %s325, 127
        %p328 = scmp.lt.s32.totalorder %s19, 0
        %s329 = scalar_select %p328, %s19, 0
        %s330 = sadd.s32 %s329, %s327
        %s331 = smul.addr %s330, 8
        %s332 = scalar_lea.vmem %s1, %s331
        %s333 = smul.u32 64, %s20
        %p334 = scmp.lt.s32.totalorder %s19, 0
        %s335 = scalar_select %p334, %s19, 0
        %s336 = scalar_lea.vmem %s2, %s335
        %p337 = scmp.lt.s32.totalorder %s19, 0
        %s338 = scalar_select %p337, %s19, 0
        %s339 = scalar_lea.vmem %s3, %s338
        %p340 = scmp.lt.s32.totalorder %s19, 0
        %s341 = scalar_select %p340, %s19, 0
        %s342 = smul.addr %s341, 8
        %s343 = scalar_lea.vmem %s4, %s342
        %p344 = scmp.eq.s32.totalorder %s20, 0
        // Predicated region
        $region60: #{fusegan_discriminator_forward.9} parent=54 // pred_check
          %p345 = pneg %p344
        $region61: #{fusegan_discriminator_forward.9} parent=54 // pred_check_branch
          %347 = sbr.rel (%p345) target = $region63
        $region62: #{fusegan_discriminator_forward.9} parent=54 // pred_region
          %348 = vst [vmem:[#allocation2] sm:$0xff] 0.0
          %349 = vst [vmem:[#allocation2 + $0x8] sm:$0xff] 0.0
          %350 = vst [vmem:[#allocation2 + $0x10] sm:$0xff] 0.0
          %351 = vst [vmem:[#allocation2 + $0x18] sm:$0xff] 0.0
          %352 = vst [vmem:[#allocation2 + $0x20] sm:$0xff] 0.0
          %353 = vst [vmem:[#allocation2 + $0x28] sm:$0xff] 0.0
          %354 = vst [vmem:[#allocation2 + $0x30] sm:$0x3] 0.0
        $region63: #{fusegan_discriminator_forward.9} parent=54 // pred_fallthru
          _
        %v355 = vld [vmem:[#allocation2] sm:$0xff]
        %v356 = vld [vmem:[#allocation2 + $0x8] sm:$0xff]
        %v357 = vld [vmem:[#allocation2 + $0x10] sm:$0xff]
        %v358 = vld [vmem:[#allocation2 + $0x18] sm:$0xff]
        %v359 = vld [vmem:[#allocation2 + $0x20] sm:$0xff]
        %v360 = vld [vmem:[#allocation2 + $0x28] sm:$0xff]
        %v361 = vld [vmem:[#allocation2 + $0x30] sm:$0x3]
        %v362 = vld [vmem:[%s288] sm:$0xff]
        %v363 = vld [vmem:[%s288 + $0x8] sm:$0xff]
        %v364 = vld [vmem:[%s288 + $0x10] sm:$0xff]
        %v365 = vld [vmem:[%s288 + $0x18] sm:$0xff]
        %v366 = vld [vmem:[%s288 + $0x20] sm:$0xff]
        %v367 = vld [vmem:[%s288 + $0x28] sm:$0xff]
        %v368 = vld [vmem:[%s288 + $0x30] sm:$0xff]
        %v369 = vld [vmem:[%s288 + $0x38] sm:$0xff]
        %v370 = vld [vmem:[%s288 + $0x40] sm:$0xff]
        %v371 = vld [vmem:[%s288 + $0x48] sm:$0xff]
        %v372 = vld [vmem:[%s288 + $0x50] sm:$0xff]
        %v373 = vld [vmem:[%s288 + $0x58] sm:$0xff]
        %v374 = vld [vmem:[%s288 + $0x60] sm:$0xff]
        %v375 = vld [vmem:[%s288 + $0x68] sm:$0xff]
        %v376 = vld [vmem:[%s288 + $0x70] sm:$0xff]
        %v377 = vld [vmem:[%s288 + $0x78] sm:$0xff]
        %v378 = vld [vmem:[%s288 + $0x80] sm:$0xff]
        %v379 = vld [vmem:[%s288 + $0x88] sm:$0xff]
        %v380 = vld [vmem:[%s288 + $0x90] sm:$0xff]
        %v381 = vld [vmem:[%s288 + $0x98] sm:$0xff]
        %v382 = vld [vmem:[%s288 + $0xa0] sm:$0xff]
        %v383 = vld [vmem:[%s288 + $0xa8] sm:$0xff]
        %v384 = vld [vmem:[%s288 + $0xb0] sm:$0xff]
        %v385 = vld [vmem:[%s288 + $0xb8] sm:$0xff]
        %v386 = vld [vmem:[%s288 + $0xc0] sm:$0x3]
        %v387 = vld [vmem:[%s288 + $0xc8] sm:$0x3]
        %v388 = vld [vmem:[%s288 + $0xd0] sm:$0x3]
        %v389 = vld [vmem:[%s288 + $0xd8] sm:$0x3]
        %v390 = vld [vmem:[%s332] sm:$0xff]
        %v391 = vld [vmem:[%s332 + $0x8] sm:$0xff]
        %v392 = vld [vmem:[%s332 + $0x10] sm:$0xff]
        %v393 = vld [vmem:[%s332 + $0x18] sm:$0xff]
        %v394 = vld [vmem:[%s332 + $0x20] sm:$0xff]
        %v395 = vld [vmem:[%s332 + $0x28] sm:$0xff]
        %v396 = vld [vmem:[%s332 + $0x30] sm:$0xff]
        %v397 = vld [vmem:[%s332 + $0x38] sm:$0xff]
        %v398 = vld [vmem:[%s332 + $0x40] sm:$0xff]
        %v399 = vld [vmem:[%s332 + $0x48] sm:$0xff]
        %v400 = vld [vmem:[%s332 + $0x50] sm:$0xff]
        %v401 = vld [vmem:[%s332 + $0x58] sm:$0xff]
        %v402 = vld [vmem:[%s332 + $0x60] sm:$0xff]
        %v403 = vld [vmem:[%s332 + $0x68] sm:$0xff]
        %v404 = vld [vmem:[%s332 + $0x70] sm:$0xff]
        %v405 = vld [vmem:[%s332 + $0x78] sm:$0xff]
        %v406 = vld [vmem:[%s332 + $0x80] sm:$0xff]
        %v407 = vld [vmem:[%s332 + $0x88] sm:$0xff]
        %v408 = vld [vmem:[%s332 + $0x90] sm:$0xff]
        %v409 = vld [vmem:[%s332 + $0x98] sm:$0xff]
        %v410 = vld [vmem:[%s332 + $0xa0] sm:$0xff]
        %v411 = vld [vmem:[%s332 + $0xa8] sm:$0xff]
        %v412 = vld [vmem:[%s332 + $0xb0] sm:$0xff]
        %v413 = vld [vmem:[%s332 + $0xb8] sm:$0xff]
        %v414 = vld [vmem:[%s332 + $0xc0] sm:$0xff]
        %v415 = vld [vmem:[%s332 + $0xc8] sm:$0xff]
        %v416 = vld [vmem:[%s332 + $0xd0] sm:$0xff]
        %v417 = vld [vmem:[%s332 + $0xd8] sm:$0xff]
        %v418 = vld [vmem:[%s332 + $0xe0] sm:$0xff]
        %v419 = vld [vmem:[%s332 + $0xe8] sm:$0xff]
        %v420 = vld [vmem:[%s332 + $0xf0] sm:$0xff]
        %v421 = vld [vmem:[%s332 + $0xf8] sm:$0xff]
        %v422 = vld [vmem:[%s332 + $0x100] sm:$0xff]
        %v423 = vld [vmem:[%s332 + $0x108] sm:$0xff]
        %v424 = vld [vmem:[%s332 + $0x110] sm:$0xff]
        %v425 = vld [vmem:[%s332 + $0x118] sm:$0xff]
        %v426 = vld [vmem:[%s332 + $0x120] sm:$0xff]
        %v427 = vld [vmem:[%s332 + $0x128] sm:$0xff]
        %v428 = vld [vmem:[%s332 + $0x130] sm:$0xff]
        %v429 = vld [vmem:[%s332 + $0x138] sm:$0xff]
        %v430 = vld [vmem:[%s332 + $0x140] sm:$0xff]
        %v431 = vld [vmem:[%s332 + $0x148] sm:$0xff]
        %v432 = vld [vmem:[%s332 + $0x150] sm:$0xff]
        %v433 = vld [vmem:[%s332 + $0x158] sm:$0xff]
        %v434 = vld [vmem:[%s332 + $0x160] sm:$0xff]
        %v435 = vld [vmem:[%s332 + $0x168] sm:$0xff]
        %v436 = vld [vmem:[%s332 + $0x170] sm:$0xff]
        %v437 = vld [vmem:[%s332 + $0x178] sm:$0xff]
        %v438 = vld [vmem:[%s332 + $0x180] sm:$0xff]
        %v439 = vld [vmem:[%s332 + $0x188] sm:$0xff]
        %v440 = vld [vmem:[%s332 + $0x190] sm:$0xff]
        %v441 = vld [vmem:[%s332 + $0x198] sm:$0xff]
        %v442 = vld [vmem:[%s332 + $0x1a0] sm:$0xff]
        %v443 = vld [vmem:[%s332 + $0x1a8] sm:$0xff]
        %v444 = vld [vmem:[%s332 + $0x1b0] sm:$0xff]
        %v445 = vld [vmem:[%s332 + $0x1b8] sm:$0xff]
        %v446 = vld [vmem:[%s332 + $0x1c0] sm:$0xff]
        %v447 = vld [vmem:[%s332 + $0x1c8] sm:$0xff]
        %v448 = vld [vmem:[%s332 + $0x1d0] sm:$0xff]
        %v449 = vld [vmem:[%s332 + $0x1d8] sm:$0xff]
        %v450 = vld [vmem:[%s332 + $0x1e0] sm:$0xff]
        %v451 = vld [vmem:[%s332 + $0x1e8] sm:$0xff]
        %v452 = vld [vmem:[%s332 + $0x1f0] sm:$0xff]
        %v453 = vld [vmem:[%s332 + $0x1f8] sm:$0xff]
        %454 = vmatprep.subr.mxu0 0.0
        %455 = vmatpush1.msra.mxu0 %v405
        %456 = vmatprep.subr.mxu0 0.0
        %457 = vmatpush1.msra.mxu0 %v404
        %458 = vmatprep.subr.mxu0 0.0
        %459 = vmatpush1.msra.mxu0 %v403
        %460 = vmatprep.subr.mxu0 0.0
        %461 = vmatpush1.msra.mxu0 %v402
        %462 = vmatprep.subr.mxu0 0.0
        %463 = vmatpush1.msra.mxu0 %v401
        %464 = vmatprep.subr.mxu0 0.0
        %465 = vmatpush1.msra.mxu0 %v400
        %466 = vmatprep.subr.mxu0 0.0
        %467 = vmatpush1.msra.mxu0 %v399
        %468 = vmatprep.subr.mxu0 0.0
        %469 = vmatpush1.msra.mxu0 %v398
        %470 = vmatprep.subr.mxu0 0.0
        %471 = vmatpush1.msra.mxu0 %v397
        %472 = vmatprep.subr.mxu0 0.0
        %473 = vmatpush1.msra.mxu0 %v396
        %474 = vmatprep.subr.mxu0 0.0
        %475 = vmatpush1.msra.mxu0 %v395
        %476 = vmatprep.subr.mxu0 0.0
        %477 = vmatpush1.msra.mxu0 %v394
        %478 = vmatprep.subr.mxu0 0.0
        %479 = vmatpush1.msra.mxu0 %v393
        %480 = vmatprep.subr.mxu0 0.0
        %481 = vmatpush1.msra.mxu0 %v392
        %482 = vmatprep.subr.mxu0 0.0
        %483 = vmatpush1.msra.mxu0 %v391
        %484 = vmatprep.subr.mxu0 0.0
        %485 = vmatpush1.msra.mxu0 %v390
        %486 = vmatprep.subr.mxu0 0.0
        %487 = vmatpush2.msra.mxu0 %v421
        %488 = vmatprep.subr.mxu0 0.0
        %489 = vmatpush2.msra.mxu0 %v420
        %490 = vmatprep.subr.mxu0 0.0
        %491 = vmatpush2.msra.mxu0 %v419
        %492 = vmatprep.subr.mxu0 0.0
        %493 = vmatpush2.msra.mxu0 %v418
        %494 = vmatprep.subr.mxu0 0.0
        %495 = vmatpush2.msra.mxu0 %v417
        %496 = vmatprep.subr.mxu0 0.0
        %497 = vmatpush2.msra.mxu0 %v416
        %498 = vmatprep.subr.mxu0 0.0
        %499 = vmatpush2.msra.mxu0 %v415
        %500 = vmatprep.subr.mxu0 0.0
        %501 = vmatpush2.msra.mxu0 %v414
        %502 = vmatprep.subr.mxu0 0.0
        %503 = vmatpush2.msra.mxu0 %v413
        %504 = vmatprep.subr.mxu0 0.0
        %505 = vmatpush2.msra.mxu0 %v412
        %506 = vmatprep.subr.mxu0 0.0
        %507 = vmatpush2.msra.mxu0 %v411
        %508 = vmatprep.subr.mxu0 0.0
        %509 = vmatpush2.msra.mxu0 %v410
        %510 = vmatprep.subr.mxu0 0.0
        %511 = vmatpush2.msra.mxu0 %v409
        %512 = vmatprep.subr.mxu0 0.0
        %513 = vmatpush2.msra.mxu0 %v408
        %514 = vmatprep.subr.mxu0 0.0
        %515 = vmatpush2.msra.mxu0 %v407
        %516 = vmatprep.subr.mxu0 0.0
        %517 = vmatpush2.msra.mxu0 %v406
        %518 = vmatprep.mubr.f32.mxu0 %v363
        %519 = vmatmul.mubr.f32.gmra.mxu0 %v362
        %v520 = vpop.f32.mrf.mxu0
        %v521 = vadd.f32 0.0, %v520
        %v522 = vpop.f32.mrf.mxu0
        %523 = vmatprep.mubr.f32.mxu0 %v367
        %524 = vmatmul.mubr.f32.gmra.mxu0 %v366
        %v525 = vpop.f32.mrf.mxu0
        %v526 = vadd.f32 0.0, %v525
        %v527 = vpop.f32.mrf.mxu0
        %528 = vmatprep.mubr.f32.mxu0 %v371
        %529 = vmatmul.mubr.f32.gmra.mxu0 %v370
        %v530 = vpop.f32.mrf.mxu0
        %v531 = vadd.f32 0.0, %v530
        %v532 = vpop.f32.mrf.mxu0
        %533 = vmatprep.mubr.f32.mxu0 %v375
        %534 = vmatmul.mubr.f32.gmra.mxu0 %v374
        %v535 = vpop.f32.mrf.mxu0
        %v536 = vadd.f32 0.0, %v535
        %v537 = vpop.f32.mrf.mxu0
        %538 = vmatprep.mubr.f32.mxu0 %v379
        %539 = vmatmul.mubr.f32.gmra.mxu0 %v378
        %v540 = vpop.f32.mrf.mxu0
        %v541 = vadd.f32 0.0, %v540
        %v542 = vpop.f32.mrf.mxu0
        %543 = vmatprep.mubr.f32.mxu0 %v383
        %544 = vmatmul.mubr.f32.gmra.mxu0 %v382
        %v545 = vpop.f32.mrf.mxu0
        %v546 = vadd.f32 0.0, %v545
        %v547 = vpop.f32.mrf.mxu0
        %548 = vmatprep.mubr.f32.mxu0 %v387
        %549 = vmatmul.mubr.f32.gmra.mxu0 %v386
        %v550 = vpop.f32.mrf.mxu0
        %v551 = vadd.f32 0.0, %v550
        %v552 = vpop.f32.mrf.mxu0
        %553 = vdwg.mxu0
        %554 = vmatprep.subr.mxu0 0.0
        %555 = vmatpush1.msra.mxu0 %v437
        %556 = vmatprep.subr.mxu0 0.0
        %557 = vmatpush1.msra.mxu0 %v436
        %558 = vmatprep.subr.mxu0 0.0
        %559 = vmatpush1.msra.mxu0 %v435
        %560 = vmatprep.subr.mxu0 0.0
        %561 = vmatpush1.msra.mxu0 %v434
        %562 = vmatprep.subr.mxu0 0.0
        %563 = vmatpush1.msra.mxu0 %v433
        %564 = vmatprep.subr.mxu0 0.0
        %565 = vmatpush1.msra.mxu0 %v432
        %566 = vmatprep.subr.mxu0 0.0
        %567 = vmatpush1.msra.mxu0 %v431
        %568 = vmatprep.subr.mxu0 0.0
        %569 = vmatpush1.msra.mxu0 %v430
        %570 = vmatprep.subr.mxu0 0.0
        %571 = vmatpush1.msra.mxu0 %v429
        %572 = vmatprep.subr.mxu0 0.0
        %573 = vmatpush1.msra.mxu0 %v428
        %574 = vmatprep.subr.mxu0 0.0
        %575 = vmatpush1.msra.mxu0 %v427
        %576 = vmatprep.subr.mxu0 0.0
        %577 = vmatpush1.msra.mxu0 %v426
        %578 = vmatprep.subr.mxu0 0.0
        %579 = vmatpush1.msra.mxu0 %v425
        %580 = vmatprep.subr.mxu0 0.0
        %581 = vmatpush1.msra.mxu0 %v424
        %582 = vmatprep.subr.mxu0 0.0
        %583 = vmatpush1.msra.mxu0 %v423
        %584 = vmatprep.subr.mxu0 0.0
        %585 = vmatpush1.msra.mxu0 %v422
        %586 = vmatprep.subr.mxu0 0.0
        %587 = vmatpush2.msra.mxu0 %v453
        %588 = vmatprep.subr.mxu0 0.0
        %589 = vmatpush2.msra.mxu0 %v452
        %590 = vmatprep.subr.mxu0 0.0
        %591 = vmatpush2.msra.mxu0 %v451
        %592 = vmatprep.subr.mxu0 0.0
        %593 = vmatpush2.msra.mxu0 %v450
        %594 = vmatprep.subr.mxu0 0.0
        %595 = vmatpush2.msra.mxu0 %v449
        %596 = vmatprep.subr.mxu0 0.0
        %597 = vmatpush2.msra.mxu0 %v448
        %598 = vmatprep.subr.mxu0 0.0
        %599 = vmatpush2.msra.mxu0 %v447
        %600 = vmatprep.subr.mxu0 0.0
        %601 = vmatpush2.msra.mxu0 %v446
        %602 = vmatprep.subr.mxu0 0.0
        %603 = vmatpush2.msra.mxu0 %v445
        %604 = vmatprep.subr.mxu0 0.0
        %605 = vmatpush2.msra.mxu0 %v444
        %606 = vmatprep.subr.mxu0 0.0
        %607 = vmatpush2.msra.mxu0 %v443
        %608 = vmatprep.subr.mxu0 0.0
        %609 = vmatpush2.msra.mxu0 %v442
        %610 = vmatprep.subr.mxu0 0.0
        %611 = vmatpush2.msra.mxu0 %v441
        %612 = vmatprep.subr.mxu0 0.0
        %613 = vmatpush2.msra.mxu0 %v440
        %614 = vmatprep.subr.mxu0 0.0
        %615 = vmatpush2.msra.mxu0 %v439
        %616 = vmatprep.subr.mxu0 0.0
        %617 = vmatpush2.msra.mxu0 %v438
        %618 = vmatprep.mubr.f32.mxu0 %v365
        %619 = vmatmul.mubr.f32.gmra.mxu0 %v364
        %v620 = vpop.f32.mrf.mxu0
        %v621 = vadd.f32 %v521, %v620
        %v622 = vpop.f32.mrf.mxu0
        %623 = vmatprep.mubr.f32.mxu0 %v369
        %624 = vmatmul.mubr.f32.gmra.mxu0 %v368
        %v625 = vpop.f32.mrf.mxu0
        %v626 = vadd.f32 %v526, %v625
        %v627 = vpop.f32.mrf.mxu0
        %628 = vmatprep.mubr.f32.mxu0 %v373
        %629 = vmatmul.mubr.f32.gmra.mxu0 %v372
        %v630 = vpop.f32.mrf.mxu0
        %v631 = vadd.f32 %v531, %v630
        %v632 = vpop.f32.mrf.mxu0
        %633 = vmatprep.mubr.f32.mxu0 %v377
        %634 = vmatmul.mubr.f32.gmra.mxu0 %v376
        %v635 = vpop.f32.mrf.mxu0
        %v636 = vadd.f32 %v536, %v635
        %v637 = vpop.f32.mrf.mxu0
        %638 = vmatprep.mubr.f32.mxu0 %v381
        %639 = vmatmul.mubr.f32.gmra.mxu0 %v380
        %v640 = vpop.f32.mrf.mxu0
        %v641 = vadd.f32 %v541, %v640
        %v642 = vpop.f32.mrf.mxu0
        %643 = vmatprep.mubr.f32.mxu0 %v385
        %644 = vmatmul.mubr.f32.gmra.mxu0 %v384
        %v645 = vpop.f32.mrf.mxu0
        %v646 = vadd.f32 %v546, %v645
        %v647 = vpop.f32.mrf.mxu0
        %648 = vmatprep.mubr.f32.mxu0 %v389
        %649 = vmatmul.mubr.f32.gmra.mxu0 %v388
        %v650 = vpop.f32.mrf.mxu0
        %v651 = vadd.f32 %v551, %v650
        %v652 = vpop.f32.mrf.mxu0
        %653 = vdwg.mxu0
        %v654 = vadd.f32 %v355, %v621
        %v655 = vadd.f32 %v356, %v626
        %v656 = vadd.f32 %v357, %v631
        %v657 = vadd.f32 %v358, %v636
        %v658 = vadd.f32 %v359, %v641
        %v659 = vadd.f32 %v360, %v646
        %v660 = vadd.f32 %v361, %v651
        %661 = vst [vmem:[#allocation2] sm:$0xff] %v654
        %662 = vst [vmem:[#allocation2 + $0x8] sm:$0xff] %v655
        %663 = vst [vmem:[#allocation2 + $0x10] sm:$0xff] %v656
        %664 = vst [vmem:[#allocation2 + $0x18] sm:$0xff] %v657
        %665 = vst [vmem:[#allocation2 + $0x20] sm:$0xff] %v658
        %666 = vst [vmem:[#allocation2 + $0x28] sm:$0xff] %v659
        %667 = vst [vmem:[#allocation2 + $0x30] sm:$0x3] %v660
        %p668 = scmp.eq.s32.totalorder %s20, 1
        // Predicated region
        $region64: #{fusegan_discriminator_forward.9} parent=54 // pred_check
          %p669 = pneg %p668
        $region65: #{fusegan_discriminator_forward.9} parent=54 // pred_check_branch
          %671 = sbr.rel (%p669) target = $region67
        $region66: #{fusegan_discriminator_forward.9} parent=54 // pred_region
          %v672 = vld [vmem:[#allocation2] sm:$0xff]
          %v673 = vld [vmem:[#allocation2 + $0x8] sm:$0xff]
          %v674 = vld [vmem:[#allocation2 + $0x10] sm:$0xff]
          %v675 = vld [vmem:[#allocation2 + $0x18] sm:$0xff]
          %v676 = vld [vmem:[#allocation2 + $0x20] sm:$0xff]
          %v677 = vld [vmem:[#allocation2 + $0x28] sm:$0xff]
          %v678 = vld [vmem:[#allocation2 + $0x30] sm:$0x3]
          %v679 = vadd.f32 %v672, %v673
          %v680 = vadd.f32 %v679, %v674
          %v681 = vadd.f32 %v680, %v675
          %v682 = vadd.f32 %v681, %v676
          %v683 = vadd.f32 %v682, %v677
          %vm684 = vcmask 1041408
          %v685 = vsel %vm684, %v678, 0.0
          %v686 = vadd.f32 %v683, %v685
          %v687 = vrot.slane %v686, 4
          %v688 = vadd.f32 %v686, %v687
          %v689 = vrot.slane %v688, 2
          %v690 = vadd.f32 %v688, %v689
          %v691 = vrot.slane %v690, 1
          %v692 = vadd.f32 %v690, %v691
          %v693 = vmul.f32 %v692, 0.02
          %v694 = vsub.f32 %v672, %v693
          %v695 = vsub.f32 %v673, %v693
          %v696 = vsub.f32 %v674, %v693
          %v697 = vsub.f32 %v675, %v693
          %v698 = vsub.f32 %v676, %v693
          %v699 = vsub.f32 %v677, %v693
          %v700 = vsub.f32 %v678, %v693
          %v701 = vmul.f32 %v694, %v694
          %v702 = vmul.f32 %v695, %v695
          %v703 = vmul.f32 %v696, %v696
          %v704 = vmul.f32 %v697, %v697
          %v705 = vmul.f32 %v698, %v698
          %v706 = vmul.f32 %v699, %v699
          %v707 = vmul.f32 %v700, %v700
          %v708 = vadd.f32 %v701, %v702
          %v709 = vadd.f32 %v708, %v703
          %v710 = vadd.f32 %v709, %v704
          %v711 = vadd.f32 %v710, %v705
          %v712 = vadd.f32 %v711, %v706
          %v713 = vsel %vm684, %v707, 0.0
          %v714 = vadd.f32 %v712, %v713
          %v715 = vrot.slane %v714, 4
          %v716 = vadd.f32 %v714, %v715
          %v717 = vrot.slane %v716, 2
          %v718 = vadd.f32 %v716, %v717
          %v719 = vrot.slane %v718, 1
          %v720 = vadd.f32 %v718, %v719
          %v721 = vmul.f32 %v720, 0.02
          %v722 = vld [vmem:[%s336] sm:$0x1]
          %v723 = vadd.f32 %v721, 1e-05
          %v724 = vrsqrt.pop %v723
          %v725 = vmul.f32 %v722, %v724
          %v727 = vlaneseq
          %v728 = vshrl.u32 %v727, 7
          %v729 = vsub.s32 0, %v728
          %v730 = vrot.slane %v725, %v729
          %v732 = vmul.f32 %v694, %v730
          %v733 = vmul.f32 %v695, %v730
          %v734 = vmul.f32 %v696, %v730
          %v735 = vmul.f32 %v697, %v730
          %v736 = vmul.f32 %v698, %v730
          %v737 = vmul.f32 %v699, %v730
          %v738 = vmul.f32 %v700, %v730
          %v739 = vld [vmem:[%s339] sm:$0x1]
          %v741 = vlaneseq
          %v742 = vshrl.u32 %v741, 7
          %v743 = vsub.s32 0, %v742
          %v744 = vrot.slane %v739, %v743
          %v746 = vadd.f32 %v732, %v744
          %v747 = vadd.f32 %v733, %v744
          %v748 = vadd.f32 %v734, %v744
          %v749 = vadd.f32 %v735, %v744
          %v750 = vadd.f32 %v736, %v744
          %v751 = vadd.f32 %v737, %v744
          %v752 = vadd.f32 %v738, %v744
          %vm753 = vcmp.ge.f32.partialorder %v746, 0.0
          %vm754 = vcmp.ge.f32.partialorder %v747, 0.0
          %vm755 = vcmp.ge.f32.partialorder %v748, 0.0
          %vm756 = vcmp.ge.f32.partialorder %v749, 0.0
          %vm757 = vcmp.ge.f32.partialorder %v750, 0.0
          %vm758 = vcmp.ge.f32.partialorder %v751, 0.0
          %vm759 = vcmp.ge.f32.partialorder %v752, 0.0
          %v760 = vmul.f32 %v746, 0.01
          %v761 = vmul.f32 %v747, 0.01
          %v762 = vmul.f32 %v748, 0.01
          %v763 = vmul.f32 %v749, 0.01
          %v764 = vmul.f32 %v750, 0.01
          %v765 = vmul.f32 %v751, 0.01
          %v766 = vmul.f32 %v752, 0.01
          %v767 = vsel %vm753, %v746, %v760
          %v768 = vsel %vm754, %v747, %v761
          %v769 = vsel %vm755, %v748, %v762
          %v770 = vsel %vm756, %v749, %v763
          %v771 = vsel %vm757, %v750, %v764
          %v772 = vsel %vm758, %v751, %v765
          %v773 = vsel %vm759, %v752, %v766
          %774 = vst [vmem:[%s343] sm:$0xff] %v767
          %775 = vst [vmem:[%s343 + $0x8] sm:$0xff] %v768
          %776 = vst [vmem:[%s343 + $0x10] sm:$0xff] %v769
          %777 = vst [vmem:[%s343 + $0x18] sm:$0xff] %v770
          %778 = vst [vmem:[%s343 + $0x20] sm:$0xff] %v771
          %779 = vst [vmem:[%s343 + $0x28] sm:$0xff] %v772
          %780 = vst [vmem:[%s343 + $0x30] sm:$0x3] %v773
        $region67: #{fusegan_discriminator_forward.9} parent=54 // pred_fallthru
          _
        %p781 = scmp.lt.s32.totalorder %s19, 0
        %s782 = scalar_select %p781, %s19, 0
        %s783 = smul.addr %s782, 8
        %s784 = scalar_lea.vmem %s4, %s783
        // Predicated region
        $region68: #{fusegan_discriminator_forward.9} parent=54 // pred_check
          %p785 = pneg %p151
        $region69: #{fusegan_discriminator_forward.9} parent=54 // pred_check_branch
          %787 = sbr.rel (%p785) target = $region71
        $region70: #{fusegan_discriminator_forward.9} parent=54 // pred_region
          _
        $region71: #{fusegan_discriminator_forward.9} parent=54 // pred_fallthru
          _
        // Predicated region
        $region72: #{fusegan_discriminator_forward.9} parent=54 // pred_check
          %p788 = pneg %p151
        $region73: #{fusegan_discriminator_forward.9} parent=54 // pred_check_branch
          %790 = sbr.rel (%p788) target = $region75
        $region74: #{fusegan_discriminator_forward.9} parent=54 // pred_region
          %p791 = scmp.lt.s32.totalorder %s19, 0
          %s792 = scalar_select %p791, %s19, 0
          %s793 = smul.addr %s792, 8
          %s794 = scalar_lea.vmem %s4, %s793
        $region75: #{fusegan_discriminator_forward.9} parent=54 // pred_fallthru
          _
      $region55: #{fusegan_discriminator_forward.9} parent=5 // pred_fallthru
        _
      %p795 = scmp.le.s32.totalorder 2, %s10
      // Predicated region
      $region76: #{fusegan_discriminator_forward.9} parent=5 // pred_check
        %p796 = pneg %p795
      $region77: #{fusegan_discriminator_forward.9} parent=5 // pred_check_branch
        %798 = sbr.rel (%p796) target = $region79
      $region78: #{fusegan_discriminator_forward.9} parent=5 // pred_region
        %s799 = ssub.s32 %s10, 2
      $region79: #{fusegan_discriminator_forward.9} parent=5 // pred_fallthru
        _
    $region6: #{fusegan_discriminator_forward.9} parent=1 // loop_footer
      %s14 = sadd.s32 1, %s10
    $region7: #{fusegan_discriminator_forward.9} parent=1 // loop_footer_branch
      %9 = sbr.rel target = $region3
    $region8: #{fusegan_discriminator_forward.9} parent=1 // loop_exit
      _

// kernel: fusegan_discriminator_forward.10
$region0: #{fusegan_discriminator_forward.10}
  #allocation0 [shape = 'u32[]', space=smem, size = 0x4, offset = 0x4, fixed_abs, tag = 'smem constant byte address 0x4 - core index']
  #allocation1 [shape = 'u32[144,128]{1,0:T(1,128)}', space=vmem, size = 0x12000, scoped, tag = 'internal scratch']
  #allocation2 [shape = 'f32[18,256]{1,0:T(8,128)}', space=vmem, size = 0x6000, scoped, tag = 'scratch operand']
  %s0 = inlined_call_operand.vmem [shape: f32[18,2048], index: 0, kind: input, shape index: {}]
  %s1 = inlined_call_operand.vmem [shape: f32[2048,256], index: 1, kind: input, shape index: {}]
  %s2 = inlined_call_operand.vmem [shape: f32[1,256], index: 2, kind: input, shape index: {}]
  %s3 = inlined_call_operand.vmem [shape: f32[1,256], index: 3, kind: input, shape index: {}]
  %s4 = inlined_call_operand.vmem [shape: f32[18,256], index: 4, kind: output, shape index: {}]
  %s5 = sld [smem:[#allocation0]]
  $region80: #{fusegan_discriminator_forward.10} parent=0
    _
  %s7 = ssub.s32 1, %s5
  %s8 = scalar_select 0, %s7, %s5
  $region1: #{fusegan_discriminator_forward.10} parent=0
    #allocation3 [shape = 'u8[98304]{0}', space=vmem, size = 0x18000, scoped, tag = 'input window, operand 0']
    loop: start=0, step=1, limit=6
    $region2: #{fusegan_discriminator_forward.10} parent=1 // loop_pre_header
      _
    $region3: #{fusegan_discriminator_forward.10} parent=1 // loop_header
      %s10 = sphi 0, %s14
      %p11 = scmp.ge.s32.totalorder %s10, 6
      %s17 = sphi 0, %s29
      %s18 = sphi 0, %s25
      %s19 = sphi 0, %s17
      %s20 = sphi 0, %s18
      %s21 = sphi 0, %s19
      %s22 = sphi 0, %s20
      %s32 = sphi 0, %s34
      %s35 = sphi 0, %s32
      %s36 = sphi 0, %s35
      %s52 = sphi 0, %s36
      %s60 = sphi 0, %s62
      %s63 = sphi 0, %s60
      %s64 = sphi 0, %s63
      %s80 = sphi 0, %s64
      %s86 = sphi 0, %s88
      %s89 = sphi 0, %s86
      %s90 = sphi 0, %s89
      %s106 = sphi 0, %s90
      %s112 = sphi 0, %s114
      %s115 = sphi 0, %s112
      %s116 = sphi 0, %s115
      %s132 = sphi 0, %s116
      %s138 = sphi 0, %s140
      %s141 = sphi 0, %s138
      %s142 = sphi 0, %s141
      %s158 = sphi 0, %s142
    $region4: #{fusegan_discriminator_forward.10} parent=1 // loop_header_branch
      %13 = sbr.rel (%p11) target = $region8
    $region5: #{fusegan_discriminator_forward.10} parent=1 // loop_body
      %s15 = ssub.s32 %s10, 1
      %s16 = ssub.s32 %s10, 2
      %s23 = sadd.s32 1, %s18
      %p24 = scmp.ge.s32.totalorder %s23, 4
      %s25 = scalar_select %p24, 0, %s23
      %s26 = sadd.s32 1, %s17
      %s27 = scalar_select %p24, %s26, %s17
      %p28 = scmp.ge.s32.totalorder %s27, 1
      %s29 = scalar_select %p28, 0, %s27
      %s30 = ssub.s32 %s18, %s25
      %p31 = scmp.eq.s32.totalorder %s30, 0
      %s33 = sadd.s32 %s32, 1
      %s34 = scalar_select %p31, %s32, %s33
      %p37 = pneg %p31
      %p38 = scmp.eq.s32.totalorder %s10, 3
      %p39 = por %p37, %p38
      %p40 = scmp.ne.s32.totalorder %s32, %s35
      %p41 = scmp.eq.s32.totalorder %s10, 0
      %p42 = por %p40, %p41
      %p43 = scmp.ne.s32.totalorder %s32, %s35
      %p44 = scmp.eq.s32.totalorder %s15, 3
      %p45 = por %p43, %p44
      %p46 = scmp.ne.s32.totalorder %s35, %s36
      %p47 = scmp.eq.s32.totalorder %s15, 0
      %p48 = por %p46, %p47
      %p49 = scmp.ne.s32.totalorder %s35, %s36
      %p50 = scmp.eq.s32.totalorder %s16, 3
      %p51 = por %p49, %p50
      %p53 = scmp.ne.s32.totalorder %s36, %s52
      %p54 = scmp.eq.s32.totalorder %s16, 0
      %p55 = por %p53, %p54
      %s56 = ssub.s32 %s18, %s25
      %s57 = ssub.s32 %s17, %s29
      %s58 = sor.u32 %s56, %s57
      %p59 = scmp.eq.s32.totalorder %s58, 0
      %s61 = sadd.s32 %s60, 1
      %s62 = scalar_select %p59, %s60, %s61
      %p65 = pneg %p59
      %p66 = scmp.eq.s32.totalorder %s10, 3
      %p67 = por %p65, %p66
      %p68 = scmp.ne.s32.totalorder %s60, %s63
      %p69 = scmp.eq.s32.totalorder %s10, 0
      %p70 = por %p68, %p69
      %p71 = scmp.ne.s32.totalorder %s60, %s63
      %p72 = scmp.eq.s32.totalorder %s15, 3
      %p73 = por %p71, %p72
      %p74 = scmp.ne.s32.totalorder %s63, %s64
      %p75 = scmp.eq.s32.totalorder %s15, 0
      %p76 = por %p74, %p75
      %p77 = scmp.ne.s32.totalorder %s63, %s64
      %p78 = scmp.eq.s32.totalorder %s16, 3
      %p79 = por %p77, %p78
      %p81 = scmp.ne.s32.totalorder %s64, %s80
      %p82 = scmp.eq.s32.totalorder %s16, 0
      %p83 = por %p81, %p82
      %s84 = ssub.s32 %s17, %s29
      %p85 = scmp.eq.s32.totalorder %s84, 0
      %s87 = sadd.s32 %s86, 1
      %s88 = scalar_select %p85, %s86, %s87
      %p91 = pneg %p85
      %p92 = scmp.eq.s32.totalorder %s10, 3
      %p93 = por %p91, %p92
      %p94 = scmp.ne.s32.totalorder %s86, %s89
      %p95 = scmp.eq.s32.totalorder %s10, 0
      %p96 = por %p94, %p95
      %p97 = scmp.ne.s32.totalorder %s86, %s89
      %p98 = scmp.eq.s32.totalorder %s15, 3
      %p99 = por %p97, %p98
      %p100 = scmp.ne.s32.totalorder %s89, %s90
      %p101 = scmp.eq.s32.totalorder %s15, 0
      %p102 = por %p100, %p101
      %p103 = scmp.ne.s32.totalorder %s89, %s90
      %p104 = scmp.eq.s32.totalorder %s16, 3
      %p105 = por %p103, %p104
      %p107 = scmp.ne.s32.totalorder %s90, %s106
      %p108 = scmp.eq.s32.totalorder %s16, 0
      %p109 = por %p107, %p108
      %s110 = ssub.s32 %s17, %s29
      %p111 = scmp.eq.s32.totalorder %s110, 0
      %s113 = sadd.s32 %s112, 1
      %s114 = scalar_select %p111, %s112, %s113
      %p117 = pneg %p111
      %p118 = scmp.eq.s32.totalorder %s10, 3
      %p119 = por %p117, %p118
      %p120 = scmp.ne.s32.totalorder %s112, %s115
      %p121 = scmp.eq.s32.totalorder %s10, 0
      %p122 = por %p120, %p121
      %p123 = scmp.ne.s32.totalorder %s112, %s115
      %p124 = scmp.eq.s32.totalorder %s15, 3
      %p125 = por %p123, %p124
      %p126 = scmp.ne.s32.totalorder %s115, %s116
      %p127 = scmp.eq.s32.totalorder %s15, 0
      %p128 = por %p126, %p127
      %p129 = scmp.ne.s32.totalorder %s115, %s116
      %p130 = scmp.eq.s32.totalorder %s16, 3
      %p131 = por %p129, %p130
      %p133 = scmp.ne.s32.totalorder %s116, %s132
      %p134 = scmp.eq.s32.totalorder %s16, 0
      %p135 = por %p133, %p134
      %s136 = ssub.s32 %s17, %s29
      %p137 = scmp.eq.s32.totalorder %s136, 0
      %s139 = sadd.s32 %s138, 1
      %s140 = scalar_select %p137, %s138, %s139
      %p143 = pneg %p137
      %p144 = scmp.eq.s32.totalorder %s10, 3
      %p145 = por %p143, %p144
      %p146 = scmp.ne.s32.totalorder %s138, %s141
      %p147 = scmp.eq.s32.totalorder %s10, 0
      %p148 = por %p146, %p147
      %p149 = scmp.ne.s32.totalorder %s138, %s141
      %p150 = scmp.eq.s32.totalorder %s15, 3
      %p151 = por %p149, %p150
      %p152 = scmp.ne.s32.totalorder %s141, %s142
      %p153 = scmp.eq.s32.totalorder %s15, 0
      %p154 = por %p152, %p153
      %p155 = scmp.ne.s32.totalorder %s141, %s142
      %p156 = scmp.eq.s32.totalorder %s16, 3
      %p157 = por %p155, %p156
      %p159 = scmp.ne.s32.totalorder %s142, %s158
      %p160 = scmp.eq.s32.totalorder %s16, 0
      %p161 = por %p159, %p160
      %p162 = scmp.le.s32.totalorder 1, %s10
      %p163 = scmp.lt.s32.totalorder %s10, 5
      %p164 = pnand %p162, %p163
      %p165 = pneg %p164
      // Predicated region
      $region9: #{fusegan_discriminator_forward.10} parent=5 // pred_check
        _
      $region10: #{fusegan_discriminator_forward.10} parent=5 // pred_check_branch
        %167 = sbr.rel (%p164) target = $region12
      $region11: #{fusegan_discriminator_forward.10} parent=5 // pred_region
        %s168 = ssub.s32 %s10, 1
        // Predicated region
        $region13: #{fusegan_discriminator_forward.10} parent=11 // pred_check
          %p169 = pneg %p102
        $region14: #{fusegan_discriminator_forward.10} parent=11 // pred_check_branch
          %171 = sbr.rel (%p169) target = $region16
        $region15: #{fusegan_discriminator_forward.10} parent=11 // pred_region
          %s172 = smul.u32 2, %s19
          %p173 = scmp.lt.s32.totalorder %s172, 1
          %s174 = scalar_select %p173, %s172, 1
          %s175 = scalar_lea.vmem %s2, %s174
          %s176 = smul.u32 2, %s19
        $region16: #{fusegan_discriminator_forward.10} parent=11 // pred_fallthru
          _
        // Predicated region
        $region17: #{fusegan_discriminator_forward.10} parent=11 // pred_check
          %p177 = pneg %p128
        $region18: #{fusegan_discriminator_forward.10} parent=11 // pred_check_branch
          %179 = sbr.rel (%p177) target = $region20
        $region19: #{fusegan_discriminator_forward.10} parent=11 // pred_region
          %s180 = smul.u32 2, %s19
          %p181 = scmp.lt.s32.totalorder %s180, 1
          %s182 = scalar_select %p181, %s180, 1
          %s183 = scalar_lea.vmem %s3, %s182
          %s184 = smul.u32 2, %s19
        $region20: #{fusegan_discriminator_forward.10} parent=11 // pred_fallthru
          _
      $region12: #{fusegan_discriminator_forward.10} parent=5 // pred_fallthru
        _
      %p185 = scmp.lt.s32.totalorder %s10, 4
      // Predicated region
      $region21: #{fusegan_discriminator_forward.10} parent=5 // pred_check
        %p186 = pneg %p185
      $region22: #{fusegan_discriminator_forward.10} parent=5 // pred_check_branch
        %188 = sbr.rel (%p186) target = $region24
      $region23: #{fusegan_discriminator_forward.10} parent=5 // pred_region
        // Predicated region
        $region25: #{fusegan_discriminator_forward.10} parent=23 // pred_check
          %p189 = pneg %p42
        $region26: #{fusegan_discriminator_forward.10} parent=23 // pred_check_branch
          %191 = sbr.rel (%p189) target = $region28
        $region27: #{fusegan_discriminator_forward.10} parent=23 // pred_region
          %s192 = sand.u32 %s32, 1
          %s193 = sand.u32 %s32, 1
          %s194 = smul.addr %s193, 96
          %s195 = scalar_lea.vmem [#allocation3], %s194
          %s196 = smul.u32 4, %s18
          %s197 = smul.addr %s196, 8
          %s198 = scalar_lea.vmem %s0, %s197
          // Predicated region
          $region29: #{fusegan_discriminator_forward.10} parent=27 // pred_check
            _
          $region30: #{fusegan_discriminator_forward.10} parent=27 // pred_check_branch
            %200 = sbr.rel (0) target = $region32
          $region31: #{fusegan_discriminator_forward.10} parent=27 // pred_region
            // Predicated region
            $region33: #{fusegan_discriminator_forward.10} parent=31 // pred_check
              _
            $region34: #{fusegan_discriminator_forward.10} parent=31 // pred_check_branch
              %202 = sbr.rel (0) target = $region36
            $region35: #{fusegan_discriminator_forward.10} parent=31 // pred_region
              loop: start=0, step=1, limit=1
              $region37: #{fusegan_discriminator_forward.10} parent=35 // loop_pre_header
                _
              $region38: #{fusegan_discriminator_forward.10} parent=35 // loop_header
                %s204 = sphi 0, %s208
                %p205 = scmp.ge.s32.totalorder %s204, 1
                %s209 = sphi %s198, %s198
                %s210 = sphi %s195, %s195
              $region39: #{fusegan_discriminator_forward.10} parent=35 // loop_header_branch
                %207 = sbr.rel (%p205) target = $region43
              $region40: #{fusegan_discriminator_forward.10} parent=35 // loop_body
                %v211 = vld [vmem:[%s209] sm:$0xff]
                %212 = vst [vmem:[%s210] sm:$0xff] %v211
                %v213 = vld [vmem:[%s209 + $0x8] sm:$0xff]
                %214 = vst [vmem:[%s210 + $0x8] sm:$0xff] %v213
                %v215 = vld [vmem:[%s209 + $0x10] sm:$0xff]
                %216 = vst [vmem:[%s210 + $0x10] sm:$0xff] %v215
                %v217 = vld [vmem:[%s209 + $0x18] sm:$0xff]
                %218 = vst [vmem:[%s210 + $0x18] sm:$0xff] %v217
                %v219 = vld [vmem:[%s209 + $0x80] sm:$0xff]
                %220 = vst [vmem:[%s210 + $0x20] sm:$0xff] %v219
                %v221 = vld [vmem:[%s209 + $0x88] sm:$0xff]
                %222 = vst [vmem:[%s210 + $0x28] sm:$0xff] %v221
                %v223 = vld [vmem:[%s209 + $0x90] sm:$0xff]
                %224 = vst [vmem:[%s210 + $0x30] sm:$0xff] %v223
                %v225 = vld [vmem:[%s209 + $0x98] sm:$0xff]
                %226 = vst [vmem:[%s210 + $0x38] sm:$0xff] %v225
                %v227 = vld [vmem:[%s209 + $0x100] sm:$0xff]
                %228 = vst [vmem:[%s210 + $0x40] sm:$0xff] %v227
                %v229 = vld [vmem:[%s209 + $0x108] sm:$0xff]
                %230 = vst [vmem:[%s210 + $0x48] sm:$0xff] %v229
                %v231 = vld [vmem:[%s209 + $0x110] sm:$0xff]
                %232 = vst [vmem:[%s210 + $0x50] sm:$0xff] %v231
                %v233 = vld [vmem:[%s209 + $0x118] sm:$0xff]
                %234 = vst [vmem:[%s210 + $0x58] sm:$0xff] %v233
              $region41: #{fusegan_discriminator_forward.10} parent=35 // loop_footer
                %s208 = sadd.s32 1, %s204
              $region42: #{fusegan_discriminator_forward.10} parent=35 // loop_footer_branch
                %203 = sbr.rel target = $region38
              $region43: #{fusegan_discriminator_forward.10} parent=35 // loop_exit
                _
            $region36: #{fusegan_discriminator_forward.10} parent=31 // pred_fallthru
              _
            // Predicated region
            $region44: #{fusegan_discriminator_forward.10} parent=31 // pred_check
              _
            $region45: #{fusegan_discriminator_forward.10} parent=31 // pred_check_branch
              %236 = sbr.rel target = $region47
            $region46: #{fusegan_discriminator_forward.10} parent=31 // pred_region
              _
            $region47: #{fusegan_discriminator_forward.10} parent=31 // pred_fallthru
              _
          $region32: #{fusegan_discriminator_forward.10} parent=27 // pred_fallthru
            _
          %237 = vnop
        $region28: #{fusegan_discriminator_forward.10} parent=23 // pred_fallthru
          _
        // Predicated region
        $region48: #{fusegan_discriminator_forward.10} parent=23 // pred_check
          %p238 = pneg %p70
        $region49: #{fusegan_discriminator_forward.10} parent=23 // pred_check_branch
          %240 = sbr.rel (%p238) target = $region51
        $region50: #{fusegan_discriminator_forward.10} parent=23 // pred_region
          %s241 = smul.u32 64, %s18
          %s242 = smul.u32 2, %s17
          %p243 = scmp.lt.s32.totalorder %s241, 255
          %s244 = scalar_select %p243, %s241, 255
          %p245 = scmp.lt.s32.totalorder %s242, 1
          %s246 = scalar_select %p245, %s242, 1
          %s247 = smul.addr %s244, 2
          %s248 = sadd.s32 %s246, %s247
          %s249 = smul.addr %s248, 8
          %s250 = scalar_lea.vmem %s1, %s249
          %s251 = smul.u32 64, %s18
          %s252 = smul.u32 2, %s17
        $region51: #{fusegan_discriminator_forward.10} parent=23 // pred_fallthru
          _
      $region24: #{fusegan_discriminator_forward.10} parent=5 // pred_fallthru
        _
      %p253 = scmp.le.s32.totalorder 1, %s10
      %p254 = scmp.lt.s32.totalorder %s10, 5
      %p255 = pnand %p253, %p254
      %p256 = pneg %p255
      // Predicated region
      $region52: #{fusegan_discriminator_forward.10} parent=5 // pred_check
        _
      $region53: #{fusegan_discriminator_forward.10} parent=5 // pred_check_branch
        %258 = sbr.rel (%p255) target = $region55
      $region54: #{fusegan_discriminator_forward.10} parent=5 // pred_region
        %s259 = ssub.s32 %s10, 1
        %s260 = sand.u32 %s35, 1
        %s261 = sand.u32 %s35, 1
        %s262 = smul.addr %s261, 96
        %s263 = scalar_lea.vmem [#allocation3], %s262
        // Predicated region
        $region56: #{fusegan_discriminator_forward.10} parent=54 // pred_check
          %p264 = pneg %p48
        $region57: #{fusegan_discriminator_forward.10} parent=54 // pred_check_branch
          %266 = sbr.rel (%p264) target = $region59
        $region58: #{fusegan_discriminator_forward.10} parent=54 // pred_region
          _
        $region59: #{fusegan_discriminator_forward.10} parent=54 // pred_fallthru
          _
        %s267 = sand.u32 %s35, 1
        %s268 = sand.u32 %s35, 1
        %s269 = smul.addr %s268, 96
        %s270 = scalar_lea.vmem [#allocation3], %s269
        %p271 = pneg %p48
        %p272 = pneg %p45
        %s273 = smul.u32 64, %s20
        %s274 = smul.u32 2, %s19
        %p275 = scmp.lt.s32.totalorder %s273, 255
        %s276 = scalar_select %p275, %s273, 255
        %p277 = scmp.lt.s32.totalorder %s274, 1
        %s278 = scalar_select %p277, %s274, 1
        %s279 = smul.addr %s276, 2
        %s280 = sadd.s32 %s278, %s279
        %s281 = smul.addr %s280, 8
        %s282 = scalar_lea.vmem %s1, %s281
        %p283 = pneg %p76
        %p284 = pneg %p73
        %s285 = smul.u32 2, %s19
        %p286 = scmp.lt.s32.totalorder %s285, 1
        %s287 = scalar_select %p286, %s285, 1
        %s288 = scalar_lea.vmem %s2, %s287
        %p289 = pneg %p102
        %p290 = pneg %p99
        %s291 = smul.u32 2, %s19
        %p292 = scmp.lt.s32.totalorder %s291, 1
        %s293 = scalar_select %p292, %s291, 1
        %s294 = scalar_lea.vmem %s3, %s293
        %p295 = pneg %p128
        %p296 = pneg %p125
        %p297 = pneg %p154
        %p298 = pneg %p151
        %s299 = smul.u32 2, %s19
        %p300 = scmp.lt.s32.totalorder %s299, 1
        %s301 = scalar_select %p300, %s299, 1
        %s302 = smul.addr %s301, 8
        %s303 = scalar_lea.vmem %s4, %s302
        %s304 = smul.u32 4, %s20
        %s305 = smul.u32 64, %s20
        %s306 = smul.u32 2, %s19
        %p307 = scmp.lt.s32.totalorder %s305, 255
        %s308 = scalar_select %p307, %s305, 255
        %p309 = scmp.lt.s32.totalorder %s306, 1
        %s310 = scalar_select %p309, %s306, 1
        %s311 = smul.addr %s308, 2
        %s312 = sadd.s32 %s310, %s311
        %s313 = smul.addr %s312, 8
        %s314 = scalar_lea.vmem %s1, %s313
        %s315 = smul.u32 64, %s20
        %s316 = smul.u32 2, %s19
        %s317 = smul.u32 2, %s19
        %p318 = scmp.lt.s32.totalorder %s317, 1
        %s319 = scalar_select %p318, %s317, 1
        %s320 = scalar_lea.vmem %s2, %s319
        %s321 = smul.u32 2, %s19
        %s322 = smul.u32 2, %s19
        %p323 = scmp.lt.s32.totalorder %s322, 1
        %s324 = scalar_select %p323, %s322, 1
        %s325 = scalar_lea.vmem %s3, %s324
        %s326 = smul.u32 2, %s19
        %s327 = smul.u32 2, %s19
        %p328 = scmp.lt.s32.totalorder %s327, 1
        %s329 = scalar_select %p328, %s327, 1
        %s330 = smul.addr %s329, 8
        %s331 = scalar_lea.vmem %s4, %s330
        %s332 = smul.u32 2, %s19
        %p333 = scmp.eq.s32.totalorder %s20, 0
        // Predicated region
        $region60: #{fusegan_discriminator_forward.10} parent=54 // pred_check
          %p334 = pneg %p333
        $region61: #{fusegan_discriminator_forward.10} parent=54 // pred_check_branch
          %336 = sbr.rel (%p334) target = $region63
        $region62: #{fusegan_discriminator_forward.10} parent=54 // pred_region
          %337 = vst [vmem:[#allocation2] sm:$0xff] 0.0
          %338 = vst [vmem:[#allocation2 + $0x8] sm:$0xff] 0.0
          %339 = vst [vmem:[#allocation2 + $0x10] sm:$0xff] 0.0
          %340 = vst [vmem:[#allocation2 + $0x18] sm:$0xff] 0.0
          %341 = vst [vmem:[#allocation2 + $0x20] sm:$0x3] 0.0
          %342 = vst [vmem:[#allocation2 + $0x28] sm:$0x3] 0.0
        $region63: #{fusegan_discriminator_forward.10} parent=54 // pred_fallthru
          _
        %v343 = vld [vmem:[#allocation2] sm:$0xff]
        %v344 = vld [vmem:[#allocation2 + $0x8] sm:$0xff]
        %v345 = vld [vmem:[#allocation2 + $0x10] sm:$0xff]
        %v346 = vld [vmem:[#allocation2 + $0x18] sm:$0xff]
        %v347 = vld [vmem:[#allocation2 + $0x20] sm:$0x3]
        %v348 = vld [vmem:[#allocation2 + $0x28] sm:$0x3]
        %v349 = vld [vmem:[%s263] sm:$0xff]
        %v350 = vld [vmem:[%s263 + $0x8] sm:$0xff]
        %v351 = vld [vmem:[%s263 + $0x10] sm:$0xff]
        %v352 = vld [vmem:[%s263 + $0x18] sm:$0xff]
        %v353 = vld [vmem:[%s263 + $0x20] sm:$0xff]
        %v354 = vld [vmem:[%s263 + $0x28] sm:$0xff]
        %v355 = vld [vmem:[%s263 + $0x30] sm:$0xff]
        %v356 = vld [vmem:[%s263 + $0x38] sm:$0xff]
        %v357 = vld [vmem:[%s263 + $0x40] sm:$0x3]
        %v358 = vld [vmem:[%s263 + $0x48] sm:$0x3]
        %v359 = vld [vmem:[%s263 + $0x50] sm:$0x3]
        %v360 = vld [vmem:[%s263 + $0x58] sm:$0x3]
        %v361 = vld [vmem:[%s314] sm:$0xff]
        %v362 = vld [vmem:[%s314 + $0x8] sm:$0xff]
        %v363 = vld [vmem:[%s314 + $0x10] sm:$0xff]
        %v364 = vld [vmem:[%s314 + $0x18] sm:$0xff]
        %v365 = vld [vmem:[%s314 + $0x20] sm:$0xff]
        %v366 = vld [vmem:[%s314 + $0x28] sm:$0xff]
        %v367 = vld [vmem:[%s314 + $0x30] sm:$0xff]
        %v368 = vld [vmem:[%s314 + $0x38] sm:$0xff]
        %v369 = vld [vmem:[%s314 + $0x40] sm:$0xff]
        %v370 = vld [vmem:[%s314 + $0x48] sm:$0xff]
        %v371 = vld [vmem:[%s314 + $0x50] sm:$0xff]
        %v372 = vld [vmem:[%s314 + $0x58] sm:$0xff]
        %v373 = vld [vmem:[%s314 + $0x60] sm:$0xff]
        %v374 = vld [vmem:[%s314 + $0x68] sm:$0xff]
        %v375 = vld [vmem:[%s314 + $0x70] sm:$0xff]
        %v376 = vld [vmem:[%s314 + $0x78] sm:$0xff]
        %v377 = vld [vmem:[%s314 + $0x80] sm:$0xff]
        %v378 = vld [vmem:[%s314 + $0x88] sm:$0xff]
        %v379 = vld [vmem:[%s314 + $0x90] sm:$0xff]
        %v380 = vld [vmem:[%s314 + $0x98] sm:$0xff]
        %v381 = vld [vmem:[%s314 + $0xa0] sm:$0xff]
        %v382 = vld [vmem:[%s314 + $0xa8] sm:$0xff]
        %v383 = vld [vmem:[%s314 + $0xb0] sm:$0xff]
        %v384 = vld [vmem:[%s314 + $0xb8] sm:$0xff]
        %v385 = vld [vmem:[%s314 + $0xc0] sm:$0xff]
        %v386 = vld [vmem:[%s314 + $0xc8] sm:$0xff]
        %v387 = vld [vmem:[%s314 + $0xd0] sm:$0xff]
        %v388 = vld [vmem:[%s314 + $0xd8] sm:$0xff]
        %v389 = vld [vmem:[%s314 + $0xe0] sm:$0xff]
        %v390 = vld [vmem:[%s314 + $0xe8] sm:$0xff]
        %v391 = vld [vmem:[%s314 + $0xf0] sm:$0xff]
        %v392 = vld [vmem:[%s314 + $0xf8] sm:$0xff]
        %v393 = vld [vmem:[%s314 + $0x100] sm:$0xff]
        %v394 = vld [vmem:[%s314 + $0x108] sm:$0xff]
        %v395 = vld [vmem:[%s314 + $0x110] sm:$0xff]
        %v396 = vld [vmem:[%s314 + $0x118] sm:$0xff]
        %v397 = vld [vmem:[%s314 + $0x120] sm:$0xff]
        %v398 = vld [vmem:[%s314 + $0x128] sm:$0xff]
        %v399 = vld [vmem:[%s314 + $0x130] sm:$0xff]
        %v400 = vld [vmem:[%s314 + $0x138] sm:$0xff]
        %v401 = vld [vmem:[%s314 + $0x140] sm:$0xff]
        %v402 = vld [vmem:[%s314 + $0x148] sm:$0xff]
        %v403 = vld [vmem:[%s314 + $0x150] sm:$0xff]
        %v404 = vld [vmem:[%s314 + $0x158] sm:$0xff]
        %v405 = vld [vmem:[%s314 + $0x160] sm:$0xff]
        %v406 = vld [vmem:[%s314 + $0x168] sm:$0xff]
        %v407 = vld [vmem:[%s314 + $0x170] sm:$0xff]
        %v408 = vld [vmem:[%s314 + $0x178] sm:$0xff]
        %v409 = vld [vmem:[%s314 + $0x180] sm:$0xff]
        %v410 = vld [vmem:[%s314 + $0x188] sm:$0xff]
        %v411 = vld [vmem:[%s314 + $0x190] sm:$0xff]
        %v412 = vld [vmem:[%s314 + $0x198] sm:$0xff]
        %v413 = vld [vmem:[%s314 + $0x1a0] sm:$0xff]
        %v414 = vld [vmem:[%s314 + $0x1a8] sm:$0xff]
        %v415 = vld [vmem:[%s314 + $0x1b0] sm:$0xff]
        %v416 = vld [vmem:[%s314 + $0x1b8] sm:$0xff]
        %v417 = vld [vmem:[%s314 + $0x1c0] sm:$0xff]
        %v418 = vld [vmem:[%s314 + $0x1c8] sm:$0xff]
        %v419 = vld [vmem:[%s314 + $0x1d0] sm:$0xff]
        %v420 = vld [vmem:[%s314 + $0x1d8] sm:$0xff]
        %v421 = vld [vmem:[%s314 + $0x1e0] sm:$0xff]
        %v422 = vld [vmem:[%s314 + $0x1e8] sm:$0xff]
        %v423 = vld [vmem:[%s314 + $0x1f0] sm:$0xff]
        %v424 = vld [vmem:[%s314 + $0x1f8] sm:$0xff]
        %v425 = vld [vmem:[%s314 + $0x200] sm:$0xff]
        %v426 = vld [vmem:[%s314 + $0x208] sm:$0xff]
        %v427 = vld [vmem:[%s314 + $0x210] sm:$0xff]
        %v428 = vld [vmem:[%s314 + $0x218] sm:$0xff]
        %v429 = vld [vmem:[%s314 + $0x220] sm:$0xff]
        %v430 = vld [vmem:[%s314 + $0x228] sm:$0xff]
        %v431 = vld [vmem:[%s314 + $0x230] sm:$0xff]
        %v432 = vld [vmem:[%s314 + $0x238] sm:$0xff]
        %v433 = vld [vmem:[%s314 + $0x240] sm:$0xff]
        %v434 = vld [vmem:[%s314 + $0x248] sm:$0xff]
        %v435 = vld [vmem:[%s314 + $0x250] sm:$0xff]
        %v436 = vld [vmem:[%s314 + $0x258] sm:$0xff]
        %v437 = vld [vmem:[%s314 + $0x260] sm:$0xff]
        %v438 = vld [vmem:[%s314 + $0x268] sm:$0xff]
        %v439 = vld [vmem:[%s314 + $0x270] sm:$0xff]
        %v440 = vld [vmem:[%s314 + $0x278] sm:$0xff]
        %v441 = vld [vmem:[%s314 + $0x280] sm:$0xff]
        %v442 = vld [vmem:[%s314 + $0x288] sm:$0xff]
        %v443 = vld [vmem:[%s314 + $0x290] sm:$0xff]
        %v444 = vld [vmem:[%s314 + $0x298] sm:$0xff]
        %v445 = vld [vmem:[%s314 + $0x2a0] sm:$0xff]
        %v446 = vld [vmem:[%s314 + $0x2a8] sm:$0xff]
        %v447 = vld [vmem:[%s314 + $0x2b0] sm:$0xff]
        %v448 = vld [vmem:[%s314 + $0x2b8] sm:$0xff]
        %v449 = vld [vmem:[%s314 + $0x2c0] sm:$0xff]
        %v450 = vld [vmem:[%s314 + $0x2c8] sm:$0xff]
        %v451 = vld [vmem:[%s314 + $0x2d0] sm:$0xff]
        %v452 = vld [vmem:[%s314 + $0x2d8] sm:$0xff]
        %v453 = vld [vmem:[%s314 + $0x2e0] sm:$0xff]
        %v454 = vld [vmem:[%s314 + $0x2e8] sm:$0xff]
        %v455 = vld [vmem:[%s314 + $0x2f0] sm:$0xff]
        %v456 = vld [vmem:[%s314 + $0x2f8] sm:$0xff]
        %v457 = vld [vmem:[%s314 + $0x300] sm:$0xff]
        %v458 = vld [vmem:[%s314 + $0x308] sm:$0xff]
        %v459 = vld [vmem:[%s314 + $0x310] sm:$0xff]
        %v460 = vld [vmem:[%s314 + $0x318] sm:$0xff]
        %v461 = vld [vmem:[%s314 + $0x320] sm:$0xff]
        %v462 = vld [vmem:[%s314 + $0x328] sm:$0xff]
        %v463 = vld [vmem:[%s314 + $0x330] sm:$0xff]
        %v464 = vld [vmem:[%s314 + $0x338] sm:$0xff]
        %v465 = vld [vmem:[%s314 + $0x340] sm:$0xff]
        %v466 = vld [vmem:[%s314 + $0x348] sm:$0xff]
        %v467 = vld [vmem:[%s314 + $0x350] sm:$0xff]
        %v468 = vld [vmem:[%s314 + $0x358] sm:$0xff]
        %v469 = vld [vmem:[%s314 + $0x360] sm:$0xff]
        %v470 = vld [vmem:[%s314 + $0x368] sm:$0xff]
        %v471 = vld [vmem:[%s314 + $0x370] sm:$0xff]
        %v472 = vld [vmem:[%s314 + $0x378] sm:$0xff]
        %v473 = vld [vmem:[%s314 + $0x380] sm:$0xff]
        %v474 = vld [vmem:[%s314 + $0x388] sm:$0xff]
        %v475 = vld [vmem:[%s314 + $0x390] sm:$0xff]
        %v476 = vld [vmem:[%s314 + $0x398] sm:$0xff]
        %v477 = vld [vmem:[%s314 + $0x3a0] sm:$0xff]
        %v478 = vld [vmem:[%s314 + $0x3a8] sm:$0xff]
        %v479 = vld [vmem:[%s314 + $0x3b0] sm:$0xff]
        %v480 = vld [vmem:[%s314 + $0x3b8] sm:$0xff]
        %v481 = vld [vmem:[%s314 + $0x3c0] sm:$0xff]
        %v482 = vld [vmem:[%s314 + $0x3c8] sm:$0xff]
        %v483 = vld [vmem:[%s314 + $0x3d0] sm:$0xff]
        %v484 = vld [vmem:[%s314 + $0x3d8] sm:$0xff]
        %v485 = vld [vmem:[%s314 + $0x3e0] sm:$0xff]
        %v486 = vld [vmem:[%s314 + $0x3e8] sm:$0xff]
        %v487 = vld [vmem:[%s314 + $0x3f0] sm:$0xff]
        %v488 = vld [vmem:[%s314 + $0x3f8] sm:$0xff]
        %489 = vmatprep.subr.mxu0 %v392
        %490 = vmatpush1.msra.mxu0 %v391
        %491 = vmatprep.subr.mxu0 %v390
        %492 = vmatpush1.msra.mxu0 %v389
        %493 = vmatprep.subr.mxu0 %v388
        %494 = vmatpush1.msra.mxu0 %v387
        %495 = vmatprep.subr.mxu0 %v386
        %496 = vmatpush1.msra.mxu0 %v385
        %497 = vmatprep.subr.mxu0 %v384
        %498 = vmatpush1.msra.mxu0 %v383
        %499 = vmatprep.subr.mxu0 %v382
        %500 = vmatpush1.msra.mxu0 %v381
        %501 = vmatprep.subr.mxu0 %v380
        %502 = vmatpush1.msra.mxu0 %v379
        %503 = vmatprep.subr.mxu0 %v378
        %504 = vmatpush1.msra.mxu0 %v377
        %505 = vmatprep.subr.mxu0 %v376
        %506 = vmatpush1.msra.mxu0 %v375
        %507 = vmatprep.subr.mxu0 %v374
        %508 = vmatpush1.msra.mxu0 %v373
        %509 = vmatprep.subr.mxu0 %v372
        %510 = vmatpush1.msra.mxu0 %v371
        %511 = vmatprep.subr.mxu0 %v370
        %512 = vmatpush1.msra.mxu0 %v369
        %513 = vmatprep.subr.mxu0 %v368
        %514 = vmatpush1.msra.mxu0 %v367
        %515 = vmatprep.subr.mxu0 %v366
        %516 = vmatpush1.msra.mxu0 %v365
        %517 = vmatprep.subr.mxu0 %v364
        %518 = vmatpush1.msra.mxu0 %v363
        %519 = vmatprep.subr.mxu0 %v362
        %520 = vmatpush1.msra.mxu0 %v361
        %521 = vmatprep.subr.mxu0 %v424
        %522 = vmatpush2.msra.mxu0 %v423
        %523 = vmatprep.subr.mxu0 %v422
        %524 = vmatpush2.msra.mxu0 %v421
        %525 = vmatprep.subr.mxu0 %v420
        %526 = vmatpush2.msra.mxu0 %v419
        %527 = vmatprep.subr.mxu0 %v418
        %528 = vmatpush2.msra.mxu0 %v417
        %529 = vmatprep.subr.mxu0 %v416
        %530 = vmatpush2.msra.mxu0 %v415
        %531 = vmatprep.subr.mxu0 %v414
        %532 = vmatpush2.msra.mxu0 %v413
        %533 = vmatprep.subr.mxu0 %v412
        %534 = vmatpush2.msra.mxu0 %v411
        %535 = vmatprep.subr.mxu0 %v410
        %536 = vmatpush2.msra.mxu0 %v409
        %537 = vmatprep.subr.mxu0 %v408
        %538 = vmatpush2.msra.mxu0 %v407
        %539 = vmatprep.subr.mxu0 %v406
        %540 = vmatpush2.msra.mxu0 %v405
        %541 = vmatprep.subr.mxu0 %v404
        %542 = vmatpush2.msra.mxu0 %v403
        %543 = vmatprep.subr.mxu0 %v402
        %544 = vmatpush2.msra.mxu0 %v401
        %545 = vmatprep.subr.mxu0 %v400
        %546 = vmatpush2.msra.mxu0 %v399
        %547 = vmatprep.subr.mxu0 %v398
        %548 = vmatpush2.msra.mxu0 %v397
        %549 = vmatprep.subr.mxu0 %v396
        %550 = vmatpush2.msra.mxu0 %v395
        %551 = vmatprep.subr.mxu0 %v394
        %552 = vmatpush2.msra.mxu0 %v393
        %553 = vmatprep.mubr.f32.mxu0 %v350
        %554 = vmatmul.mubr.f32.gmra.mxu0 %v349
        %v555 = vpop.f32.mrf.mxu0
        %v556 = vadd.f32 0.0, %v555
        %v557 = vpop.f32.mrf.mxu0
        %v558 = vadd.f32 0.0, %v557
        %559 = vmatprep.mubr.f32.mxu0 %v354
        %560 = vmatmul.mubr.f32.gmra.mxu0 %v353
        %v561 = vpop.f32.mrf.mxu0
        %v562 = vadd.f32 0.0, %v561
        %v563 = vpop.f32.mrf.mxu0
        %v564 = vadd.f32 0.0, %v563
        %565 = vmatprep.mubr.f32.mxu0 %v358
        %566 = vmatmul.mubr.f32.gmra.mxu0 %v357
        %v567 = vpop.f32.mrf.mxu0
        %v568 = vadd.f32 0.0, %v567
        %v569 = vpop.f32.mrf.mxu0
        %v570 = vadd.f32 0.0, %v569
        %571 = vdwg.mxu0
        %572 = vmatprep.subr.mxu0 %v456
        %573 = vmatpush1.msra.mxu0 %v455
        %574 = vmatprep.subr.mxu0 %v454
        %575 = vmatpush1.msra.mxu0 %v453
        %576 = vmatprep.subr.mxu0 %v452
        %577 = vmatpush1.msra.mxu0 %v451
        %578 = vmatprep.subr.mxu0 %v450
        %579 = vmatpush1.msra.mxu0 %v449
        %580 = vmatprep.subr.mxu0 %v448
        %581 = vmatpush1.msra.mxu0 %v447
        %582 = vmatprep.subr.mxu0 %v446
        %583 = vmatpush1.msra.mxu0 %v445
        %584 = vmatprep.subr.mxu0 %v444
        %585 = vmatpush1.msra.mxu0 %v443
        %586 = vmatprep.subr.mxu0 %v442
        %587 = vmatpush1.msra.mxu0 %v441
        %588 = vmatprep.subr.mxu0 %v440
        %589 = vmatpush1.msra.mxu0 %v439
        %590 = vmatprep.subr.mxu0 %v438
        %591 = vmatpush1.msra.mxu0 %v437
        %592 = vmatprep.subr.mxu0 %v436
        %593 = vmatpush1.msra.mxu0 %v435
        %594 = vmatprep.subr.mxu0 %v434
        %595 = vmatpush1.msra.mxu0 %v433
        %596 = vmatprep.subr.mxu0 %v432
        %597 = vmatpush1.msra.mxu0 %v431
        %598 = vmatprep.subr.mxu0 %v430
        %599 = vmatpush1.msra.mxu0 %v429
        %600 = vmatprep.subr.mxu0 %v428
        %601 = vmatpush1.msra.mxu0 %v427
        %602 = vmatprep.subr.mxu0 %v426
        %603 = vmatpush1.msra.mxu0 %v425
        %604 = vmatprep.subr.mxu0 %v488
        %605 = vmatpush2.msra.mxu0 %v487
        %606 = vmatprep.subr.mxu0 %v486
        %607 = vmatpush2.msra.mxu0 %v485
        %608 = vmatprep.subr.mxu0 %v484
        %609 = vmatpush2.msra.mxu0 %v483
        %610 = vmatprep.subr.mxu0 %v482
        %611 = vmatpush2.msra.mxu0 %v481
        %612 = vmatprep.subr.mxu0 %v480
        %613 = vmatpush2.msra.mxu0 %v479
        %614 = vmatprep.subr.mxu0 %v478
        %615 = vmatpush2.msra.mxu0 %v477
        %616 = vmatprep.subr.mxu0 %v476
        %617 = vmatpush2.msra.mxu0 %v475
        %618 = vmatprep.subr.mxu0 %v474
        %619 = vmatpush2.msra.mxu0 %v473
        %620 = vmatprep.subr.mxu0 %v472
        %621 = vmatpush2.msra.mxu0 %v471
        %622 = vmatprep.subr.mxu0 %v470
        %623 = vmatpush2.msra.mxu0 %v469
        %624 = vmatprep.subr.mxu0 %v468
        %625 = vmatpush2.msra.mxu0 %v467
        %626 = vmatprep.subr.mxu0 %v466
        %627 = vmatpush2.msra.mxu0 %v465
        %628 = vmatprep.subr.mxu0 %v464
        %629 = vmatpush2.msra.mxu0 %v463
        %630 = vmatprep.subr.mxu0 %v462
        %631 = vmatpush2.msra.mxu0 %v461
        %632 = vmatprep.subr.mxu0 %v460
        %633 = vmatpush2.msra.mxu0 %v459
        %634 = vmatprep.subr.mxu0 %v458
        %635 = vmatpush2.msra.mxu0 %v457
        %636 = vmatprep.mubr.f32.mxu0 %v352
        %637 = vmatmul.mubr.f32.gmra.mxu0 %v351
        %v638 = vpop.f32.mrf.mxu0
        %v639 = vadd.f32 %v556, %v638
        %v640 = vpop.f32.mrf.mxu0
        %v641 = vadd.f32 %v558, %v640
        %642 = vmatprep.mubr.f32.mxu0 %v356
        %643 = vmatmul.mubr.f32.gmra.mxu0 %v355
        %v644 = vpop.f32.mrf.mxu0
        %v645 = vadd.f32 %v562, %v644
        %v646 = vpop.f32.mrf.mxu0
        %v647 = vadd.f32 %v564, %v646
        %648 = vmatprep.mubr.f32.mxu0 %v360
        %649 = vmatmul.mubr.f32.gmra.mxu0 %v359
        %v650 = vpop.f32.mrf.mxu0
        %v651 = vadd.f32 %v568, %v650
        %v652 = vpop.f32.mrf.mxu0
        %v653 = vadd.f32 %v570, %v652
        %654 = vdwg.mxu0
        %v655 = vadd.f32 %v343, %v639
        %v656 = vadd.f32 %v344, %v641
        %v657 = vadd.f32 %v345, %v645
        %v658 = vadd.f32 %v346, %v647
        %v659 = vadd.f32 %v347, %v651
        %v660 = vadd.f32 %v348, %v653
        %661 = vst [vmem:[#allocation2] sm:$0xff] %v655
        %662 = vst [vmem:[#allocation2 + $0x8] sm:$0xff] %v656
        %663 = vst [vmem:[#allocation2 + $0x10] sm:$0xff] %v657
        %664 = vst [vmem:[#allocation2 + $0x18] sm:$0xff] %v658
        %665 = vst [vmem:[#allocation2 + $0x20] sm:$0x3] %v659
        %666 = vst [vmem:[#allocation2 + $0x28] sm:$0x3] %v660
        %p667 = scmp.eq.s32.totalorder %s20, 3
        // Predicated region
        $region64: #{fusegan_discriminator_forward.10} parent=54 // pred_check
          %p668 = pneg %p667
        $region65: #{fusegan_discriminator_forward.10} parent=54 // pred_check_branch
          %670 = sbr.rel (%p668) target = $region67
        $region66: #{fusegan_discriminator_forward.10} parent=54 // pred_region
          %v671 = vld [vmem:[#allocation2] sm:$0xff]
          %v672 = vld [vmem:[#allocation2 + $0x8] sm:$0xff]
          %v673 = vld [vmem:[#allocation2 + $0x10] sm:$0xff]
          %v674 = vld [vmem:[#allocation2 + $0x18] sm:$0xff]
          %v675 = vld [vmem:[#allocation2 + $0x20] sm:$0x3]
          %v676 = vld [vmem:[#allocation2 + $0x28] sm:$0x3]
          %v677 = vadd.f32 %v671, %v673
          %vm678 = vcmask 1041408
          %v679 = vsel %vm678, %v675, 0.0
          %v680 = vadd.f32 %v677, %v679
          %v681 = vrot.slane %v680, 4
          %v682 = vadd.f32 %v680, %v681
          %v683 = vrot.slane %v682, 2
          %v684 = vadd.f32 %v682, %v683
          %v685 = vrot.slane %v684, 1
          %v686 = vadd.f32 %v684, %v685
          %v687 = vadd.f32 %v672, %v674
          %v688 = vsel %vm678, %v676, 0.0
          %v689 = vadd.f32 %v687, %v688
          %v690 = vrot.slane %v689, 4
          %v691 = vadd.f32 %v689, %v690
          %v692 = vrot.slane %v691, 2
          %v693 = vadd.f32 %v691, %v692
          %v694 = vrot.slane %v693, 1
          %v695 = vadd.f32 %v693, %v694
          %v696 = vmul.f32 %v686, 0.055555556
          %v697 = vmul.f32 %v695, 0.055555556
          %v698 = vsub.f32 %v671, %v696
          %v699 = vsub.f32 %v672, %v697
          %v700 = vsub.f32 %v673, %v696
          %v701 = vsub.f32 %v674, %v697
          %v702 = vsub.f32 %v675, %v696
          %v703 = vsub.f32 %v676, %v697
          %v704 = vmul.f32 %v698, %v698
          %v705 = vmul.f32 %v699, %v699
          %v706 = vmul.f32 %v700, %v700
          %v707 = vmul.f32 %v701, %v701
          %v708 = vmul.f32 %v702, %v702
          %v709 = vmul.f32 %v703, %v703
          %v710 = vadd.f32 %v704, %v706
          %v711 = vsel %vm678, %v708, 0.0
          %v712 = vadd.f32 %v710, %v711
          %v713 = vrot.slane %v712, 4
          %v714 = vadd.f32 %v712, %v713
          %v715 = vrot.slane %v714, 2
          %v716 = vadd.f32 %v714, %v715
          %v717 = vrot.slane %v716, 1
          %v718 = vadd.f32 %v716, %v717
          %v719 = vadd.f32 %v705, %v707
          %v720 = vsel %vm678, %v709, 0.0
          %v721 = vadd.f32 %v719, %v720
          %v722 = vrot.slane %v721, 4
          %v723 = vadd.f32 %v721, %v722
          %v724 = vrot.slane %v723, 2
          %v725 = vadd.f32 %v723, %v724
          %v726 = vrot.slane %v725, 1
          %v727 = vadd.f32 %v725, %v726
          %v728 = vmul.f32 %v718, 0.055555556
          %v729 = vmul.f32 %v727, 0.055555556
          %v730 = vld [vmem:[%s320] sm:$0x3]
          %v731 = vadd.f32 %v728, 1e-05
          %v732 = vadd.f32 %v729, 1e-05
          %v733 = vrsqrt.pop %v731
          %v734 = vrsqrt.pop %v732
          %v737 = vcombine.low %v733, %v734
          %v739 = vunpack.c.l.s4 1966171168
          %v740 = vunpack.c.0.s8 %v739
          %v741 = vlaneseq
          %v742 = vshrl.u32 %v741, 7
          %v743 = vsub.s32 %v740, %v742
          %v744 = vrot.slane %v737, %v743
          %v746 = vunpack.c.l.s4 1966171168
          %v747 = vunpack.c.0.s8 %v746
          %v748 = vlaneseq
          %v749 = vshrl.u32 %v748, 7
          %v750 = vsub.s32 %v747, %v749
          %v751 = vrot.slane %v744, %v750
          %v753 = vmul.f32 %v730, %v751
          %v755 = vlaneseq
          %v756 = vshrl.u32 %v755, 7
          %v757 = vsub.s32 0, %v756
          %v758 = vrot.slane %v753, %v757
          %v759 = vlaneseq
          %v760 = vshrl.u32 %v759, 7
          %v761 = vsub.s32 1, %v760
          %v762 = vrot.slane %v753, %v761
          %v765 = vmul.f32 %v698, %v758
          %v766 = vmul.f32 %v699, %v762
          %v767 = vmul.f32 %v700, %v758
          %v768 = vmul.f32 %v701, %v762
          %v769 = vmul.f32 %v702, %v758
          %v770 = vmul.f32 %v703, %v762
          %v771 = vld [vmem:[%s325] sm:$0x3]
          %v773 = vlaneseq
          %v774 = vshrl.u32 %v773, 7
          %v775 = vsub.s32 0, %v774
          %v776 = vrot.slane %v771, %v775
          %v777 = vlaneseq
          %v778 = vshrl.u32 %v777, 7
          %v779 = vsub.s32 1, %v778
          %v780 = vrot.slane %v771, %v779
          %v783 = vadd.f32 %v765, %v776
          %v784 = vadd.f32 %v766, %v780
          %v785 = vadd.f32 %v767, %v776
          %v786 = vadd.f32 %v768, %v780
          %v787 = vadd.f32 %v769, %v776
          %v788 = vadd.f32 %v770, %v780
          %vm789 = vcmp.ge.f32.partialorder %v783, 0.0
          %vm790 = vcmp.ge.f32.partialorder %v784, 0.0
          %vm791 = vcmp.ge.f32.partialorder %v785, 0.0
          %vm792 = vcmp.ge.f32.partialorder %v786, 0.0
          %vm793 = vcmp.ge.f32.partialorder %v787, 0.0
          %vm794 = vcmp.ge.f32.partialorder %v788, 0.0
          %v795 = vmul.f32 %v783, 0.01
          %v796 = vmul.f32 %v784, 0.01
          %v797 = vmul.f32 %v785, 0.01
          %v798 = vmul.f32 %v786, 0.01
          %v799 = vmul.f32 %v787, 0.01
          %v800 = vmul.f32 %v788, 0.01
          %v801 = vsel %vm789, %v783, %v795
          %v802 = vsel %vm790, %v784, %v796
          %v803 = vsel %vm791, %v785, %v797
          %v804 = vsel %vm792, %v786, %v798
          %v805 = vsel %vm793, %v787, %v799
          %v806 = vsel %vm794, %v788, %v800
          %807 = vst [vmem:[%s331] sm:$0xff] %v801
          %808 = vst [vmem:[%s331 + $0x8] sm:$0xff] %v802
          %809 = vst [vmem:[%s331 + $0x10] sm:$0xff] %v803
          %810 = vst [vmem:[%s331 + $0x18] sm:$0xff] %v804
          %811 = vst [vmem:[%s331 + $0x20] sm:$0x3] %v805
          %812 = vst [vmem:[%s331 + $0x28] sm:$0x3] %v806
        $region67: #{fusegan_discriminator_forward.10} parent=54 // pred_fallthru
          _
        %s813 = smul.u32 2, %s19
        %p814 = scmp.lt.s32.totalorder %s813, 1
        %s815 = scalar_select %p814, %s813, 1
        %s816 = smul.addr %s815, 8
        %s817 = scalar_lea.vmem %s4, %s816
        // Predicated region
        $region68: #{fusegan_discriminator_forward.10} parent=54 // pred_check
          %p818 = pneg %p151
        $region69: #{fusegan_discriminator_forward.10} parent=54 // pred_check_branch
          %820 = sbr.rel (%p818) target = $region71
        $region70: #{fusegan_discriminator_forward.10} parent=54 // pred_region
          %s821 = smul.u32 2, %s19
        $region71: #{fusegan_discriminator_forward.10} parent=54 // pred_fallthru
          _
        // Predicated region
        $region72: #{fusegan_discriminator_forward.10} parent=54 // pred_check
          %p822 = pneg %p151
        $region73: #{fusegan_discriminator_forward.10} parent=54 // pred_check_branch
          %824 = sbr.rel (%p822) target = $region75
        $region74: #{fusegan_discriminator_forward.10} parent=54 // pred_region
          %s825 = smul.u32 2, %s19
          %p826 = scmp.lt.s32.totalorder %s825, 1
          %s827 = scalar_select %p826, %s825, 1
          %s828 = smul.addr %s827, 8
          %s829 = scalar_lea.vmem %s4, %s828
        $region75: #{fusegan_discriminator_forward.10} parent=54 // pred_fallthru
          _
      $region55: #{fusegan_discriminator_forward.10} parent=5 // pred_fallthru
        _
      %p830 = scmp.le.s32.totalorder 2, %s10
      // Predicated region
      $region76: #{fusegan_discriminator_forward.10} parent=5 // pred_check
        %p831 = pneg %p830
      $region77: #{fusegan_discriminator_forward.10} parent=5 // pred_check_branch
        %833 = sbr.rel (%p831) target = $region79
      $region78: #{fusegan_discriminator_forward.10} parent=5 // pred_region
        %s834 = ssub.s32 %s10, 2
      $region79: #{fusegan_discriminator_forward.10} parent=5 // pred_fallthru
        _
    $region6: #{fusegan_discriminator_forward.10} parent=1 // loop_footer
      %s14 = sadd.s32 1, %s10
    $region7: #{fusegan_discriminator_forward.10} parent=1 // loop_footer_branch
      %9 = sbr.rel target = $region3
    $region8: #{fusegan_discriminator_forward.10} parent=1 // loop_exit
      _

// kernel: fusegan_discriminator_forward.11
$region0: #{fusegan_discriminator_forward.11}
  #allocation0 [shape = 'u32[]', space=smem, size = 0x4, offset = 0x4, fixed_abs, tag = 'smem constant byte address 0x4 - core index']
  #allocation1 [shape = 'u32[144,128]{1,0:T(1,128)}', space=vmem, size = 0x12000, scoped, tag = 'internal scratch']
  #allocation2 [shape = 'f32[8,256]{1,0:T(8,128)}', space=vmem, size = 0x2000, scoped, tag = 'scratch operand']
  %s0 = inlined_call_operand.vmem [shape: f32[8,4096], index: 0, kind: input, shape index: {}]
  %s1 = inlined_call_operand.vmem [shape: f32[4096,512], index: 1, kind: input, shape index: {}]
  %s2 = inlined_call_operand.vmem [shape: f32[1,512], index: 2, kind: input, shape index: {}]
  %s3 = inlined_call_operand.vmem [shape: f32[1,512], index: 3, kind: input, shape index: {}]
  %s4 = inlined_call_operand.vmem [shape: f32[8,512], index: 4, kind: output, shape index: {}]
  %s5 = sld [smem:[#allocation0]]
  $region80: #{fusegan_discriminator_forward.11} parent=0
    _
  %s7 = ssub.s32 1, %s5
  %s8 = scalar_select 0, %s7, %s5
  $region1: #{fusegan_discriminator_forward.11} parent=0
    #allocation3 [shape = 'u8[1048576]{0}', space=vmem, size = 0x100000, scoped, tag = 'input window, operand 1']
    loop: start=0, step=1, limit=18
    $region2: #{fusegan_discriminator_forward.11} parent=1 // loop_pre_header
      _
    $region3: #{fusegan_discriminator_forward.11} parent=1 // loop_header
      %s10 = sphi 0, %s14
      %p11 = scmp.ge.s32.totalorder %s10, 18
      %s17 = sphi 0, %s29
      %s18 = sphi 0, %s25
      %s19 = sphi 0, %s17
      %s20 = sphi 0, %s18
      %s21 = sphi 0, %s19
      %s22 = sphi 0, %s20
      %s32 = sphi 0, %s34
      %s35 = sphi 0, %s32
      %s36 = sphi 0, %s35
      %s52 = sphi 0, %s36
      %s60 = sphi 0, %s62
      %s63 = sphi 0, %s60
      %s64 = sphi 0, %s63
      %s80 = sphi 0, %s64
      %s86 = sphi 0, %s88
      %s89 = sphi 0, %s86
      %s90 = sphi 0, %s89
      %s106 = sphi 0, %s90
      %s112 = sphi 0, %s114
      %s115 = sphi 0, %s112
      %s116 = sphi 0, %s115
      %s132 = sphi 0, %s116
      %s138 = sphi 0, %s140
      %s141 = sphi 0, %s138
      %s142 = sphi 0, %s141
      %s158 = sphi 0, %s142
    $region4: #{fusegan_discriminator_forward.11} parent=1 // loop_header_branch
      %13 = sbr.rel (%p11) target = $region8
    $region5: #{fusegan_discriminator_forward.11} parent=1 // loop_body
      %s15 = ssub.s32 %s10, 1
      %s16 = ssub.s32 %s10, 2
      %s23 = sadd.s32 1, %s18
      %p24 = scmp.ge.s32.totalorder %s23, 8
      %s25 = scalar_select %p24, 0, %s23
      %s26 = sadd.s32 1, %s17
      %s27 = scalar_select %p24, %s26, %s17
      %p28 = scmp.ge.s32.totalorder %s27, 2
      %s29 = scalar_select %p28, 0, %s27
      %s30 = ssub.s32 %s18, %s25
      %p31 = scmp.eq.s32.totalorder %s30, 0
      %s33 = sadd.s32 %s32, 1
      %s34 = scalar_select %p31, %s32, %s33
      %p37 = pneg %p31
      %p38 = scmp.eq.s32.totalorder %s10, 15
      %p39 = por %p37, %p38
      %p40 = scmp.ne.s32.totalorder %s32, %s35
      %p41 = scmp.eq.s32.totalorder %s10, 0
      %p42 = por %p40, %p41
      %p43 = scmp.ne.s32.totalorder %s32, %s35
      %p44 = scmp.eq.s32.totalorder %s15, 15
      %p45 = por %p43, %p44
      %p46 = scmp.ne.s32.totalorder %s35, %s36
      %p47 = scmp.eq.s32.totalorder %s15, 0
      %p48 = por %p46, %p47
      %p49 = scmp.ne.s32.totalorder %s35, %s36
      %p50 = scmp.eq.s32.totalorder %s16, 15
      %p51 = por %p49, %p50
      %p53 = scmp.ne.s32.totalorder %s36, %s52
      %p54 = scmp.eq.s32.totalorder %s16, 0
      %p55 = por %p53, %p54
      %s56 = ssub.s32 %s18, %s25
      %s57 = ssub.s32 %s17, %s29
      %s58 = sor.u32 %s56, %s57
      %p59 = scmp.eq.s32.totalorder %s58, 0
      %s61 = sadd.s32 %s60, 1
      %s62 = scalar_select %p59, %s60, %s61
      %p65 = pneg %p59
      %p66 = scmp.eq.s32.totalorder %s10, 15
      %p67 = por %p65, %p66
      %p68 = scmp.ne.s32.totalorder %s60, %s63
      %p69 = scmp.eq.s32.totalorder %s10, 0
      %p70 = por %p68, %p69
      %p71 = scmp.ne.s32.totalorder %s60, %s63
      %p72 = scmp.eq.s32.totalorder %s15, 15
      %p73 = por %p71, %p72
      %p74 = scmp.ne.s32.totalorder %s63, %s64
      %p75 = scmp.eq.s32.totalorder %s15, 0
      %p76 = por %p74, %p75
      %p77 = scmp.ne.s32.totalorder %s63, %s64
      %p78 = scmp.eq.s32.totalorder %s16, 15
      %p79 = por %p77, %p78
      %p81 = scmp.ne.s32.totalorder %s64, %s80
      %p82 = scmp.eq.s32.totalorder %s16, 0
      %p83 = por %p81, %p82
      %s84 = ssub.s32 %s17, %s29
      %p85 = scmp.eq.s32.totalorder %s84, 0
      %s87 = sadd.s32 %s86, 1
      %s88 = scalar_select %p85, %s86, %s87
      %p91 = pneg %p85
      %p92 = scmp.eq.s32.totalorder %s10, 15
      %p93 = por %p91, %p92
      %p94 = scmp.ne.s32.totalorder %s86, %s89
      %p95 = scmp.eq.s32.totalorder %s10, 0
      %p96 = por %p94, %p95
      %p97 = scmp.ne.s32.totalorder %s86, %s89
      %p98 = scmp.eq.s32.totalorder %s15, 15
      %p99 = por %p97, %p98
      %p100 = scmp.ne.s32.totalorder %s89, %s90
      %p101 = scmp.eq.s32.totalorder %s15, 0
      %p102 = por %p100, %p101
      %p103 = scmp.ne.s32.totalorder %s89, %s90
      %p104 = scmp.eq.s32.totalorder %s16, 15
      %p105 = por %p103, %p104
      %p107 = scmp.ne.s32.totalorder %s90, %s106
      %p108 = scmp.eq.s32.totalorder %s16, 0
      %p109 = por %p107, %p108
      %s110 = ssub.s32 %s17, %s29
      %p111 = scmp.eq.s32.totalorder %s110, 0
      %s113 = sadd.s32 %s112, 1
      %s114 = scalar_select %p111, %s112, %s113
      %p117 = pneg %p111
      %p118 = scmp.eq.s32.totalorder %s10, 15
      %p119 = por %p117, %p118
      %p120 = scmp.ne.s32.totalorder %s112, %s115
      %p121 = scmp.eq.s32.totalorder %s10, 0
      %p122 = por %p120, %p121
      %p123 = scmp.ne.s32.totalorder %s112, %s115
      %p124 = scmp.eq.s32.totalorder %s15, 15
      %p125 = por %p123, %p124
      %p126 = scmp.ne.s32.totalorder %s115, %s116
      %p127 = scmp.eq.s32.totalorder %s15, 0
      %p128 = por %p126, %p127
      %p129 = scmp.ne.s32.totalorder %s115, %s116
      %p130 = scmp.eq.s32.totalorder %s16, 15
      %p131 = por %p129, %p130
      %p133 = scmp.ne.s32.totalorder %s116, %s132
      %p134 = scmp.eq.s32.totalorder %s16, 0
      %p135 = por %p133, %p134
      %s136 = ssub.s32 %s17, %s29
      %p137 = scmp.eq.s32.totalorder %s136, 0
      %s139 = sadd.s32 %s138, 1
      %s140 = scalar_select %p137, %s138, %s139
      %p143 = pneg %p137
      %p144 = scmp.eq.s32.totalorder %s10, 15
      %p145 = por %p143, %p144
      %p146 = scmp.ne.s32.totalorder %s138, %s141
      %p147 = scmp.eq.s32.totalorder %s10, 0
      %p148 = por %p146, %p147
      %p149 = scmp.ne.s32.totalorder %s138, %s141
      %p150 = scmp.eq.s32.totalorder %s15, 15
      %p151 = por %p149, %p150
      %p152 = scmp.ne.s32.totalorder %s141, %s142
      %p153 = scmp.eq.s32.totalorder %s15, 0
      %p154 = por %p152, %p153
      %p155 = scmp.ne.s32.totalorder %s141, %s142
      %p156 = scmp.eq.s32.totalorder %s16, 15
      %p157 = por %p155, %p156
      %p159 = scmp.ne.s32.totalorder %s142, %s158
      %p160 = scmp.eq.s32.totalorder %s16, 0
      %p161 = por %p159, %p160
      %p162 = scmp.le.s32.totalorder 1, %s10
      %p163 = scmp.lt.s32.totalorder %s10, 17
      %p164 = pnand %p162, %p163
      %p165 = pneg %p164
      // Predicated region
      $region9: #{fusegan_discriminator_forward.11} parent=5 // pred_check
        _
      $region10: #{fusegan_discriminator_forward.11} parent=5 // pred_check_branch
        %167 = sbr.rel (%p164) target = $region12
      $region11: #{fusegan_discriminator_forward.11} parent=5 // pred_region
        %s168 = ssub.s32 %s10, 1
      $region12: #{fusegan_discriminator_forward.11} parent=5 // pred_fallthru
        _
      %p169 = scmp.lt.s32.totalorder %s10, 16
      // Predicated region
      $region13: #{fusegan_discriminator_forward.11} parent=5 // pred_check
        %p170 = pneg %p169
      $region14: #{fusegan_discriminator_forward.11} parent=5 // pred_check_branch
        %172 = sbr.rel (%p170) target = $region16
      $region15: #{fusegan_discriminator_forward.11} parent=5 // pred_region
        // Predicated region
        $region17: #{fusegan_discriminator_forward.11} parent=15 // pred_check
          %p173 = pneg %p42
        $region18: #{fusegan_discriminator_forward.11} parent=15 // pred_check_branch
          %175 = sbr.rel (%p173) target = $region20
        $region19: #{fusegan_discriminator_forward.11} parent=15 // pred_region
          %s176 = smul.u32 4, %s18
          %p177 = scmp.lt.s32.totalorder %s176, 31
          %s178 = scalar_select %p177, %s176, 31
          %s179 = smul.addr %s178, 8
          %s180 = scalar_lea.vmem %s0, %s179
          %s181 = smul.u32 4, %s18
        $region20: #{fusegan_discriminator_forward.11} parent=15 // pred_fallthru
          _
        // Predicated region
        $region21: #{fusegan_discriminator_forward.11} parent=15 // pred_check
          %p182 = pneg %p70
        $region22: #{fusegan_discriminator_forward.11} parent=15 // pred_check_branch
          %184 = sbr.rel (%p182) target = $region24
        $region23: #{fusegan_discriminator_forward.11} parent=15 // pred_region
          %s185 = sand.u32 %s60, 1
          %s186 = sand.u32 %s60, 1
          %s187 = smul.addr %s186, 1024
          %s188 = scalar_lea.vmem [#allocation3], %s187
          %s189 = smul.u32 64, %s18
          %s190 = smul.u32 2, %s17
          %s191 = smul.addr %s189, 4
          %s192 = sadd.s32 %s190, %s191
          %s193 = smul.addr %s192, 8
          %s194 = scalar_lea.vmem %s1, %s193
          // Predicated region
          $region25: #{fusegan_discriminator_forward.11} parent=23 // pred_check
            _
          $region26: #{fusegan_discriminator_forward.11} parent=23 // pred_check_branch
            %196 = sbr.rel (0) target = $region28
          $region27: #{fusegan_discriminator_forward.11} parent=23 // pred_region
            // Predicated region
            $region29: #{fusegan_discriminator_forward.11} parent=27 // pred_check
              _
            $region30: #{fusegan_discriminator_forward.11} parent=27 // pred_check_branch
              %198 = sbr.rel (0) target = $region32
            $region31: #{fusegan_discriminator_forward.11} parent=27 // pred_region
              loop: start=0, step=1, limit=1
              $region33: #{fusegan_discriminator_forward.11} parent=31 // loop_pre_header
                _
              $region34: #{fusegan_discriminator_forward.11} parent=31 // loop_header
                %s200 = sphi 0, %s204
                %p201 = scmp.ge.s32.totalorder %s200, 1
                %s205 = sphi %s194, %s194
                %s206 = sphi %s188, %s188
              $region35: #{fusegan_discriminator_forward.11} parent=31 // loop_header_branch
                %203 = sbr.rel (%p201) target = $region39
              $region36: #{fusegan_discriminator_forward.11} parent=31 // loop_body
                %v207 = vld [vmem:[%s205] sm:$0xff]
                %208 = vst [vmem:[%s206] sm:$0xff] %v207
                %v209 = vld [vmem:[%s205 + $0x8] sm:$0xff]
                %210 = vst [vmem:[%s206 + $0x8] sm:$0xff] %v209
                %v211 = vld [vmem:[%s205 + $0x20] sm:$0xff]
                %212 = vst [vmem:[%s206 + $0x10] sm:$0xff] %v211
                %v213 = vld [vmem:[%s205 + $0x28] sm:$0xff]
                %214 = vst [vmem:[%s206 + $0x18] sm:$0xff] %v213
                %v215 = vld [vmem:[%s205 + $0x40] sm:$0xff]
                %216 = vst [vmem:[%s206 + $0x20] sm:$0xff] %v215
                %v217 = vld [vmem:[%s205 + $0x48] sm:$0xff]
                %218 = vst [vmem:[%s206 + $0x28] sm:$0xff] %v217
                %v219 = vld [vmem:[%s205 + $0x60] sm:$0xff]
                %220 = vst [vmem:[%s206 + $0x30] sm:$0xff] %v219
                %v221 = vld [vmem:[%s205 + $0x68] sm:$0xff]
                %222 = vst [vmem:[%s206 + $0x38] sm:$0xff] %v221
                %v223 = vld [vmem:[%s205 + $0x80] sm:$0xff]
                %224 = vst [vmem:[%s206 + $0x40] sm:$0xff] %v223
                %v225 = vld [vmem:[%s205 + $0x88] sm:$0xff]
                %226 = vst [vmem:[%s206 + $0x48] sm:$0xff] %v225
                %v227 = vld [vmem:[%s205 + $0xa0] sm:$0xff]
                %228 = vst [vmem:[%s206 + $0x50] sm:$0xff] %v227
                %v229 = vld [vmem:[%s205 + $0xa8] sm:$0xff]
                %230 = vst [vmem:[%s206 + $0x58] sm:$0xff] %v229
                %v231 = vld [vmem:[%s205 + $0xc0] sm:$0xff]
                %232 = vst [vmem:[%s206 + $0x60] sm:$0xff] %v231
                %v233 = vld [vmem:[%s205 + $0xc8] sm:$0xff]
                %234 = vst [vmem:[%s206 + $0x68] sm:$0xff] %v233
                %v235 = vld [vmem:[%s205 + $0xe0] sm:$0xff]
                %236 = vst [vmem:[%s206 + $0x70] sm:$0xff] %v235
                %v237 = vld [vmem:[%s205 + $0xe8] sm:$0xff]
                %238 = vst [vmem:[%s206 + $0x78] sm:$0xff] %v237
                %v239 = vld [vmem:[%s205 + $0x100] sm:$0xff]
                %240 = vst [vmem:[%s206 + $0x80] sm:$0xff] %v239
                %v241 = vld [vmem:[%s205 + $0x108] sm:$0xff]
                %242 = vst [vmem:[%s206 + $0x88] sm:$0xff] %v241
                %v243 = vld [vmem:[%s205 + $0x120] sm:$0xff]
                %244 = vst [vmem:[%s206 + $0x90] sm:$0xff] %v243
                %v245 = vld [vmem:[%s205 + $0x128] sm:$0xff]
                %246 = vst [vmem:[%s206 + $0x98] sm:$0xff] %v245
                %v247 = vld [vmem:[%s205 + $0x140] sm:$0xff]
                %248 = vst [vmem:[%s206 + $0xa0] sm:$0xff] %v247
                %v249 = vld [vmem:[%s205 + $0x148] sm:$0xff]
                %250 = vst [vmem:[%s206 + $0xa8] sm:$0xff] %v249
                %v251 = vld [vmem:[%s205 + $0x160] sm:$0xff]
                %252 = vst [vmem:[%s206 + $0xb0] sm:$0xff] %v251
                %v253 = vld [vmem:[%s205 + $0x168] sm:$0xff]
                %254 = vst [vmem:[%s206 + $0xb8] sm:$0xff] %v253
                %v255 = vld [vmem:[%s205 + $0x180] sm:$0xff]
                %256 = vst [vmem:[%s206 + $0xc0] sm:$0xff] %v255
                %v257 = vld [vmem:[%s205 + $0x188] sm:$0xff]
                %258 = vst [vmem:[%s206 + $0xc8] sm:$0xff] %v257
                %v259 = vld [vmem:[%s205 + $0x1a0] sm:$0xff]
                %260 = vst [vmem:[%s206 + $0xd0] sm:$0xff] %v259
                %v261 = vld [vmem:[%s205 + $0x1a8] sm:$0xff]
                %262 = vst [vmem:[%s206 + $0xd8] sm:$0xff] %v261
                %v263 = vld [vmem:[%s205 + $0x1c0] sm:$0xff]
                %264 = vst [vmem:[%s206 + $0xe0] sm:$0xff] %v263
                %v265 = vld [vmem:[%s205 + $0x1c8] sm:$0xff]
                %266 = vst [vmem:[%s206 + $0xe8] sm:$0xff] %v265
                %v267 = vld [vmem:[%s205 + $0x1e0] sm:$0xff]
                %268 = vst [vmem:[%s206 + $0xf0] sm:$0xff] %v267
                %v269 = vld [vmem:[%s205 + $0x1e8] sm:$0xff]
                %270 = vst [vmem:[%s206 + $0xf8] sm:$0xff] %v269
                %v271 = vld [vmem:[%s205 + $0x200] sm:$0xff]
                %272 = vst [vmem:[%s206 + $0x100] sm:$0xff] %v271
                %v273 = vld [vmem:[%s205 + $0x208] sm:$0xff]
                %274 = vst [vmem:[%s206 + $0x108] sm:$0xff] %v273
                %v275 = vld [vmem:[%s205 + $0x220] sm:$0xff]
                %276 = vst [vmem:[%s206 + $0x110] sm:$0xff] %v275
                %v277 = vld [vmem:[%s205 + $0x228] sm:$0xff]
                %278 = vst [vmem:[%s206 + $0x118] sm:$0xff] %v277
                %v279 = vld [vmem:[%s205 + $0x240] sm:$0xff]
                %280 = vst [vmem:[%s206 + $0x120] sm:$0xff] %v279
                %v281 = vld [vmem:[%s205 + $0x248] sm:$0xff]
                %282 = vst [vmem:[%s206 + $0x128] sm:$0xff] %v281
                %v283 = vld [vmem:[%s205 + $0x260] sm:$0xff]
                %284 = vst [vmem:[%s206 + $0x130] sm:$0xff] %v283
                %v285 = vld [vmem:[%s205 + $0x268] sm:$0xff]
                %286 = vst [vmem:[%s206 + $0x138] sm:$0xff] %v285
                %v287 = vld [vmem:[%s205 + $0x280] sm:$0xff]
                %288 = vst [vmem:[%s206 + $0x140] sm:$0xff] %v287
                %v289 = vld [vmem:[%s205 + $0x288] sm:$0xff]
                %290 = vst [vmem:[%s206 + $0x148] sm:$0xff] %v289
                %v291 = vld [vmem:[%s205 + $0x2a0] sm:$0xff]
                %292 = vst [vmem:[%s206 + $0x150] sm:$0xff] %v291
                %v293 = vld [vmem:[%s205 + $0x2a8] sm:$0xff]
                %294 = vst [vmem:[%s206 + $0x158] sm:$0xff] %v293
                %v295 = vld [vmem:[%s205 + $0x2c0] sm:$0xff]
                %296 = vst [vmem:[%s206 + $0x160] sm:$0xff] %v295
                %v297 = vld [vmem:[%s205 + $0x2c8] sm:$0xff]
                %298 = vst [vmem:[%s206 + $0x168] sm:$0xff] %v297
                %v299 = vld [vmem:[%s205 + $0x2e0] sm:$0xff]
                %300 = vst [vmem:[%s206 + $0x170] sm:$0xff] %v299
                %v301 = vld [vmem:[%s205 + $0x2e8] sm:$0xff]
                %302 = vst [vmem:[%s206 + $0x178] sm:$0xff] %v301
                %v303 = vld [vmem:[%s205 + $0x300] sm:$0xff]
                %304 = vst [vmem:[%s206 + $0x180] sm:$0xff] %v303
                %v305 = vld [vmem:[%s205 + $0x308] sm:$0xff]
                %306 = vst [vmem:[%s206 + $0x188] sm:$0xff] %v305
                %v307 = vld [vmem:[%s205 + $0x320] sm:$0xff]
                %308 = vst [vmem:[%s206 + $0x190] sm:$0xff] %v307
                %v309 = vld [vmem:[%s205 + $0x328] sm:$0xff]
                %310 = vst [vmem:[%s206 + $0x198] sm:$0xff] %v309
                %v311 = vld [vmem:[%s205 + $0x340] sm:$0xff]
                %312 = vst [vmem:[%s206 + $0x1a0] sm:$0xff] %v311
                %v313 = vld [vmem:[%s205 + $0x348] sm:$0xff]
                %314 = vst [vmem:[%s206 + $0x1a8] sm:$0xff] %v313
                %v315 = vld [vmem:[%s205 + $0x360] sm:$0xff]
                %316 = vst [vmem:[%s206 + $0x1b0] sm:$0xff] %v315
                %v317 = vld [vmem:[%s205 + $0x368] sm:$0xff]
                %318 = vst [vmem:[%s206 + $0x1b8] sm:$0xff] %v317
                %v319 = vld [vmem:[%s205 + $0x380] sm:$0xff]
                %320 = vst [vmem:[%s206 + $0x1c0] sm:$0xff] %v319
                %v321 = vld [vmem:[%s205 + $0x388] sm:$0xff]
                %322 = vst [vmem:[%s206 + $0x1c8] sm:$0xff] %v321
                %v323 = vld [vmem:[%s205 + $0x3a0] sm:$0xff]
                %324 = vst [vmem:[%s206 + $0x1d0] sm:$0xff] %v323
                %v325 = vld [vmem:[%s205 + $0x3a8] sm:$0xff]
                %326 = vst [vmem:[%s206 + $0x1d8] sm:$0xff] %v325
                %v327 = vld [vmem:[%s205 + $0x3c0] sm:$0xff]
                %328 = vst [vmem:[%s206 + $0x1e0] sm:$0xff] %v327
                %v329 = vld [vmem:[%s205 + $0x3c8] sm:$0xff]
                %330 = vst [vmem:[%s206 + $0x1e8] sm:$0xff] %v329
                %v331 = vld [vmem:[%s205 + $0x3e0] sm:$0xff]
                %332 = vst [vmem:[%s206 + $0x1f0] sm:$0xff] %v331
                %v333 = vld [vmem:[%s205 + $0x3e8] sm:$0xff]
                %334 = vst [vmem:[%s206 + $0x1f8] sm:$0xff] %v333
                %v335 = vld [vmem:[%s205 + $0x400] sm:$0xff]
                %336 = vst [vmem:[%s206 + $0x200] sm:$0xff] %v335
                %v337 = vld [vmem:[%s205 + $0x408] sm:$0xff]
                %338 = vst [vmem:[%s206 + $0x208] sm:$0xff] %v337
                %v339 = vld [vmem:[%s205 + $0x420] sm:$0xff]
                %340 = vst [vmem:[%s206 + $0x210] sm:$0xff] %v339
                %v341 = vld [vmem:[%s205 + $0x428] sm:$0xff]
                %342 = vst [vmem:[%s206 + $0x218] sm:$0xff] %v341
                %v343 = vld [vmem:[%s205 + $0x440] sm:$0xff]
                %344 = vst [vmem:[%s206 + $0x220] sm:$0xff] %v343
                %v345 = vld [vmem:[%s205 + $0x448] sm:$0xff]
                %346 = vst [vmem:[%s206 + $0x228] sm:$0xff] %v345
                %v347 = vld [vmem:[%s205 + $0x460] sm:$0xff]
                %348 = vst [vmem:[%s206 + $0x230] sm:$0xff] %v347
                %v349 = vld [vmem:[%s205 + $0x468] sm:$0xff]
                %350 = vst [vmem:[%s206 + $0x238] sm:$0xff] %v349
                %v351 = vld [vmem:[%s205 + $0x480] sm:$0xff]
                %352 = vst [vmem:[%s206 + $0x240] sm:$0xff] %v351
                %v353 = vld [vmem:[%s205 + $0x488] sm:$0xff]
                %354 = vst [vmem:[%s206 + $0x248] sm:$0xff] %v353
                %v355 = vld [vmem:[%s205 + $0x4a0] sm:$0xff]
                %356 = vst [vmem:[%s206 + $0x250] sm:$0xff] %v355
                %v357 = vld [vmem:[%s205 + $0x4a8] sm:$0xff]
                %358 = vst [vmem:[%s206 + $0x258] sm:$0xff] %v357
                %v359 = vld [vmem:[%s205 + $0x4c0] sm:$0xff]
                %360 = vst [vmem:[%s206 + $0x260] sm:$0xff] %v359
                %v361 = vld [vmem:[%s205 + $0x4c8] sm:$0xff]
                %362 = vst [vmem:[%s206 + $0x268] sm:$0xff] %v361
                %v363 = vld [vmem:[%s205 + $0x4e0] sm:$0xff]
                %364 = vst [vmem:[%s206 + $0x270] sm:$0xff] %v363
                %v365 = vld [vmem:[%s205 + $0x4e8] sm:$0xff]
                %366 = vst [vmem:[%s206 + $0x278] sm:$0xff] %v365
                %v367 = vld [vmem:[%s205 + $0x500] sm:$0xff]
                %368 = vst [vmem:[%s206 + $0x280] sm:$0xff] %v367
                %v369 = vld [vmem:[%s205 + $0x508] sm:$0xff]
                %370 = vst [vmem:[%s206 + $0x288] sm:$0xff] %v369
                %v371 = vld [vmem:[%s205 + $0x520] sm:$0xff]
                %372 = vst [vmem:[%s206 + $0x290] sm:$0xff] %v371
                %v373 = vld [vmem:[%s205 + $0x528] sm:$0xff]
                %374 = vst [vmem:[%s206 + $0x298] sm:$0xff] %v373
                %v375 = vld [vmem:[%s205 + $0x540] sm:$0xff]
                %376 = vst [vmem:[%s206 + $0x2a0] sm:$0xff] %v375
                %v377 = vld [vmem:[%s205 + $0x548] sm:$0xff]
                %378 = vst [vmem:[%s206 + $0x2a8] sm:$0xff] %v377
                %v379 = vld [vmem:[%s205 + $0x560] sm:$0xff]
                %380 = vst [vmem:[%s206 + $0x2b0] sm:$0xff] %v379
                %v381 = vld [vmem:[%s205 + $0x568] sm:$0xff]
                %382 = vst [vmem:[%s206 + $0x2b8] sm:$0xff] %v381
                %v383 = vld [vmem:[%s205 + $0x580] sm:$0xff]
                %384 = vst [vmem:[%s206 + $0x2c0] sm:$0xff] %v383
                %v385 = vld [vmem:[%s205 + $0x588] sm:$0xff]
                %386 = vst [vmem:[%s206 + $0x2c8] sm:$0xff] %v385
                %v387 = vld [vmem:[%s205 + $0x5a0] sm:$0xff]
                %388 = vst [vmem:[%s206 + $0x2d0] sm:$0xff] %v387
                %v389 = vld [vmem:[%s205 + $0x5a8] sm:$0xff]
                %390 = vst [vmem:[%s206 + $0x2d8] sm:$0xff] %v389
                %v391 = vld [vmem:[%s205 + $0x5c0] sm:$0xff]
                %392 = vst [vmem:[%s206 + $0x2e0] sm:$0xff] %v391
                %v393 = vld [vmem:[%s205 + $0x5c8] sm:$0xff]
                %394 = vst [vmem:[%s206 + $0x2e8] sm:$0xff] %v393
                %v395 = vld [vmem:[%s205 + $0x5e0] sm:$0xff]
                %396 = vst [vmem:[%s206 + $0x2f0] sm:$0xff] %v395
                %v397 = vld [vmem:[%s205 + $0x5e8] sm:$0xff]
                %398 = vst [vmem:[%s206 + $0x2f8] sm:$0xff] %v397
                %v399 = vld [vmem:[%s205 + $0x600] sm:$0xff]
                %400 = vst [vmem:[%s206 + $0x300] sm:$0xff] %v399
                %v401 = vld [vmem:[%s205 + $0x608] sm:$0xff]
                %402 = vst [vmem:[%s206 + $0x308] sm:$0xff] %v401
                %v403 = vld [vmem:[%s205 + $0x620] sm:$0xff]
                %404 = vst [vmem:[%s206 + $0x310] sm:$0xff] %v403
                %v405 = vld [vmem:[%s205 + $0x628] sm:$0xff]
                %406 = vst [vmem:[%s206 + $0x318] sm:$0xff] %v405
                %v407 = vld [vmem:[%s205 + $0x640] sm:$0xff]
                %408 = vst [vmem:[%s206 + $0x320] sm:$0xff] %v407
                %v409 = vld [vmem:[%s205 + $0x648] sm:$0xff]
                %410 = vst [vmem:[%s206 + $0x328] sm:$0xff] %v409
                %v411 = vld [vmem:[%s205 + $0x660] sm:$0xff]
                %412 = vst [vmem:[%s206 + $0x330] sm:$0xff] %v411
                %v413 = vld [vmem:[%s205 + $0x668] sm:$0xff]
                %414 = vst [vmem:[%s206 + $0x338] sm:$0xff] %v413
                %v415 = vld [vmem:[%s205 + $0x680] sm:$0xff]
                %416 = vst [vmem:[%s206 + $0x340] sm:$0xff] %v415
                %v417 = vld [vmem:[%s205 + $0x688] sm:$0xff]
                %418 = vst [vmem:[%s206 + $0x348] sm:$0xff] %v417
                %v419 = vld [vmem:[%s205 + $0x6a0] sm:$0xff]
                %420 = vst [vmem:[%s206 + $0x350] sm:$0xff] %v419
                %v421 = vld [vmem:[%s205 + $0x6a8] sm:$0xff]
                %422 = vst [vmem:[%s206 + $0x358] sm:$0xff] %v421
                %v423 = vld [vmem:[%s205 + $0x6c0] sm:$0xff]
                %424 = vst [vmem:[%s206 + $0x360] sm:$0xff] %v423
                %v425 = vld [vmem:[%s205 + $0x6c8] sm:$0xff]
                %426 = vst [vmem:[%s206 + $0x368] sm:$0xff] %v425
                %v427 = vld [vmem:[%s205 + $0x6e0] sm:$0xff]
                %428 = vst [vmem:[%s206 + $0x370] sm:$0xff] %v427
                %v429 = vld [vmem:[%s205 + $0x6e8] sm:$0xff]
                %430 = vst [vmem:[%s206 + $0x378] sm:$0xff] %v429
                %v431 = vld [vmem:[%s205 + $0x700] sm:$0xff]
                %432 = vst [vmem:[%s206 + $0x380] sm:$0xff] %v431
                %v433 = vld [vmem:[%s205 + $0x708] sm:$0xff]
                %434 = vst [vmem:[%s206 + $0x388] sm:$0xff] %v433
                %v435 = vld [vmem:[%s205 + $0x720] sm:$0xff]
                %436 = vst [vmem:[%s206 + $0x390] sm:$0xff] %v435
                %v437 = vld [vmem:[%s205 + $0x728] sm:$0xff]
                %438 = vst [vmem:[%s206 + $0x398] sm:$0xff] %v437
                %v439 = vld [vmem:[%s205 + $0x740] sm:$0xff]
                %440 = vst [vmem:[%s206 + $0x3a0] sm:$0xff] %v439
                %v441 = vld [vmem:[%s205 + $0x748] sm:$0xff]
                %442 = vst [vmem:[%s206 + $0x3a8] sm:$0xff] %v441
                %v443 = vld [vmem:[%s205 + $0x760] sm:$0xff]
                %444 = vst [vmem:[%s206 + $0x3b0] sm:$0xff] %v443
                %v445 = vld [vmem:[%s205 + $0x768] sm:$0xff]
                %446 = vst [vmem:[%s206 + $0x3b8] sm:$0xff] %v445
                %v447 = vld [vmem:[%s205 + $0x780] sm:$0xff]
                %448 = vst [vmem:[%s206 + $0x3c0] sm:$0xff] %v447
                %v449 = vld [vmem:[%s205 + $0x788] sm:$0xff]
                %450 = vst [vmem:[%s206 + $0x3c8] sm:$0xff] %v449
                %v451 = vld [vmem:[%s205 + $0x7a0] sm:$0xff]
                %452 = vst [vmem:[%s206 + $0x3d0] sm:$0xff] %v451
                %v453 = vld [vmem:[%s205 + $0x7a8] sm:$0xff]
                %454 = vst [vmem:[%s206 + $0x3d8] sm:$0xff] %v453
                %v455 = vld [vmem:[%s205 + $0x7c0] sm:$0xff]
                %456 = vst [vmem:[%s206 + $0x3e0] sm:$0xff] %v455
                %v457 = vld [vmem:[%s205 + $0x7c8] sm:$0xff]
                %458 = vst [vmem:[%s206 + $0x3e8] sm:$0xff] %v457
                %v459 = vld [vmem:[%s205 + $0x7e0] sm:$0xff]
                %460 = vst [vmem:[%s206 + $0x3f0] sm:$0xff] %v459
                %v461 = vld [vmem:[%s205 + $0x7e8] sm:$0xff]
                %462 = vst [vmem:[%s206 + $0x3f8] sm:$0xff] %v461
              $region37: #{fusegan_discriminator_forward.11} parent=31 // loop_footer
                %s204 = sadd.s32 1, %s200
              $region38: #{fusegan_discriminator_forward.11} parent=31 // loop_footer_branch
                %199 = sbr.rel target = $region34
              $region39: #{fusegan_discriminator_forward.11} parent=31 // loop_exit
                _
            $region32: #{fusegan_discriminator_forward.11} parent=27 // pred_fallthru
              _
            // Predicated region
            $region40: #{fusegan_discriminator_forward.11} parent=27 // pred_check
              _
            $region41: #{fusegan_discriminator_forward.11} parent=27 // pred_check_branch
              %464 = sbr.rel target = $region43
            $region42: #{fusegan_discriminator_forward.11} parent=27 // pred_region
              _
            $region43: #{fusegan_discriminator_forward.11} parent=27 // pred_fallthru
              _
          $region28: #{fusegan_discriminator_forward.11} parent=23 // pred_fallthru
            _
          %465 = vnop
        $region24: #{fusegan_discriminator_forward.11} parent=15 // pred_fallthru
          _
        // Predicated region
        $region44: #{fusegan_discriminator_forward.11} parent=15 // pred_check
          %p466 = pneg %p96
        $region45: #{fusegan_discriminator_forward.11} parent=15 // pred_check_branch
          %468 = sbr.rel (%p466) target = $region47
        $region46: #{fusegan_discriminator_forward.11} parent=15 // pred_region
          %s469 = smul.u32 2, %s17
          %p470 = scmp.lt.s32.totalorder %s469, 3
          %s471 = scalar_select %p470, %s469, 3
          %s472 = scalar_lea.vmem %s2, %s471
          %s473 = smul.u32 2, %s17
        $region47: #{fusegan_discriminator_forward.11} parent=15 // pred_fallthru
          _
        // Predicated region
        $region48: #{fusegan_discriminator_forward.11} parent=15 // pred_check
          %p474 = pneg %p122
        $region49: #{fusegan_discriminator_forward.11} parent=15 // pred_check_branch
          %476 = sbr.rel (%p474) target = $region51
        $region50: #{fusegan_discriminator_forward.11} parent=15 // pred_region
          %s477 = smul.u32 2, %s17
          %p478 = scmp.lt.s32.totalorder %s477, 3
          %s479 = scalar_select %p478, %s477, 3
          %s480 = scalar_lea.vmem %s3, %s479
          %s481 = smul.u32 2, %s17
        $region51: #{fusegan_discriminator_forward.11} parent=15 // pred_fallthru
          _
      $region16: #{fusegan_discriminator_forward.11} parent=5 // pred_fallthru
        _
      %p482 = scmp.le.s32.totalorder 1, %s10
      %p483 = scmp.lt.s32.totalorder %s10, 17
      %p484 = pnand %p482, %p483
      %p485 = pneg %p484
      // Predicated region
      $region52: #{fusegan_discriminator_forward.11} parent=5 // pred_check
        _
      $region53: #{fusegan_discriminator_forward.11} parent=5 // pred_check_branch
        %487 = sbr.rel (%p484) target = $region55
      $region54: #{fusegan_discriminator_forward.11} parent=5 // pred_region
        %s488 = ssub.s32 %s10, 1
        %s489 = sand.u32 %s63, 1
        %s490 = sand.u32 %s63, 1
        %s491 = smul.addr %s490, 1024
        %s492 = scalar_lea.vmem [#allocation3], %s491
        // Predicated region
        $region56: #{fusegan_discriminator_forward.11} parent=54 // pred_check
          %p493 = pneg %p76
        $region57: #{fusegan_discriminator_forward.11} parent=54 // pred_check_branch
          %495 = sbr.rel (%p493) target = $region59
        $region58: #{fusegan_discriminator_forward.11} parent=54 // pred_region
          _
        $region59: #{fusegan_discriminator_forward.11} parent=54 // pred_fallthru
          _
        %s496 = smul.u32 4, %s20
        %p497 = scmp.lt.s32.totalorder %s496, 31
        %s498 = scalar_select %p497, %s496, 31
        %s499 = smul.addr %s498, 8
        %s500 = scalar_lea.vmem %s0, %s499
        %p501 = pneg %p48
        %p502 = pneg %p45
        %s503 = sand.u32 %s63, 1
        %s504 = sand.u32 %s63, 1
        %s505 = smul.addr %s504, 1024
        %s506 = scalar_lea.vmem [#allocation3], %s505
        %p507 = pneg %p76
        %p508 = pneg %p73
        %s509 = smul.u32 2, %s19
        %p510 = scmp.lt.s32.totalorder %s509, 3
        %s511 = scalar_select %p510, %s509, 3
        %s512 = scalar_lea.vmem %s2, %s511
        %p513 = pneg %p102
        %p514 = pneg %p99
        %s515 = smul.u32 2, %s19
        %p516 = scmp.lt.s32.totalorder %s515, 3
        %s517 = scalar_select %p516, %s515, 3
        %s518 = scalar_lea.vmem %s3, %s517
        %p519 = pneg %p128
        %p520 = pneg %p125
        %p521 = pneg %p154
        %p522 = pneg %p151
        %s523 = smul.u32 2, %s19
        %p524 = scmp.lt.s32.totalorder %s523, 3
        %s525 = scalar_select %p524, %s523, 3
        %s526 = smul.addr %s525, 8
        %s527 = scalar_lea.vmem %s4, %s526
        %s528 = smul.u32 4, %s20
        %p529 = scmp.lt.s32.totalorder %s528, 31
        %s530 = scalar_select %p529, %s528, 31
        %s531 = smul.addr %s530, 8
        %s532 = scalar_lea.vmem %s0, %s531
        %s533 = smul.u32 4, %s20
        %s534 = smul.u32 64, %s20
        %s535 = smul.u32 2, %s19
        %s536 = smul.u32 2, %s19
        %p537 = scmp.lt.s32.totalorder %s536, 3
        %s538 = scalar_select %p537, %s536, 3
        %s539 = scalar_lea.vmem %s2, %s538
        %s540 = smul.u32 2, %s19
        %s541 = smul.u32 2, %s19
        %p542 = scmp.lt.s32.totalorder %s541, 3
        %s543 = scalar_select %p542, %s541, 3
        %s544 = scalar_lea.vmem %s3, %s543
        %s545 = smul.u32 2, %s19
        %s546 = smul.u32 2, %s19
        %p547 = scmp.lt.s32.totalorder %s546, 3
        %s548 = scalar_select %p547, %s546, 3
        %s549 = smul.addr %s548, 8
        %s550 = scalar_lea.vmem %s4, %s549
        %s551 = smul.u32 2, %s19
        %p552 = scmp.eq.s32.totalorder %s20, 0
        // Predicated region
        $region60: #{fusegan_discriminator_forward.11} parent=54 // pred_check
          %p553 = pneg %p552
        $region61: #{fusegan_discriminator_forward.11} parent=54 // pred_check_branch
          %555 = sbr.rel (%p553) target = $region63
        $region62: #{fusegan_discriminator_forward.11} parent=54 // pred_region
          %556 = vst [vmem:[#allocation2] sm:$0xff] 0.0
          %557 = vst [vmem:[#allocation2 + $0x8] sm:$0xff] 0.0
        $region63: #{fusegan_discriminator_forward.11} parent=54 // pred_fallthru
          _
        %v558 = vld [vmem:[#allocation2] sm:$0xff]
        %v559 = vld [vmem:[#allocation2 + $0x8] sm:$0xff]
        %v560 = vld [vmem:[%s532] sm:$0xff]
        %v561 = vld [vmem:[%s532 + $0x8] sm:$0xff]
        %v562 = vld [vmem:[%s532 + $0x10] sm:$0xff]
        %v563 = vld [vmem:[%s532 + $0x18] sm:$0xff]
        %v564 = vld [vmem:[%s492] sm:$0xff]
        %v565 = vld [vmem:[%s492 + $0x8] sm:$0xff]
        %v566 = vld [vmem:[%s492 + $0x10] sm:$0xff]
        %v567 = vld [vmem:[%s492 + $0x18] sm:$0xff]
        %v568 = vld [vmem:[%s492 + $0x20] sm:$0xff]
        %v569 = vld [vmem:[%s492 + $0x28] sm:$0xff]
        %v570 = vld [vmem:[%s492 + $0x30] sm:$0xff]
        %v571 = vld [vmem:[%s492 + $0x38] sm:$0xff]
        %v572 = vld [vmem:[%s492 + $0x40] sm:$0xff]
        %v573 = vld [vmem:[%s492 + $0x48] sm:$0xff]
        %v574 = vld [vmem:[%s492 + $0x50] sm:$0xff]
        %v575 = vld [vmem:[%s492 + $0x58] sm:$0xff]
        %v576 = vld [vmem:[%s492 + $0x60] sm:$0xff]
        %v577 = vld [vmem:[%s492 + $0x68] sm:$0xff]
        %v578 = vld [vmem:[%s492 + $0x70] sm:$0xff]
        %v579 = vld [vmem:[%s492 + $0x78] sm:$0xff]
        %v580 = vld [vmem:[%s492 + $0x80] sm:$0xff]
        %v581 = vld [vmem:[%s492 + $0x88] sm:$0xff]
        %v582 = vld [vmem:[%s492 + $0x90] sm:$0xff]
        %v583 = vld [vmem:[%s492 + $0x98] sm:$0xff]
        %v584 = vld [vmem:[%s492 + $0xa0] sm:$0xff]
        %v585 = vld [vmem:[%s492 + $0xa8] sm:$0xff]
        %v586 = vld [vmem:[%s492 + $0xb0] sm:$0xff]
        %v587 = vld [vmem:[%s492 + $0xb8] sm:$0xff]
        %v588 = vld [vmem:[%s492 + $0xc0] sm:$0xff]
        %v589 = vld [vmem:[%s492 + $0xc8] sm:$0xff]
        %v590 = vld [vmem:[%s492 + $0xd0] sm:$0xff]
        %v591 = vld [vmem:[%s492 + $0xd8] sm:$0xff]
        %v592 = vld [vmem:[%s492 + $0xe0] sm:$0xff]
        %v593 = vld [vmem:[%s492 + $0xe8] sm:$0xff]
        %v594 = vld [vmem:[%s492 + $0xf0] sm:$0xff]
        %v595 = vld [vmem:[%s492 + $0xf8] sm:$0xff]
        %v596 = vld [vmem:[%s492 + $0x100] sm:$0xff]
        %v597 = vld [vmem:[%s492 + $0x108] sm:$0xff]
        %v598 = vld [vmem:[%s492 + $0x110] sm:$0xff]
        %v599 = vld [vmem:[%s492 + $0x118] sm:$0xff]
        %v600 = vld [vmem:[%s492 + $0x120] sm:$0xff]
        %v601 = vld [vmem:[%s492 + $0x128] sm:$0xff]
        %v602 = vld [vmem:[%s492 + $0x130] sm:$0xff]
        %v603 = vld [vmem:[%s492 + $0x138] sm:$0xff]
        %v604 = vld [vmem:[%s492 + $0x140] sm:$0xff]
        %v605 = vld [vmem:[%s492 + $0x148] sm:$0xff]
        %v606 = vld [vmem:[%s492 + $0x150] sm:$0xff]
        %v607 = vld [vmem:[%s492 + $0x158] sm:$0xff]
        %v608 = vld [vmem:[%s492 + $0x160] sm:$0xff]
        %v609 = vld [vmem:[%s492 + $0x168] sm:$0xff]
        %v610 = vld [vmem:[%s492 + $0x170] sm:$0xff]
        %v611 = vld [vmem:[%s492 + $0x178] sm:$0xff]
        %v612 = vld [vmem:[%s492 + $0x180] sm:$0xff]
        %v613 = vld [vmem:[%s492 + $0x188] sm:$0xff]
        %v614 = vld [vmem:[%s492 + $0x190] sm:$0xff]
        %v615 = vld [vmem:[%s492 + $0x198] sm:$0xff]
        %v616 = vld [vmem:[%s492 + $0x1a0] sm:$0xff]
        %v617 = vld [vmem:[%s492 + $0x1a8] sm:$0xff]
        %v618 = vld [vmem:[%s492 + $0x1b0] sm:$0xff]
        %v619 = vld [vmem:[%s492 + $0x1b8] sm:$0xff]
        %v620 = vld [vmem:[%s492 + $0x1c0] sm:$0xff]
        %v621 = vld [vmem:[%s492 + $0x1c8] sm:$0xff]
        %v622 = vld [vmem:[%s492 + $0x1d0] sm:$0xff]
        %v623 = vld [vmem:[%s492 + $0x1d8] sm:$0xff]
        %v624 = vld [vmem:[%s492 + $0x1e0] sm:$0xff]
        %v625 = vld [vmem:[%s492 + $0x1e8] sm:$0xff]
        %v626 = vld [vmem:[%s492 + $0x1f0] sm:$0xff]
        %v627 = vld [vmem:[%s492 + $0x1f8] sm:$0xff]
        %v628 = vld [vmem:[%s492 + $0x200] sm:$0xff]
        %v629 = vld [vmem:[%s492 + $0x208] sm:$0xff]
        %v630 = vld [vmem:[%s492 + $0x210] sm:$0xff]
        %v631 = vld [vmem:[%s492 + $0x218] sm:$0xff]
        %v632 = vld [vmem:[%s492 + $0x220] sm:$0xff]
        %v633 = vld [vmem:[%s492 + $0x228] sm:$0xff]
        %v634 = vld [vmem:[%s492 + $0x230] sm:$0xff]
        %v635 = vld [vmem:[%s492 + $0x238] sm:$0xff]
        %v636 = vld [vmem:[%s492 + $0x240] sm:$0xff]
        %v637 = vld [vmem:[%s492 + $0x248] sm:$0xff]
        %v638 = vld [vmem:[%s492 + $0x250] sm:$0xff]
        %v639 = vld [vmem:[%s492 + $0x258] sm:$0xff]
        %v640 = vld [vmem:[%s492 + $0x260] sm:$0xff]
        %v641 = vld [vmem:[%s492 + $0x268] sm:$0xff]
        %v642 = vld [vmem:[%s492 + $0x270] sm:$0xff]
        %v643 = vld [vmem:[%s492 + $0x278] sm:$0xff]
        %v644 = vld [vmem:[%s492 + $0x280] sm:$0xff]
        %v645 = vld [vmem:[%s492 + $0x288] sm:$0xff]
        %v646 = vld [vmem:[%s492 + $0x290] sm:$0xff]
        %v647 = vld [vmem:[%s492 + $0x298] sm:$0xff]
        %v648 = vld [vmem:[%s492 + $0x2a0] sm:$0xff]
        %v649 = vld [vmem:[%s492 + $0x2a8] sm:$0xff]
        %v650 = vld [vmem:[%s492 + $0x2b0] sm:$0xff]
        %v651 = vld [vmem:[%s492 + $0x2b8] sm:$0xff]
        %v652 = vld [vmem:[%s492 + $0x2c0] sm:$0xff]
        %v653 = vld [vmem:[%s492 + $0x2c8] sm:$0xff]
        %v654 = vld [vmem:[%s492 + $0x2d0] sm:$0xff]
        %v655 = vld [vmem:[%s492 + $0x2d8] sm:$0xff]
        %v656 = vld [vmem:[%s492 + $0x2e0] sm:$0xff]
        %v657 = vld [vmem:[%s492 + $0x2e8] sm:$0xff]
        %v658 = vld [vmem:[%s492 + $0x2f0] sm:$0xff]
        %v659 = vld [vmem:[%s492 + $0x2f8] sm:$0xff]
        %v660 = vld [vmem:[%s492 + $0x300] sm:$0xff]
        %v661 = vld [vmem:[%s492 + $0x308] sm:$0xff]
        %v662 = vld [vmem:[%s492 + $0x310] sm:$0xff]
        %v663 = vld [vmem:[%s492 + $0x318] sm:$0xff]
        %v664 = vld [vmem:[%s492 + $0x320] sm:$0xff]
        %v665 = vld [vmem:[%s492 + $0x328] sm:$0xff]
        %v666 = vld [vmem:[%s492 + $0x330] sm:$0xff]
        %v667 = vld [vmem:[%s492 + $0x338] sm:$0xff]
        %v668 = vld [vmem:[%s492 + $0x340] sm:$0xff]
        %v669 = vld [vmem:[%s492 + $0x348] sm:$0xff]
        %v670 = vld [vmem:[%s492 + $0x350] sm:$0xff]
        %v671 = vld [vmem:[%s492 + $0x358] sm:$0xff]
        %v672 = vld [vmem:[%s492 + $0x360] sm:$0xff]
        %v673 = vld [vmem:[%s492 + $0x368] sm:$0xff]
        %v674 = vld [vmem:[%s492 + $0x370] sm:$0xff]
        %v675 = vld [vmem:[%s492 + $0x378] sm:$0xff]
        %v676 = vld [vmem:[%s492 + $0x380] sm:$0xff]
        %v677 = vld [vmem:[%s492 + $0x388] sm:$0xff]
        %v678 = vld [vmem:[%s492 + $0x390] sm:$0xff]
        %v679 = vld [vmem:[%s492 + $0x398] sm:$0xff]
        %v680 = vld [vmem:[%s492 + $0x3a0] sm:$0xff]
        %v681 = vld [vmem:[%s492 + $0x3a8] sm:$0xff]
        %v682 = vld [vmem:[%s492 + $0x3b0] sm:$0xff]
        %v683 = vld [vmem:[%s492 + $0x3b8] sm:$0xff]
        %v684 = vld [vmem:[%s492 + $0x3c0] sm:$0xff]
        %v685 = vld [vmem:[%s492 + $0x3c8] sm:$0xff]
        %v686 = vld [vmem:[%s492 + $0x3d0] sm:$0xff]
        %v687 = vld [vmem:[%s492 + $0x3d8] sm:$0xff]
        %v688 = vld [vmem:[%s492 + $0x3e0] sm:$0xff]
        %v689 = vld [vmem:[%s492 + $0x3e8] sm:$0xff]
        %v690 = vld [vmem:[%s492 + $0x3f0] sm:$0xff]
        %v691 = vld [vmem:[%s492 + $0x3f8] sm:$0xff]
        %692 = vmatprep.subr.mxu0 %v595
        %693 = vmatpush1.msra.mxu0 %v594
        %694 = vmatprep.subr.mxu0 %v593
        %695 = vmatpush1.msra.mxu0 %v592
        %696 = vmatprep.subr.mxu0 %v591
        %697 = vmatpush1.msra.mxu0 %v590
        %698 = vmatprep.subr.mxu0 %v589
        %699 = vmatpush1.msra.mxu0 %v588
        %700 = vmatprep.subr.mxu0 %v587
        %701 = vmatpush1.msra.mxu0 %v586
        %702 = vmatprep.subr.mxu0 %v585
        %703 = vmatpush1.msra.mxu0 %v584
        %704 = vmatprep.subr.mxu0 %v583
        %705 = vmatpush1.msra.mxu0 %v582
        %706 = vmatprep.subr.mxu0 %v581
        %707 = vmatpush1.msra.mxu0 %v580
        %708 = vmatprep.subr.mxu0 %v579
        %709 = vmatpush1.msra.mxu0 %v578
        %710 = vmatprep.subr.mxu0 %v577
        %711 = vmatpush1.msra.mxu0 %v576
        %712 = vmatprep.subr.mxu0 %v575
        %713 = vmatpush1.msra.mxu0 %v574
        %714 = vmatprep.subr.mxu0 %v573
        %715 = vmatpush1.msra.mxu0 %v572
        %716 = vmatprep.subr.mxu0 %v571
        %717 = vmatpush1.msra.mxu0 %v570
        %718 = vmatprep.subr.mxu0 %v569
        %719 = vmatpush1.msra.mxu0 %v568
        %720 = vmatprep.subr.mxu0 %v567
        %721 = vmatpush1.msra.mxu0 %v566
        %722 = vmatprep.subr.mxu0 %v565
        %723 = vmatpush1.msra.mxu0 %v564
        %724 = vmatprep.subr.mxu0 %v627
        %725 = vmatpush2.msra.mxu0 %v626
        %726 = vmatprep.subr.mxu0 %v625
        %727 = vmatpush2.msra.mxu0 %v624
        %728 = vmatprep.subr.mxu0 %v623
        %729 = vmatpush2.msra.mxu0 %v622
        %730 = vmatprep.subr.mxu0 %v621
        %731 = vmatpush2.msra.mxu0 %v620
        %732 = vmatprep.subr.mxu0 %v619
        %733 = vmatpush2.msra.mxu0 %v618
        %734 = vmatprep.subr.mxu0 %v617
        %735 = vmatpush2.msra.mxu0 %v616
        %736 = vmatprep.subr.mxu0 %v615
        %737 = vmatpush2.msra.mxu0 %v614
        %738 = vmatprep.subr.mxu0 %v613
        %739 = vmatpush2.msra.mxu0 %v612
        %740 = vmatprep.subr.mxu0 %v611
        %741 = vmatpush2.msra.mxu0 %v610
        %742 = vmatprep.subr.mxu0 %v609
        %743 = vmatpush2.msra.mxu0 %v608
        %744 = vmatprep.subr.mxu0 %v607
        %745 = vmatpush2.msra.mxu0 %v606
        %746 = vmatprep.subr.mxu0 %v605
        %747 = vmatpush2.msra.mxu0 %v604
        %748 = vmatprep.subr.mxu0 %v603
        %749 = vmatpush2.msra.mxu0 %v602
        %750 = vmatprep.subr.mxu0 %v601
        %751 = vmatpush2.msra.mxu0 %v600
        %752 = vmatprep.subr.mxu0 %v599
        %753 = vmatpush2.msra.mxu0 %v598
        %754 = vmatprep.subr.mxu0 %v597
        %755 = vmatpush2.msra.mxu0 %v596
        %756 = vmatprep.mubr.f32.mxu0 %v561
        %757 = vmatmul.mubr.f32.gmra.mxu0 %v560
        %v758 = vpop.f32.mrf.mxu0
        %v759 = vadd.f32 0.0, %v758
        %v760 = vpop.f32.mrf.mxu0
        %v761 = vadd.f32 0.0, %v760
        %762 = vdwg.mxu0
        %763 = vmatprep.subr.mxu0 %v659
        %764 = vmatpush1.msra.mxu0 %v658
        %765 = vmatprep.subr.mxu0 %v657
        %766 = vmatpush1.msra.mxu0 %v656
        %767 = vmatprep.subr.mxu0 %v655
        %768 = vmatpush1.msra.mxu0 %v654
        %769 = vmatprep.subr.mxu0 %v653
        %770 = vmatpush1.msra.mxu0 %v652
        %771 = vmatprep.subr.mxu0 %v651
        %772 = vmatpush1.msra.mxu0 %v650
        %773 = vmatprep.subr.mxu0 %v649
        %774 = vmatpush1.msra.mxu0 %v648
        %775 = vmatprep.subr.mxu0 %v647
        %776 = vmatpush1.msra.mxu0 %v646
        %777 = vmatprep.subr.mxu0 %v645
        %778 = vmatpush1.msra.mxu0 %v644
        %779 = vmatprep.subr.mxu0 %v643
        %780 = vmatpush1.msra.mxu0 %v642
        %781 = vmatprep.subr.mxu0 %v641
        %782 = vmatpush1.msra.mxu0 %v640
        %783 = vmatprep.subr.mxu0 %v639
        %784 = vmatpush1.msra.mxu0 %v638
        %785 = vmatprep.subr.mxu0 %v637
        %786 = vmatpush1.msra.mxu0 %v636
        %787 = vmatprep.subr.mxu0 %v635
        %788 = vmatpush1.msra.mxu0 %v634
        %789 = vmatprep.subr.mxu0 %v633
        %790 = vmatpush1.msra.mxu0 %v632
        %791 = vmatprep.subr.mxu0 %v631
        %792 = vmatpush1.msra.mxu0 %v630
        %793 = vmatprep.subr.mxu0 %v629
        %794 = vmatpush1.msra.mxu0 %v628
        %795 = vmatprep.subr.mxu0 %v691
        %796 = vmatpush2.msra.mxu0 %v690
        %797 = vmatprep.subr.mxu0 %v689
        %798 = vmatpush2.msra.mxu0 %v688
        %799 = vmatprep.subr.mxu0 %v687
        %800 = vmatpush2.msra.mxu0 %v686
        %801 = vmatprep.subr.mxu0 %v685
        %802 = vmatpush2.msra.mxu0 %v684
        %803 = vmatprep.subr.mxu0 %v683
        %804 = vmatpush2.msra.mxu0 %v682
        %805 = vmatprep.subr.mxu0 %v681
        %806 = vmatpush2.msra.mxu0 %v680
        %807 = vmatprep.subr.mxu0 %v679
        %808 = vmatpush2.msra.mxu0 %v678
        %809 = vmatprep.subr.mxu0 %v677
        %810 = vmatpush2.msra.mxu0 %v676
        %811 = vmatprep.subr.mxu0 %v675
        %812 = vmatpush2.msra.mxu0 %v674
        %813 = vmatprep.subr.mxu0 %v673
        %814 = vmatpush2.msra.mxu0 %v672
        %815 = vmatprep.subr.mxu0 %v671
        %816 = vmatpush2.msra.mxu0 %v670
        %817 = vmatprep.subr.mxu0 %v669
        %818 = vmatpush2.msra.mxu0 %v668
        %819 = vmatprep.subr.mxu0 %v667
        %820 = vmatpush2.msra.mxu0 %v666
        %821 = vmatprep.subr.mxu0 %v665
        %822 = vmatpush2.msra.mxu0 %v664
        %823 = vmatprep.subr.mxu0 %v663
        %824 = vmatpush2.msra.mxu0 %v662
        %825 = vmatprep.subr.mxu0 %v661
        %826 = vmatpush2.msra.mxu0 %v660
        %827 = vmatprep.mubr.f32.mxu0 %v563
        %828 = vmatmul.mubr.f32.gmra.mxu0 %v562
        %v829 = vpop.f32.mrf.mxu0
        %v830 = vadd.f32 %v759, %v829
        %v831 = vpop.f32.mrf.mxu0
        %v832 = vadd.f32 %v761, %v831
        %833 = vdwg.mxu0
        %v834 = vadd.f32 %v558, %v830
        %v835 = vadd.f32 %v559, %v832
        %836 = vst [vmem:[#allocation2] sm:$0xff] %v834
        %837 = vst [vmem:[#allocation2 + $0x8] sm:$0xff] %v835
        %p838 = scmp.eq.s32.totalorder %s20, 7
        // Predicated region
        $region64: #{fusegan_discriminator_forward.11} parent=54 // pred_check
          %p839 = pneg %p838
        $region65: #{fusegan_discriminator_forward.11} parent=54 // pred_check_branch
          %841 = sbr.rel (%p839) target = $region67
        $region66: #{fusegan_discriminator_forward.11} parent=54 // pred_region
          %v842 = vld [vmem:[#allocation2] sm:$0xff]
          %v843 = vld [vmem:[#allocation2 + $0x8] sm:$0xff]
          %v844 = vrot.slane %v842, 4
          %v845 = vadd.f32 %v842, %v844
          %v846 = vrot.slane %v845, 2
          %v847 = vadd.f32 %v845, %v846
          %v848 = vrot.slane %v847, 1
          %v849 = vadd.f32 %v847, %v848
          %v850 = vrot.slane %v843, 4
          %v851 = vadd.f32 %v843, %v850
          %v852 = vrot.slane %v851, 2
          %v853 = vadd.f32 %v851, %v852
          %v854 = vrot.slane %v853, 1
          %v855 = vadd.f32 %v853, %v854
          %v856 = vmul.f32 %v849, 0.125
          %v857 = vmul.f32 %v855, 0.125
          %v858 = vsub.f32 %v842, %v856
          %v859 = vsub.f32 %v843, %v857
          %v860 = vmul.f32 %v858, %v858
          %v861 = vmul.f32 %v859, %v859
          %v862 = vrot.slane %v860, 4
          %v863 = vadd.f32 %v860, %v862
          %v864 = vrot.slane %v863, 2
          %v865 = vadd.f32 %v863, %v864
          %v866 = vrot.slane %v865, 1
          %v867 = vadd.f32 %v865, %v866
          %v868 = vrot.slane %v861, 4
          %v869 = vadd.f32 %v861, %v868
          %v870 = vrot.slane %v869, 2
          %v871 = vadd.f32 %v869, %v870
          %v872 = vrot.slane %v871, 1
          %v873 = vadd.f32 %v871, %v872
          %v874 = vmul.f32 %v867, 0.125
          %v875 = vmul.f32 %v873, 0.125
          %v876 = vld [vmem:[%s539] sm:$0x3]
          %v877 = vadd.f32 %v874, 1e-05
          %v878 = vadd.f32 %v875, 1e-05
          %v879 = vrsqrt.pop %v877
          %v880 = vrsqrt.pop %v878
          %v883 = vcombine.low %v879, %v880
          %v885 = vunpack.c.l.s4 1966171168
          %v886 = vunpack.c.0.s8 %v885
          %v887 = vlaneseq
          %v888 = vshrl.u32 %v887, 7
          %v889 = vsub.s32 %v886, %v888
          %v890 = vrot.slane %v883, %v889
          %v892 = vunpack.c.l.s4 1966171168
          %v893 = vunpack.c.0.s8 %v892
          %v894 = vlaneseq
          %v895 = vshrl.u32 %v894, 7
          %v896 = vsub.s32 %v893, %v895
          %v897 = vrot.slane %v890, %v896
          %v899 = vmul.f32 %v876, %v897
          %v901 = vlaneseq
          %v902 = vshrl.u32 %v901, 7
          %v903 = vsub.s32 0, %v902
          %v904 = vrot.slane %v899, %v903
          %v905 = vlaneseq
          %v906 = vshrl.u32 %v905, 7
          %v907 = vsub.s32 1, %v906
          %v908 = vrot.slane %v899, %v907
          %v911 = vmul.f32 %v858, %v904
          %v912 = vmul.f32 %v859, %v908
          %v913 = vld [vmem:[%s544] sm:$0x3]
          %v915 = vlaneseq
          %v916 = vshrl.u32 %v915, 7
          %v917 = vsub.s32 0, %v916
          %v918 = vrot.slane %v913, %v917
          %v919 = vlaneseq
          %v920 = vshrl.u32 %v919, 7
          %v921 = vsub.s32 1, %v920
          %v922 = vrot.slane %v913, %v921
          %v925 = vadd.f32 %v911, %v918
          %v926 = vadd.f32 %v912, %v922
          %vm927 = vcmp.ge.f32.partialorder %v925, 0.0
          %vm928 = vcmp.ge.f32.partialorder %v926, 0.0
          %v929 = vmul.f32 %v925, 0.01
          %v930 = vmul.f32 %v926, 0.01
          %v931 = vsel %vm927, %v925, %v929
          %v932 = vsel %vm928, %v926, %v930
          %933 = vst [vmem:[%s550] sm:$0xff] %v931
          %934 = vst [vmem:[%s550 + $0x8] sm:$0xff] %v932
        $region67: #{fusegan_discriminator_forward.11} parent=54 // pred_fallthru
          _
        %s935 = smul.u32 2, %s19
        %p936 = scmp.lt.s32.totalorder %s935, 3
        %s937 = scalar_select %p936, %s935, 3
        %s938 = smul.addr %s937, 8
        %s939 = scalar_lea.vmem %s4, %s938
        // Predicated region
        $region68: #{fusegan_discriminator_forward.11} parent=54 // pred_check
          %p940 = pneg %p151
        $region69: #{fusegan_discriminator_forward.11} parent=54 // pred_check_branch
          %942 = sbr.rel (%p940) target = $region71
        $region70: #{fusegan_discriminator_forward.11} parent=54 // pred_region
          %s943 = smul.u32 2, %s19
        $region71: #{fusegan_discriminator_forward.11} parent=54 // pred_fallthru
          _
      $region55: #{fusegan_discriminator_forward.11} parent=5 // pred_fallthru
        _
      %p944 = scmp.le.s32.totalorder 2, %s10
      // Predicated region
      $region72: #{fusegan_discriminator_forward.11} parent=5 // pred_check
        %p945 = pneg %p944
      $region73: #{fusegan_discriminator_forward.11} parent=5 // pred_check_branch
        %947 = sbr.rel (%p945) target = $region75
      $region74: #{fusegan_discriminator_forward.11} parent=5 // pred_region
        %s948 = ssub.s32 %s10, 2
        // Predicated region
        $region76: #{fusegan_discriminator_forward.11} parent=74 // pred_check
          %p949 = pneg %p157
        $region77: #{fusegan_discriminator_forward.11} parent=74 // pred_check_branch
          %951 = sbr.rel (%p949) target = $region79
        $region78: #{fusegan_discriminator_forward.11} parent=74 // pred_region
          %s952 = smul.u32 2, %s21
          %p953 = scmp.lt.s32.totalorder %s952, 3
          %s954 = scalar_select %p953, %s952, 3
          %s955 = smul.addr %s954, 8
          %s956 = scalar_lea.vmem %s4, %s955
        $region79: #{fusegan_discriminator_forward.11} parent=74 // pred_fallthru
          _
      $region75: #{fusegan_discriminator_forward.11} parent=5 // pred_fallthru
        _
    $region6: #{fusegan_discriminator_forward.11} parent=1 // loop_footer
      %s14 = sadd.s32 1, %s10
    $region7: #{fusegan_discriminator_forward.11} parent=1 // loop_footer_branch
      %9 = sbr.rel target = $region3
    $region8: #{fusegan_discriminator_forward.11} parent=1 // loop_exit
      _

// kernel: fusegan_discriminator_forward.12
$region0: #{fusegan_discriminator_forward.12}
  #allocation0 [shape = 'u32[]', space=smem, size = 0x4, offset = 0x4, fixed_abs, tag = 'smem constant byte address 0x4 - core index']
  #allocation1 [shape = 'u32[144,128]{1,0:T(1,128)}', space=vmem, size = 0x12000, scoped, tag = 'internal scratch']
  #allocation2 [shape = 'f32[8,256]{1,0:T(8,128)}', space=vmem, size = 0x2000, scoped, tag = 'scratch operand']
  %s0 = inlined_call_operand.vmem [shape: f32[8,8192], index: 0, kind: input, shape index: {}]
  %s1 = inlined_call_operand.vmem [shape: f32[8192,512], index: 1, kind: input, shape index: {}]
  %s2 = inlined_call_operand.vmem [shape: f32[1,512], index: 2, kind: input, shape index: {}]
  %s3 = inlined_call_operand.vmem [shape: f32[1,512], index: 3, kind: input, shape index: {}]
  %s4 = inlined_call_operand.vmem [shape: f32[8,512], index: 4, kind: output, shape index: {}]
  %s5 = sld [smem:[#allocation0]]
  $region80: #{fusegan_discriminator_forward.12} parent=0
    _
  %s7 = ssub.s32 1, %s5
  %s8 = scalar_select 0, %s7, %s5
  $region1: #{fusegan_discriminator_forward.12} parent=0
    #allocation3 [shape = 'u8[1048576]{0}', space=vmem, size = 0x100000, scoped, tag = 'input window, operand 1']
    loop: start=0, step=1, limit=34
    $region2: #{fusegan_discriminator_forward.12} parent=1 // loop_pre_header
      _
    $region3: #{fusegan_discriminator_forward.12} parent=1 // loop_header
      %s10 = sphi 0, %s14
      %p11 = scmp.ge.s32.totalorder %s10, 34
      %s17 = sphi 0, %s29
      %s18 = sphi 0, %s25
      %s19 = sphi 0, %s17
      %s20 = sphi 0, %s18
      %s21 = sphi 0, %s19
      %s22 = sphi 0, %s20
      %s32 = sphi 0, %s34
      %s35 = sphi 0, %s32
      %s36 = sphi 0, %s35
      %s52 = sphi 0, %s36
      %s60 = sphi 0, %s62
      %s63 = sphi 0, %s60
      %s64 = sphi 0, %s63
      %s80 = sphi 0, %s64
      %s86 = sphi 0, %s88
      %s89 = sphi 0, %s86
      %s90 = sphi 0, %s89
      %s106 = sphi 0, %s90
      %s112 = sphi 0, %s114
      %s115 = sphi 0, %s112
      %s116 = sphi 0, %s115
      %s132 = sphi 0, %s116
      %s138 = sphi 0, %s140
      %s141 = sphi 0, %s138
      %s142 = sphi 0, %s141
      %s158 = sphi 0, %s142
    $region4: #{fusegan_discriminator_forward.12} parent=1 // loop_header_branch
      %13 = sbr.rel (%p11) target = $region8
    $region5: #{fusegan_discriminator_forward.12} parent=1 // loop_body
      %s15 = ssub.s32 %s10, 1
      %s16 = ssub.s32 %s10, 2
      %s23 = sadd.s32 1, %s18
      %p24 = scmp.ge.s32.totalorder %s23, 16
      %s25 = scalar_select %p24, 0, %s23
      %s26 = sadd.s32 1, %s17
      %s27 = scalar_select %p24, %s26, %s17
      %p28 = scmp.ge.s32.totalorder %s27, 2
      %s29 = scalar_select %p28, 0, %s27
      %s30 = ssub.s32 %s18, %s25
      %p31 = scmp.eq.s32.totalorder %s30, 0
      %s33 = sadd.s32 %s32, 1
      %s34 = scalar_select %p31, %s32, %s33
      %p37 = pneg %p31
      %p38 = scmp.eq.s32.totalorder %s10, 31
      %p39 = por %p37, %p38
      %p40 = scmp.ne.s32.totalorder %s32, %s35
      %p41 = scmp.eq.s32.totalorder %s10, 0
      %p42 = por %p40, %p41
      %p43 = scmp.ne.s32.totalorder %s32, %s35
      %p44 = scmp.eq.s32.totalorder %s15, 31
      %p45 = por %p43, %p44
      %p46 = scmp.ne.s32.totalorder %s35, %s36
      %p47 = scmp.eq.s32.totalorder %s15, 0
      %p48 = por %p46, %p47
      %p49 = scmp.ne.s32.totalorder %s35, %s36
      %p50 = scmp.eq.s32.totalorder %s16, 31
      %p51 = por %p49, %p50
      %p53 = scmp.ne.s32.totalorder %s36, %s52
      %p54 = scmp.eq.s32.totalorder %s16, 0
      %p55 = por %p53, %p54
      %s56 = ssub.s32 %s18, %s25
      %s57 = ssub.s32 %s17, %s29
      %s58 = sor.u32 %s56, %s57
      %p59 = scmp.eq.s32.totalorder %s58, 0
      %s61 = sadd.s32 %s60, 1
      %s62 = scalar_select %p59, %s60, %s61
      %p65 = pneg %p59
      %p66 = scmp.eq.s32.totalorder %s10, 31
      %p67 = por %p65, %p66
      %p68 = scmp.ne.s32.totalorder %s60, %s63
      %p69 = scmp.eq.s32.totalorder %s10, 0
      %p70 = por %p68, %p69
      %p71 = scmp.ne.s32.totalorder %s60, %s63
      %p72 = scmp.eq.s32.totalorder %s15, 31
      %p73 = por %p71, %p72
      %p74 = scmp.ne.s32.totalorder %s63, %s64
      %p75 = scmp.eq.s32.totalorder %s15, 0
      %p76 = por %p74, %p75
      %p77 = scmp.ne.s32.totalorder %s63, %s64
      %p78 = scmp.eq.s32.totalorder %s16, 31
      %p79 = por %p77, %p78
      %p81 = scmp.ne.s32.totalorder %s64, %s80
      %p82 = scmp.eq.s32.totalorder %s16, 0
      %p83 = por %p81, %p82
      %s84 = ssub.s32 %s17, %s29
      %p85 = scmp.eq.s32.totalorder %s84, 0
      %s87 = sadd.s32 %s86, 1
      %s88 = scalar_select %p85, %s86, %s87
      %p91 = pneg %p85
      %p92 = scmp.eq.s32.totalorder %s10, 31
      %p93 = por %p91, %p92
      %p94 = scmp.ne.s32.totalorder %s86, %s89
      %p95 = scmp.eq.s32.totalorder %s10, 0
      %p96 = por %p94, %p95
      %p97 = scmp.ne.s32.totalorder %s86, %s89
      %p98 = scmp.eq.s32.totalorder %s15, 31
      %p99 = por %p97, %p98
      %p100 = scmp.ne.s32.totalorder %s89, %s90
      %p101 = scmp.eq.s32.totalorder %s15, 0
      %p102 = por %p100, %p101
      %p103 = scmp.ne.s32.totalorder %s89, %s90
      %p104 = scmp.eq.s32.totalorder %s16, 31
      %p105 = por %p103, %p104
      %p107 = scmp.ne.s32.totalorder %s90, %s106
      %p108 = scmp.eq.s32.totalorder %s16, 0
      %p109 = por %p107, %p108
      %s110 = ssub.s32 %s17, %s29
      %p111 = scmp.eq.s32.totalorder %s110, 0
      %s113 = sadd.s32 %s112, 1
      %s114 = scalar_select %p111, %s112, %s113
      %p117 = pneg %p111
      %p118 = scmp.eq.s32.totalorder %s10, 31
      %p119 = por %p117, %p118
      %p120 = scmp.ne.s32.totalorder %s112, %s115
      %p121 = scmp.eq.s32.totalorder %s10, 0
      %p122 = por %p120, %p121
      %p123 = scmp.ne.s32.totalorder %s112, %s115
      %p124 = scmp.eq.s32.totalorder %s15, 31
      %p125 = por %p123, %p124
      %p126 = scmp.ne.s32.totalorder %s115, %s116
      %p127 = scmp.eq.s32.totalorder %s15, 0
      %p128 = por %p126, %p127
      %p129 = scmp.ne.s32.totalorder %s115, %s116
      %p130 = scmp.eq.s32.totalorder %s16, 31
      %p131 = por %p129, %p130
      %p133 = scmp.ne.s32.totalorder %s116, %s132
      %p134 = scmp.eq.s32.totalorder %s16, 0
      %p135 = por %p133, %p134
      %s136 = ssub.s32 %s17, %s29
      %p137 = scmp.eq.s32.totalorder %s136, 0
      %s139 = sadd.s32 %s138, 1
      %s140 = scalar_select %p137, %s138, %s139
      %p143 = pneg %p137
      %p144 = scmp.eq.s32.totalorder %s10, 31
      %p145 = por %p143, %p144
      %p146 = scmp.ne.s32.totalorder %s138, %s141
      %p147 = scmp.eq.s32.totalorder %s10, 0
      %p148 = por %p146, %p147
      %p149 = scmp.ne.s32.totalorder %s138, %s141
      %p150 = scmp.eq.s32.totalorder %s15, 31
      %p151 = por %p149, %p150
      %p152 = scmp.ne.s32.totalorder %s141, %s142
      %p153 = scmp.eq.s32.totalorder %s15, 0
      %p154 = por %p152, %p153
      %p155 = scmp.ne.s32.totalorder %s141, %s142
      %p156 = scmp.eq.s32.totalorder %s16, 31
      %p157 = por %p155, %p156
      %p159 = scmp.ne.s32.totalorder %s142, %s158
      %p160 = scmp.eq.s32.totalorder %s16, 0
      %p161 = por %p159, %p160
      %p162 = scmp.le.s32.totalorder 1, %s10
      %p163 = scmp.lt.s32.totalorder %s10, 33
      %p164 = pnand %p162, %p163
      %p165 = pneg %p164
      // Predicated region
      $region9: #{fusegan_discriminator_forward.12} parent=5 // pred_check
        _
      $region10: #{fusegan_discriminator_forward.12} parent=5 // pred_check_branch
        %167 = sbr.rel (%p164) target = $region12
      $region11: #{fusegan_discriminator_forward.12} parent=5 // pred_region
        %s168 = ssub.s32 %s10, 1
      $region12: #{fusegan_discriminator_forward.12} parent=5 // pred_fallthru
        _
      %p169 = scmp.lt.s32.totalorder %s10, 32
      // Predicated region
      $region13: #{fusegan_discriminator_forward.12} parent=5 // pred_check
        %p170 = pneg %p169
      $region14: #{fusegan_discriminator_forward.12} parent=5 // pred_check_branch
        %172 = sbr.rel (%p170) target = $region16
      $region15: #{fusegan_discriminator_forward.12} parent=5 // pred_region
        // Predicated region
        $region17: #{fusegan_discriminator_forward.12} parent=15 // pred_check
          %p173 = pneg %p42
        $region18: #{fusegan_discriminator_forward.12} parent=15 // pred_check_branch
          %175 = sbr.rel (%p173) target = $region20
        $region19: #{fusegan_discriminator_forward.12} parent=15 // pred_region
          %s176 = smul.u32 4, %s18
          %p177 = scmp.lt.s32.totalorder %s176, 63
          %s178 = scalar_select %p177, %s176, 63
          %s179 = smul.addr %s178, 8
          %s180 = scalar_lea.vmem %s0, %s179
          %s181 = smul.u32 4, %s18
        $region20: #{fusegan_discriminator_forward.12} parent=15 // pred_fallthru
          _
        // Predicated region
        $region21: #{fusegan_discriminator_forward.12} parent=15 // pred_check
          %p182 = pneg %p70
        $region22: #{fusegan_discriminator_forward.12} parent=15 // pred_check_branch
          %184 = sbr.rel (%p182) target = $region24
        $region23: #{fusegan_discriminator_forward.12} parent=15 // pred_region
          %s185 = sand.u32 %s60, 1
          %s186 = sand.u32 %s60, 1
          %s187 = smul.addr %s186, 1024
          %s188 = scalar_lea.vmem [#allocation3], %s187
          %s189 = smul.u32 64, %s18
          %s190 = smul.u32 2, %s17
          %s191 = smul.addr %s189, 4
          %s192 = sadd.s32 %s190, %s191
          %s193 = smul.addr %s192, 8
          %s194 = scalar_lea.vmem %s1, %s193
          // Predicated region
          $region25: #{fusegan_discriminator_forward.12} parent=23 // pred_check
            _
          $region26: #{fusegan_discriminator_forward.12} parent=23 // pred_check_branch
            %196 = sbr.rel (0) target = $region28
          $region27: #{fusegan_discriminator_forward.12} parent=23 // pred_region
            // Predicated region
            $region29: #{fusegan_discriminator_forward.12} parent=27 // pred_check
              _
            $region30: #{fusegan_discriminator_forward.12} parent=27 // pred_check_branch
              %198 = sbr.rel (0) target = $region32
            $region31: #{fusegan_discriminator_forward.12} parent=27 // pred_region
              loop: start=0, step=1, limit=1
              $region33: #{fusegan_discriminator_forward.12} parent=31 // loop_pre_header
                _
              $region34: #{fusegan_discriminator_forward.12} parent=31 // loop_header
                %s200 = sphi 0, %s204
                %p201 = scmp.ge.s32.totalorder %s200, 1
                %s205 = sphi %s194, %s194
                %s206 = sphi %s188, %s188
              $region35: #{fusegan_discriminator_forward.12} parent=31 // loop_header_branch
                %203 = sbr.rel (%p201) target = $region39
              $region36: #{fusegan_discriminator_forward.12} parent=31 // loop_body
                %v207 = vld [vmem:[%s205] sm:$0xff]
                %208 = vst [vmem:[%s206] sm:$0xff] %v207
                %v209 = vld [vmem:[%s205 + $0x8] sm:$0xff]
                %210 = vst [vmem:[%s206 + $0x8] sm:$0xff] %v209
                %v211 = vld [vmem:[%s205 + $0x20] sm:$0xff]
                %212 = vst [vmem:[%s206 + $0x10] sm:$0xff] %v211
                %v213 = vld [vmem:[%s205 + $0x28] sm:$0xff]
                %214 = vst [vmem:[%s206 + $0x18] sm:$0xff] %v213
                %v215 = vld [vmem:[%s205 + $0x40] sm:$0xff]
                %216 = vst [vmem:[%s206 + $0x20] sm:$0xff] %v215
                %v217 = vld [vmem:[%s205 + $0x48] sm:$0xff]
                %218 = vst [vmem:[%s206 + $0x28] sm:$0xff] %v217
                %v219 = vld [vmem:[%s205 + $0x60] sm:$0xff]
                %220 = vst [vmem:[%s206 + $0x30] sm:$0xff] %v219
                %v221 = vld [vmem:[%s205 + $0x68] sm:$0xff]
                %222 = vst [vmem:[%s206 + $0x38] sm:$0xff] %v221
                %v223 = vld [vmem:[%s205 + $0x80] sm:$0xff]
                %224 = vst [vmem:[%s206 + $0x40] sm:$0xff] %v223
                %v225 = vld [vmem:[%s205 + $0x88] sm:$0xff]
                %226 = vst [vmem:[%s206 + $0x48] sm:$0xff] %v225
                %v227 = vld [vmem:[%s205 + $0xa0] sm:$0xff]
                %228 = vst [vmem:[%s206 + $0x50] sm:$0xff] %v227
                %v229 = vld [vmem:[%s205 + $0xa8] sm:$0xff]
                %230 = vst [vmem:[%s206 + $0x58] sm:$0xff] %v229
                %v231 = vld [vmem:[%s205 + $0xc0] sm:$0xff]
                %232 = vst [vmem:[%s206 + $0x60] sm:$0xff] %v231
                %v233 = vld [vmem:[%s205 + $0xc8] sm:$0xff]
                %234 = vst [vmem:[%s206 + $0x68] sm:$0xff] %v233
                %v235 = vld [vmem:[%s205 + $0xe0] sm:$0xff]
                %236 = vst [vmem:[%s206 + $0x70] sm:$0xff] %v235
                %v237 = vld [vmem:[%s205 + $0xe8] sm:$0xff]
                %238 = vst [vmem:[%s206 + $0x78] sm:$0xff] %v237
                %v239 = vld [vmem:[%s205 + $0x100] sm:$0xff]
                %240 = vst [vmem:[%s206 + $0x80] sm:$0xff] %v239
                %v241 = vld [vmem:[%s205 + $0x108] sm:$0xff]
                %242 = vst [vmem:[%s206 + $0x88] sm:$0xff] %v241
                %v243 = vld [vmem:[%s205 + $0x120] sm:$0xff]
                %244 = vst [vmem:[%s206 + $0x90] sm:$0xff] %v243
                %v245 = vld [vmem:[%s205 + $0x128] sm:$0xff]
                %246 = vst [vmem:[%s206 + $0x98] sm:$0xff] %v245
                %v247 = vld [vmem:[%s205 + $0x140] sm:$0xff]
                %248 = vst [vmem:[%s206 + $0xa0] sm:$0xff] %v247
                %v249 = vld [vmem:[%s205 + $0x148] sm:$0xff]
                %250 = vst [vmem:[%s206 + $0xa8] sm:$0xff] %v249
                %v251 = vld [vmem:[%s205 + $0x160] sm:$0xff]
                %252 = vst [vmem:[%s206 + $0xb0] sm:$0xff] %v251
                %v253 = vld [vmem:[%s205 + $0x168] sm:$0xff]
                %254 = vst [vmem:[%s206 + $0xb8] sm:$0xff] %v253
                %v255 = vld [vmem:[%s205 + $0x180] sm:$0xff]
                %256 = vst [vmem:[%s206 + $0xc0] sm:$0xff] %v255
                %v257 = vld [vmem:[%s205 + $0x188] sm:$0xff]
                %258 = vst [vmem:[%s206 + $0xc8] sm:$0xff] %v257
                %v259 = vld [vmem:[%s205 + $0x1a0] sm:$0xff]
                %260 = vst [vmem:[%s206 + $0xd0] sm:$0xff] %v259
                %v261 = vld [vmem:[%s205 + $0x1a8] sm:$0xff]
                %262 = vst [vmem:[%s206 + $0xd8] sm:$0xff] %v261
                %v263 = vld [vmem:[%s205 + $0x1c0] sm:$0xff]
                %264 = vst [vmem:[%s206 + $0xe0] sm:$0xff] %v263
                %v265 = vld [vmem:[%s205 + $0x1c8] sm:$0xff]
                %266 = vst [vmem:[%s206 + $0xe8] sm:$0xff] %v265
                %v267 = vld [vmem:[%s205 + $0x1e0] sm:$0xff]
                %268 = vst [vmem:[%s206 + $0xf0] sm:$0xff] %v267
                %v269 = vld [vmem:[%s205 + $0x1e8] sm:$0xff]
                %270 = vst [vmem:[%s206 + $0xf8] sm:$0xff] %v269
                %v271 = vld [vmem:[%s205 + $0x200] sm:$0xff]
                %272 = vst [vmem:[%s206 + $0x100] sm:$0xff] %v271
                %v273 = vld [vmem:[%s205 + $0x208] sm:$0xff]
                %274 = vst [vmem:[%s206 + $0x108] sm:$0xff] %v273
                %v275 = vld [vmem:[%s205 + $0x220] sm:$0xff]
                %276 = vst [vmem:[%s206 + $0x110] sm:$0xff] %v275
                %v277 = vld [vmem:[%s205 + $0x228] sm:$0xff]
                %278 = vst [vmem:[%s206 + $0x118] sm:$0xff] %v277
                %v279 = vld [vmem:[%s205 + $0x240] sm:$0xff]
                %280 = vst [vmem:[%s206 + $0x120] sm:$0xff] %v279
                %v281 = vld [vmem:[%s205 + $0x248] sm:$0xff]
                %282 = vst [vmem:[%s206 + $0x128] sm:$0xff] %v281
                %v283 = vld [vmem:[%s205 + $0x260] sm:$0xff]
                %284 = vst [vmem:[%s206 + $0x130] sm:$0xff] %v283
                %v285 = vld [vmem:[%s205 + $0x268] sm:$0xff]
                %286 = vst [vmem:[%s206 + $0x138] sm:$0xff] %v285
                %v287 = vld [vmem:[%s205 + $0x280] sm:$0xff]
                %288 = vst [vmem:[%s206 + $0x140] sm:$0xff] %v287
                %v289 = vld [vmem:[%s205 + $0x288] sm:$0xff]
                %290 = vst [vmem:[%s206 + $0x148] sm:$0xff] %v289
                %v291 = vld [vmem:[%s205 + $0x2a0] sm:$0xff]
                %292 = vst [vmem:[%s206 + $0x150] sm:$0xff] %v291
                %v293 = vld [vmem:[%s205 + $0x2a8] sm:$0xff]
                %294 = vst [vmem:[%s206 + $0x158] sm:$0xff] %v293
                %v295 = vld [vmem:[%s205 + $0x2c0] sm:$0xff]
                %296 = vst [vmem:[%s206 + $0x160] sm:$0xff] %v295
                %v297 = vld [vmem:[%s205 + $0x2c8] sm:$0xff]
                %298 = vst [vmem:[%s206 + $0x168] sm:$0xff] %v297
                %v299 = vld [vmem:[%s205 + $0x2e0] sm:$0xff]
                %300 = vst [vmem:[%s206 + $0x170] sm:$0xff] %v299
                %v301 = vld [vmem:[%s205 + $0x2e8] sm:$0xff]
                %302 = vst [vmem:[%s206 + $0x178] sm:$0xff] %v301
                %v303 = vld [vmem:[%s205 + $0x300] sm:$0xff]
                %304 = vst [vmem:[%s206 + $0x180] sm:$0xff] %v303
                %v305 = vld [vmem:[%s205 + $0x308] sm:$0xff]
                %306 = vst [vmem:[%s206 + $0x188] sm:$0xff] %v305
                %v307 = vld [vmem:[%s205 + $0x320] sm:$0xff]
                %308 = vst [vmem:[%s206 + $0x190] sm:$0xff] %v307
                %v309 = vld [vmem:[%s205 + $0x328] sm:$0xff]
                %310 = vst [vmem:[%s206 + $0x198] sm:$0xff] %v309
                %v311 = vld [vmem:[%s205 + $0x340] sm:$0xff]
                %312 = vst [vmem:[%s206 + $0x1a0] sm:$0xff] %v311
                %v313 = vld [vmem:[%s205 + $0x348] sm:$0xff]
                %314 = vst [vmem:[%s206 + $0x1a8] sm:$0xff] %v313
                %v315 = vld [vmem:[%s205 + $0x360] sm:$0xff]
                %316 = vst [vmem:[%s206 + $0x1b0] sm:$0xff] %v315
                %v317 = vld [vmem:[%s205 + $0x368] sm:$0xff]
                %318 = vst [vmem:[%s206 + $0x1b8] sm:$0xff] %v317
                %v319 = vld [vmem:[%s205 + $0x380] sm:$0xff]
                %320 = vst [vmem:[%s206 + $0x1c0] sm:$0xff] %v319
                %v321 = vld [vmem:[%s205 + $0x388] sm:$0xff]
                %322 = vst [vmem:[%s206 + $0x1c8] sm:$0xff] %v321
                %v323 = vld [vmem:[%s205 + $0x3a0] sm:$0xff]
                %324 = vst [vmem:[%s206 + $0x1d0] sm:$0xff] %v323
                %v325 = vld [vmem:[%s205 + $0x3a8] sm:$0xff]
                %326 = vst [vmem:[%s206 + $0x1d8] sm:$0xff] %v325
                %v327 = vld [vmem:[%s205 + $0x3c0] sm:$0xff]
                %328 = vst [vmem:[%s206 + $0x1e0] sm:$0xff] %v327
                %v329 = vld [vmem:[%s205 + $0x3c8] sm:$0xff]
                %330 = vst [vmem:[%s206 + $0x1e8] sm:$0xff] %v329
                %v331 = vld [vmem:[%s205 + $0x3e0] sm:$0xff]
                %332 = vst [vmem:[%s206 + $0x1f0] sm:$0xff] %v331
                %v333 = vld [vmem:[%s205 + $0x3e8] sm:$0xff]
                %334 = vst [vmem:[%s206 + $0x1f8] sm:$0xff] %v333
                %v335 = vld [vmem:[%s205 + $0x400] sm:$0xff]
                %336 = vst [vmem:[%s206 + $0x200] sm:$0xff] %v335
                %v337 = vld [vmem:[%s205 + $0x408] sm:$0xff]
                %338 = vst [vmem:[%s206 + $0x208] sm:$0xff] %v337
                %v339 = vld [vmem:[%s205 + $0x420] sm:$0xff]
                %340 = vst [vmem:[%s206 + $0x210] sm:$0xff] %v339
                %v341 = vld [vmem:[%s205 + $0x428] sm:$0xff]
                %342 = vst [vmem:[%s206 + $0x218] sm:$0xff] %v341
                %v343 = vld [vmem:[%s205 + $0x440] sm:$0xff]
                %344 = vst [vmem:[%s206 + $0x220] sm:$0xff] %v343
                %v345 = vld [vmem:[%s205 + $0x448] sm:$0xff]
                %346 = vst [vmem:[%s206 + $0x228] sm:$0xff] %v345
                %v347 = vld [vmem:[%s205 + $0x460] sm:$0xff]
                %348 = vst [vmem:[%s206 + $0x230] sm:$0xff] %v347
                %v349 = vld [vmem:[%s205 + $0x468] sm:$0xff]
                %350 = vst [vmem:[%s206 + $0x238] sm:$0xff] %v349
                %v351 = vld [vmem:[%s205 + $0x480] sm:$0xff]
                %352 = vst [vmem:[%s206 + $0x240] sm:$0xff] %v351
                %v353 = vld [vmem:[%s205 + $0x488] sm:$0xff]
                %354 = vst [vmem:[%s206 + $0x248] sm:$0xff] %v353
                %v355 = vld [vmem:[%s205 + $0x4a0] sm:$0xff]
                %356 = vst [vmem:[%s206 + $0x250] sm:$0xff] %v355
                %v357 = vld [vmem:[%s205 + $0x4a8] sm:$0xff]
                %358 = vst [vmem:[%s206 + $0x258] sm:$0xff] %v357
                %v359 = vld [vmem:[%s205 + $0x4c0] sm:$0xff]
                %360 = vst [vmem:[%s206 + $0x260] sm:$0xff] %v359
                %v361 = vld [vmem:[%s205 + $0x4c8] sm:$0xff]
                %362 = vst [vmem:[%s206 + $0x268] sm:$0xff] %v361
                %v363 = vld [vmem:[%s205 + $0x4e0] sm:$0xff]
                %364 = vst [vmem:[%s206 + $0x270] sm:$0xff] %v363
                %v365 = vld [vmem:[%s205 + $0x4e8] sm:$0xff]
                %366 = vst [vmem:[%s206 + $0x278] sm:$0xff] %v365
                %v367 = vld [vmem:[%s205 + $0x500] sm:$0xff]
                %368 = vst [vmem:[%s206 + $0x280] sm:$0xff] %v367
                %v369 = vld [vmem:[%s205 + $0x508] sm:$0xff]
                %370 = vst [vmem:[%s206 + $0x288] sm:$0xff] %v369
                %v371 = vld [vmem:[%s205 + $0x520] sm:$0xff]
                %372 = vst [vmem:[%s206 + $0x290] sm:$0xff] %v371
                %v373 = vld [vmem:[%s205 + $0x528] sm:$0xff]
                %374 = vst [vmem:[%s206 + $0x298] sm:$0xff] %v373
                %v375 = vld [vmem:[%s205 + $0x540] sm:$0xff]
                %376 = vst [vmem:[%s206 + $0x2a0] sm:$0xff] %v375
                %v377 = vld [vmem:[%s205 + $0x548] sm:$0xff]
                %378 = vst [vmem:[%s206 + $0x2a8] sm:$0xff] %v377
                %v379 = vld [vmem:[%s205 + $0x560] sm:$0xff]
                %380 = vst [vmem:[%s206 + $0x2b0] sm:$0xff] %v379
                %v381 = vld [vmem:[%s205 + $0x568] sm:$0xff]
                %382 = vst [vmem:[%s206 + $0x2b8] sm:$0xff] %v381
                %v383 = vld [vmem:[%s205 + $0x580] sm:$0xff]
                %384 = vst [vmem:[%s206 + $0x2c0] sm:$0xff] %v383
                %v385 = vld [vmem:[%s205 + $0x588] sm:$0xff]
                %386 = vst [vmem:[%s206 + $0x2c8] sm:$0xff] %v385
                %v387 = vld [vmem:[%s205 + $0x5a0] sm:$0xff]
                %388 = vst [vmem:[%s206 + $0x2d0] sm:$0xff] %v387
                %v389 = vld [vmem:[%s205 + $0x5a8] sm:$0xff]
                %390 = vst [vmem:[%s206 + $0x2d8] sm:$0xff] %v389
                %v391 = vld [vmem:[%s205 + $0x5c0] sm:$0xff]
                %392 = vst [vmem:[%s206 + $0x2e0] sm:$0xff] %v391
                %v393 = vld [vmem:[%s205 + $0x5c8] sm:$0xff]
                %394 = vst [vmem:[%s206 + $0x2e8] sm:$0xff] %v393
                %v395 = vld [vmem:[%s205 + $0x5e0] sm:$0xff]
                %396 = vst [vmem:[%s206 + $0x2f0] sm:$0xff] %v395
                %v397 = vld [vmem:[%s205 + $0x5e8] sm:$0xff]
                %398 = vst [vmem:[%s206 + $0x2f8] sm:$0xff] %v397
                %v399 = vld [vmem:[%s205 + $0x600] sm:$0xff]
                %400 = vst [vmem:[%s206 + $0x300] sm:$0xff] %v399
                %v401 = vld [vmem:[%s205 + $0x608] sm:$0xff]
                %402 = vst [vmem:[%s206 + $0x308] sm:$0xff] %v401
                %v403 = vld [vmem:[%s205 + $0x620] sm:$0xff]
                %404 = vst [vmem:[%s206 + $0x310] sm:$0xff] %v403
                %v405 = vld [vmem:[%s205 + $0x628] sm:$0xff]
                %406 = vst [vmem:[%s206 + $0x318] sm:$0xff] %v405
                %v407 = vld [vmem:[%s205 + $0x640] sm:$0xff]
                %408 = vst [vmem:[%s206 + $0x320] sm:$0xff] %v407
                %v409 = vld [vmem:[%s205 + $0x648] sm:$0xff]
                %410 = vst [vmem:[%s206 + $0x328] sm:$0xff] %v409
                %v411 = vld [vmem:[%s205 + $0x660] sm:$0xff]
                %412 = vst [vmem:[%s206 + $0x330] sm:$0xff] %v411
                %v413 = vld [vmem:[%s205 + $0x668] sm:$0xff]
                %414 = vst [vmem:[%s206 + $0x338] sm:$0xff] %v413
                %v415 = vld [vmem:[%s205 + $0x680] sm:$0xff]
                %416 = vst [vmem:[%s206 + $0x340] sm:$0xff] %v415
                %v417 = vld [vmem:[%s205 + $0x688] sm:$0xff]
                %418 = vst [vmem:[%s206 + $0x348] sm:$0xff] %v417
                %v419 = vld [vmem:[%s205 + $0x6a0] sm:$0xff]
                %420 = vst [vmem:[%s206 + $0x350] sm:$0xff] %v419
                %v421 = vld [vmem:[%s205 + $0x6a8] sm:$0xff]
                %422 = vst [vmem:[%s206 + $0x358] sm:$0xff] %v421
                %v423 = vld [vmem:[%s205 + $0x6c0] sm:$0xff]
                %424 = vst [vmem:[%s206 + $0x360] sm:$0xff] %v423
                %v425 = vld [vmem:[%s205 + $0x6c8] sm:$0xff]
                %426 = vst [vmem:[%s206 + $0x368] sm:$0xff] %v425
                %v427 = vld [vmem:[%s205 + $0x6e0] sm:$0xff]
                %428 = vst [vmem:[%s206 + $0x370] sm:$0xff] %v427
                %v429 = vld [vmem:[%s205 + $0x6e8] sm:$0xff]
                %430 = vst [vmem:[%s206 + $0x378] sm:$0xff] %v429
                %v431 = vld [vmem:[%s205 + $0x700] sm:$0xff]
                %432 = vst [vmem:[%s206 + $0x380] sm:$0xff] %v431
                %v433 = vld [vmem:[%s205 + $0x708] sm:$0xff]
                %434 = vst [vmem:[%s206 + $0x388] sm:$0xff] %v433
                %v435 = vld [vmem:[%s205 + $0x720] sm:$0xff]
                %436 = vst [vmem:[%s206 + $0x390] sm:$0xff] %v435
                %v437 = vld [vmem:[%s205 + $0x728] sm:$0xff]
                %438 = vst [vmem:[%s206 + $0x398] sm:$0xff] %v437
                %v439 = vld [vmem:[%s205 + $0x740] sm:$0xff]
                %440 = vst [vmem:[%s206 + $0x3a0] sm:$0xff] %v439
                %v441 = vld [vmem:[%s205 + $0x748] sm:$0xff]
                %442 = vst [vmem:[%s206 + $0x3a8] sm:$0xff] %v441
                %v443 = vld [vmem:[%s205 + $0x760] sm:$0xff]
                %444 = vst [vmem:[%s206 + $0x3b0] sm:$0xff] %v443
                %v445 = vld [vmem:[%s205 + $0x768] sm:$0xff]
                %446 = vst [vmem:[%s206 + $0x3b8] sm:$0xff] %v445
                %v447 = vld [vmem:[%s205 + $0x780] sm:$0xff]
                %448 = vst [vmem:[%s206 + $0x3c0] sm:$0xff] %v447
                %v449 = vld [vmem:[%s205 + $0x788] sm:$0xff]
                %450 = vst [vmem:[%s206 + $0x3c8] sm:$0xff] %v449
                %v451 = vld [vmem:[%s205 + $0x7a0] sm:$0xff]
                %452 = vst [vmem:[%s206 + $0x3d0] sm:$0xff] %v451
                %v453 = vld [vmem:[%s205 + $0x7a8] sm:$0xff]
                %454 = vst [vmem:[%s206 + $0x3d8] sm:$0xff] %v453
                %v455 = vld [vmem:[%s205 + $0x7c0] sm:$0xff]
                %456 = vst [vmem:[%s206 + $0x3e0] sm:$0xff] %v455
                %v457 = vld [vmem:[%s205 + $0x7c8] sm:$0xff]
                %458 = vst [vmem:[%s206 + $0x3e8] sm:$0xff] %v457
                %v459 = vld [vmem:[%s205 + $0x7e0] sm:$0xff]
                %460 = vst [vmem:[%s206 + $0x3f0] sm:$0xff] %v459
                %v461 = vld [vmem:[%s205 + $0x7e8] sm:$0xff]
                %462 = vst [vmem:[%s206 + $0x3f8] sm:$0xff] %v461
              $region37: #{fusegan_discriminator_forward.12} parent=31 // loop_footer
                %s204 = sadd.s32 1, %s200
              $region38: #{fusegan_discriminator_forward.12} parent=31 // loop_footer_branch
                %199 = sbr.rel target = $region34
              $region39: #{fusegan_discriminator_forward.12} parent=31 // loop_exit
                _
            $region32: #{fusegan_discriminator_forward.12} parent=27 // pred_fallthru
              _
            // Predicated region
            $region40: #{fusegan_discriminator_forward.12} parent=27 // pred_check
              _
            $region41: #{fusegan_discriminator_forward.12} parent=27 // pred_check_branch
              %464 = sbr.rel target = $region43
            $region42: #{fusegan_discriminator_forward.12} parent=27 // pred_region
              _
            $region43: #{fusegan_discriminator_forward.12} parent=27 // pred_fallthru
              _
          $region28: #{fusegan_discriminator_forward.12} parent=23 // pred_fallthru
            _
          %465 = vnop
        $region24: #{fusegan_discriminator_forward.12} parent=15 // pred_fallthru
          _
        // Predicated region
        $region44: #{fusegan_discriminator_forward.12} parent=15 // pred_check
          %p466 = pneg %p96
        $region45: #{fusegan_discriminator_forward.12} parent=15 // pred_check_branch
          %468 = sbr.rel (%p466) target = $region47
        $region46: #{fusegan_discriminator_forward.12} parent=15 // pred_region
          %s469 = smul.u32 2, %s17
          %p470 = scmp.lt.s32.totalorder %s469, 3
          %s471 = scalar_select %p470, %s469, 3
          %s472 = scalar_lea.vmem %s2, %s471
          %s473 = smul.u32 2, %s17
        $region47: #{fusegan_discriminator_forward.12} parent=15 // pred_fallthru
          _
        // Predicated region
        $region48: #{fusegan_discriminator_forward.12} parent=15 // pred_check
          %p474 = pneg %p122
        $region49: #{fusegan_discriminator_forward.12} parent=15 // pred_check_branch
          %476 = sbr.rel (%p474) target = $region51
        $region50: #{fusegan_discriminator_forward.12} parent=15 // pred_region
          %s477 = smul.u32 2, %s17
          %p478 = scmp.lt.s32.totalorder %s477, 3
          %s479 = scalar_select %p478, %s477, 3
          %s480 = scalar_lea.vmem %s3, %s479
          %s481 = smul.u32 2, %s17
        $region51: #{fusegan_discriminator_forward.12} parent=15 // pred_fallthru
          _
      $region16: #{fusegan_discriminator_forward.12} parent=5 // pred_fallthru
        _
      %p482 = scmp.le.s32.totalorder 1, %s10
      %p483 = scmp.lt.s32.totalorder %s10, 33
      %p484 = pnand %p482, %p483
      %p485 = pneg %p484
      // Predicated region
      $region52: #{fusegan_discriminator_forward.12} parent=5 // pred_check
        _
      $region53: #{fusegan_discriminator_forward.12} parent=5 // pred_check_branch
        %487 = sbr.rel (%p484) target = $region55
      $region54: #{fusegan_discriminator_forward.12} parent=5 // pred_region
        %s488 = ssub.s32 %s10, 1
        %s489 = sand.u32 %s63, 1
        %s490 = sand.u32 %s63, 1
        %s491 = smul.addr %s490, 1024
        %s492 = scalar_lea.vmem [#allocation3], %s491
        // Predicated region
        $region56: #{fusegan_discriminator_forward.12} parent=54 // pred_check
          %p493 = pneg %p76
        $region57: #{fusegan_discriminator_forward.12} parent=54 // pred_check_branch
          %495 = sbr.rel (%p493) target = $region59
        $region58: #{fusegan_discriminator_forward.12} parent=54 // pred_region
          _
        $region59: #{fusegan_discriminator_forward.12} parent=54 // pred_fallthru
          _
        %s496 = smul.u32 4, %s20
        %p497 = scmp.lt.s32.totalorder %s496, 63
        %s498 = scalar_select %p497, %s496, 63
        %s499 = smul.addr %s498, 8
        %s500 = scalar_lea.vmem %s0, %s499
        %p501 = pneg %p48
        %p502 = pneg %p45
        %s503 = sand.u32 %s63, 1
        %s504 = sand.u32 %s63, 1
        %s505 = smul.addr %s504, 1024
        %s506 = scalar_lea.vmem [#allocation3], %s505
        %p507 = pneg %p76
        %p508 = pneg %p73
        %s509 = smul.u32 2, %s19
        %p510 = scmp.lt.s32.totalorder %s509, 3
        %s511 = scalar_select %p510, %s509, 3
        %s512 = scalar_lea.vmem %s2, %s511
        %p513 = pneg %p102
        %p514 = pneg %p99
        %s515 = smul.u32 2, %s19
        %p516 = scmp.lt.s32.totalorder %s515, 3
        %s517 = scalar_select %p516, %s515, 3
        %s518 = scalar_lea.vmem %s3, %s517
        %p519 = pneg %p128
        %p520 = pneg %p125
        %p521 = pneg %p154
        %p522 = pneg %p151
        %s523 = smul.u32 2, %s19
        %p524 = scmp.lt.s32.totalorder %s523, 3
        %s525 = scalar_select %p524, %s523, 3
        %s526 = smul.addr %s525, 8
        %s527 = scalar_lea.vmem %s4, %s526
        %s528 = smul.u32 4, %s20
        %p529 = scmp.lt.s32.totalorder %s528, 63
        %s530 = scalar_select %p529, %s528, 63
        %s531 = smul.addr %s530, 8
        %s532 = scalar_lea.vmem %s0, %s531
        %s533 = smul.u32 4, %s20
        %s534 = smul.u32 64, %s20
        %s535 = smul.u32 2, %s19
        %s536 = smul.u32 2, %s19
        %p537 = scmp.lt.s32.totalorder %s536, 3
        %s538 = scalar_select %p537, %s536, 3
        %s539 = scalar_lea.vmem %s2, %s538
        %s540 = smul.u32 2, %s19
        %s541 = smul.u32 2, %s19
        %p542 = scmp.lt.s32.totalorder %s541, 3
        %s543 = scalar_select %p542, %s541, 3
        %s544 = scalar_lea.vmem %s3, %s543
        %s545 = smul.u32 2, %s19
        %s546 = smul.u32 2, %s19
        %p547 = scmp.lt.s32.totalorder %s546, 3
        %s548 = scalar_select %p547, %s546, 3
        %s549 = smul.addr %s548, 8
        %s550 = scalar_lea.vmem %s4, %s549
        %s551 = smul.u32 2, %s19
        %p552 = scmp.eq.s32.totalorder %s20, 0
        // Predicated region
        $region60: #{fusegan_discriminator_forward.12} parent=54 // pred_check
          %p553 = pneg %p552
        $region61: #{fusegan_discriminator_forward.12} parent=54 // pred_check_branch
          %555 = sbr.rel (%p553) target = $region63
        $region62: #{fusegan_discriminator_forward.12} parent=54 // pred_region
          %556 = vst [vmem:[#allocation2] sm:$0xff] 0.0
          %557 = vst [vmem:[#allocation2 + $0x8] sm:$0xff] 0.0
        $region63: #{fusegan_discriminator_forward.12} parent=54 // pred_fallthru
          _
        %v558 = vld [vmem:[#allocation2] sm:$0xff]
        %v559 = vld [vmem:[#allocation2 + $0x8] sm:$0xff]
        %v560 = vld [vmem:[%s532] sm:$0xff]
        %v561 = vld [vmem:[%s532 + $0x8] sm:$0xff]
        %v562 = vld [vmem:[%s532 + $0x10] sm:$0xff]
        %v563 = vld [vmem:[%s532 + $0x18] sm:$0xff]
        %v564 = vld [vmem:[%s492] sm:$0xff]
        %v565 = vld [vmem:[%s492 + $0x8] sm:$0xff]
        %v566 = vld [vmem:[%s492 + $0x10] sm:$0xff]
        %v567 = vld [vmem:[%s492 + $0x18] sm:$0xff]
        %v568 = vld [vmem:[%s492 + $0x20] sm:$0xff]
        %v569 = vld [vmem:[%s492 + $0x28] sm:$0xff]
        %v570 = vld [vmem:[%s492 + $0x30] sm:$0xff]
        %v571 = vld [vmem:[%s492 + $0x38] sm:$0xff]
        %v572 = vld [vmem:[%s492 + $0x40] sm:$0xff]
        %v573 = vld [vmem:[%s492 + $0x48] sm:$0xff]
        %v574 = vld [vmem:[%s492 + $0x50] sm:$0xff]
        %v575 = vld [vmem:[%s492 + $0x58] sm:$0xff]
        %v576 = vld [vmem:[%s492 + $0x60] sm:$0xff]
        %v577 = vld [vmem:[%s492 + $0x68] sm:$0xff]
        %v578 = vld [vmem:[%s492 + $0x70] sm:$0xff]
        %v579 = vld [vmem:[%s492 + $0x78] sm:$0xff]
        %v580 = vld [vmem:[%s492 + $0x80] sm:$0xff]
        %v581 = vld [vmem:[%s492 + $0x88] sm:$0xff]
        %v582 = vld [vmem:[%s492 + $0x90] sm:$0xff]
        %v583 = vld [vmem:[%s492 + $0x98] sm:$0xff]
        %v584 = vld [vmem:[%s492 + $0xa0] sm:$0xff]
        %v585 = vld [vmem:[%s492 + $0xa8] sm:$0xff]
        %v586 = vld [vmem:[%s492 + $0xb0] sm:$0xff]
        %v587 = vld [vmem:[%s492 + $0xb8] sm:$0xff]
        %v588 = vld [vmem:[%s492 + $0xc0] sm:$0xff]
        %v589 = vld [vmem:[%s492 + $0xc8] sm:$0xff]
        %v590 = vld [vmem:[%s492 + $0xd0] sm:$0xff]
        %v591 = vld [vmem:[%s492 + $0xd8] sm:$0xff]
        %v592 = vld [vmem:[%s492 + $0xe0] sm:$0xff]
        %v593 = vld [vmem:[%s492 + $0xe8] sm:$0xff]
        %v594 = vld [vmem:[%s492 + $0xf0] sm:$0xff]
        %v595 = vld [vmem:[%s492 + $0xf8] sm:$0xff]
        %v596 = vld [vmem:[%s492 + $0x100] sm:$0xff]
        %v597 = vld [vmem:[%s492 + $0x108] sm:$0xff]
        %v598 = vld [vmem:[%s492 + $0x110] sm:$0xff]
        %v599 = vld [vmem:[%s492 + $0x118] sm:$0xff]
        %v600 = vld [vmem:[%s492 + $0x120] sm:$0xff]
        %v601 = vld [vmem:[%s492 + $0x128] sm:$0xff]
        %v602 = vld [vmem:[%s492 + $0x130] sm:$0xff]
        %v603 = vld [vmem:[%s492 + $0x138] sm:$0xff]
        %v604 = vld [vmem:[%s492 + $0x140] sm:$0xff]
        %v605 = vld [vmem:[%s492 + $0x148] sm:$0xff]
        %v606 = vld [vmem:[%s492 + $0x150] sm:$0xff]
        %v607 = vld [vmem:[%s492 + $0x158] sm:$0xff]
        %v608 = vld [vmem:[%s492 + $0x160] sm:$0xff]
        %v609 = vld [vmem:[%s492 + $0x168] sm:$0xff]
        %v610 = vld [vmem:[%s492 + $0x170] sm:$0xff]
        %v611 = vld [vmem:[%s492 + $0x178] sm:$0xff]
        %v612 = vld [vmem:[%s492 + $0x180] sm:$0xff]
        %v613 = vld [vmem:[%s492 + $0x188] sm:$0xff]
        %v614 = vld [vmem:[%s492 + $0x190] sm:$0xff]
        %v615 = vld [vmem:[%s492 + $0x198] sm:$0xff]
        %v616 = vld [vmem:[%s492 + $0x1a0] sm:$0xff]
        %v617 = vld [vmem:[%s492 + $0x1a8] sm:$0xff]
        %v618 = vld [vmem:[%s492 + $0x1b0] sm:$0xff]
        %v619 = vld [vmem:[%s492 + $0x1b8] sm:$0xff]
        %v620 = vld [vmem:[%s492 + $0x1c0] sm:$0xff]
        %v621 = vld [vmem:[%s492 + $0x1c8] sm:$0xff]
        %v622 = vld [vmem:[%s492 + $0x1d0] sm:$0xff]
        %v623 = vld [vmem:[%s492 + $0x1d8] sm:$0xff]
        %v624 = vld [vmem:[%s492 + $0x1e0] sm:$0xff]
        %v625 = vld [vmem:[%s492 + $0x1e8] sm:$0xff]
        %v626 = vld [vmem:[%s492 + $0x1f0] sm:$0xff]
        %v627 = vld [vmem:[%s492 + $0x1f8] sm:$0xff]
        %v628 = vld [vmem:[%s492 + $0x200] sm:$0xff]
        %v629 = vld [vmem:[%s492 + $0x208] sm:$0xff]
        %v630 = vld [vmem:[%s492 + $0x210] sm:$0xff]
        %v631 = vld [vmem:[%s492 + $0x218] sm:$0xff]
        %v632 = vld [vmem:[%s492 + $0x220] sm:$0xff]
        %v633 = vld [vmem:[%s492 + $0x228] sm:$0xff]
        %v634 = vld [vmem:[%s492 + $0x230] sm:$0xff]
        %v635 = vld [vmem:[%s492 + $0x238] sm:$0xff]
        %v636 = vld [vmem:[%s492 + $0x240] sm:$0xff]
        %v637 = vld [vmem:[%s492 + $0x248] sm:$0xff]
        %v638 = vld [vmem:[%s492 + $0x250] sm:$0xff]
        %v639 = vld [vmem:[%s492 + $0x258] sm:$0xff]
        %v640 = vld [vmem:[%s492 + $0x260] sm:$0xff]
        %v641 = vld [vmem:[%s492 + $0x268] sm:$0xff]
        %v642 = vld [vmem:[%s492 + $0x270] sm:$0xff]
        %v643 = vld [vmem:[%s492 + $0x278] sm:$0xff]
        %v644 = vld [vmem:[%s492 + $0x280] sm:$0xff]
        %v645 = vld [vmem:[%s492 + $0x288] sm:$0xff]
        %v646 = vld [vmem:[%s492 + $0x290] sm:$0xff]
        %v647 = vld [vmem:[%s492 + $0x298] sm:$0xff]
        %v648 = vld [vmem:[%s492 + $0x2a0] sm:$0xff]
        %v649 = vld [vmem:[%s492 + $0x2a8] sm:$0xff]
        %v650 = vld [vmem:[%s492 + $0x2b0] sm:$0xff]
        %v651 = vld [vmem:[%s492 + $0x2b8] sm:$0xff]
        %v652 = vld [vmem:[%s492 + $0x2c0] sm:$0xff]
        %v653 = vld [vmem:[%s492 + $0x2c8] sm:$0xff]
        %v654 = vld [vmem:[%s492 + $0x2d0] sm:$0xff]
        %v655 = vld [vmem:[%s492 + $0x2d8] sm:$0xff]
        %v656 = vld [vmem:[%s492 + $0x2e0] sm:$0xff]
        %v657 = vld [vmem:[%s492 + $0x2e8] sm:$0xff]
        %v658 = vld [vmem:[%s492 + $0x2f0] sm:$0xff]
        %v659 = vld [vmem:[%s492 + $0x2f8] sm:$0xff]
        %v660 = vld [vmem:[%s492 + $0x300] sm:$0xff]
        %v661 = vld [vmem:[%s492 + $0x308] sm:$0xff]
        %v662 = vld [vmem:[%s492 + $0x310] sm:$0xff]
        %v663 = vld [vmem:[%s492 + $0x318] sm:$0xff]
        %v664 = vld [vmem:[%s492 + $0x320] sm:$0xff]
        %v665 = vld [vmem:[%s492 + $0x328] sm:$0xff]
        %v666 = vld [vmem:[%s492 + $0x330] sm:$0xff]
        %v667 = vld [vmem:[%s492 + $0x338] sm:$0xff]
        %v668 = vld [vmem:[%s492 + $0x340] sm:$0xff]
        %v669 = vld [vmem:[%s492 + $0x348] sm:$0xff]
        %v670 = vld [vmem:[%s492 + $0x350] sm:$0xff]
        %v671 = vld [vmem:[%s492 + $0x358] sm:$0xff]
        %v672 = vld [vmem:[%s492 + $0x360] sm:$0xff]
        %v673 = vld [vmem:[%s492 + $0x368] sm:$0xff]
        %v674 = vld [vmem:[%s492 + $0x370] sm:$0xff]
        %v675 = vld [vmem:[%s492 + $0x378] sm:$0xff]
        %v676 = vld [vmem:[%s492 + $0x380] sm:$0xff]
        %v677 = vld [vmem:[%s492 + $0x388] sm:$0xff]
        %v678 = vld [vmem:[%s492 + $0x390] sm:$0xff]
        %v679 = vld [vmem:[%s492 + $0x398] sm:$0xff]
        %v680 = vld [vmem:[%s492 + $0x3a0] sm:$0xff]
        %v681 = vld [vmem:[%s492 + $0x3a8] sm:$0xff]
        %v682 = vld [vmem:[%s492 + $0x3b0] sm:$0xff]
        %v683 = vld [vmem:[%s492 + $0x3b8] sm:$0xff]
        %v684 = vld [vmem:[%s492 + $0x3c0] sm:$0xff]
        %v685 = vld [vmem:[%s492 + $0x3c8] sm:$0xff]
        %v686 = vld [vmem:[%s492 + $0x3d0] sm:$0xff]
        %v687 = vld [vmem:[%s492 + $0x3d8] sm:$0xff]
        %v688 = vld [vmem:[%s492 + $0x3e0] sm:$0xff]
        %v689 = vld [vmem:[%s492 + $0x3e8] sm:$0xff]
        %v690 = vld [vmem:[%s492 + $0x3f0] sm:$0xff]
        %v691 = vld [vmem:[%s492 + $0x3f8] sm:$0xff]
        %692 = vmatprep.subr.mxu0 %v595
        %693 = vmatpush1.msra.mxu0 %v594
        %694 = vmatprep.subr.mxu0 %v593
        %695 = vmatpush1.msra.mxu0 %v592
        %696 = vmatprep.subr.mxu0 %v591
        %697 = vmatpush1.msra.mxu0 %v590
        %698 = vmatprep.subr.mxu0 %v589
        %699 = vmatpush1.msra.mxu0 %v588
        %700 = vmatprep.subr.mxu0 %v587
        %701 = vmatpush1.msra.mxu0 %v586
        %702 = vmatprep.subr.mxu0 %v585
        %703 = vmatpush1.msra.mxu0 %v584
        %704 = vmatprep.subr.mxu0 %v583
        %705 = vmatpush1.msra.mxu0 %v582
        %706 = vmatprep.subr.mxu0 %v581
        %707 = vmatpush1.msra.mxu0 %v580
        %708 = vmatprep.subr.mxu0 %v579
        %709 = vmatpush1.msra.mxu0 %v578
        %710 = vmatprep.subr.mxu0 %v577
        %711 = vmatpush1.msra.mxu0 %v576
        %712 = vmatprep.subr.mxu0 %v575
        %713 = vmatpush1.msra.mxu0 %v574
        %714 = vmatprep.subr.mxu0 %v573
        %715 = vmatpush1.msra.mxu0 %v572
        %716 = vmatprep.subr.mxu0 %v571
        %717 = vmatpush1.msra.mxu0 %v570
        %718 = vmatprep.subr.mxu0 %v569
        %719 = vmatpush1.msra.mxu0 %v568
        %720 = vmatprep.subr.mxu0 %v567
        %721 = vmatpush1.msra.mxu0 %v566
        %722 = vmatprep.subr.mxu0 %v565
        %723 = vmatpush1.msra.mxu0 %v564
        %724 = vmatprep.subr.mxu0 %v627
        %725 = vmatpush2.msra.mxu0 %v626
        %726 = vmatprep.subr.mxu0 %v625
        %727 = vmatpush2.msra.mxu0 %v624
        %728 = vmatprep.subr.mxu0 %v623
        %729 = vmatpush2.msra.mxu0 %v622
        %730 = vmatprep.subr.mxu0 %v621
        %731 = vmatpush2.msra.mxu0 %v620
        %732 = vmatprep.subr.mxu0 %v619
        %733 = vmatpush2.msra.mxu0 %v618
        %734 = vmatprep.subr.mxu0 %v617
        %735 = vmatpush2.msra.mxu0 %v616
        %736 = vmatprep.subr.mxu0 %v615
        %737 = vmatpush2.msra.mxu0 %v614
        %738 = vmatprep.subr.mxu0 %v613
        %739 = vmatpush2.msra.mxu0 %v612
        %740 = vmatprep.subr.mxu0 %v611
        %741 = vmatpush2.msra.mxu0 %v610
        %742 = vmatprep.subr.mxu0 %v609
        %743 = vmatpush2.msra.mxu0 %v608
        %744 = vmatprep.subr.mxu0 %v607
        %745 = vmatpush2.msra.mxu0 %v606
        %746 = vmatprep.subr.mxu0 %v605
        %747 = vmatpush2.msra.mxu0 %v604
        %748 = vmatprep.subr.mxu0 %v603
        %749 = vmatpush2.msra.mxu0 %v602
        %750 = vmatprep.subr.mxu0 %v601
        %751 = vmatpush2.msra.mxu0 %v600
        %752 = vmatprep.subr.mxu0 %v599
        %753 = vmatpush2.msra.mxu0 %v598
        %754 = vmatprep.subr.mxu0 %v597
        %755 = vmatpush2.msra.mxu0 %v596
        %756 = vmatprep.mubr.f32.mxu0 %v561
        %757 = vmatmul.mubr.f32.gmra.mxu0 %v560
        %v758 = vpop.f32.mrf.mxu0
        %v759 = vadd.f32 0.0, %v758
        %v760 = vpop.f32.mrf.mxu0
        %v761 = vadd.f32 0.0, %v760
        %762 = vdwg.mxu0
        %763 = vmatprep.subr.mxu0 %v659
        %764 = vmatpush1.msra.mxu0 %v658
        %765 = vmatprep.subr.mxu0 %v657
        %766 = vmatpush1.msra.mxu0 %v656
        %767 = vmatprep.subr.mxu0 %v655
        %768 = vmatpush1.msra.mxu0 %v654
        %769 = vmatprep.subr.mxu0 %v653
        %770 = vmatpush1.msra.mxu0 %v652
        %771 = vmatprep.subr.mxu0 %v651
        %772 = vmatpush1.msra.mxu0 %v650
        %773 = vmatprep.subr.mxu0 %v649
        %774 = vmatpush1.msra.mxu0 %v648
        %775 = vmatprep.subr.mxu0 %v647
        %776 = vmatpush1.msra.mxu0 %v646
        %777 = vmatprep.subr.mxu0 %v645
        %778 = vmatpush1.msra.mxu0 %v644
        %779 = vmatprep.subr.mxu0 %v643
        %780 = vmatpush1.msra.mxu0 %v642
        %781 = vmatprep.subr.mxu0 %v641
        %782 = vmatpush1.msra.mxu0 %v640
        %783 = vmatprep.subr.mxu0 %v639
        %784 = vmatpush1.msra.mxu0 %v638
        %785 = vmatprep.subr.mxu0 %v637
        %786 = vmatpush1.msra.mxu0 %v636
        %787 = vmatprep.subr.mxu0 %v635
        %788 = vmatpush1.msra.mxu0 %v634
        %789 = vmatprep.subr.mxu0 %v633
        %790 = vmatpush1.msra.mxu0 %v632
        %791 = vmatprep.subr.mxu0 %v631
        %792 = vmatpush1.msra.mxu0 %v630
        %793 = vmatprep.subr.mxu0 %v629
        %794 = vmatpush1.msra.mxu0 %v628
        %795 = vmatprep.subr.mxu0 %v691
        %796 = vmatpush2.msra.mxu0 %v690
        %797 = vmatprep.subr.mxu0 %v689
        %798 = vmatpush2.msra.mxu0 %v688
        %799 = vmatprep.subr.mxu0 %v687
        %800 = vmatpush2.msra.mxu0 %v686
        %801 = vmatprep.subr.mxu0 %v685
        %802 = vmatpush2.msra.mxu0 %v684
        %803 = vmatprep.subr.mxu0 %v683
        %804 = vmatpush2.msra.mxu0 %v682
        %805 = vmatprep.subr.mxu0 %v681
        %806 = vmatpush2.msra.mxu0 %v680
        %807 = vmatprep.subr.mxu0 %v679
        %808 = vmatpush2.msra.mxu0 %v678
        %809 = vmatprep.subr.mxu0 %v677
        %810 = vmatpush2.msra.mxu0 %v676
        %811 = vmatprep.subr.mxu0 %v675
        %812 = vmatpush2.msra.mxu0 %v674
        %813 = vmatprep.subr.mxu0 %v673
        %814 = vmatpush2.msra.mxu0 %v672
        %815 = vmatprep.subr.mxu0 %v671
        %816 = vmatpush2.msra.mxu0 %v670
        %817 = vmatprep.subr.mxu0 %v669
        %818 = vmatpush2.msra.mxu0 %v668
        %819 = vmatprep.subr.mxu0 %v667
        %820 = vmatpush2.msra.mxu0 %v666
        %821 = vmatprep.subr.mxu0 %v665
        %822 = vmatpush2.msra.mxu0 %v664
        %823 = vmatprep.subr.mxu0 %v663
        %824 = vmatpush2.msra.mxu0 %v662
        %825 = vmatprep.subr.mxu0 %v661
        %826 = vmatpush2.msra.mxu0 %v660
        %827 = vmatprep.mubr.f32.mxu0 %v563
        %828 = vmatmul.mubr.f32.gmra.mxu0 %v562
        %v829 = vpop.f32.mrf.mxu0
        %v830 = vadd.f32 %v759, %v829
        %v831 = vpop.f32.mrf.mxu0
        %v832 = vadd.f32 %v761, %v831
        %833 = vdwg.mxu0
        %v834 = vadd.f32 %v558, %v830
        %v835 = vadd.f32 %v559, %v832
        %836 = vst [vmem:[#allocation2] sm:$0xff] %v834
        %837 = vst [vmem:[#allocation2 + $0x8] sm:$0xff] %v835
        %p838 = scmp.eq.s32.totalorder %s20, 15
        // Predicated region
        $region64: #{fusegan_discriminator_forward.12} parent=54 // pred_check
          %p839 = pneg %p838
        $region65: #{fusegan_discriminator_forward.12} parent=54 // pred_check_branch
          %841 = sbr.rel (%p839) target = $region67
        $region66: #{fusegan_discriminator_forward.12} parent=54 // pred_region
          %v842 = vld [vmem:[#allocation2] sm:$0xff]
          %v843 = vld [vmem:[#allocation2 + $0x8] sm:$0xff]
          %v844 = vrot.slane %v842, 4
          %v845 = vadd.f32 %v842, %v844
          %v846 = vrot.slane %v845, 2
          %v847 = vadd.f32 %v845, %v846
          %v848 = vrot.slane %v847, 1
          %v849 = vadd.f32 %v847, %v848
          %v850 = vrot.slane %v843, 4
          %v851 = vadd.f32 %v843, %v850
          %v852 = vrot.slane %v851, 2
          %v853 = vadd.f32 %v851, %v852
          %v854 = vrot.slane %v853, 1
          %v855 = vadd.f32 %v853, %v854
          %v856 = vmul.f32 %v849, 0.125
          %v857 = vmul.f32 %v855, 0.125
          %v858 = vsub.f32 %v842, %v856
          %v859 = vsub.f32 %v843, %v857
          %v860 = vmul.f32 %v858, %v858
          %v861 = vmul.f32 %v859, %v859
          %v862 = vrot.slane %v860, 4
          %v863 = vadd.f32 %v860, %v862
          %v864 = vrot.slane %v863, 2
          %v865 = vadd.f32 %v863, %v864
          %v866 = vrot.slane %v865, 1
          %v867 = vadd.f32 %v865, %v866
          %v868 = vrot.slane %v861, 4
          %v869 = vadd.f32 %v861, %v868
          %v870 = vrot.slane %v869, 2
          %v871 = vadd.f32 %v869, %v870
          %v872 = vrot.slane %v871, 1
          %v873 = vadd.f32 %v871, %v872
          %v874 = vmul.f32 %v867, 0.125
          %v875 = vmul.f32 %v873, 0.125
          %v876 = vld [vmem:[%s539] sm:$0x3]
          %v877 = vadd.f32 %v874, 1e-05
          %v878 = vadd.f32 %v875, 1e-05
          %v879 = vrsqrt.pop %v877
          %v880 = vrsqrt.pop %v878
          %v883 = vcombine.low %v879, %v880
          %v885 = vunpack.c.l.s4 1966171168
          %v886 = vunpack.c.0.s8 %v885
          %v887 = vlaneseq
          %v888 = vshrl.u32 %v887, 7
          %v889 = vsub.s32 %v886, %v888
          %v890 = vrot.slane %v883, %v889
          %v892 = vunpack.c.l.s4 1966171168
          %v893 = vunpack.c.0.s8 %v892
          %v894 = vlaneseq
          %v895 = vshrl.u32 %v894, 7
          %v896 = vsub.s32 %v893, %v895
          %v897 = vrot.slane %v890, %v896
          %v899 = vmul.f32 %v876, %v897
          %v901 = vlaneseq
          %v902 = vshrl.u32 %v901, 7
          %v903 = vsub.s32 0, %v902
          %v904 = vrot.slane %v899, %v903
          %v905 = vlaneseq
          %v906 = vshrl.u32 %v905, 7
          %v907 = vsub.s32 1, %v906
          %v908 = vrot.slane %v899, %v907
          %v911 = vmul.f32 %v858, %v904
          %v912 = vmul.f32 %v859, %v908
          %v913 = vld [vmem:[%s544] sm:$0x3]
          %v915 = vlaneseq
          %v916 = vshrl.u32 %v915, 7
          %v917 = vsub.s32 0, %v916
          %v918 = vrot.slane %v913, %v917
          %v919 = vlaneseq
          %v920 = vshrl.u32 %v919, 7
          %v921 = vsub.s32 1, %v920
          %v922 = vrot.slane %v913, %v921
          %v925 = vadd.f32 %v911, %v918
          %v926 = vadd.f32 %v912, %v922
          %vm927 = vcmp.ge.f32.partialorder %v925, 0.0
          %vm928 = vcmp.ge.f32.partialorder %v926, 0.0
          %v929 = vmul.f32 %v925, 0.01
          %v930 = vmul.f32 %v926, 0.01
          %v931 = vsel %vm927, %v925, %v929
          %v932 = vsel %vm928, %v926, %v930
          %933 = vst [vmem:[%s550] sm:$0xff] %v931
          %934 = vst [vmem:[%s550 + $0x8] sm:$0xff] %v932
        $region67: #{fusegan_discriminator_forward.12} parent=54 // pred_fallthru
          _
        %s935 = smul.u32 2, %s19
        %p936 = scmp.lt.s32.totalorder %s935, 3
        %s937 = scalar_select %p936, %s935, 3
        %s938 = smul.addr %s937, 8
        %s939 = scalar_lea.vmem %s4, %s938
        // Predicated region
        $region68: #{fusegan_discriminator_forward.12} parent=54 // pred_check
          %p940 = pneg %p151
        $region69: #{fusegan_discriminator_forward.12} parent=54 // pred_check_branch
          %942 = sbr.rel (%p940) target = $region71
        $region70: #{fusegan_discriminator_forward.12} parent=54 // pred_region
          %s943 = smul.u32 2, %s19
        $region71: #{fusegan_discriminator_forward.12} parent=54 // pred_fallthru
          _
      $region55: #{fusegan_discriminator_forward.12} parent=5 // pred_fallthru
        _
      %p944 = scmp.le.s32.totalorder 2, %s10
      // Predicated region
      $region72: #{fusegan_discriminator_forward.12} parent=5 // pred_check
        %p945 = pneg %p944
      $region73: #{fusegan_discriminator_forward.12} parent=5 // pred_check_branch
        %947 = sbr.rel (%p945) target = $region75
      $region74: #{fusegan_discriminator_forward.12} parent=5 // pred_region
        %s948 = ssub.s32 %s10, 2
        // Predicated region
        $region76: #{fusegan_discriminator_forward.12} parent=74 // pred_check
          %p949 = pneg %p157
        $region77: #{fusegan_discriminator_forward.12} parent=74 // pred_check_branch
          %951 = sbr.rel (%p949) target = $region79
        $region78: #{fusegan_discriminator_forward.12} parent=74 // pred_region
          %s952 = smul.u32 2, %s21
          %p953 = scmp.lt.s32.totalorder %s952, 3
          %s954 = scalar_select %p953, %s952, 3
          %s955 = smul.addr %s954, 8
          %s956 = scalar_lea.vmem %s4, %s955
        $region79: #{fusegan_discriminator_forward.12} parent=74 // pred_fallthru
          _
      $region75: #{fusegan_discriminator_forward.12} parent=5 // pred_fallthru
        _
    $region6: #{fusegan_discriminator_forward.12} parent=1 // loop_footer
      %s14 = sadd.s32 1, %s10
    $region7: #{fusegan_discriminator_forward.12} parent=1 // loop_footer_branch
      %9 = sbr.rel target = $region3
    $region8: #{fusegan_discriminator_forward.12} parent=1 // loop_exit
      _

// kernel: fusegan_discriminator_forward.14
$region0: #{fusegan_discriminator_forward.14}
  #allocation0 [shape = 'u32[]', space=smem, size = 0x4, offset = 0x4, fixed_abs, tag = 'smem constant byte address 0x4 - core index']
  #allocation1 [shape = 'u32[144,128]{1,0:T(1,128)}', space=vmem, size = 0x12000, scoped, tag = 'internal scratch']
  #allocation2 [shape = 'f32[18,256]{1,0:T(8,128)}', space=vmem, size = 0x6000, scoped, tag = 'scratch operand']
  %s0 = inlined_call_operand.vmem [shape: f32[18,8192], index: 0, kind: input, shape index: {}]
  %s1 = inlined_call_operand.vmem [shape: f32[8192,512], index: 1, kind: input, shape index: {}]
  %s2 = inlined_call_operand.vmem [shape: f32[1,512], index: 2, kind: input, shape index: {}]
  %s3 = inlined_call_operand.vmem [shape: f32[1,512], index: 3, kind: input, shape index: {}]
  %s4 = inlined_call_operand.vmem [shape: f32[18,512], index: 4, kind: output, shape index: {}]
  %s5 = sld [smem:[#allocation0]]
  $region122: #{fusegan_discriminator_forward.14} parent=0
    _
  %s7 = ssub.s32 1, %s5
  %s8 = scalar_select 0, %s7, %s5
  $region1: #{fusegan_discriminator_forward.14} parent=0
    #allocation3 [shape = 'u8[98304]{0}', space=vmem, size = 0x18000, scoped, tag = 'input window, operand 0']
    #allocation4 [shape = 'u8[1048576]{0}', space=vmem, size = 0x100000, scoped, tag = 'input window, operand 1']
    #allocation5 [shape = 'u8[49152]{0}', space=vmem, size = 0xc000, scoped, tag = 'output window, operand 0']
    loop: start=0, step=1, limit=34
    $region2: #{fusegan_discriminator_forward.14} parent=1 // loop_pre_header
      _
    $region3: #{fusegan_discriminator_forward.14} parent=1 // loop_header
      %s10 = sphi 0, %s14
      %p11 = scmp.ge.s32.totalorder %s10, 34
      %s17 = sphi 0, %s29
      %s18 = sphi 0, %s25
      %s19 = sphi 0, %s17
      %s20 = sphi 0, %s18
      %s21 = sphi 0, %s19
      %s22 = sphi 0, %s20
      %s32 = sphi 0, %s34
      %s35 = sphi 0, %s32
      %s36 = sphi 0, %s35
      %s52 = sphi 0, %s36
      %s60 = sphi 0, %s62
      %s63 = sphi 0, %s60
      %s64 = sphi 0, %s63
      %s80 = sphi 0, %s64
      %s86 = sphi 0, %s88
      %s89 = sphi 0, %s86
      %s90 = sphi 0, %s89
      %s106 = sphi 0, %s90
      %s112 = sphi 0, %s114
      %s115 = sphi 0, %s112
      %s116 = sphi 0, %s115
      %s132 = sphi 0, %s116
      %s138 = sphi 0, %s140
      %s141 = sphi 0, %s138
      %s142 = sphi 0, %s141
      %s158 = sphi 0, %s142
    $region4: #{fusegan_discriminator_forward.14} parent=1 // loop_header_branch
      %13 = sbr.rel (%p11) target = $region8
    $region5: #{fusegan_discriminator_forward.14} parent=1 // loop_body
      %s15 = ssub.s32 %s10, 1
      %s16 = ssub.s32 %s10, 2
      %s23 = sadd.s32 1, %s18
      %p24 = scmp.ge.s32.totalorder %s23, 16
      %s25 = scalar_select %p24, 0, %s23
      %s26 = sadd.s32 1, %s17
      %s27 = scalar_select %p24, %s26, %s17
      %p28 = scmp.ge.s32.totalorder %s27, 2
      %s29 = scalar_select %p28, 0, %s27
      %s30 = ssub.s32 %s18, %s25
      %p31 = scmp.eq.s32.totalorder %s30, 0
      %s33 = sadd.s32 %s32, 1
      %s34 = scalar_select %p31, %s32, %s33
      %p37 = pneg %p31
      %p38 = scmp.eq.s32.totalorder %s10, 31
      %p39 = por %p37, %p38
      %p40 = scmp.ne.s32.totalorder %s32, %s35
      %p41 = scmp.eq.s32.totalorder %s10, 0
      %p42 = por %p40, %p41
      %p43 = scmp.ne.s32.totalorder %s32, %s35
      %p44 = scmp.eq.s32.totalorder %s15, 31
      %p45 = por %p43, %p44
      %p46 = scmp.ne.s32.totalorder %s35, %s36
      %p47 = scmp.eq.s32.totalorder %s15, 0
      %p48 = por %p46, %p47
      %p49 = scmp.ne.s32.totalorder %s35, %s36
      %p50 = scmp.eq.s32.totalorder %s16, 31
      %p51 = por %p49, %p50
      %p53 = scmp.ne.s32.totalorder %s36, %s52
      %p54 = scmp.eq.s32.totalorder %s16, 0
      %p55 = por %p53, %p54
      %s56 = ssub.s32 %s18, %s25
      %s57 = ssub.s32 %s17, %s29
      %s58 = sor.u32 %s56, %s57
      %p59 = scmp.eq.s32.totalorder %s58, 0
      %s61 = sadd.s32 %s60, 1
      %s62 = scalar_select %p59, %s60, %s61
      %p65 = pneg %p59
      %p66 = scmp.eq.s32.totalorder %s10, 31
      %p67 = por %p65, %p66
      %p68 = scmp.ne.s32.totalorder %s60, %s63
      %p69 = scmp.eq.s32.totalorder %s10, 0
      %p70 = por %p68, %p69
      %p71 = scmp.ne.s32.totalorder %s60, %s63
      %p72 = scmp.eq.s32.totalorder %s15, 31
      %p73 = por %p71, %p72
      %p74 = scmp.ne.s32.totalorder %s63, %s64
      %p75 = scmp.eq.s32.totalorder %s15, 0
      %p76 = por %p74, %p75
      %p77 = scmp.ne.s32.totalorder %s63, %s64
      %p78 = scmp.eq.s32.totalorder %s16, 31
      %p79 = por %p77, %p78
      %p81 = scmp.ne.s32.totalorder %s64, %s80
      %p82 = scmp.eq.s32.totalorder %s16, 0
      %p83 = por %p81, %p82
      %s84 = ssub.s32 %s17, %s29
      %p85 = scmp.eq.s32.totalorder %s84, 0
      %s87 = sadd.s32 %s86, 1
      %s88 = scalar_select %p85, %s86, %s87
      %p91 = pneg %p85
      %p92 = scmp.eq.s32.totalorder %s10, 31
      %p93 = por %p91, %p92
      %p94 = scmp.ne.s32.totalorder %s86, %s89
      %p95 = scmp.eq.s32.totalorder %s10, 0
      %p96 = por %p94, %p95
      %p97 = scmp.ne.s32.totalorder %s86, %s89
      %p98 = scmp.eq.s32.totalorder %s15, 31
      %p99 = por %p97, %p98
      %p100 = scmp.ne.s32.totalorder %s89, %s90
      %p101 = scmp.eq.s32.totalorder %s15, 0
      %p102 = por %p100, %p101
      %p103 = scmp.ne.s32.totalorder %s89, %s90
      %p104 = scmp.eq.s32.totalorder %s16, 31
      %p105 = por %p103, %p104
      %p107 = scmp.ne.s32.totalorder %s90, %s106
      %p108 = scmp.eq.s32.totalorder %s16, 0
      %p109 = por %p107, %p108
      %s110 = ssub.s32 %s17, %s29
      %p111 = scmp.eq.s32.totalorder %s110, 0
      %s113 = sadd.s32 %s112, 1
      %s114 = scalar_select %p111, %s112, %s113
      %p117 = pneg %p111
      %p118 = scmp.eq.s32.totalorder %s10, 31
      %p119 = por %p117, %p118
      %p120 = scmp.ne.s32.totalorder %s112, %s115
      %p121 = scmp.eq.s32.totalorder %s10, 0
      %p122 = por %p120, %p121
      %p123 = scmp.ne.s32.totalorder %s112, %s115
      %p124 = scmp.eq.s32.totalorder %s15, 31
      %p125 = por %p123, %p124
      %p126 = scmp.ne.s32.totalorder %s115, %s116
      %p127 = scmp.eq.s32.totalorder %s15, 0
      %p128 = por %p126, %p127
      %p129 = scmp.ne.s32.totalorder %s115, %s116
      %p130 = scmp.eq.s32.totalorder %s16, 31
      %p131 = por %p129, %p130
      %p133 = scmp.ne.s32.totalorder %s116, %s132
      %p134 = scmp.eq.s32.totalorder %s16, 0
      %p135 = por %p133, %p134
      %s136 = ssub.s32 %s17, %s29
      %p137 = scmp.eq.s32.totalorder %s136, 0
      %s139 = sadd.s32 %s138, 1
      %s140 = scalar_select %p137, %s138, %s139
      %p143 = pneg %p137
      %p144 = scmp.eq.s32.totalorder %s10, 31
      %p145 = por %p143, %p144
      %p146 = scmp.ne.s32.totalorder %s138, %s141
      %p147 = scmp.eq.s32.totalorder %s10, 0
      %p148 = por %p146, %p147
      %p149 = scmp.ne.s32.totalorder %s138, %s141
      %p150 = scmp.eq.s32.totalorder %s15, 31
      %p151 = por %p149, %p150
      %p152 = scmp.ne.s32.totalorder %s141, %s142
      %p153 = scmp.eq.s32.totalorder %s15, 0
      %p154 = por %p152, %p153
      %p155 = scmp.ne.s32.totalorder %s141, %s142
      %p156 = scmp.eq.s32.totalorder %s16, 31
      %p157 = por %p155, %p156
      %p159 = scmp.ne.s32.totalorder %s142, %s158
      %p160 = scmp.eq.s32.totalorder %s16, 0
      %p161 = por %p159, %p160
      %p162 = scmp.le.s32.totalorder 1, %s10
      %p163 = scmp.lt.s32.totalorder %s10, 33
      %p164 = pnand %p162, %p163
      %p165 = pneg %p164
      // Predicated region
      $region9: #{fusegan_discriminator_forward.14} parent=5 // pred_check
        _
      $region10: #{fusegan_discriminator_forward.14} parent=5 // pred_check_branch
        %167 = sbr.rel (%p164) target = $region12
      $region11: #{fusegan_discriminator_forward.14} parent=5 // pred_region
        %s168 = ssub.s32 %s10, 1
      $region12: #{fusegan_discriminator_forward.14} parent=5 // pred_fallthru
        _
      %p169 = scmp.lt.s32.totalorder %s10, 32
      // Predicated region
      $region13: #{fusegan_discriminator_forward.14} parent=5 // pred_check
        %p170 = pneg %p169
      $region14: #{fusegan_discriminator_forward.14} parent=5 // pred_check_branch
        %172 = sbr.rel (%p170) target = $region16
      $region15: #{fusegan_discriminator_forward.14} parent=5 // pred_region
        // Predicated region
        $region17: #{fusegan_discriminator_forward.14} parent=15 // pred_check
          %p173 = pneg %p42
        $region18: #{fusegan_discriminator_forward.14} parent=15 // pred_check_branch
          %175 = sbr.rel (%p173) target = $region20
        $region19: #{fusegan_discriminator_forward.14} parent=15 // pred_region
          %s176 = sand.u32 %s32, 1
          %s177 = sand.u32 %s32, 1
          %s178 = smul.addr %s177, 96
          %s179 = scalar_lea.vmem [#allocation3], %s178
          %s180 = smul.u32 4, %s18
          %s181 = smul.addr %s180, 8
          %s182 = scalar_lea.vmem %s0, %s181
          // Predicated region
          $region21: #{fusegan_discriminator_forward.14} parent=19 // pred_check
            _
          $region22: #{fusegan_discriminator_forward.14} parent=19 // pred_check_branch
            %184 = sbr.rel (0) target = $region24
          $region23: #{fusegan_discriminator_forward.14} parent=19 // pred_region
            // Predicated region
            $region25: #{fusegan_discriminator_forward.14} parent=23 // pred_check
              _
            $region26: #{fusegan_discriminator_forward.14} parent=23 // pred_check_branch
              %186 = sbr.rel (0) target = $region28
            $region27: #{fusegan_discriminator_forward.14} parent=23 // pred_region
              loop: start=0, step=1, limit=1
              $region29: #{fusegan_discriminator_forward.14} parent=27 // loop_pre_header
                _
              $region30: #{fusegan_discriminator_forward.14} parent=27 // loop_header
                %s188 = sphi 0, %s192
                %p189 = scmp.ge.s32.totalorder %s188, 1
                %s193 = sphi %s182, %s182
                %s194 = sphi %s179, %s179
              $region31: #{fusegan_discriminator_forward.14} parent=27 // loop_header_branch
                %191 = sbr.rel (%p189) target = $region35
              $region32: #{fusegan_discriminator_forward.14} parent=27 // loop_body
                %v195 = vld [vmem:[%s193] sm:$0xff]
                %196 = vst [vmem:[%s194] sm:$0xff] %v195
                %v197 = vld [vmem:[%s193 + $0x8] sm:$0xff]
                %198 = vst [vmem:[%s194 + $0x8] sm:$0xff] %v197
                %v199 = vld [vmem:[%s193 + $0x10] sm:$0xff]
                %200 = vst [vmem:[%s194 + $0x10] sm:$0xff] %v199
                %v201 = vld [vmem:[%s193 + $0x18] sm:$0xff]
                %202 = vst [vmem:[%s194 + $0x18] sm:$0xff] %v201
                %v203 = vld [vmem:[%s193 + $0x200] sm:$0xff]
                %204 = vst [vmem:[%s194 + $0x20] sm:$0xff] %v203
                %v205 = vld [vmem:[%s193 + $0x208] sm:$0xff]
                %206 = vst [vmem:[%s194 + $0x28] sm:$0xff] %v205
                %v207 = vld [vmem:[%s193 + $0x210] sm:$0xff]
                %208 = vst [vmem:[%s194 + $0x30] sm:$0xff] %v207
                %v209 = vld [vmem:[%s193 + $0x218] sm:$0xff]
                %210 = vst [vmem:[%s194 + $0x38] sm:$0xff] %v209
                %v211 = vld [vmem:[%s193 + $0x400] sm:$0xff]
                %212 = vst [vmem:[%s194 + $0x40] sm:$0xff] %v211
                %v213 = vld [vmem:[%s193 + $0x408] sm:$0xff]
                %214 = vst [vmem:[%s194 + $0x48] sm:$0xff] %v213
                %v215 = vld [vmem:[%s193 + $0x410] sm:$0xff]
                %216 = vst [vmem:[%s194 + $0x50] sm:$0xff] %v215
                %v217 = vld [vmem:[%s193 + $0x418] sm:$0xff]
                %218 = vst [vmem:[%s194 + $0x58] sm:$0xff] %v217
              $region33: #{fusegan_discriminator_forward.14} parent=27 // loop_footer
                %s192 = sadd.s32 1, %s188
              $region34: #{fusegan_discriminator_forward.14} parent=27 // loop_footer_branch
                %187 = sbr.rel target = $region30
              $region35: #{fusegan_discriminator_forward.14} parent=27 // loop_exit
                _
            $region28: #{fusegan_discriminator_forward.14} parent=23 // pred_fallthru
              _
            // Predicated region
            $region36: #{fusegan_discriminator_forward.14} parent=23 // pred_check
              _
            $region37: #{fusegan_discriminator_forward.14} parent=23 // pred_check_branch
              %220 = sbr.rel target = $region39
            $region38: #{fusegan_discriminator_forward.14} parent=23 // pred_region
              _
            $region39: #{fusegan_discriminator_forward.14} parent=23 // pred_fallthru
              _
          $region24: #{fusegan_discriminator_forward.14} parent=19 // pred_fallthru
            _
          %221 = vnop
        $region20: #{fusegan_discriminator_forward.14} parent=15 // pred_fallthru
          _
        // Predicated region
        $region40: #{fusegan_discriminator_forward.14} parent=15 // pred_check
          %p222 = pneg %p70
        $region41: #{fusegan_discriminator_forward.14} parent=15 // pred_check_branch
          %224 = sbr.rel (%p222) target = $region43
        $region42: #{fusegan_discriminator_forward.14} parent=15 // pred_region
          %s225 = sand.u32 %s60, 1
          %s226 = sand.u32 %s60, 1
          %s227 = smul.addr %s226, 1024
          %s228 = scalar_lea.vmem [#allocation4], %s227
          %s229 = smul.u32 64, %s18
          %s230 = smul.u32 2, %s17
          %s231 = smul.addr %s229, 4
          %s232 = sadd.s32 %s230, %s231
          %s233 = smul.addr %s232, 8
          %s234 = scalar_lea.vmem %s1, %s233
          // Predicated region
          $region44: #{fusegan_discriminator_forward.14} parent=42 // pred_check
            _
          $region45: #{fusegan_discriminator_forward.14} parent=42 // pred_check_branch
            %236 = sbr.rel (0) target = $region47
          $region46: #{fusegan_discriminator_forward.14} parent=42 // pred_region
            // Predicated region
            $region48: #{fusegan_discriminator_forward.14} parent=46 // pred_check
              _
            $region49: #{fusegan_discriminator_forward.14} parent=46 // pred_check_branch
              %238 = sbr.rel (0) target = $region51
            $region50: #{fusegan_discriminator_forward.14} parent=46 // pred_region
              loop: start=0, step=1, limit=1
              $region52: #{fusegan_discriminator_forward.14} parent=50 // loop_pre_header
                _
              $region53: #{fusegan_discriminator_forward.14} parent=50 // loop_header
                %s240 = sphi 0, %s244
                %p241 = scmp.ge.s32.totalorder %s240, 1
                %s245 = sphi %s234, %s234
                %s246 = sphi %s228, %s228
              $region54: #{fusegan_discriminator_forward.14} parent=50 // loop_header_branch
                %243 = sbr.rel (%p241) target = $region58
              $region55: #{fusegan_discriminator_forward.14} parent=50 // loop_body
                %v247 = vld [vmem:[%s245] sm:$0xff]
                %248 = vst [vmem:[%s246] sm:$0xff] %v247
                %v249 = vld [vmem:[%s245 + $0x8] sm:$0xff]
                %250 = vst [vmem:[%s246 + $0x8] sm:$0xff] %v249
                %v251 = vld [vmem:[%s245 + $0x20] sm:$0xff]
                %252 = vst [vmem:[%s246 + $0x10] sm:$0xff] %v251
                %v253 = vld [vmem:[%s245 + $0x28] sm:$0xff]
                %254 = vst [vmem:[%s246 + $0x18] sm:$0xff] %v253
                %v255 = vld [vmem:[%s245 + $0x40] sm:$0xff]
                %256 = vst [vmem:[%s246 + $0x20] sm:$0xff] %v255
                %v257 = vld [vmem:[%s245 + $0x48] sm:$0xff]
                %258 = vst [vmem:[%s246 + $0x28] sm:$0xff] %v257
                %v259 = vld [vmem:[%s245 + $0x60] sm:$0xff]
                %260 = vst [vmem:[%s246 + $0x30] sm:$0xff] %v259
                %v261 = vld [vmem:[%s245 + $0x68] sm:$0xff]
                %262 = vst [vmem:[%s246 + $0x38] sm:$0xff] %v261
                %v263 = vld [vmem:[%s245 + $0x80] sm:$0xff]
                %264 = vst [vmem:[%s246 + $0x40] sm:$0xff] %v263
                %v265 = vld [vmem:[%s245 + $0x88] sm:$0xff]
                %266 = vst [vmem:[%s246 + $0x48] sm:$0xff] %v265
                %v267 = vld [vmem:[%s245 + $0xa0] sm:$0xff]
                %268 = vst [vmem:[%s246 + $0x50] sm:$0xff] %v267
                %v269 = vld [vmem:[%s245 + $0xa8] sm:$0xff]
                %270 = vst [vmem:[%s246 + $0x58] sm:$0xff] %v269
                %v271 = vld [vmem:[%s245 + $0xc0] sm:$0xff]
                %272 = vst [vmem:[%s246 + $0x60] sm:$0xff] %v271
                %v273 = vld [vmem:[%s245 + $0xc8] sm:$0xff]
                %274 = vst [vmem:[%s246 + $0x68] sm:$0xff] %v273
                %v275 = vld [vmem:[%s245 + $0xe0] sm:$0xff]
                %276 = vst [vmem:[%s246 + $0x70] sm:$0xff] %v275
                %v277 = vld [vmem:[%s245 + $0xe8] sm:$0xff]
                %278 = vst [vmem:[%s246 + $0x78] sm:$0xff] %v277
                %v279 = vld [vmem:[%s245 + $0x100] sm:$0xff]
                %280 = vst [vmem:[%s246 + $0x80] sm:$0xff] %v279
                %v281 = vld [vmem:[%s245 + $0x108] sm:$0xff]
                %282 = vst [vmem:[%s246 + $0x88] sm:$0xff] %v281
                %v283 = vld [vmem:[%s245 + $0x120] sm:$0xff]
                %284 = vst [vmem:[%s246 + $0x90] sm:$0xff] %v283
                %v285 = vld [vmem:[%s245 + $0x128] sm:$0xff]
                %286 = vst [vmem:[%s246 + $0x98] sm:$0xff] %v285
                %v287 = vld [vmem:[%s245 + $0x140] sm:$0xff]
                %288 = vst [vmem:[%s246 + $0xa0] sm:$0xff] %v287
                %v289 = vld [vmem:[%s245 + $0x148] sm:$0xff]
                %290 = vst [vmem:[%s246 + $0xa8] sm:$0xff] %v289
                %v291 = vld [vmem:[%s245 + $0x160] sm:$0xff]
                %292 = vst [vmem:[%s246 + $0xb0] sm:$0xff] %v291
                %v293 = vld [vmem:[%s245 + $0x168] sm:$0xff]
                %294 = vst [vmem:[%s246 + $0xb8] sm:$0xff] %v293
                %v295 = vld [vmem:[%s245 + $0x180] sm:$0xff]
                %296 = vst [vmem:[%s246 + $0xc0] sm:$0xff] %v295
                %v297 = vld [vmem:[%s245 + $0x188] sm:$0xff]
                %298 = vst [vmem:[%s246 + $0xc8] sm:$0xff] %v297
                %v299 = vld [vmem:[%s245 + $0x1a0] sm:$0xff]
                %300 = vst [vmem:[%s246 + $0xd0] sm:$0xff] %v299
                %v301 = vld [vmem:[%s245 + $0x1a8] sm:$0xff]
                %302 = vst [vmem:[%s246 + $0xd8] sm:$0xff] %v301
                %v303 = vld [vmem:[%s245 + $0x1c0] sm:$0xff]
                %304 = vst [vmem:[%s246 + $0xe0] sm:$0xff] %v303
                %v305 = vld [vmem:[%s245 + $0x1c8] sm:$0xff]
                %306 = vst [vmem:[%s246 + $0xe8] sm:$0xff] %v305
                %v307 = vld [vmem:[%s245 + $0x1e0] sm:$0xff]
                %308 = vst [vmem:[%s246 + $0xf0] sm:$0xff] %v307
                %v309 = vld [vmem:[%s245 + $0x1e8] sm:$0xff]
                %310 = vst [vmem:[%s246 + $0xf8] sm:$0xff] %v309
                %v311 = vld [vmem:[%s245 + $0x200] sm:$0xff]
                %312 = vst [vmem:[%s246 + $0x100] sm:$0xff] %v311
                %v313 = vld [vmem:[%s245 + $0x208] sm:$0xff]
                %314 = vst [vmem:[%s246 + $0x108] sm:$0xff] %v313
                %v315 = vld [vmem:[%s245 + $0x220] sm:$0xff]
                %316 = vst [vmem:[%s246 + $0x110] sm:$0xff] %v315
                %v317 = vld [vmem:[%s245 + $0x228] sm:$0xff]
                %318 = vst [vmem:[%s246 + $0x118] sm:$0xff] %v317
                %v319 = vld [vmem:[%s245 + $0x240] sm:$0xff]
                %320 = vst [vmem:[%s246 + $0x120] sm:$0xff] %v319
                %v321 = vld [vmem:[%s245 + $0x248] sm:$0xff]
                %322 = vst [vmem:[%s246 + $0x128] sm:$0xff] %v321
                %v323 = vld [vmem:[%s245 + $0x260] sm:$0xff]
                %324 = vst [vmem:[%s246 + $0x130] sm:$0xff] %v323
                %v325 = vld [vmem:[%s245 + $0x268] sm:$0xff]
                %326 = vst [vmem:[%s246 + $0x138] sm:$0xff] %v325
                %v327 = vld [vmem:[%s245 + $0x280] sm:$0xff]
                %328 = vst [vmem:[%s246 + $0x140] sm:$0xff] %v327
                %v329 = vld [vmem:[%s245 + $0x288] sm:$0xff]
                %330 = vst [vmem:[%s246 + $0x148] sm:$0xff] %v329
                %v331 = vld [vmem:[%s245 + $0x2a0] sm:$0xff]
                %332 = vst [vmem:[%s246 + $0x150] sm:$0xff] %v331
                %v333 = vld [vmem:[%s245 + $0x2a8] sm:$0xff]
                %334 = vst [vmem:[%s246 + $0x158] sm:$0xff] %v333
                %v335 = vld [vmem:[%s245 + $0x2c0] sm:$0xff]
                %336 = vst [vmem:[%s246 + $0x160] sm:$0xff] %v335
                %v337 = vld [vmem:[%s245 + $0x2c8] sm:$0xff]
                %338 = vst [vmem:[%s246 + $0x168] sm:$0xff] %v337
                %v339 = vld [vmem:[%s245 + $0x2e0] sm:$0xff]
                %340 = vst [vmem:[%s246 + $0x170] sm:$0xff] %v339
                %v341 = vld [vmem:[%s245 + $0x2e8] sm:$0xff]
                %342 = vst [vmem:[%s246 + $0x178] sm:$0xff] %v341
                %v343 = vld [vmem:[%s245 + $0x300] sm:$0xff]
                %344 = vst [vmem:[%s246 + $0x180] sm:$0xff] %v343
                %v345 = vld [vmem:[%s245 + $0x308] sm:$0xff]
                %346 = vst [vmem:[%s246 + $0x188] sm:$0xff] %v345
                %v347 = vld [vmem:[%s245 + $0x320] sm:$0xff]
                %348 = vst [vmem:[%s246 + $0x190] sm:$0xff] %v347
                %v349 = vld [vmem:[%s245 + $0x328] sm:$0xff]
                %350 = vst [vmem:[%s246 + $0x198] sm:$0xff] %v349
                %v351 = vld [vmem:[%s245 + $0x340] sm:$0xff]
                %352 = vst [vmem:[%s246 + $0x1a0] sm:$0xff] %v351
                %v353 = vld [vmem:[%s245 + $0x348] sm:$0xff]
                %354 = vst [vmem:[%s246 + $0x1a8] sm:$0xff] %v353
                %v355 = vld [vmem:[%s245 + $0x360] sm:$0xff]
                %356 = vst [vmem:[%s246 + $0x1b0] sm:$0xff] %v355
                %v357 = vld [vmem:[%s245 + $0x368] sm:$0xff]
                %358 = vst [vmem:[%s246 + $0x1b8] sm:$0xff] %v357
                %v359 = vld [vmem:[%s245 + $0x380] sm:$0xff]
                %360 = vst [vmem:[%s246 + $0x1c0] sm:$0xff] %v359
                %v361 = vld [vmem:[%s245 + $0x388] sm:$0xff]
                %362 = vst [vmem:[%s246 + $0x1c8] sm:$0xff] %v361
                %v363 = vld [vmem:[%s245 + $0x3a0] sm:$0xff]
                %364 = vst [vmem:[%s246 + $0x1d0] sm:$0xff] %v363
                %v365 = vld [vmem:[%s245 + $0x3a8] sm:$0xff]
                %366 = vst [vmem:[%s246 + $0x1d8] sm:$0xff] %v365
                %v367 = vld [vmem:[%s245 + $0x3c0] sm:$0xff]
                %368 = vst [vmem:[%s246 + $0x1e0] sm:$0xff] %v367
                %v369 = vld [vmem:[%s245 + $0x3c8] sm:$0xff]
                %370 = vst [vmem:[%s246 + $0x1e8] sm:$0xff] %v369
                %v371 = vld [vmem:[%s245 + $0x3e0] sm:$0xff]
                %372 = vst [vmem:[%s246 + $0x1f0] sm:$0xff] %v371
                %v373 = vld [vmem:[%s245 + $0x3e8] sm:$0xff]
                %374 = vst [vmem:[%s246 + $0x1f8] sm:$0xff] %v373
                %v375 = vld [vmem:[%s245 + $0x400] sm:$0xff]
                %376 = vst [vmem:[%s246 + $0x200] sm:$0xff] %v375
                %v377 = vld [vmem:[%s245 + $0x408] sm:$0xff]
                %378 = vst [vmem:[%s246 + $0x208] sm:$0xff] %v377
                %v379 = vld [vmem:[%s245 + $0x420] sm:$0xff]
                %380 = vst [vmem:[%s246 + $0x210] sm:$0xff] %v379
                %v381 = vld [vmem:[%s245 + $0x428] sm:$0xff]
                %382 = vst [vmem:[%s246 + $0x218] sm:$0xff] %v381
                %v383 = vld [vmem:[%s245 + $0x440] sm:$0xff]
                %384 = vst [vmem:[%s246 + $0x220] sm:$0xff] %v383
                %v385 = vld [vmem:[%s245 + $0x448] sm:$0xff]
                %386 = vst [vmem:[%s246 + $0x228] sm:$0xff] %v385
                %v387 = vld [vmem:[%s245 + $0x460] sm:$0xff]
                %388 = vst [vmem:[%s246 + $0x230] sm:$0xff] %v387
                %v389 = vld [vmem:[%s245 + $0x468] sm:$0xff]
                %390 = vst [vmem:[%s246 + $0x238] sm:$0xff] %v389
                %v391 = vld [vmem:[%s245 + $0x480] sm:$0xff]
                %392 = vst [vmem:[%s246 + $0x240] sm:$0xff] %v391
                %v393 = vld [vmem:[%s245 + $0x488] sm:$0xff]
                %394 = vst [vmem:[%s246 + $0x248] sm:$0xff] %v393
                %v395 = vld [vmem:[%s245 + $0x4a0] sm:$0xff]
                %396 = vst [vmem:[%s246 + $0x250] sm:$0xff] %v395
                %v397 = vld [vmem:[%s245 + $0x4a8] sm:$0xff]
                %398 = vst [vmem:[%s246 + $0x258] sm:$0xff] %v397
                %v399 = vld [vmem:[%s245 + $0x4c0] sm:$0xff]
                %400 = vst [vmem:[%s246 + $0x260] sm:$0xff] %v399
                %v401 = vld [vmem:[%s245 + $0x4c8] sm:$0xff]
                %402 = vst [vmem:[%s246 + $0x268] sm:$0xff] %v401
                %v403 = vld [vmem:[%s245 + $0x4e0] sm:$0xff]
                %404 = vst [vmem:[%s246 + $0x270] sm:$0xff] %v403
                %v405 = vld [vmem:[%s245 + $0x4e8] sm:$0xff]
                %406 = vst [vmem:[%s246 + $0x278] sm:$0xff] %v405
                %v407 = vld [vmem:[%s245 + $0x500] sm:$0xff]
                %408 = vst [vmem:[%s246 + $0x280] sm:$0xff] %v407
                %v409 = vld [vmem:[%s245 + $0x508] sm:$0xff]
                %410 = vst [vmem:[%s246 + $0x288] sm:$0xff] %v409
                %v411 = vld [vmem:[%s245 + $0x520] sm:$0xff]
                %412 = vst [vmem:[%s246 + $0x290] sm:$0xff] %v411
                %v413 = vld [vmem:[%s245 + $0x528] sm:$0xff]
                %414 = vst [vmem:[%s246 + $0x298] sm:$0xff] %v413
                %v415 = vld [vmem:[%s245 + $0x540] sm:$0xff]
                %416 = vst [vmem:[%s246 + $0x2a0] sm:$0xff] %v415
                %v417 = vld [vmem:[%s245 + $0x548] sm:$0xff]
                %418 = vst [vmem:[%s246 + $0x2a8] sm:$0xff] %v417
                %v419 = vld [vmem:[%s245 + $0x560] sm:$0xff]
                %420 = vst [vmem:[%s246 + $0x2b0] sm:$0xff] %v419
                %v421 = vld [vmem:[%s245 + $0x568] sm:$0xff]
                %422 = vst [vmem:[%s246 + $0x2b8] sm:$0xff] %v421
                %v423 = vld [vmem:[%s245 + $0x580] sm:$0xff]
                %424 = vst [vmem:[%s246 + $0x2c0] sm:$0xff] %v423
                %v425 = vld [vmem:[%s245 + $0x588] sm:$0xff]
                %426 = vst [vmem:[%s246 + $0x2c8] sm:$0xff] %v425
                %v427 = vld [vmem:[%s245 + $0x5a0] sm:$0xff]
                %428 = vst [vmem:[%s246 + $0x2d0] sm:$0xff] %v427
                %v429 = vld [vmem:[%s245 + $0x5a8] sm:$0xff]
                %430 = vst [vmem:[%s246 + $0x2d8] sm:$0xff] %v429
                %v431 = vld [vmem:[%s245 + $0x5c0] sm:$0xff]
                %432 = vst [vmem:[%s246 + $0x2e0] sm:$0xff] %v431
                %v433 = vld [vmem:[%s245 + $0x5c8] sm:$0xff]
                %434 = vst [vmem:[%s246 + $0x2e8] sm:$0xff] %v433
                %v435 = vld [vmem:[%s245 + $0x5e0] sm:$0xff]
                %436 = vst [vmem:[%s246 + $0x2f0] sm:$0xff] %v435
                %v437 = vld [vmem:[%s245 + $0x5e8] sm:$0xff]
                %438 = vst [vmem:[%s246 + $0x2f8] sm:$0xff] %v437
                %v439 = vld [vmem:[%s245 + $0x600] sm:$0xff]
                %440 = vst [vmem:[%s246 + $0x300] sm:$0xff] %v439
                %v441 = vld [vmem:[%s245 + $0x608] sm:$0xff]
                %442 = vst [vmem:[%s246 + $0x308] sm:$0xff] %v441
                %v443 = vld [vmem:[%s245 + $0x620] sm:$0xff]
                %444 = vst [vmem:[%s246 + $0x310] sm:$0xff] %v443
                %v445 = vld [vmem:[%s245 + $0x628] sm:$0xff]
                %446 = vst [vmem:[%s246 + $0x318] sm:$0xff] %v445
                %v447 = vld [vmem:[%s245 + $0x640] sm:$0xff]
                %448 = vst [vmem:[%s246 + $0x320] sm:$0xff] %v447
                %v449 = vld [vmem:[%s245 + $0x648] sm:$0xff]
                %450 = vst [vmem:[%s246 + $0x328] sm:$0xff] %v449
                %v451 = vld [vmem:[%s245 + $0x660] sm:$0xff]
                %452 = vst [vmem:[%s246 + $0x330] sm:$0xff] %v451
                %v453 = vld [vmem:[%s245 + $0x668] sm:$0xff]
                %454 = vst [vmem:[%s246 + $0x338] sm:$0xff] %v453
                %v455 = vld [vmem:[%s245 + $0x680] sm:$0xff]
                %456 = vst [vmem:[%s246 + $0x340] sm:$0xff] %v455
                %v457 = vld [vmem:[%s245 + $0x688] sm:$0xff]
                %458 = vst [vmem:[%s246 + $0x348] sm:$0xff] %v457
                %v459 = vld [vmem:[%s245 + $0x6a0] sm:$0xff]
                %460 = vst [vmem:[%s246 + $0x350] sm:$0xff] %v459
                %v461 = vld [vmem:[%s245 + $0x6a8] sm:$0xff]
                %462 = vst [vmem:[%s246 + $0x358] sm:$0xff] %v461
                %v463 = vld [vmem:[%s245 + $0x6c0] sm:$0xff]
                %464 = vst [vmem:[%s246 + $0x360] sm:$0xff] %v463
                %v465 = vld [vmem:[%s245 + $0x6c8] sm:$0xff]
                %466 = vst [vmem:[%s246 + $0x368] sm:$0xff] %v465
                %v467 = vld [vmem:[%s245 + $0x6e0] sm:$0xff]
                %468 = vst [vmem:[%s246 + $0x370] sm:$0xff] %v467
                %v469 = vld [vmem:[%s245 + $0x6e8] sm:$0xff]
                %470 = vst [vmem:[%s246 + $0x378] sm:$0xff] %v469
                %v471 = vld [vmem:[%s245 + $0x700] sm:$0xff]
                %472 = vst [vmem:[%s246 + $0x380] sm:$0xff] %v471
                %v473 = vld [vmem:[%s245 + $0x708] sm:$0xff]
                %474 = vst [vmem:[%s246 + $0x388] sm:$0xff] %v473
                %v475 = vld [vmem:[%s245 + $0x720] sm:$0xff]
                %476 = vst [vmem:[%s246 + $0x390] sm:$0xff] %v475
                %v477 = vld [vmem:[%s245 + $0x728] sm:$0xff]
                %478 = vst [vmem:[%s246 + $0x398] sm:$0xff] %v477
                %v479 = vld [vmem:[%s245 + $0x740] sm:$0xff]
                %480 = vst [vmem:[%s246 + $0x3a0] sm:$0xff] %v479
                %v481 = vld [vmem:[%s245 + $0x748] sm:$0xff]
                %482 = vst [vmem:[%s246 + $0x3a8] sm:$0xff] %v481
                %v483 = vld [vmem:[%s245 + $0x760] sm:$0xff]
                %484 = vst [vmem:[%s246 + $0x3b0] sm:$0xff] %v483
                %v485 = vld [vmem:[%s245 + $0x768] sm:$0xff]
                %486 = vst [vmem:[%s246 + $0x3b8] sm:$0xff] %v485
                %v487 = vld [vmem:[%s245 + $0x780] sm:$0xff]
                %488 = vst [vmem:[%s246 + $0x3c0] sm:$0xff] %v487
                %v489 = vld [vmem:[%s245 + $0x788] sm:$0xff]
                %490 = vst [vmem:[%s246 + $0x3c8] sm:$0xff] %v489
                %v491 = vld [vmem:[%s245 + $0x7a0] sm:$0xff]
                %492 = vst [vmem:[%s246 + $0x3d0] sm:$0xff] %v491
                %v493 = vld [vmem:[%s245 + $0x7a8] sm:$0xff]
                %494 = vst [vmem:[%s246 + $0x3d8] sm:$0xff] %v493
                %v495 = vld [vmem:[%s245 + $0x7c0] sm:$0xff]
                %496 = vst [vmem:[%s246 + $0x3e0] sm:$0xff] %v495
                %v497 = vld [vmem:[%s245 + $0x7c8] sm:$0xff]
                %498 = vst [vmem:[%s246 + $0x3e8] sm:$0xff] %v497
                %v499 = vld [vmem:[%s245 + $0x7e0] sm:$0xff]
                %500 = vst [vmem:[%s246 + $0x3f0] sm:$0xff] %v499
                %v501 = vld [vmem:[%s245 + $0x7e8] sm:$0xff]
                %502 = vst [vmem:[%s246 + $0x3f8] sm:$0xff] %v501
              $region56: #{fusegan_discriminator_forward.14} parent=50 // loop_footer
                %s244 = sadd.s32 1, %s240
              $region57: #{fusegan_discriminator_forward.14} parent=50 // loop_footer_branch
                %239 = sbr.rel target = $region53
              $region58: #{fusegan_discriminator_forward.14} parent=50 // loop_exit
                _
            $region51: #{fusegan_discriminator_forward.14} parent=46 // pred_fallthru
              _
            // Predicated region
            $region59: #{fusegan_discriminator_forward.14} parent=46 // pred_check
              _
            $region60: #{fusegan_discriminator_forward.14} parent=46 // pred_check_branch
              %504 = sbr.rel target = $region62
            $region61: #{fusegan_discriminator_forward.14} parent=46 // pred_region
              _
            $region62: #{fusegan_discriminator_forward.14} parent=46 // pred_fallthru
              _
          $region47: #{fusegan_discriminator_forward.14} parent=42 // pred_fallthru
            _
          %505 = vnop
        $region43: #{fusegan_discriminator_forward.14} parent=15 // pred_fallthru
          _
        // Predicated region
        $region63: #{fusegan_discriminator_forward.14} parent=15 // pred_check
          %p506 = pneg %p96
        $region64: #{fusegan_discriminator_forward.14} parent=15 // pred_check_branch
          %508 = sbr.rel (%p506) target = $region66
        $region65: #{fusegan_discriminator_forward.14} parent=15 // pred_region
          %s509 = smul.u32 2, %s17
          %p510 = scmp.lt.s32.totalorder %s509, 3
          %s511 = scalar_select %p510, %s509, 3
          %s512 = scalar_lea.vmem %s2, %s511
          %s513 = smul.u32 2, %s17
        $region66: #{fusegan_discriminator_forward.14} parent=15 // pred_fallthru
          _
        // Predicated region
        $region67: #{fusegan_discriminator_forward.14} parent=15 // pred_check
          %p514 = pneg %p122
        $region68: #{fusegan_discriminator_forward.14} parent=15 // pred_check_branch
          %516 = sbr.rel (%p514) target = $region70
        $region69: #{fusegan_discriminator_forward.14} parent=15 // pred_region
          %s517 = smul.u32 2, %s17
          %p518 = scmp.lt.s32.totalorder %s517, 3
          %s519 = scalar_select %p518, %s517, 3
          %s520 = scalar_lea.vmem %s3, %s519
          %s521 = smul.u32 2, %s17
        $region70: #{fusegan_discriminator_forward.14} parent=15 // pred_fallthru
          _
      $region16: #{fusegan_discriminator_forward.14} parent=5 // pred_fallthru
        _
      %p522 = scmp.le.s32.totalorder 1, %s10
      %p523 = scmp.lt.s32.totalorder %s10, 33
      %p524 = pnand %p522, %p523
      %p525 = pneg %p524
      // Predicated region
      $region71: #{fusegan_discriminator_forward.14} parent=5 // pred_check
        _
      $region72: #{fusegan_discriminator_forward.14} parent=5 // pred_check_branch
        %527 = sbr.rel (%p524) target = $region74
      $region73: #{fusegan_discriminator_forward.14} parent=5 // pred_region
        %s528 = ssub.s32 %s10, 1
        %s529 = sand.u32 %s35, 1
        %s530 = sand.u32 %s35, 1
        %s531 = smul.addr %s530, 96
        %s532 = scalar_lea.vmem [#allocation3], %s531
        // Predicated region
        $region75: #{fusegan_discriminator_forward.14} parent=73 // pred_check
          %p533 = pneg %p48
        $region76: #{fusegan_discriminator_forward.14} parent=73 // pred_check_branch
          %535 = sbr.rel (%p533) target = $region78
        $region77: #{fusegan_discriminator_forward.14} parent=73 // pred_region
          _
        $region78: #{fusegan_discriminator_forward.14} parent=73 // pred_fallthru
          _
        %s536 = sand.u32 %s63, 1
        %s537 = sand.u32 %s63, 1
        %s538 = smul.addr %s537, 1024
        %s539 = scalar_lea.vmem [#allocation4], %s538
        // Predicated region
        $region79: #{fusegan_discriminator_forward.14} parent=73 // pred_check
          %p540 = pneg %p76
        $region80: #{fusegan_discriminator_forward.14} parent=73 // pred_check_branch
          %542 = sbr.rel (%p540) target = $region82
        $region81: #{fusegan_discriminator_forward.14} parent=73 // pred_region
          _
        $region82: #{fusegan_discriminator_forward.14} parent=73 // pred_fallthru
          _
        %s543 = sand.u32 %s35, 1
        %s544 = sand.u32 %s35, 1
        %s545 = smul.addr %s544, 96
        %s546 = scalar_lea.vmem [#allocation3], %s545
        %p547 = pneg %p48
        %p548 = pneg %p45
        %s549 = sand.u32 %s63, 1
        %s550 = sand.u32 %s63, 1
        %s551 = smul.addr %s550, 1024
        %s552 = scalar_lea.vmem [#allocation4], %s551
        %p553 = pneg %p76
        %p554 = pneg %p73
        %s555 = smul.u32 2, %s19
        %p556 = scmp.lt.s32.totalorder %s555, 3
        %s557 = scalar_select %p556, %s555, 3
        %s558 = scalar_lea.vmem %s2, %s557
        %p559 = pneg %p102
        %p560 = pneg %p99
        %s561 = smul.u32 2, %s19
        %p562 = scmp.lt.s32.totalorder %s561, 3
        %s563 = scalar_select %p562, %s561, 3
        %s564 = scalar_lea.vmem %s3, %s563
        %p565 = pneg %p128
        %p566 = pneg %p125
        %p567 = pneg %p154
        %p568 = pneg %p151
        %s569 = sand.u32 %s141, 1
        %s570 = sand.u32 %s141, 1
        %s571 = smul.addr %s570, 48
        %s572 = scalar_lea.vmem [#allocation5], %s571
        %s573 = smul.u32 4, %s20
        %s574 = smul.u32 64, %s20
        %s575 = smul.u32 2, %s19
        %s576 = smul.u32 2, %s19
        %p577 = scmp.lt.s32.totalorder %s576, 3
        %s578 = scalar_select %p577, %s576, 3
        %s579 = scalar_lea.vmem %s2, %s578
        %s580 = smul.u32 2, %s19
        %s581 = smul.u32 2, %s19
        %p582 = scmp.lt.s32.totalorder %s581, 3
        %s583 = scalar_select %p582, %s581, 3
        %s584 = scalar_lea.vmem %s3, %s583
        %s585 = smul.u32 2, %s19
        %s586 = smul.u32 2, %s19
        %p587 = scmp.eq.s32.totalorder %s20, 0
        // Predicated region
        $region83: #{fusegan_discriminator_forward.14} parent=73 // pred_check
          %p588 = pneg %p587
        $region84: #{fusegan_discriminator_forward.14} parent=73 // pred_check_branch
          %590 = sbr.rel (%p588) target = $region86
        $region85: #{fusegan_discriminator_forward.14} parent=73 // pred_region
          %591 = vst [vmem:[#allocation2] sm:$0xff] 0.0
          %592 = vst [vmem:[#allocation2 + $0x8] sm:$0xff] 0.0
          %593 = vst [vmem:[#allocation2 + $0x10] sm:$0xff] 0.0
          %594 = vst [vmem:[#allocation2 + $0x18] sm:$0xff] 0.0
          %595 = vst [vmem:[#allocation2 + $0x20] sm:$0x3] 0.0
          %596 = vst [vmem:[#allocation2 + $0x28] sm:$0x3] 0.0
        $region86: #{fusegan_discriminator_forward.14} parent=73 // pred_fallthru
          _
        %v597 = vld [vmem:[#allocation2] sm:$0xff]
        %v598 = vld [vmem:[#allocation2 + $0x8] sm:$0xff]
        %v599 = vld [vmem:[#allocation2 + $0x10] sm:$0xff]
        %v600 = vld [vmem:[#allocation2 + $0x18] sm:$0xff]
        %v601 = vld [vmem:[#allocation2 + $0x20] sm:$0x3]
        %v602 = vld [vmem:[#allocation2 + $0x28] sm:$0x3]
        %v603 = vld [vmem:[%s532] sm:$0xff]
        %v604 = vld [vmem:[%s532 + $0x8] sm:$0xff]
        %v605 = vld [vmem:[%s532 + $0x10] sm:$0xff]
        %v606 = vld [vmem:[%s532 + $0x18] sm:$0xff]
        %v607 = vld [vmem:[%s532 + $0x20] sm:$0xff]
        %v608 = vld [vmem:[%s532 + $0x28] sm:$0xff]
        %v609 = vld [vmem:[%s532 + $0x30] sm:$0xff]
        %v610 = vld [vmem:[%s532 + $0x38] sm:$0xff]
        %v611 = vld [vmem:[%s532 + $0x40] sm:$0x3]
        %v612 = vld [vmem:[%s532 + $0x48] sm:$0x3]
        %v613 = vld [vmem:[%s532 + $0x50] sm:$0x3]
        %v614 = vld [vmem:[%s532 + $0x58] sm:$0x3]
        %v615 = vld [vmem:[%s539] sm:$0xff]
        %v616 = vld [vmem:[%s539 + $0x8] sm:$0xff]
        %v617 = vld [vmem:[%s539 + $0x10] sm:$0xff]
        %v618 = vld [vmem:[%s539 + $0x18] sm:$0xff]
        %v619 = vld [vmem:[%s539 + $0x20] sm:$0xff]
        %v620 = vld [vmem:[%s539 + $0x28] sm:$0xff]
        %v621 = vld [vmem:[%s539 + $0x30] sm:$0xff]
        %v622 = vld [vmem:[%s539 + $0x38] sm:$0xff]
        %v623 = vld [vmem:[%s539 + $0x40] sm:$0xff]
        %v624 = vld [vmem:[%s539 + $0x48] sm:$0xff]
        %v625 = vld [vmem:[%s539 + $0x50] sm:$0xff]
        %v626 = vld [vmem:[%s539 + $0x58] sm:$0xff]
        %v627 = vld [vmem:[%s539 + $0x60] sm:$0xff]
        %v628 = vld [vmem:[%s539 + $0x68] sm:$0xff]
        %v629 = vld [vmem:[%s539 + $0x70] sm:$0xff]
        %v630 = vld [vmem:[%s539 + $0x78] sm:$0xff]
        %v631 = vld [vmem:[%s539 + $0x80] sm:$0xff]
        %v632 = vld [vmem:[%s539 + $0x88] sm:$0xff]
        %v633 = vld [vmem:[%s539 + $0x90] sm:$0xff]
        %v634 = vld [vmem:[%s539 + $0x98] sm:$0xff]
        %v635 = vld [vmem:[%s539 + $0xa0] sm:$0xff]
        %v636 = vld [vmem:[%s539 + $0xa8] sm:$0xff]
        %v637 = vld [vmem:[%s539 + $0xb0] sm:$0xff]
        %v638 = vld [vmem:[%s539 + $0xb8] sm:$0xff]
        %v639 = vld [vmem:[%s539 + $0xc0] sm:$0xff]
        %v640 = vld [vmem:[%s539 + $0xc8] sm:$0xff]
        %v641 = vld [vmem:[%s539 + $0xd0] sm:$0xff]
        %v642 = vld [vmem:[%s539 + $0xd8] sm:$0xff]
        %v643 = vld [vmem:[%s539 + $0xe0] sm:$0xff]
        %v644 = vld [vmem:[%s539 + $0xe8] sm:$0xff]
        %v645 = vld [vmem:[%s539 + $0xf0] sm:$0xff]
        %v646 = vld [vmem:[%s539 + $0xf8] sm:$0xff]
        %v647 = vld [vmem:[%s539 + $0x100] sm:$0xff]
        %v648 = vld [vmem:[%s539 + $0x108] sm:$0xff]
        %v649 = vld [vmem:[%s539 + $0x110] sm:$0xff]
        %v650 = vld [vmem:[%s539 + $0x118] sm:$0xff]
        %v651 = vld [vmem:[%s539 + $0x120] sm:$0xff]
        %v652 = vld [vmem:[%s539 + $0x128] sm:$0xff]
        %v653 = vld [vmem:[%s539 + $0x130] sm:$0xff]
        %v654 = vld [vmem:[%s539 + $0x138] sm:$0xff]
        %v655 = vld [vmem:[%s539 + $0x140] sm:$0xff]
        %v656 = vld [vmem:[%s539 + $0x148] sm:$0xff]
        %v657 = vld [vmem:[%s539 + $0x150] sm:$0xff]
        %v658 = vld [vmem:[%s539 + $0x158] sm:$0xff]
        %v659 = vld [vmem:[%s539 + $0x160] sm:$0xff]
        %v660 = vld [vmem:[%s539 + $0x168] sm:$0xff]
        %v661 = vld [vmem:[%s539 + $0x170] sm:$0xff]
        %v662 = vld [vmem:[%s539 + $0x178] sm:$0xff]
        %v663 = vld [vmem:[%s539 + $0x180] sm:$0xff]
        %v664 = vld [vmem:[%s539 + $0x188] sm:$0xff]
        %v665 = vld [vmem:[%s539 + $0x190] sm:$0xff]
        %v666 = vld [vmem:[%s539 + $0x198] sm:$0xff]
        %v667 = vld [vmem:[%s539 + $0x1a0] sm:$0xff]
        %v668 = vld [vmem:[%s539 + $0x1a8] sm:$0xff]
        %v669 = vld [vmem:[%s539 + $0x1b0] sm:$0xff]
        %v670 = vld [vmem:[%s539 + $0x1b8] sm:$0xff]
        %v671 = vld [vmem:[%s539 + $0x1c0] sm:$0xff]
        %v672 = vld [vmem:[%s539 + $0x1c8] sm:$0xff]
        %v673 = vld [vmem:[%s539 + $0x1d0] sm:$0xff]
        %v674 = vld [vmem:[%s539 + $0x1d8] sm:$0xff]
        %v675 = vld [vmem:[%s539 + $0x1e0] sm:$0xff]
        %v676 = vld [vmem:[%s539 + $0x1e8] sm:$0xff]
        %v677 = vld [vmem:[%s539 + $0x1f0] sm:$0xff]
        %v678 = vld [vmem:[%s539 + $0x1f8] sm:$0xff]
        %v679 = vld [vmem:[%s539 + $0x200] sm:$0xff]
        %v680 = vld [vmem:[%s539 + $0x208] sm:$0xff]
        %v681 = vld [vmem:[%s539 + $0x210] sm:$0xff]
        %v682 = vld [vmem:[%s539 + $0x218] sm:$0xff]
        %v683 = vld [vmem:[%s539 + $0x220] sm:$0xff]
        %v684 = vld [vmem:[%s539 + $0x228] sm:$0xff]
        %v685 = vld [vmem:[%s539 + $0x230] sm:$0xff]
        %v686 = vld [vmem:[%s539 + $0x238] sm:$0xff]
        %v687 = vld [vmem:[%s539 + $0x240] sm:$0xff]
        %v688 = vld [vmem:[%s539 + $0x248] sm:$0xff]
        %v689 = vld [vmem:[%s539 + $0x250] sm:$0xff]
        %v690 = vld [vmem:[%s539 + $0x258] sm:$0xff]
        %v691 = vld [vmem:[%s539 + $0x260] sm:$0xff]
        %v692 = vld [vmem:[%s539 + $0x268] sm:$0xff]
        %v693 = vld [vmem:[%s539 + $0x270] sm:$0xff]
        %v694 = vld [vmem:[%s539 + $0x278] sm:$0xff]
        %v695 = vld [vmem:[%s539 + $0x280] sm:$0xff]
        %v696 = vld [vmem:[%s539 + $0x288] sm:$0xff]
        %v697 = vld [vmem:[%s539 + $0x290] sm:$0xff]
        %v698 = vld [vmem:[%s539 + $0x298] sm:$0xff]
        %v699 = vld [vmem:[%s539 + $0x2a0] sm:$0xff]
        %v700 = vld [vmem:[%s539 + $0x2a8] sm:$0xff]
        %v701 = vld [vmem:[%s539 + $0x2b0] sm:$0xff]
        %v702 = vld [vmem:[%s539 + $0x2b8] sm:$0xff]
        %v703 = vld [vmem:[%s539 + $0x2c0] sm:$0xff]
        %v704 = vld [vmem:[%s539 + $0x2c8] sm:$0xff]
        %v705 = vld [vmem:[%s539 + $0x2d0] sm:$0xff]
        %v706 = vld [vmem:[%s539 + $0x2d8] sm:$0xff]
        %v707 = vld [vmem:[%s539 + $0x2e0] sm:$0xff]
        %v708 = vld [vmem:[%s539 + $0x2e8] sm:$0xff]
        %v709 = vld [vmem:[%s539 + $0x2f0] sm:$0xff]
        %v710 = vld [vmem:[%s539 + $0x2f8] sm:$0xff]
        %v711 = vld [vmem:[%s539 + $0x300] sm:$0xff]
        %v712 = vld [vmem:[%s539 + $0x308] sm:$0xff]
        %v713 = vld [vmem:[%s539 + $0x310] sm:$0xff]
        %v714 = vld [vmem:[%s539 + $0x318] sm:$0xff]
        %v715 = vld [vmem:[%s539 + $0x320] sm:$0xff]
        %v716 = vld [vmem:[%s539 + $0x328] sm:$0xff]
        %v717 = vld [vmem:[%s539 + $0x330] sm:$0xff]
        %v718 = vld [vmem:[%s539 + $0x338] sm:$0xff]
        %v719 = vld [vmem:[%s539 + $0x340] sm:$0xff]
        %v720 = vld [vmem:[%s539 + $0x348] sm:$0xff]
        %v721 = vld [vmem:[%s539 + $0x350] sm:$0xff]
        %v722 = vld [vmem:[%s539 + $0x358] sm:$0xff]
        %v723 = vld [vmem:[%s539 + $0x360] sm:$0xff]
        %v724 = vld [vmem:[%s539 + $0x368] sm:$0xff]
        %v725 = vld [vmem:[%s539 + $0x370] sm:$0xff]
        %v726 = vld [vmem:[%s539 + $0x378] sm:$0xff]
        %v727 = vld [vmem:[%s539 + $0x380] sm:$0xff]
        %v728 = vld [vmem:[%s539 + $0x388] sm:$0xff]
        %v729 = vld [vmem:[%s539 + $0x390] sm:$0xff]
        %v730 = vld [vmem:[%s539 + $0x398] sm:$0xff]
        %v731 = vld [vmem:[%s539 + $0x3a0] sm:$0xff]
        %v732 = vld [vmem:[%s539 + $0x3a8] sm:$0xff]
        %v733 = vld [vmem:[%s539 + $0x3b0] sm:$0xff]
        %v734 = vld [vmem:[%s539 + $0x3b8] sm:$0xff]
        %v735 = vld [vmem:[%s539 + $0x3c0] sm:$0xff]
        %v736 = vld [vmem:[%s539 + $0x3c8] sm:$0xff]
        %v737 = vld [vmem:[%s539 + $0x3d0] sm:$0xff]
        %v738 = vld [vmem:[%s539 + $0x3d8] sm:$0xff]
        %v739 = vld [vmem:[%s539 + $0x3e0] sm:$0xff]
        %v740 = vld [vmem:[%s539 + $0x3e8] sm:$0xff]
        %v741 = vld [vmem:[%s539 + $0x3f0] sm:$0xff]
        %v742 = vld [vmem:[%s539 + $0x3f8] sm:$0xff]
        %743 = vmatprep.subr.mxu0 %v646
        %744 = vmatpush1.msra.mxu0 %v645
        %745 = vmatprep.subr.mxu0 %v644
        %746 = vmatpush1.msra.mxu0 %v643
        %747 = vmatprep.subr.mxu0 %v642
        %748 = vmatpush1.msra.mxu0 %v641
        %749 = vmatprep.subr.mxu0 %v640
        %750 = vmatpush1.msra.mxu0 %v639
        %751 = vmatprep.subr.mxu0 %v638
        %752 = vmatpush1.msra.mxu0 %v637
        %753 = vmatprep.subr.mxu0 %v636
        %754 = vmatpush1.msra.mxu0 %v635
        %755 = vmatprep.subr.mxu0 %v634
        %756 = vmatpush1.msra.mxu0 %v633
        %757 = vmatprep.subr.mxu0 %v632
        %758 = vmatpush1.msra.mxu0 %v631
        %759 = vmatprep.subr.mxu0 %v630
        %760 = vmatpush1.msra.mxu0 %v629
        %761 = vmatprep.subr.mxu0 %v628
        %762 = vmatpush1.msra.mxu0 %v627
        %763 = vmatprep.subr.mxu0 %v626
        %764 = vmatpush1.msra.mxu0 %v625
        %765 = vmatprep.subr.mxu0 %v624
        %766 = vmatpush1.msra.mxu0 %v623
        %767 = vmatprep.subr.mxu0 %v622
        %768 = vmatpush1.msra.mxu0 %v621
        %769 = vmatprep.subr.mxu0 %v620
        %770 = vmatpush1.msra.mxu0 %v619
        %771 = vmatprep.subr.mxu0 %v618
        %772 = vmatpush1.msra.mxu0 %v617
        %773 = vmatprep.subr.mxu0 %v616
        %774 = vmatpush1.msra.mxu0 %v615
        %775 = vmatprep.subr.mxu0 %v678
        %776 = vmatpush2.msra.mxu0 %v677
        %777 = vmatprep.subr.mxu0 %v676
        %778 = vmatpush2.msra.mxu0 %v675
        %779 = vmatprep.subr.mxu0 %v674
        %780 = vmatpush2.msra.mxu0 %v673
        %781 = vmatprep.subr.mxu0 %v672
        %782 = vmatpush2.msra.mxu0 %v671
        %783 = vmatprep.subr.mxu0 %v670
        %784 = vmatpush2.msra.mxu0 %v669
        %785 = vmatprep.subr.mxu0 %v668
        %786 = vmatpush2.msra.mxu0 %v667
        %787 = vmatprep.subr.mxu0 %v666
        %788 = vmatpush2.msra.mxu0 %v665
        %789 = vmatprep.subr.mxu0 %v664
        %790 = vmatpush2.msra.mxu0 %v663
        %791 = vmatprep.subr.mxu0 %v662
        %792 = vmatpush2.msra.mxu0 %v661
        %793 = vmatprep.subr.mxu0 %v660
        %794 = vmatpush2.msra.mxu0 %v659
        %795 = vmatprep.subr.mxu0 %v658
        %796 = vmatpush2.msra.mxu0 %v657
        %797 = vmatprep.subr.mxu0 %v656
        %798 = vmatpush2.msra.mxu0 %v655
        %799 = vmatprep.subr.mxu0 %v654
        %800 = vmatpush2.msra.mxu0 %v653
        %801 = vmatprep.subr.mxu0 %v652
        %802 = vmatpush2.msra.mxu0 %v651
        %803 = vmatprep.subr.mxu0 %v650
        %804 = vmatpush2.msra.mxu0 %v649
        %805 = vmatprep.subr.mxu0 %v648
        %806 = vmatpush2.msra.mxu0 %v647
        %807 = vmatprep.mubr.f32.mxu0 %v604
        %808 = vmatmul.mubr.f32.gmra.mxu0 %v603
        %v809 = vpop.f32.mrf.mxu0
        %v810 = vadd.f32 0.0, %v809
        %v811 = vpop.f32.mrf.mxu0
        %v812 = vadd.f32 0.0, %v811
        %813 = vmatprep.mubr.f32.mxu0 %v608
        %814 = vmatmul.mubr.f32.gmra.mxu0 %v607
        %v815 = vpop.f32.mrf.mxu0
        %v816 = vadd.f32 0.0, %v815
        %v817 = vpop.f32.mrf.mxu0
        %v818 = vadd.f32 0.0, %v817
        %819 = vmatprep.mubr.f32.mxu0 %v612
        %820 = vmatmul.mubr.f32.gmra.mxu0 %v611
        %v821 = vpop.f32.mrf.mxu0
        %v822 = vadd.f32 0.0, %v821
        %v823 = vpop.f32.mrf.mxu0
        %v824 = vadd.f32 0.0, %v823
        %825 = vdwg.mxu0
        %826 = vmatprep.subr.mxu0 %v710
        %827 = vmatpush1.msra.mxu0 %v709
        %828 = vmatprep.subr.mxu0 %v708
        %829 = vmatpush1.msra.mxu0 %v707
        %830 = vmatprep.subr.mxu0 %v706
        %831 = vmatpush1.msra.mxu0 %v705
        %832 = vmatprep.subr.mxu0 %v704
        %833 = vmatpush1.msra.mxu0 %v703
        %834 = vmatprep.subr.mxu0 %v702
        %835 = vmatpush1.msra.mxu0 %v701
        %836 = vmatprep.subr.mxu0 %v700
        %837 = vmatpush1.msra.mxu0 %v699
        %838 = vmatprep.subr.mxu0 %v698
        %839 = vmatpush1.msra.mxu0 %v697
        %840 = vmatprep.subr.mxu0 %v696
        %841 = vmatpush1.msra.mxu0 %v695
        %842 = vmatprep.subr.mxu0 %v694
        %843 = vmatpush1.msra.mxu0 %v693
        %844 = vmatprep.subr.mxu0 %v692
        %845 = vmatpush1.msra.mxu0 %v691
        %846 = vmatprep.subr.mxu0 %v690
        %847 = vmatpush1.msra.mxu0 %v689
        %848 = vmatprep.subr.mxu0 %v688
        %849 = vmatpush1.msra.mxu0 %v687
        %850 = vmatprep.subr.mxu0 %v686
        %851 = vmatpush1.msra.mxu0 %v685
        %852 = vmatprep.subr.mxu0 %v684
        %853 = vmatpush1.msra.mxu0 %v683
        %854 = vmatprep.subr.mxu0 %v682
        %855 = vmatpush1.msra.mxu0 %v681
        %856 = vmatprep.subr.mxu0 %v680
        %857 = vmatpush1.msra.mxu0 %v679
        %858 = vmatprep.subr.mxu0 %v742
        %859 = vmatpush2.msra.mxu0 %v741
        %860 = vmatprep.subr.mxu0 %v740
        %861 = vmatpush2.msra.mxu0 %v739
        %862 = vmatprep.subr.mxu0 %v738
        %863 = vmatpush2.msra.mxu0 %v737
        %864 = vmatprep.subr.mxu0 %v736
        %865 = vmatpush2.msra.mxu0 %v735
        %866 = vmatprep.subr.mxu0 %v734
        %867 = vmatpush2.msra.mxu0 %v733
        %868 = vmatprep.subr.mxu0 %v732
        %869 = vmatpush2.msra.mxu0 %v731
        %870 = vmatprep.subr.mxu0 %v730
        %871 = vmatpush2.msra.mxu0 %v729
        %872 = vmatprep.subr.mxu0 %v728
        %873 = vmatpush2.msra.mxu0 %v727
        %874 = vmatprep.subr.mxu0 %v726
        %875 = vmatpush2.msra.mxu0 %v725
        %876 = vmatprep.subr.mxu0 %v724
        %877 = vmatpush2.msra.mxu0 %v723
        %878 = vmatprep.subr.mxu0 %v722
        %879 = vmatpush2.msra.mxu0 %v721
        %880 = vmatprep.subr.mxu0 %v720
        %881 = vmatpush2.msra.mxu0 %v719
        %882 = vmatprep.subr.mxu0 %v718
        %883 = vmatpush2.msra.mxu0 %v717
        %884 = vmatprep.subr.mxu0 %v716
        %885 = vmatpush2.msra.mxu0 %v715
        %886 = vmatprep.subr.mxu0 %v714
        %887 = vmatpush2.msra.mxu0 %v713
        %888 = vmatprep.subr.mxu0 %v712
        %889 = vmatpush2.msra.mxu0 %v711
        %890 = vmatprep.mubr.f32.mxu0 %v606
        %891 = vmatmul.mubr.f32.gmra.mxu0 %v605
        %v892 = vpop.f32.mrf.mxu0
        %v893 = vadd.f32 %v810, %v892
        %v894 = vpop.f32.mrf.mxu0
        %v895 = vadd.f32 %v812, %v894
        %896 = vmatprep.mubr.f32.mxu0 %v610
        %897 = vmatmul.mubr.f32.gmra.mxu0 %v609
        %v898 = vpop.f32.mrf.mxu0
        %v899 = vadd.f32 %v816, %v898
        %v900 = vpop.f32.mrf.mxu0
        %v901 = vadd.f32 %v818, %v900
        %902 = vmatprep.mubr.f32.mxu0 %v614
        %903 = vmatmul.mubr.f32.gmra.mxu0 %v613
        %v904 = vpop.f32.mrf.mxu0
        %v905 = vadd.f32 %v822, %v904
        %v906 = vpop.f32.mrf.mxu0
        %v907 = vadd.f32 %v824, %v906
        %908 = vdwg.mxu0
        %v909 = vadd.f32 %v597, %v893
        %v910 = vadd.f32 %v598, %v895
        %v911 = vadd.f32 %v599, %v899
        %v912 = vadd.f32 %v600, %v901
        %v913 = vadd.f32 %v601, %v905
        %v914 = vadd.f32 %v602, %v907
        %915 = vst [vmem:[#allocation2] sm:$0xff] %v909
        %916 = vst [vmem:[#allocation2 + $0x8] sm:$0xff] %v910
        %917 = vst [vmem:[#allocation2 + $0x10] sm:$0xff] %v911
        %918 = vst [vmem:[#allocation2 + $0x18] sm:$0xff] %v912
        %919 = vst [vmem:[#allocation2 + $0x20] sm:$0x3] %v913
        %920 = vst [vmem:[#allocation2 + $0x28] sm:$0x3] %v914
        %p921 = scmp.eq.s32.totalorder %s20, 15
        // Predicated region
        $region87: #{fusegan_discriminator_forward.14} parent=73 // pred_check
          %p922 = pneg %p921
        $region88: #{fusegan_discriminator_forward.14} parent=73 // pred_check_branch
          %924 = sbr.rel (%p922) target = $region90
        $region89: #{fusegan_discriminator_forward.14} parent=73 // pred_region
          %v925 = vld [vmem:[#allocation2] sm:$0xff]
          %v926 = vld [vmem:[#allocation2 + $0x8] sm:$0xff]
          %v927 = vld [vmem:[#allocation2 + $0x10] sm:$0xff]
          %v928 = vld [vmem:[#allocation2 + $0x18] sm:$0xff]
          %v929 = vld [vmem:[#allocation2 + $0x20] sm:$0x3]
          %v930 = vld [vmem:[#allocation2 + $0x28] sm:$0x3]
          %v931 = vadd.f32 %v925, %v927
          %vm932 = vcmask 1041408
          %v933 = vsel %vm932, %v929, 0.0
          %v934 = vadd.f32 %v931, %v933
          %v935 = vrot.slane %v934, 4
          %v936 = vadd.f32 %v934, %v935
          %v937 = vrot.slane %v936, 2
          %v938 = vadd.f32 %v936, %v937
          %v939 = vrot.slane %v938, 1
          %v940 = vadd.f32 %v938, %v939
          %v941 = vadd.f32 %v926, %v928
          %v942 = vsel %vm932, %v930, 0.0
          %v943 = vadd.f32 %v941, %v942
          %v944 = vrot.slane %v943, 4
          %v945 = vadd.f32 %v943, %v944
          %v946 = vrot.slane %v945, 2
          %v947 = vadd.f32 %v945, %v946
          %v948 = vrot.slane %v947, 1
          %v949 = vadd.f32 %v947, %v948
          %v950 = vmul.f32 %v940, 0.055555556
          %v951 = vmul.f32 %v949, 0.055555556
          %v952 = vsub.f32 %v925, %v950
          %v953 = vsub.f32 %v926, %v951
          %v954 = vsub.f32 %v927, %v950
          %v955 = vsub.f32 %v928, %v951
          %v956 = vsub.f32 %v929, %v950
          %v957 = vsub.f32 %v930, %v951
          %v958 = vmul.f32 %v952, %v952
          %v959 = vmul.f32 %v953, %v953
          %v960 = vmul.f32 %v954, %v954
          %v961 = vmul.f32 %v955, %v955
          %v962 = vmul.f32 %v956, %v956
          %v963 = vmul.f32 %v957, %v957
          %v964 = vadd.f32 %v958, %v960
          %v965 = vsel %vm932, %v962, 0.0
          %v966 = vadd.f32 %v964, %v965
          %v967 = vrot.slane %v966, 4
          %v968 = vadd.f32 %v966, %v967
          %v969 = vrot.slane %v968, 2
          %v970 = vadd.f32 %v968, %v969
          %v971 = vrot.slane %v970, 1
          %v972 = vadd.f32 %v970, %v971
          %v973 = vadd.f32 %v959, %v961
          %v974 = vsel %vm932, %v963, 0.0
          %v975 = vadd.f32 %v973, %v974
          %v976 = vrot.slane %v975, 4
          %v977 = vadd.f32 %v975, %v976
          %v978 = vrot.slane %v977, 2
          %v979 = vadd.f32 %v977, %v978
          %v980 = vrot.slane %v979, 1
          %v981 = vadd.f32 %v979, %v980
          %v982 = vmul.f32 %v972, 0.055555556
          %v983 = vmul.f32 %v981, 0.055555556
          %v984 = vld [vmem:[%s579] sm:$0x3]
          %v985 = vadd.f32 %v982, 1e-05
          %v986 = vadd.f32 %v983, 1e-05
          %v987 = vrsqrt.pop %v985
          %v988 = vrsqrt.pop %v986
          %v991 = vcombine.low %v987, %v988
          %v993 = vunpack.c.l.s4 1966171168
          %v994 = vunpack.c.0.s8 %v993
          %v995 = vlaneseq
          %v996 = vshrl.u32 %v995, 7
          %v997 = vsub.s32 %v994, %v996
          %v998 = vrot.slane %v991, %v997
          %v1000 = vunpack.c.l.s4 1966171168
          %v1001 = vunpack.c.0.s8 %v1000
          %v1002 = vlaneseq
          %v1003 = vshrl.u32 %v1002, 7
          %v1004 = vsub.s32 %v1001, %v1003
          %v1005 = vrot.slane %v998, %v1004
          %v1007 = vmul.f32 %v984, %v1005
          %v1009 = vlaneseq
          %v1010 = vshrl.u32 %v1009, 7
          %v1011 = vsub.s32 0, %v1010
          %v1012 = vrot.slane %v1007, %v1011
          %v1013 = vlaneseq
          %v1014 = vshrl.u32 %v1013, 7
          %v1015 = vsub.s32 1, %v1014
          %v1016 = vrot.slane %v1007, %v1015
          %v1019 = vmul.f32 %v952, %v1012
          %v1020 = vmul.f32 %v953, %v1016
          %v1021 = vmul.f32 %v954, %v1012
          %v1022 = vmul.f32 %v955, %v1016
          %v1023 = vmul.f32 %v956, %v1012
          %v1024 = vmul.f32 %v957, %v1016
          %v1025 = vld [vmem:[%s584] sm:$0x3]
          %v1027 = vlaneseq
          %v1028 = vshrl.u32 %v1027, 7
          %v1029 = vsub.s32 0, %v1028
          %v1030 = vrot.slane %v1025, %v1029
          %v1031 = vlaneseq
          %v1032 = vshrl.u32 %v1031, 7
          %v1033 = vsub.s32 1, %v1032
          %v1034 = vrot.slane %v1025, %v1033
          %v1037 = vadd.f32 %v1019, %v1030
          %v1038 = vadd.f32 %v1020, %v1034
          %v1039 = vadd.f32 %v1021, %v1030
          %v1040 = vadd.f32 %v1022, %v1034
          %v1041 = vadd.f32 %v1023, %v1030
          %v1042 = vadd.f32 %v1024, %v1034
          %vm1043 = vcmp.ge.f32.partialorder %v1037, 0.0
          %vm1044 = vcmp.ge.f32.partialorder %v1038, 0.0
          %vm1045 = vcmp.ge.f32.partialorder %v1039, 0.0
          %vm1046 = vcmp.ge.f32.partialorder %v1040, 0.0
          %vm1047 = vcmp.ge.f32.partialorder %v1041, 0.0
          %vm1048 = vcmp.ge.f32.partialorder %v1042, 0.0
          %v1049 = vmul.f32 %v1037, 0.01
          %v1050 = vmul.f32 %v1038, 0.01
          %v1051 = vmul.f32 %v1039, 0.01
          %v1052 = vmul.f32 %v1040, 0.01
          %v1053 = vmul.f32 %v1041, 0.01
          %v1054 = vmul.f32 %v1042, 0.01
          %v1055 = vsel %vm1043, %v1037, %v1049
          %v1056 = vsel %vm1044, %v1038, %v1050
          %v1057 = vsel %vm1045, %v1039, %v1051
          %v1058 = vsel %vm1046, %v1040, %v1052
          %v1059 = vsel %vm1047, %v1041, %v1053
          %v1060 = vsel %vm1048, %v1042, %v1054
          %1061 = vst [vmem:[%s572] sm:$0xff] %v1055
          %1062 = vst [vmem:[%s572 + $0x8] sm:$0xff] %v1056
          %1063 = vst [vmem:[%s572 + $0x10] sm:$0xff] %v1057
          %1064 = vst [vmem:[%s572 + $0x18] sm:$0xff] %v1058
          %1065 = vst [vmem:[%s572 + $0x20] sm:$0x3] %v1059
          %1066 = vst [vmem:[%s572 + $0x28] sm:$0x3] %v1060
        $region90: #{fusegan_discriminator_forward.14} parent=73 // pred_fallthru
          _
        %s1067 = sand.u32 %s141, 1
        %s1068 = sand.u32 %s141, 1
        %s1069 = smul.addr %s1068, 48
        %s1070 = scalar_lea.vmem [#allocation5], %s1069
        // Predicated region
        $region91: #{fusegan_discriminator_forward.14} parent=73 // pred_check
          %p1071 = pneg %p151
        $region92: #{fusegan_discriminator_forward.14} parent=73 // pred_check_branch
          %1073 = sbr.rel (%p1071) target = $region94
        $region93: #{fusegan_discriminator_forward.14} parent=73 // pred_region
          %s1074 = smul.u32 2, %s19
          %s1075 = smul.addr %s1074, 8
          %s1076 = scalar_lea.vmem %s4, %s1075
          // Predicated region
          $region95: #{fusegan_discriminator_forward.14} parent=93 // pred_check
            _
          $region96: #{fusegan_discriminator_forward.14} parent=93 // pred_check_branch
            %1078 = sbr.rel (0) target = $region98
          $region97: #{fusegan_discriminator_forward.14} parent=93 // pred_region
            // Predicated region
            $region99: #{fusegan_discriminator_forward.14} parent=97 // pred_check
              _
            $region100: #{fusegan_discriminator_forward.14} parent=97 // pred_check_branch
              %1080 = sbr.rel (0) target = $region102
            $region101: #{fusegan_discriminator_forward.14} parent=97 // pred_region
              loop: start=0, step=1, limit=1
              $region103: #{fusegan_discriminator_forward.14} parent=101 // loop_pre_header
                _
              $region104: #{fusegan_discriminator_forward.14} parent=101 // loop_header
                %s1082 = sphi 0, %s1086
                %p1083 = scmp.ge.s32.totalorder %s1082, 1
                %s1087 = sphi %s1070, %s1070
                %s1088 = sphi %s1076, %s1076
              $region105: #{fusegan_discriminator_forward.14} parent=101 // loop_header_branch
                %1085 = sbr.rel (%p1083) target = $region109
              $region106: #{fusegan_discriminator_forward.14} parent=101 // loop_body
                %v1089 = vld [vmem:[%s1087] sm:$0xff]
                %1090 = vst [vmem:[%s1088] sm:$0xff] %v1089
                %v1091 = vld [vmem:[%s1087 + $0x8] sm:$0xff]
                %1092 = vst [vmem:[%s1088 + $0x8] sm:$0xff] %v1091
                %v1093 = vld [vmem:[%s1087 + $0x10] sm:$0xff]
                %1094 = vst [vmem:[%s1088 + $0x20] sm:$0xff] %v1093
                %v1095 = vld [vmem:[%s1087 + $0x18] sm:$0xff]
                %1096 = vst [vmem:[%s1088 + $0x28] sm:$0xff] %v1095
                %v1097 = vld [vmem:[%s1087 + $0x20] sm:$0xff]
                %1098 = vst [vmem:[%s1088 + $0x40] sm:$0xff] %v1097
                %v1099 = vld [vmem:[%s1087 + $0x28] sm:$0xff]
                %1100 = vst [vmem:[%s1088 + $0x48] sm:$0xff] %v1099
              $region107: #{fusegan_discriminator_forward.14} parent=101 // loop_footer
                %s1086 = sadd.s32 1, %s1082
              $region108: #{fusegan_discriminator_forward.14} parent=101 // loop_footer_branch
                %1081 = sbr.rel target = $region104
              $region109: #{fusegan_discriminator_forward.14} parent=101 // loop_exit
                _
            $region102: #{fusegan_discriminator_forward.14} parent=97 // pred_fallthru
              _
            // Predicated region
            $region110: #{fusegan_discriminator_forward.14} parent=97 // pred_check
              _
            $region111: #{fusegan_discriminator_forward.14} parent=97 // pred_check_branch
              %1102 = sbr.rel target = $region113
            $region112: #{fusegan_discriminator_forward.14} parent=97 // pred_region
              _
            $region113: #{fusegan_discriminator_forward.14} parent=97 // pred_fallthru
              _
          $region98: #{fusegan_discriminator_forward.14} parent=93 // pred_fallthru
            _
          %1103 = vnop
        $region94: #{fusegan_discriminator_forward.14} parent=73 // pred_fallthru
          _
      $region74: #{fusegan_discriminator_forward.14} parent=5 // pred_fallthru
        _
      %p1104 = scmp.le.s32.totalorder 2, %s10
      // Predicated region
      $region114: #{fusegan_discriminator_forward.14} parent=5 // pred_check
        %p1105 = pneg %p1104
      $region115: #{fusegan_discriminator_forward.14} parent=5 // pred_check_branch
        %1107 = sbr.rel (%p1105) target = $region117
      $region116: #{fusegan_discriminator_forward.14} parent=5 // pred_region
        %s1108 = ssub.s32 %s10, 2
        // Predicated region
        $region118: #{fusegan_discriminator_forward.14} parent=116 // pred_check
          %p1109 = pneg %p157
        $region119: #{fusegan_discriminator_forward.14} parent=116 // pred_check_branch
          %1111 = sbr.rel (%p1109) target = $region121
        $region120: #{fusegan_discriminator_forward.14} parent=116 // pred_region
          %s1112 = sand.u32 %s142, 1
          %s1113 = sand.u32 %s142, 1
          %s1114 = smul.addr %s1113, 48
          %s1115 = scalar_lea.vmem [#allocation5], %s1114
        $region121: #{fusegan_discriminator_forward.14} parent=116 // pred_fallthru
          _
      $region117: #{fusegan_discriminator_forward.14} parent=5 // pred_fallthru
        _
    $region6: #{fusegan_discriminator_forward.14} parent=1 // loop_footer
      %s14 = sadd.s32 1, %s10
    $region7: #{fusegan_discriminator_forward.14} parent=1 // loop_footer_branch
      %9 = sbr.rel target = $region3
    $region8: #{fusegan_discriminator_forward.14} parent=1 // loop_exit
      _

// kernel: fusegan_discriminator_forward.15
$region0: #{fusegan_discriminator_forward.15}
  #allocation0 [shape = 'u32[]', space=smem, size = 0x4, offset = 0x4, fixed_abs, tag = 'smem constant byte address 0x4 - core index']
  #allocation1 [shape = 'u32[144,128]{1,0:T(1,128)}', space=vmem, size = 0x12000, scoped, tag = 'internal scratch']
  #allocation2 [shape = 'f32[32,128]{1,0:T(8,128)}', space=vmem, size = 0x4000, scoped, tag = 'scratch operand']
  %s0 = inlined_call_operand.vmem [shape: f32[32,8192], index: 0, kind: input, shape index: {}]
  %s1 = inlined_call_operand.vmem [shape: f32[8192,128], index: 1, kind: input, shape index: {}]
  %s2 = inlined_call_operand.vmem [shape: f32[1,128], index: 2, kind: input, shape index: {}]
  %s3 = inlined_call_operand.vmem [shape: f32[1,128], index: 3, kind: input, shape index: {}]
  %s4 = inlined_call_operand.vmem [shape: f32[32,128], index: 4, kind: output, shape index: {}]
  %s5 = sld [smem:[#allocation0]]
  $region80: #{fusegan_discriminator_forward.15} parent=0
    _
  %s7 = ssub.s32 1, %s5
  %s8 = scalar_select 0, %s7, %s5
  $region1: #{fusegan_discriminator_forward.15} parent=0
    #allocation3 [shape = 'u8[131072]{0}', space=vmem, size = 0x20000, scoped, tag = 'input window, operand 0']
    loop: start=0, step=1, limit=18
    $region2: #{fusegan_discriminator_forward.15} parent=1 // loop_pre_header
      _
    $region3: #{fusegan_discriminator_forward.15} parent=1 // loop_header
      %s10 = sphi 0, %s14
      %p11 = scmp.ge.s32.totalorder %s10, 18
      %s17 = sphi 0, %s29
      %s18 = sphi 0, %s25
      %s19 = sphi 0, %s17
      %s20 = sphi 0, %s18
      %s21 = sphi 0, %s19
      %s22 = sphi 0, %s20
      %s32 = sphi 0, %s34
      %s35 = sphi 0, %s32
      %s36 = sphi 0, %s35
      %s52 = sphi 0, %s36
      %s60 = sphi 0, %s62
      %s63 = sphi 0, %s60
      %s64 = sphi 0, %s63
      %s80 = sphi 0, %s64
      %s86 = sphi 0, %s88
      %s89 = sphi 0, %s86
      %s90 = sphi 0, %s89
      %s106 = sphi 0, %s90
      %s112 = sphi 0, %s114
      %s115 = sphi 0, %s112
      %s116 = sphi 0, %s115
      %s132 = sphi 0, %s116
      %s138 = sphi 0, %s140
      %s141 = sphi 0, %s138
      %s142 = sphi 0, %s141
      %s158 = sphi 0, %s142
    $region4: #{fusegan_discriminator_forward.15} parent=1 // loop_header_branch
      %13 = sbr.rel (%p11) target = $region8
    $region5: #{fusegan_discriminator_forward.15} parent=1 // loop_body
      %s15 = ssub.s32 %s10, 1
      %s16 = ssub.s32 %s10, 2
      %s23 = sadd.s32 1, %s18
      %p24 = scmp.ge.s32.totalorder %s23, 16
      %s25 = scalar_select %p24, 0, %s23
      %s26 = sadd.s32 1, %s17
      %s27 = scalar_select %p24, %s26, %s17
      %p28 = scmp.ge.s32.totalorder %s27, 1
      %s29 = scalar_select %p28, 0, %s27
      %s30 = ssub.s32 %s18, %s25
      %p31 = scmp.eq.s32.totalorder %s30, 0
      %s33 = sadd.s32 %s32, 1
      %s34 = scalar_select %p31, %s32, %s33
      %p37 = pneg %p31
      %p38 = scmp.eq.s32.totalorder %s10, 15
      %p39 = por %p37, %p38
      %p40 = scmp.ne.s32.totalorder %s32, %s35
      %p41 = scmp.eq.s32.totalorder %s10, 0
      %p42 = por %p40, %p41
      %p43 = scmp.ne.s32.totalorder %s32, %s35
      %p44 = scmp.eq.s32.totalorder %s15, 15
      %p45 = por %p43, %p44
      %p46 = scmp.ne.s32.totalorder %s35, %s36
      %p47 = scmp.eq.s32.totalorder %s15, 0
      %p48 = por %p46, %p47
      %p49 = scmp.ne.s32.totalorder %s35, %s36
      %p50 = scmp.eq.s32.totalorder %s16, 15
      %p51 = por %p49, %p50
      %p53 = scmp.ne.s32.totalorder %s36, %s52
      %p54 = scmp.eq.s32.totalorder %s16, 0
      %p55 = por %p53, %p54
      %s56 = ssub.s32 %s18, %s25
      %s57 = ssub.s32 %s17, %s29
      %s58 = sor.u32 %s56, %s57
      %p59 = scmp.eq.s32.totalorder %s58, 0
      %s61 = sadd.s32 %s60, 1
      %s62 = scalar_select %p59, %s60, %s61
      %p65 = pneg %p59
      %p66 = scmp.eq.s32.totalorder %s10, 15
      %p67 = por %p65, %p66
      %p68 = scmp.ne.s32.totalorder %s60, %s63
      %p69 = scmp.eq.s32.totalorder %s10, 0
      %p70 = por %p68, %p69
      %p71 = scmp.ne.s32.totalorder %s60, %s63
      %p72 = scmp.eq.s32.totalorder %s15, 15
      %p73 = por %p71, %p72
      %p74 = scmp.ne.s32.totalorder %s63, %s64
      %p75 = scmp.eq.s32.totalorder %s15, 0
      %p76 = por %p74, %p75
      %p77 = scmp.ne.s32.totalorder %s63, %s64
      %p78 = scmp.eq.s32.totalorder %s16, 15
      %p79 = por %p77, %p78
      %p81 = scmp.ne.s32.totalorder %s64, %s80
      %p82 = scmp.eq.s32.totalorder %s16, 0
      %p83 = por %p81, %p82
      %s84 = ssub.s32 %s17, %s29
      %p85 = scmp.eq.s32.totalorder %s84, 0
      %s87 = sadd.s32 %s86, 1
      %s88 = scalar_select %p85, %s86, %s87
      %p91 = pneg %p85
      %p92 = scmp.eq.s32.totalorder %s10, 15
      %p93 = por %p91, %p92
      %p94 = scmp.ne.s32.totalorder %s86, %s89
      %p95 = scmp.eq.s32.totalorder %s10, 0
      %p96 = por %p94, %p95
      %p97 = scmp.ne.s32.totalorder %s86, %s89
      %p98 = scmp.eq.s32.totalorder %s15, 15
      %p99 = por %p97, %p98
      %p100 = scmp.ne.s32.totalorder %s89, %s90
      %p101 = scmp.eq.s32.totalorder %s15, 0
      %p102 = por %p100, %p101
      %p103 = scmp.ne.s32.totalorder %s89, %s90
      %p104 = scmp.eq.s32.totalorder %s16, 15
      %p105 = por %p103, %p104
      %p107 = scmp.ne.s32.totalorder %s90, %s106
      %p108 = scmp.eq.s32.totalorder %s16, 0
      %p109 = por %p107, %p108
      %s110 = ssub.s32 %s17, %s29
      %p111 = scmp.eq.s32.totalorder %s110, 0
      %s113 = sadd.s32 %s112, 1
      %s114 = scalar_select %p111, %s112, %s113
      %p117 = pneg %p111
      %p118 = scmp.eq.s32.totalorder %s10, 15
      %p119 = por %p117, %p118
      %p120 = scmp.ne.s32.totalorder %s112, %s115
      %p121 = scmp.eq.s32.totalorder %s10, 0
      %p122 = por %p120, %p121
      %p123 = scmp.ne.s32.totalorder %s112, %s115
      %p124 = scmp.eq.s32.totalorder %s15, 15
      %p125 = por %p123, %p124
      %p126 = scmp.ne.s32.totalorder %s115, %s116
      %p127 = scmp.eq.s32.totalorder %s15, 0
      %p128 = por %p126, %p127
      %p129 = scmp.ne.s32.totalorder %s115, %s116
      %p130 = scmp.eq.s32.totalorder %s16, 15
      %p131 = por %p129, %p130
      %p133 = scmp.ne.s32.totalorder %s116, %s132
      %p134 = scmp.eq.s32.totalorder %s16, 0
      %p135 = por %p133, %p134
      %s136 = ssub.s32 %s17, %s29
      %p137 = scmp.eq.s32.totalorder %s136, 0
      %s139 = sadd.s32 %s138, 1
      %s140 = scalar_select %p137, %s138, %s139
      %p143 = pneg %p137
      %p144 = scmp.eq.s32.totalorder %s10, 15
      %p145 = por %p143, %p144
      %p146 = scmp.ne.s32.totalorder %s138, %s141
      %p147 = scmp.eq.s32.totalorder %s10, 0
      %p148 = por %p146, %p147
      %p149 = scmp.ne.s32.totalorder %s138, %s141
      %p150 = scmp.eq.s32.totalorder %s15, 15
      %p151 = por %p149, %p150
      %p152 = scmp.ne.s32.totalorder %s141, %s142
      %p153 = scmp.eq.s32.totalorder %s15, 0
      %p154 = por %p152, %p153
      %p155 = scmp.ne.s32.totalorder %s141, %s142
      %p156 = scmp.eq.s32.totalorder %s16, 15
      %p157 = por %p155, %p156
      %p159 = scmp.ne.s32.totalorder %s142, %s158
      %p160 = scmp.eq.s32.totalorder %s16, 0
      %p161 = por %p159, %p160
      %p162 = scmp.le.s32.totalorder 1, %s10
      %p163 = scmp.lt.s32.totalorder %s10, 17
      %p164 = pnand %p162, %p163
      %p165 = pneg %p164
      // Predicated region
      $region9: #{fusegan_discriminator_forward.15} parent=5 // pred_check
        _
      $region10: #{fusegan_discriminator_forward.15} parent=5 // pred_check_branch
        %167 = sbr.rel (%p164) target = $region12
      $region11: #{fusegan_discriminator_forward.15} parent=5 // pred_region
        %s168 = ssub.s32 %s10, 1
        // Predicated region
        $region13: #{fusegan_discriminator_forward.15} parent=11 // pred_check
          %p169 = pneg %p102
        $region14: #{fusegan_discriminator_forward.15} parent=11 // pred_check_branch
          %171 = sbr.rel (%p169) target = $region16
        $region15: #{fusegan_discriminator_forward.15} parent=11 // pred_region
          %p172 = scmp.lt.s32.totalorder %s19, 0
          %s173 = scalar_select %p172, %s19, 0
          %s174 = scalar_lea.vmem %s2, %s173
        $region16: #{fusegan_discriminator_forward.15} parent=11 // pred_fallthru
          _
        // Predicated region
        $region17: #{fusegan_discriminator_forward.15} parent=11 // pred_check
          %p175 = pneg %p128
        $region18: #{fusegan_discriminator_forward.15} parent=11 // pred_check_branch
          %177 = sbr.rel (%p175) target = $region20
        $region19: #{fusegan_discriminator_forward.15} parent=11 // pred_region
          %p178 = scmp.lt.s32.totalorder %s19, 0
          %s179 = scalar_select %p178, %s19, 0
          %s180 = scalar_lea.vmem %s3, %s179
        $region20: #{fusegan_discriminator_forward.15} parent=11 // pred_fallthru
          _
      $region12: #{fusegan_discriminator_forward.15} parent=5 // pred_fallthru
        _
      %p181 = scmp.lt.s32.totalorder %s10, 16
      // Predicated region
      $region21: #{fusegan_discriminator_forward.15} parent=5 // pred_check
        %p182 = pneg %p181
      $region22: #{fusegan_discriminator_forward.15} parent=5 // pred_check_branch
        %184 = sbr.rel (%p182) target = $region24
      $region23: #{fusegan_discriminator_forward.15} parent=5 // pred_region
        // Predicated region
        $region25: #{fusegan_discriminator_forward.15} parent=23 // pred_check
          %p185 = pneg %p42
        $region26: #{fusegan_discriminator_forward.15} parent=23 // pred_check_branch
          %187 = sbr.rel (%p185) target = $region28
        $region27: #{fusegan_discriminator_forward.15} parent=23 // pred_region
          %s188 = sand.u32 %s32, 1
          %s189 = sand.u32 %s32, 1
          %s190 = smul.addr %s189, 128
          %s191 = scalar_lea.vmem [#allocation3], %s190
          %s192 = smul.u32 4, %s18
          %s193 = smul.addr %s192, 8
          %s194 = scalar_lea.vmem %s0, %s193
          // Predicated region
          $region29: #{fusegan_discriminator_forward.15} parent=27 // pred_check
            _
          $region30: #{fusegan_discriminator_forward.15} parent=27 // pred_check_branch
            %196 = sbr.rel (0) target = $region32
          $region31: #{fusegan_discriminator_forward.15} parent=27 // pred_region
            // Predicated region
            $region33: #{fusegan_discriminator_forward.15} parent=31 // pred_check
              _
            $region34: #{fusegan_discriminator_forward.15} parent=31 // pred_check_branch
              %198 = sbr.rel (0) target = $region36
            $region35: #{fusegan_discriminator_forward.15} parent=31 // pred_region
              loop: start=0, step=1, limit=1
              $region37: #{fusegan_discriminator_forward.15} parent=35 // loop_pre_header
                _
              $region38: #{fusegan_discriminator_forward.15} parent=35 // loop_header
                %s200 = sphi 0, %s204
                %p201 = scmp.ge.s32.totalorder %s200, 1
                %s205 = sphi %s194, %s194
                %s206 = sphi %s191, %s191
              $region39: #{fusegan_discriminator_forward.15} parent=35 // loop_header_branch
                %203 = sbr.rel (%p201) target = $region43
              $region40: #{fusegan_discriminator_forward.15} parent=35 // loop_body
                %v207 = vld [vmem:[%s205] sm:$0xff]
                %208 = vst [vmem:[%s206] sm:$0xff] %v207
                %v209 = vld [vmem:[%s205 + $0x8] sm:$0xff]
                %210 = vst [vmem:[%s206 + $0x8] sm:$0xff] %v209
                %v211 = vld [vmem:[%s205 + $0x10] sm:$0xff]
                %212 = vst [vmem:[%s206 + $0x10] sm:$0xff] %v211
                %v213 = vld [vmem:[%s205 + $0x18] sm:$0xff]
                %214 = vst [vmem:[%s206 + $0x18] sm:$0xff] %v213
                %v215 = vld [vmem:[%s205 + $0x200] sm:$0xff]
                %216 = vst [vmem:[%s206 + $0x20] sm:$0xff] %v215
                %v217 = vld [vmem:[%s205 + $0x208] sm:$0xff]
                %218 = vst [vmem:[%s206 + $0x28] sm:$0xff] %v217
                %v219 = vld [vmem:[%s205 + $0x210] sm:$0xff]
                %220 = vst [vmem:[%s206 + $0x30] sm:$0xff] %v219
                %v221 = vld [vmem:[%s205 + $0x218] sm:$0xff]
                %222 = vst [vmem:[%s206 + $0x38] sm:$0xff] %v221
                %v223 = vld [vmem:[%s205 + $0x400] sm:$0xff]
                %224 = vst [vmem:[%s206 + $0x40] sm:$0xff] %v223
                %v225 = vld [vmem:[%s205 + $0x408] sm:$0xff]
                %226 = vst [vmem:[%s206 + $0x48] sm:$0xff] %v225
                %v227 = vld [vmem:[%s205 + $0x410] sm:$0xff]
                %228 = vst [vmem:[%s206 + $0x50] sm:$0xff] %v227
                %v229 = vld [vmem:[%s205 + $0x418] sm:$0xff]
                %230 = vst [vmem:[%s206 + $0x58] sm:$0xff] %v229
                %v231 = vld [vmem:[%s205 + $0x600] sm:$0xff]
                %232 = vst [vmem:[%s206 + $0x60] sm:$0xff] %v231
                %v233 = vld [vmem:[%s205 + $0x608] sm:$0xff]
                %234 = vst [vmem:[%s206 + $0x68] sm:$0xff] %v233
                %v235 = vld [vmem:[%s205 + $0x610] sm:$0xff]
                %236 = vst [vmem:[%s206 + $0x70] sm:$0xff] %v235
                %v237 = vld [vmem:[%s205 + $0x618] sm:$0xff]
                %238 = vst [vmem:[%s206 + $0x78] sm:$0xff] %v237
              $region41: #{fusegan_discriminator_forward.15} parent=35 // loop_footer
                %s204 = sadd.s32 1, %s200
              $region42: #{fusegan_discriminator_forward.15} parent=35 // loop_footer_branch
                %199 = sbr.rel target = $region38
              $region43: #{fusegan_discriminator_forward.15} parent=35 // loop_exit
                _
            $region36: #{fusegan_discriminator_forward.15} parent=31 // pred_fallthru
              _
            // Predicated region
            $region44: #{fusegan_discriminator_forward.15} parent=31 // pred_check
              _
            $region45: #{fusegan_discriminator_forward.15} parent=31 // pred_check_branch
              %240 = sbr.rel target = $region47
            $region46: #{fusegan_discriminator_forward.15} parent=31 // pred_region
              _
            $region47: #{fusegan_discriminator_forward.15} parent=31 // pred_fallthru
              _
          $region32: #{fusegan_discriminator_forward.15} parent=27 // pred_fallthru
            _
          %241 = vnop
        $region28: #{fusegan_discriminator_forward.15} parent=23 // pred_fallthru
          _
        // Predicated region
        $region48: #{fusegan_discriminator_forward.15} parent=23 // pred_check
          %p242 = pneg %p70
        $region49: #{fusegan_discriminator_forward.15} parent=23 // pred_check_branch
          %244 = sbr.rel (%p242) target = $region51
        $region50: #{fusegan_discriminator_forward.15} parent=23 // pred_region
          %s245 = smul.u32 64, %s18
          %p246 = scmp.lt.s32.totalorder %s245, 1023
          %s247 = scalar_select %p246, %s245, 1023
          %p248 = scmp.lt.s32.totalorder %s17, 0
          %s249 = scalar_select %p248, %s17, 0
          %s250 = sadd.s32 %s249, %s247
          %s251 = smul.addr %s250, 8
          %s252 = scalar_lea.vmem %s1, %s251
          %s253 = smul.u32 64, %s18
        $region51: #{fusegan_discriminator_forward.15} parent=23 // pred_fallthru
          _
      $region24: #{fusegan_discriminator_forward.15} parent=5 // pred_fallthru
        _
      %p254 = scmp.le.s32.totalorder 1, %s10
      %p255 = scmp.lt.s32.totalorder %s10, 17
      %p256 = pnand %p254, %p255
      %p257 = pneg %p256
      // Predicated region
      $region52: #{fusegan_discriminator_forward.15} parent=5 // pred_check
        _
      $region53: #{fusegan_discriminator_forward.15} parent=5 // pred_check_branch
        %259 = sbr.rel (%p256) target = $region55
      $region54: #{fusegan_discriminator_forward.15} parent=5 // pred_region
        %s260 = ssub.s32 %s10, 1
        %s261 = sand.u32 %s35, 1
        %s262 = sand.u32 %s35, 1
        %s263 = smul.addr %s262, 128
        %s264 = scalar_lea.vmem [#allocation3], %s263
        // Predicated region
        $region56: #{fusegan_discriminator_forward.15} parent=54 // pred_check
          %p265 = pneg %p48
        $region57: #{fusegan_discriminator_forward.15} parent=54 // pred_check_branch
          %267 = sbr.rel (%p265) target = $region59
        $region58: #{fusegan_discriminator_forward.15} parent=54 // pred_region
          _
        $region59: #{fusegan_discriminator_forward.15} parent=54 // pred_fallthru
          _
        %s268 = sand.u32 %s35, 1
        %s269 = sand.u32 %s35, 1
        %s270 = smul.addr %s269, 128
        %s271 = scalar_lea.vmem [#allocation3], %s270
        %p272 = pneg %p48
        %p273 = pneg %p45
        %s274 = smul.u32 64, %s20
        %p275 = scmp.lt.s32.totalorder %s274, 1023
        %s276 = scalar_select %p275, %s274, 1023
        %p277 = scmp.lt.s32.totalorder %s19, 0
        %s278 = scalar_select %p277, %s19, 0
        %s279 = sadd.s32 %s278, %s276
        %s280 = smul.addr %s279, 8
        %s281 = scalar_lea.vmem %s1, %s280
        %p282 = pneg %p76
        %p283 = pneg %p73
        %p284 = scmp.lt.s32.totalorder %s19, 0
        %s285 = scalar_select %p284, %s19, 0
        %s286 = scalar_lea.vmem %s2, %s285
        %p287 = pneg %p102
        %p288 = pneg %p99
        %p289 = scmp.lt.s32.totalorder %s19, 0
        %s290 = scalar_select %p289, %s19, 0
        %s291 = scalar_lea.vmem %s3, %s290
        %p292 = pneg %p128
        %p293 = pneg %p125
        %p294 = pneg %p154
        %p295 = pneg %p151
        %p296 = scmp.lt.s32.totalorder %s19, 0
        %s297 = scalar_select %p296, %s19, 0
        %s298 = smul.addr %s297, 8
        %s299 = scalar_lea.vmem %s4, %s298
        %s300 = smul.u32 4, %s20
        %s301 = smul.u32 64, %s20
        %p302 = scmp.lt.s32.totalorder %s301, 1023
        %s303 = scalar_select %p302, %s301, 1023
        %p304 = scmp.lt.s32.totalorder %s19, 0
        %s305 = scalar_select %p304, %s19, 0
        %s306 = sadd.s32 %s305, %s303
        %s307 = smul.addr %s306, 8
        %s308 = scalar_lea.vmem %s1, %s307
        %s309 = smul.u32 64, %s20
        %p310 = scmp.lt.s32.totalorder %s19, 0
        %s311 = scalar_select %p310, %s19, 0
        %s312 = scalar_lea.vmem %s2, %s311
        %p313 = scmp.lt.s32.totalorder %s19, 0
        %s314 = scalar_select %p313, %s19, 0
        %s315 = scalar_lea.vmem %s3, %s314
        %p316 = scmp.lt.s32.totalorder %s19, 0
        %s317 = scalar_select %p316, %s19, 0
        %s318 = smul.addr %s317, 8
        %s319 = scalar_lea.vmem %s4, %s318
        %p320 = scmp.eq.s32.totalorder %s20, 0
        // Predicated region
        $region60: #{fusegan_discriminator_forward.15} parent=54 // pred_check
          %p321 = pneg %p320
        $region61: #{fusegan_discriminator_forward.15} parent=54 // pred_check_branch
          %323 = sbr.rel (%p321) target = $region63
        $region62: #{fusegan_discriminator_forward.15} parent=54 // pred_region
          %324 = vst [vmem:[#allocation2] sm:$0xff] 0.0
          %325 = vst [vmem:[#allocation2 + $0x8] sm:$0xff] 0.0
          %326 = vst [vmem:[#allocation2 + $0x10] sm:$0xff] 0.0
          %327 = vst [vmem:[#allocation2 + $0x18] sm:$0xff] 0.0
        $region63: #{fusegan_discriminator_forward.15} parent=54 // pred_fallthru
          _
        %v328 = vld [vmem:[#allocation2] sm:$0xff]
        %v329 = vld [vmem:[#allocation2 + $0x8] sm:$0xff]
        %v330 = vld [vmem:[#allocation2 + $0x10] sm:$0xff]
        %v331 = vld [vmem:[#allocation2 + $0x18] sm:$0xff]
        %v332 = vld [vmem:[%s264] sm:$0xff]
        %v333 = vld [vmem:[%s264 + $0x8] sm:$0xff]
        %v334 = vld [vmem:[%s264 + $0x10] sm:$0xff]
        %v335 = vld [vmem:[%s264 + $0x18] sm:$0xff]
        %v336 = vld [vmem:[%s264 + $0x20] sm:$0xff]
        %v337 = vld [vmem:[%s264 + $0x28] sm:$0xff]
        %v338 = vld [vmem:[%s264 + $0x30] sm:$0xff]
        %v339 = vld [vmem:[%s264 + $0x38] sm:$0xff]
        %v340 = vld [vmem:[%s264 + $0x40] sm:$0xff]
        %v341 = vld [vmem:[%s264 + $0x48] sm:$0xff]
        %v342 = vld [vmem:[%s264 + $0x50] sm:$0xff]
        %v343 = vld [vmem:[%s264 + $0x58] sm:$0xff]
        %v344 = vld [vmem:[%s264 + $0x60] sm:$0xff]
        %v345 = vld [vmem:[%s264 + $0x68] sm:$0xff]
        %v346 = vld [vmem:[%s264 + $0x70] sm:$0xff]
        %v347 = vld [vmem:[%s264 + $0x78] sm:$0xff]
        %v348 = vld [vmem:[%s308] sm:$0xff]
        %v349 = vld [vmem:[%s308 + $0x8] sm:$0xff]
        %v350 = vld [vmem:[%s308 + $0x10] sm:$0xff]
        %v351 = vld [vmem:[%s308 + $0x18] sm:$0xff]
        %v352 = vld [vmem:[%s308 + $0x20] sm:$0xff]
        %v353 = vld [vmem:[%s308 + $0x28] sm:$0xff]
        %v354 = vld [vmem:[%s308 + $0x30] sm:$0xff]
        %v355 = vld [vmem:[%s308 + $0x38] sm:$0xff]
        %v356 = vld [vmem:[%s308 + $0x40] sm:$0xff]
        %v357 = vld [vmem:[%s308 + $0x48] sm:$0xff]
        %v358 = vld [vmem:[%s308 + $0x50] sm:$0xff]
        %v359 = vld [vmem:[%s308 + $0x58] sm:$0xff]
        %v360 = vld [vmem:[%s308 + $0x60] sm:$0xff]
        %v361 = vld [vmem:[%s308 + $0x68] sm:$0xff]
        %v362 = vld [vmem:[%s308 + $0x70] sm:$0xff]
        %v363 = vld [vmem:[%s308 + $0x78] sm:$0xff]
        %v364 = vld [vmem:[%s308 + $0x80] sm:$0xff]
        %v365 = vld [vmem:[%s308 + $0x88] sm:$0xff]
        %v366 = vld [vmem:[%s308 + $0x90] sm:$0xff]
        %v367 = vld [vmem:[%s308 + $0x98] sm:$0xff]
        %v368 = vld [vmem:[%s308 + $0xa0] sm:$0xff]
        %v369 = vld [vmem:[%s308 + $0xa8] sm:$0xff]
        %v370 = vld [vmem:[%s308 + $0xb0] sm:$0xff]
        %v371 = vld [vmem:[%s308 + $0xb8] sm:$0xff]
        %v372 = vld [vmem:[%s308 + $0xc0] sm:$0xff]
        %v373 = vld [vmem:[%s308 + $0xc8] sm:$0xff]
        %v374 = vld [vmem:[%s308 + $0xd0] sm:$0xff]
        %v375 = vld [vmem:[%s308 + $0xd8] sm:$0xff]
        %v376 = vld [vmem:[%s308 + $0xe0] sm:$0xff]
        %v377 = vld [vmem:[%s308 + $0xe8] sm:$0xff]
        %v378 = vld [vmem:[%s308 + $0xf0] sm:$0xff]
        %v379 = vld [vmem:[%s308 + $0xf8] sm:$0xff]
        %v380 = vld [vmem:[%s308 + $0x100] sm:$0xff]
        %v381 = vld [vmem:[%s308 + $0x108] sm:$0xff]
        %v382 = vld [vmem:[%s308 + $0x110] sm:$0xff]
        %v383 = vld [vmem:[%s308 + $0x118] sm:$0xff]
        %v384 = vld [vmem:[%s308 + $0x120] sm:$0xff]
        %v385 = vld [vmem:[%s308 + $0x128] sm:$0xff]
        %v386 = vld [vmem:[%s308 + $0x130] sm:$0xff]
        %v387 = vld [vmem:[%s308 + $0x138] sm:$0xff]
        %v388 = vld [vmem:[%s308 + $0x140] sm:$0xff]
        %v389 = vld [vmem:[%s308 + $0x148] sm:$0xff]
        %v390 = vld [vmem:[%s308 + $0x150] sm:$0xff]
        %v391 = vld [vmem:[%s308 + $0x158] sm:$0xff]
        %v392 = vld [vmem:[%s308 + $0x160] sm:$0xff]
        %v393 = vld [vmem:[%s308 + $0x168] sm:$0xff]
        %v394 = vld [vmem:[%s308 + $0x170] sm:$0xff]
        %v395 = vld [vmem:[%s308 + $0x178] sm:$0xff]
        %v396 = vld [vmem:[%s308 + $0x180] sm:$0xff]
        %v397 = vld [vmem:[%s308 + $0x188] sm:$0xff]
        %v398 = vld [vmem:[%s308 + $0x190] sm:$0xff]
        %v399 = vld [vmem:[%s308 + $0x198] sm:$0xff]
        %v400 = vld [vmem:[%s308 + $0x1a0] sm:$0xff]
        %v401 = vld [vmem:[%s308 + $0x1a8] sm:$0xff]
        %v402 = vld [vmem:[%s308 + $0x1b0] sm:$0xff]
        %v403 = vld [vmem:[%s308 + $0x1b8] sm:$0xff]
        %v404 = vld [vmem:[%s308 + $0x1c0] sm:$0xff]
        %v405 = vld [vmem:[%s308 + $0x1c8] sm:$0xff]
        %v406 = vld [vmem:[%s308 + $0x1d0] sm:$0xff]
        %v407 = vld [vmem:[%s308 + $0x1d8] sm:$0xff]
        %v408 = vld [vmem:[%s308 + $0x1e0] sm:$0xff]
        %v409 = vld [vmem:[%s308 + $0x1e8] sm:$0xff]
        %v410 = vld [vmem:[%s308 + $0x1f0] sm:$0xff]
        %v411 = vld [vmem:[%s308 + $0x1f8] sm:$0xff]
        %412 = vmatprep.subr.mxu0 0.0
        %413 = vmatpush1.msra.mxu0 %v363
        %414 = vmatprep.subr.mxu0 0.0
        %415 = vmatpush1.msra.mxu0 %v362
        %416 = vmatprep.subr.mxu0 0.0
        %417 = vmatpush1.msra.mxu0 %v361
        %418 = vmatprep.subr.mxu0 0.0
        %419 = vmatpush1.msra.mxu0 %v360
        %420 = vmatprep.subr.mxu0 0.0
        %421 = vmatpush1.msra.mxu0 %v359
        %422 = vmatprep.subr.mxu0 0.0
        %423 = vmatpush1.msra.mxu0 %v358
        %424 = vmatprep.subr.mxu0 0.0
        %425 = vmatpush1.msra.mxu0 %v357
        %426 = vmatprep.subr.mxu0 0.0
        %427 = vmatpush1.msra.mxu0 %v356
        %428 = vmatprep.subr.mxu0 0.0
        %429 = vmatpush1.msra.mxu0 %v355
        %430 = vmatprep.subr.mxu0 0.0
        %431 = vmatpush1.msra.mxu0 %v354
        %432 = vmatprep.subr.mxu0 0.0
        %433 = vmatpush1.msra.mxu0 %v353
        %434 = vmatprep.subr.mxu0 0.0
        %435 = vmatpush1.msra.mxu0 %v352
        %436 = vmatprep.subr.mxu0 0.0
        %437 = vmatpush1.msra.mxu0 %v351
        %438 = vmatprep.subr.mxu0 0.0
        %439 = vmatpush1.msra.mxu0 %v350
        %440 = vmatprep.subr.mxu0 0.0
        %441 = vmatpush1.msra.mxu0 %v349
        %442 = vmatprep.subr.mxu0 0.0
        %443 = vmatpush1.msra.mxu0 %v348
        %444 = vmatprep.subr.mxu0 0.0
        %445 = vmatpush2.msra.mxu0 %v379
        %446 = vmatprep.subr.mxu0 0.0
        %447 = vmatpush2.msra.mxu0 %v378
        %448 = vmatprep.subr.mxu0 0.0
        %449 = vmatpush2.msra.mxu0 %v377
        %450 = vmatprep.subr.mxu0 0.0
        %451 = vmatpush2.msra.mxu0 %v376
        %452 = vmatprep.subr.mxu0 0.0
        %453 = vmatpush2.msra.mxu0 %v375
        %454 = vmatprep.subr.mxu0 0.0
        %455 = vmatpush2.msra.mxu0 %v374
        %456 = vmatprep.subr.mxu0 0.0
        %457 = vmatpush2.msra.mxu0 %v373
        %458 = vmatprep.subr.mxu0 0.0
        %459 = vmatpush2.msra.mxu0 %v372
        %460 = vmatprep.subr.mxu0 0.0
        %461 = vmatpush2.msra.mxu0 %v371
        %462 = vmatprep.subr.mxu0 0.0
        %463 = vmatpush2.msra.mxu0 %v370
        %464 = vmatprep.subr.mxu0 0.0
        %465 = vmatpush2.msra.mxu0 %v369
        %466 = vmatprep.subr.mxu0 0.0
        %467 = vmatpush2.msra.mxu0 %v368
        %468 = vmatprep.subr.mxu0 0.0
        %469 = vmatpush2.msra.mxu0 %v367
        %470 = vmatprep.subr.mxu0 0.0
        %471 = vmatpush2.msra.mxu0 %v366
        %472 = vmatprep.subr.mxu0 0.0
        %473 = vmatpush2.msra.mxu0 %v365
        %474 = vmatprep.subr.mxu0 0.0
        %475 = vmatpush2.msra.mxu0 %v364
        %476 = vmatprep.mubr.f32.mxu0 %v333
        %477 = vmatmul.mubr.f32.gmra.mxu0 %v332
        %v478 = vpop.f32.mrf.mxu0
        %v479 = vadd.f32 0.0, %v478
        %v480 = vpop.f32.mrf.mxu0
        %481 = vmatprep.mubr.f32.mxu0 %v337
        %482 = vmatmul.mubr.f32.gmra.mxu0 %v336
        %v483 = vpop.f32.mrf.mxu0
        %v484 = vadd.f32 0.0, %v483
        %v485 = vpop.f32.mrf.mxu0
        %486 = vmatprep.mubr.f32.mxu0 %v341
        %487 = vmatmul.mubr.f32.gmra.mxu0 %v340
        %v488 = vpop.f32.mrf.mxu0
        %v489 = vadd.f32 0.0, %v488
        %v490 = vpop.f32.mrf.mxu0
        %491 = vmatprep.mubr.f32.mxu0 %v345
        %492 = vmatmul.mubr.f32.gmra.mxu0 %v344
        %v493 = vpop.f32.mrf.mxu0
        %v494 = vadd.f32 0.0, %v493
        %v495 = vpop.f32.mrf.mxu0
        %496 = vdwg.mxu0
        %497 = vmatprep.subr.mxu0 0.0
        %498 = vmatpush1.msra.mxu0 %v395
        %499 = vmatprep.subr.mxu0 0.0
        %500 = vmatpush1.msra.mxu0 %v394
        %501 = vmatprep.subr.mxu0 0.0
        %502 = vmatpush1.msra.mxu0 %v393
        %503 = vmatprep.subr.mxu0 0.0
        %504 = vmatpush1.msra.mxu0 %v392
        %505 = vmatprep.subr.mxu0 0.0
        %506 = vmatpush1.msra.mxu0 %v391
        %507 = vmatprep.subr.mxu0 0.0
        %508 = vmatpush1.msra.mxu0 %v390
        %509 = vmatprep.subr.mxu0 0.0
        %510 = vmatpush1.msra.mxu0 %v389
        %511 = vmatprep.subr.mxu0 0.0
        %512 = vmatpush1.msra.mxu0 %v388
        %513 = vmatprep.subr.mxu0 0.0
        %514 = vmatpush1.msra.mxu0 %v387
        %515 = vmatprep.subr.mxu0 0.0
        %516 = vmatpush1.msra.mxu0 %v386
        %517 = vmatprep.subr.mxu0 0.0
        %518 = vmatpush1.msra.mxu0 %v385
        %519 = vmatprep.subr.mxu0 0.0
        %520 = vmatpush1.msra.mxu0 %v384
        %521 = vmatprep.subr.mxu0 0.0
        %522 = vmatpush1.msra.mxu0 %v383
        %523 = vmatprep.subr.mxu0 0.0
        %524 = vmatpush1.msra.mxu0 %v382
        %525 = vmatprep.subr.mxu0 0.0
        %526 = vmatpush1.msra.mxu0 %v381
        %527 = vmatprep.subr.mxu0 0.0
        %528 = vmatpush1.msra.mxu0 %v380
        %529 = vmatprep.subr.mxu0 0.0
        %530 = vmatpush2.msra.mxu0 %v411
        %531 = vmatprep.subr.mxu0 0.0
        %532 = vmatpush2.msra.mxu0 %v410
        %533 = vmatprep.subr.mxu0 0.0
        %534 = vmatpush2.msra.mxu0 %v409
        %535 = vmatprep.subr.mxu0 0.0
        %536 = vmatpush2.msra.mxu0 %v408
        %537 = vmatprep.subr.mxu0 0.0
        %538 = vmatpush2.msra.mxu0 %v407
        %539 = vmatprep.subr.mxu0 0.0
        %540 = vmatpush2.msra.mxu0 %v406
        %541 = vmatprep.subr.mxu0 0.0
        %542 = vmatpush2.msra.mxu0 %v405
        %543 = vmatprep.subr.mxu0 0.0
        %544 = vmatpush2.msra.mxu0 %v404
        %545 = vmatprep.subr.mxu0 0.0
        %546 = vmatpush2.msra.mxu0 %v403
        %547 = vmatprep.subr.mxu0 0.0
        %548 = vmatpush2.msra.mxu0 %v402
        %549 = vmatprep.subr.mxu0 0.0
        %550 = vmatpush2.msra.mxu0 %v401
        %551 = vmatprep.subr.mxu0 0.0
        %552 = vmatpush2.msra.mxu0 %v400
        %553 = vmatprep.subr.mxu0 0.0
        %554 = vmatpush2.msra.mxu0 %v399
        %555 = vmatprep.subr.mxu0 0.0
        %556 = vmatpush2.msra.mxu0 %v398
        %557 = vmatprep.subr.mxu0 0.0
        %558 = vmatpush2.msra.mxu0 %v397
        %559 = vmatprep.subr.mxu0 0.0
        %560 = vmatpush2.msra.mxu0 %v396
        %561 = vmatprep.mubr.f32.mxu0 %v335
        %562 = vmatmul.mubr.f32.gmra.mxu0 %v334
        %v563 = vpop.f32.mrf.mxu0
        %v564 = vadd.f32 %v479, %v563
        %v565 = vpop.f32.mrf.mxu0
        %566 = vmatprep.mubr.f32.mxu0 %v339
        %567 = vmatmul.mubr.f32.gmra.mxu0 %v338
        %v568 = vpop.f32.mrf.mxu0
        %v569 = vadd.f32 %v484, %v568
        %v570 = vpop.f32.mrf.mxu0
        %571 = vmatprep.mubr.f32.mxu0 %v343
        %572 = vmatmul.mubr.f32.gmra.mxu0 %v342
        %v573 = vpop.f32.mrf.mxu0
        %v574 = vadd.f32 %v489, %v573
        %v575 = vpop.f32.mrf.mxu0
        %576 = vmatprep.mubr.f32.mxu0 %v347
        %577 = vmatmul.mubr.f32.gmra.mxu0 %v346
        %v578 = vpop.f32.mrf.mxu0
        %v579 = vadd.f32 %v494, %v578
        %v580 = vpop.f32.mrf.mxu0
        %581 = vdwg.mxu0
        %v582 = vadd.f32 %v328, %v564
        %v583 = vadd.f32 %v329, %v569
        %v584 = vadd.f32 %v330, %v574
        %v585 = vadd.f32 %v331, %v579
        %586 = vst [vmem:[#allocation2] sm:$0xff] %v582
        %587 = vst [vmem:[#allocation2 + $0x8] sm:$0xff] %v583
        %588 = vst [vmem:[#allocation2 + $0x10] sm:$0xff] %v584
        %589 = vst [vmem:[#allocation2 + $0x18] sm:$0xff] %v585
        %p590 = scmp.eq.s32.totalorder %s20, 15
        // Predicated region
        $region64: #{fusegan_discriminator_forward.15} parent=54 // pred_check
          %p591 = pneg %p590
        $region65: #{fusegan_discriminator_forward.15} parent=54 // pred_check_branch
          %593 = sbr.rel (%p591) target = $region67
        $region66: #{fusegan_discriminator_forward.15} parent=54 // pred_region
          %v594 = vld [vmem:[#allocation2] sm:$0xff]
          %v595 = vld [vmem:[#allocation2 + $0x8] sm:$0xff]
          %v596 = vld [vmem:[#allocation2 + $0x10] sm:$0xff]
          %v597 = vld [vmem:[#allocation2 + $0x18] sm:$0xff]
          %v598 = vld [vmem:[%s315] sm:$0x1]
          %v600 = vlaneseq
          %v601 = vshrl.u32 %v600, 7
          %v602 = vsub.s32 0, %v601
          %v603 = vrot.slane %v598, %v602
          %v605 = vadd.f32 %v594, %v603
          %v606 = vadd.f32 %v595, %v603
          %v607 = vadd.f32 %v596, %v603
          %v608 = vadd.f32 %v597, %v603
          %v609 = vsub.f32 0.0, %v605
          %v610 = vsub.f32 0.0, %v606
          %v611 = vsub.f32 0.0, %v607
          %v612 = vsub.f32 0.0, %v608
          %v613 = vmul.f32 %v609, 1.442695
          %v614 = vpow.pop %v613
          %v615 = vmul.f32 %v610, 1.442695
          %v616 = vpow.pop %v615
          %v617 = vmul.f32 %v611, 1.442695
          %v618 = vpow.pop %v617
          %v619 = vmul.f32 %v612, 1.442695
          %v620 = vpow.pop %v619
          %v621 = vadd.f32 %v614, 1.0
          %v622 = vadd.f32 %v616, 1.0
          %v623 = vadd.f32 %v618, 1.0
          %v624 = vadd.f32 %v620, 1.0
          %v625 = vrcp.pop %v621
          %v626 = vmul.f32 1.0, %v625
          %v627 = vrcp.pop %v622
          %v628 = vmul.f32 1.0, %v627
          %v629 = vrcp.pop %v623
          %v630 = vmul.f32 1.0, %v629
          %v631 = vrcp.pop %v624
          %v632 = vmul.f32 1.0, %v631
          %633 = vst [vmem:[%s319] sm:$0xff] %v626
          %634 = vst [vmem:[%s319 + $0x8] sm:$0xff] %v628
          %635 = vst [vmem:[%s319 + $0x10] sm:$0xff] %v630
          %636 = vst [vmem:[%s319 + $0x18] sm:$0xff] %v632
        $region67: #{fusegan_discriminator_forward.15} parent=54 // pred_fallthru
          _
        %p637 = scmp.lt.s32.totalorder %s19, 0
        %s638 = scalar_select %p637, %s19, 0
        %s639 = smul.addr %s638, 8
        %s640 = scalar_lea.vmem %s4, %s639
        // Predicated region
        $region68: #{fusegan_discriminator_forward.15} parent=54 // pred_check
          %p641 = pneg %p151
        $region69: #{fusegan_discriminator_forward.15} parent=54 // pred_check_branch
          %643 = sbr.rel (%p641) target = $region71
        $region70: #{fusegan_discriminator_forward.15} parent=54 // pred_region
          _
        $region71: #{fusegan_discriminator_forward.15} parent=54 // pred_fallthru
          _
        // Predicated region
        $region72: #{fusegan_discriminator_forward.15} parent=54 // pred_check
          %p644 = pneg %p151
        $region73: #{fusegan_discriminator_forward.15} parent=54 // pred_check_branch
          %646 = sbr.rel (%p644) target = $region75
        $region74: #{fusegan_discriminator_forward.15} parent=54 // pred_region
          %p647 = scmp.lt.s32.totalorder %s19, 0
          %s648 = scalar_select %p647, %s19, 0
          %s649 = smul.addr %s648, 8
          %s650 = scalar_lea.vmem %s4, %s649
        $region75: #{fusegan_discriminator_forward.15} parent=54 // pred_fallthru
          _
      $region55: #{fusegan_discriminator_forward.15} parent=5 // pred_fallthru
        _
      %p651 = scmp.le.s32.totalorder 2, %s10
      // Predicated region
      $region76: #{fusegan_discriminator_forward.15} parent=5 // pred_check
        %p652 = pneg %p651
      $region77: #{fusegan_discriminator_forward.15} parent=5 // pred_check_branch
        %654 = sbr.rel (%p652) target = $region79
      $region78: #{fusegan_discriminator_forward.15} parent=5 // pred_region
        %s655 = ssub.s32 %s10, 2
      $region79: #{fusegan_discriminator_forward.15} parent=5 // pred_fallthru
        _
    $region6: #{fusegan_discriminator_forward.15} parent=1 // loop_footer
      %s14 = sadd.s32 1, %s10
    $region7: #{fusegan_discriminator_forward.15} parent=1 // loop_footer_branch
      %9 = sbr.rel target = $region3
    $region8: #{fusegan_discriminator_forward.15} parent=1 // loop_exit
      _

</llo_original>
